<compile_context>
chip_gen: v7x
topology: tpu7x:2x2x1
jax: 0.10.0
libtpu: 0.0.40
codegen_flags: <defaults>
</compile_context>

<pallas_src>
import jax
import jax.numpy as jnp
from jax.experimental import pallas as pl
from jax.experimental.pallas import tpu as pltpu
import numpy as np


def _round_up(x, m):
    return (x + m - 1) // m * m


# ----------------------------- Pallas kernel ------------------------------- #
def _sine_layer_kernel(x_ref, w_ref, b_ref, o_ref):
    # x_ref: (tm, K)   w_ref: (K, tn)  (pre-transposed, omega folded in)
    # b_ref: (1, tn)   o_ref: (tm, tn)
    acc = jnp.dot(x_ref[...], w_ref[...], preferred_element_type=jnp.float32)
    acc = acc + b_ref[...]                       # f32 bias, broadcast over rows
    # TODO(synk): if a bundle dump shows sin lowering to a VALU polynomial and
    # VALU saturating, consider bf16 dot operands (numerics check needed).
    o_ref[...] = jnp.sin(acc).astype(o_ref.dtype)


# ------------------------------- wrapper ------------------------------------ #
def sine_layer_forward(x, weight, bias=None, *, omega_0=30.0, is_first=True,
                       period=0, tm=2048, tn=None):
    """x: [N, in_features]; weight: [out_features, in_features]; bias: [out_features]."""
    N, K = x.shape
    O, K2 = weight.shape
    assert K == K2
    out_dtype = x.dtype

    # ---- fold omega_0 into the tiny parameters (exact identity), transpose once.
    apply_omega = not (period > 0 and is_first)
    scale = float(omega_0) if apply_omega else 1.0
    if bias is None:
        bias = jnp.zeros((O,), jnp.float32)
    w_t = (weight.astype(jnp.float32) * scale).T.astype(x.dtype)   # [K, O]
    b_f = bias.astype(jnp.float32) * scale                         # [O], kept f32

    # ---- pad ONLY the tiny params on the out-feature axis (lane-dense).
    O_pad = _round_up(O, 128)
    if O_pad != O:
        w_t = jnp.pad(w_t, ((0, 0), (0, O_pad - O)))
        b_f = jnp.pad(b_f, ((0, O_pad - O),))
    b2d = b_f.reshape(1, O_pad)

    x_b = jnp.dtype(x.dtype).itemsize
    w_b = jnp.dtype(w_t.dtype).itemsize
    o_b = jnp.dtype(out_dtype).itemsize

    # ---- generation-aware VMEM budget.
    try:
        phys_vmem = int(pltpu.get_tpu_info().vmem_capacity_bytes)
    except Exception:
        phys_vmem = 64 << 20            # conservative fallback: v7x per-TC VMEM
    vmem_budget = int(phys_vmem * 0.85)

    # ---- column tiling: keep the whole weight resident when it fits.
    w_cap = min(16 << 20, vmem_budget // 4)
    if tn is None:
        if K * O_pad * w_b <= w_cap:
            tn = O_pad                                   # fully resident weight
        else:
            tn = max(256, (w_cap // max(K * w_b, 1)) // 256 * 256)   # 256-aligned
            tn = min(tn, O_pad)
    else:
        tn = min(max(128, _round_up(tn, 128)), O_pad)
    n_col = pl.cdiv(O_pad, tn)

    # ---- row tiling: dtype-aware sublane multiple, shrink to fit VMEM budget.
    sub = max(8, 32 // max(x_b, 1))      # 8 for f32, 16 for bf16, 32 for int8/fp8
    tm = max(sub, min(_round_up(tm, sub), _round_up(N, sub)))

    def _footprint(tm_):
        return (2 * tm_ * K * x_b        # x tiles (double-buffered)
                + 2 * tm_ * tn * o_b     # out tiles
                + 2 * K * tn * w_b       # weight tile(s)
                + 2 * tn * 4             # bias
                + (2 << 20))             # compiler-internal scratch margin

    while tm > sub and _footprint(tm) > vmem_budget:
        tm = max(sub, _round_up(tm // 2, sub))
    n_row = pl.cdiv(N, tm)

    vmem_limit = int(min(max(_footprint(tm), 16 << 20), vmem_budget))

    cost = pl.CostEstimate(
        flops=2 * N * K * O_pad,
        transcendentals=N * O_pad,
        bytes_accessed=(n_col * N * K * x_b      # x is re-streamed once per column pass
                        + K * O_pad * w_b + O_pad * 4
                        + N * O * o_b),
    )

    return pl.pallas_call(
        _sine_layer_kernel,
        out_shape=jax.ShapeDtypeStruct((N, O), out_dtype),
        grid=(n_col, n_row),                         # columns OUTER, rows inner
        in_specs=[
            pl.BlockSpec((tm, K), lambda j, i: (i, 0)),   # x row tile (streams)
            pl.BlockSpec((K, tn), lambda j, i: (0, j)),   # weight col tile (resident)
            pl.BlockSpec((1, tn), lambda j, i: (0, j)),   # bias col tile
        ],
        out_specs=pl.BlockSpec((tm, tn), lambda j, i: (i, j)),
        compiler_params=pltpu.CompilerParams(
            dimension_semantics=("parallel", "parallel"),
            vmem_limit_bytes=vmem_limit,
        ),
        cost_estimate=cost,
    )(x, w_t, b2d)


# ------------------------ deterministic parameter init --------------------- #
def init_sine_layer_params(key, in_features, out_features, *, is_first, omega_0):
    """Mirrors SineLayer.init_weights (period == 0 branch) + nn.Linear bias init."""
    kw, kb = jax.random.split(key)
    if is_first:
        w_bound = 1.0
    else:
        w_bound = np.sqrt(6.0 / in_features) / omega_0
    weight = jax.random.uniform(
        kw, (out_features, in_features), jnp.float32, -w_bound, w_bound)
    b_bound = 1.0 / np.sqrt(in_features)
    bias = jax.random.uniform(
        kb, (out_features,), jnp.float32, -b_bound, b_bound)
    return weight, bias
    # TODO(synk): init_periodic_uniform / init_periodic_sampling are host-side
    # numpy frequency sampling (not kernel work) and are not reproduced here.


# ---------------------------------- demo ----------------------------------- #
if __name__ == "__main__":
    key = jax.random.PRNGKey(0)
    k_x, k_p = jax.random.split(key)

    # Deliberately non-multiple shapes to exercise the pad-free boundary path.
    N, IN_FEATURES, OUT_FEATURES = 300, 64, 200
    OMEGA_0 = 30.0
    IS_FIRST = True

    x = jax.random.uniform(k_x, (N, IN_FEATURES), jnp.float32, -1.0, 1.0)
    weight, bias = init_sine_layer_params(
        k_p, IN_FEATURES, OUT_FEATURES, is_first=IS_FIRST, omega_0=OMEGA_0)

    out = sine_layer_forward(
        x, weight, bias, omega_0=OMEGA_0, is_first=IS_FIRST, period=0)
    out = jax.block_until_ready(out)

    # Pure-JAX reference of the exact forward semantics (full-precision matmul).
    ref = jnp.sin(OMEGA_0 * (
        jnp.dot(x, weight.T, precision=jax.lax.Precision.HIGHEST) + bias))
    assert out.shape == (N, OUT_FEATURES)
    max_err = float(jnp.max(jnp.abs(out - ref)))
    assert jnp.allclose(out, ref, atol=1e-3, rtol=1e-3), \
        f"mismatch vs reference (max abs err {max_err})"

    print("KERNEL_OK")
</pallas_src>

<mosaic_0001>
module attributes {stable_mosaic.version = 11 : i64} {
  func.func @_sine_layer_kernel(%arg0: i32, %arg1: i32, %arg2: memref<304x64xf32, #tpu.memory_space<vmem>>, %arg3: memref<64x256xf32, #tpu.memory_space<vmem>>, %arg4: memref<1x256xf32, #tpu.memory_space<vmem>>, %arg5: memref<304x256xf32, #tpu.memory_space<vmem>>) attributes {dimension_semantics = [#tpu.dimension_semantics<parallel>, #tpu.dimension_semantics<parallel>], iteration_bounds = array<i64: 1, 1>, scalar_prefetch = 0 : i64, scratch_operands = 0 : i64, tpu.core_type = #tpu.core_type<tc>, window_params = [{transform_indices = @transform_0, window_bounds = array<i64: 304, 64>}, {transform_indices = @transform_1, window_bounds = array<i64: 64, 256>}, {transform_indices = @transform_2, window_bounds = array<i64: 1, 256>}, {transform_indices = @transform_3, window_bounds = array<i64: 304, 256>}]} {
    %c0 = arith.constant 0 : index
    %c0_0 = arith.constant 0 : index
    %0 = vector.load %arg2[%c0, %c0_0] : memref<304x64xf32, #tpu.memory_space<vmem>>, vector<304x64xf32>
    %c0_1 = arith.constant 0 : index
    %c0_2 = arith.constant 0 : index
    %1 = vector.load %arg3[%c0_1, %c0_2] : memref<64x256xf32, #tpu.memory_space<vmem>>, vector<64x256xf32>
    %cst = arith.constant dense<0.000000e+00> : vector<304x256xf32>
    %2 = tpu.matmul %0, %1, %cst {dimension_numbers = #tpu.dot_dimension_numbers<[1], [0], [0], [1], [0, 0, 1, 1], [], []>} : vector<304x64xf32>, vector<64x256xf32>, vector<304x256xf32> -> vector<304x256xf32>
    %c0_3 = arith.constant 0 : index
    %c0_4 = arith.constant 0 : index
    %3 = vector.load %arg4[%c0_3, %c0_4] : memref<1x256xf32, #tpu.memory_space<vmem>>, vector<1x256xf32>
    %4 = vector.broadcast %3 : vector<1x256xf32> to vector<304x256xf32>
    %5 = arith.addf %2, %4 : vector<304x256xf32>
    %6 = math.sin %5 : vector<304x256xf32>
    %c0_5 = arith.constant 0 : index
    %c0_6 = arith.constant 0 : index
    %7 = vector.load %arg5[%c0_5, %c0_6] : memref<304x256xf32, #tpu.memory_space<vmem>>, vector<304x256xf32>
    tpu.vector_store %arg5[%c0_5, %c0_6], %6 {strides = array<i32>} : memref<304x256xf32, #tpu.memory_space<vmem>>, vector<304x256xf32>,
    return
  }
  func.func @transform_0(%arg0: i32, %arg1: i32) -> (i32, i32) {
    %c0_i32 = arith.constant 0 : i32
    %c0_i32_0 = arith.constant 0 : i32
    return %arg1, %c0_i32 : i32, i32
  }
  func.func @transform_1(%arg0: i32, %arg1: i32) -> (i32, i32) {
    %c0_i32 = arith.constant 0 : i32
    %c0_i32_0 = arith.constant 0 : i32
    return %c0_i32, %arg0 : i32, i32
  }
  func.func @transform_2(%arg0: i32, %arg1: i32) -> (i32, i32) {
    %c0_i32 = arith.constant 0 : i32
    %c0_i32_0 = arith.constant 0 : i32
    return %c0_i32, %arg0 : i32, i32
  }
  func.func @transform_3(%arg0: i32, %arg1: i32) -> (i32, i32) {
    %c0_i32 = arith.constant 0 : i32
    return %arg1, %arg0 : i32, i32
  }
}

</mosaic_0001>

<llo_original>
// kernel: tpu_custom_call.1
$region0: #{tpu_custom_call.1}
  #allocation0 [shape = 'u32[]', space=smem, size = 0x4, offset = 0x4, fixed_abs, tag = 'smem constant byte address 0x4 - core index']
  #allocation1 [shape = 'u32[144,128]{1,0:T(1,128)}', space=vmem, size = 0x12000, scoped, tag = 'internal scratch']
  %s0 = inlined_call_operand.vmem [shape: f32[300,64], index: 0, kind: input, shape index: {}]
  %s1 = inlined_call_operand.vmem [shape: f32[64,256], index: 1, kind: input, shape index: {}]
  %s2 = inlined_call_operand.vmem [shape: f32[1,256], index: 2, kind: input, shape index: {}]
  %s3 = inlined_call_operand.vmem [shape: f32[300,200], index: 3, kind: output, shape index: {}]
  %s4 = sld [smem:[#allocation0]]
  $region22: #{tpu_custom_call.1} parent=0
    _
  %s6 = ssub.s32 1, %s4
  %s7 = scalar_select 0, %s6, %s4
  // Predicated region
  $region2: #{tpu_custom_call.1} parent=0 // pred_check
    _
  $region3: #{tpu_custom_call.1} parent=0 // pred_check_branch
    %9 = sbr.rel (0) target = $region5
  $region4: #{tpu_custom_call.1} parent=0 // pred_region
    _
  $region5: #{tpu_custom_call.1} parent=0 // pred_fallthru
    _
  // Predicated region
  $region6: #{tpu_custom_call.1} parent=0 // pred_check
    _
  $region7: #{tpu_custom_call.1} parent=0 // pred_check_branch
    %11 = sbr.rel (0) target = $region9
  $region8: #{tpu_custom_call.1} parent=0 // pred_region
    _
  $region9: #{tpu_custom_call.1} parent=0 // pred_fallthru
    _
  // Predicated region
  $region10: #{tpu_custom_call.1} parent=0 // pred_check
    _
  $region11: #{tpu_custom_call.1} parent=0 // pred_check_branch
    %13 = sbr.rel (0) target = $region13
  $region12: #{tpu_custom_call.1} parent=0 // pred_region
    _
  $region13: #{tpu_custom_call.1} parent=0 // pred_fallthru
    _
  %v14 = vld [vmem:[%s0] sm:$0xff]
  %v15 = vld [vmem:[%s0 + $0x8] sm:$0xff]
  %v16 = vld [vmem:[%s0 + $0x10] sm:$0xff]
  %v17 = vld [vmem:[%s0 + $0x18] sm:$0xff]
  %v18 = vld [vmem:[%s0 + $0x20] sm:$0xff]
  %v19 = vld [vmem:[%s0 + $0x28] sm:$0xff]
  %v20 = vld [vmem:[%s0 + $0x30] sm:$0xff]
  %v21 = vld [vmem:[%s0 + $0x38] sm:$0xff]
  %v22 = vld [vmem:[%s0 + $0x40] sm:$0xff]
  %v23 = vld [vmem:[%s0 + $0x48] sm:$0xff]
  %v24 = vld [vmem:[%s0 + $0x50] sm:$0xff]
  %v25 = vld [vmem:[%s0 + $0x58] sm:$0xff]
  %v26 = vld [vmem:[%s0 + $0x60] sm:$0xff]
  %v27 = vld [vmem:[%s0 + $0x68] sm:$0xff]
  %v28 = vld [vmem:[%s0 + $0x70] sm:$0xff]
  %v29 = vld [vmem:[%s0 + $0x78] sm:$0xff]
  %v30 = vld [vmem:[%s0 + $0x80] sm:$0xff]
  %v31 = vld [vmem:[%s0 + $0x88] sm:$0xff]
  %v32 = vld [vmem:[%s0 + $0x90] sm:$0xff]
  %v33 = vld [vmem:[%s0 + $0x98] sm:$0xff]
  %v34 = vld [vmem:[%s0 + $0xa0] sm:$0xff]
  %v35 = vld [vmem:[%s0 + $0xa8] sm:$0xff]
  %v36 = vld [vmem:[%s0 + $0xb0] sm:$0xff]
  %v37 = vld [vmem:[%s0 + $0xb8] sm:$0xff]
  %v38 = vld [vmem:[%s0 + $0xc0] sm:$0xff]
  %v39 = vld [vmem:[%s0 + $0xc8] sm:$0xff]
  %v40 = vld [vmem:[%s0 + $0xd0] sm:$0xff]
  %v41 = vld [vmem:[%s0 + $0xd8] sm:$0xff]
  %v42 = vld [vmem:[%s0 + $0xe0] sm:$0xff]
  %v43 = vld [vmem:[%s0 + $0xe8] sm:$0xff]
  %v44 = vld [vmem:[%s0 + $0xf0] sm:$0xff]
  %v45 = vld [vmem:[%s0 + $0xf8] sm:$0xff]
  %v46 = vld [vmem:[%s0 + $0x100] sm:$0xff]
  %v47 = vld [vmem:[%s0 + $0x108] sm:$0xff]
  %v48 = vld [vmem:[%s0 + $0x110] sm:$0xff]
  %v49 = vld [vmem:[%s0 + $0x118] sm:$0xff]
  %v50 = vld [vmem:[%s0 + $0x120] sm:$0xff]
  %v51 = vld [vmem:[%s0 + $0x128] sm:$0xff]
  %v52 = vld [vmem:[%s1] sm:$0xff]
  %v53 = vld [vmem:[%s1 + $0x8] sm:$0xff]
  %v54 = vld [vmem:[%s1 + $0x10] sm:$0xff]
  %v55 = vld [vmem:[%s1 + $0x18] sm:$0xff]
  %v56 = vld [vmem:[%s1 + $0x20] sm:$0xff]
  %v57 = vld [vmem:[%s1 + $0x28] sm:$0xff]
  %v58 = vld [vmem:[%s1 + $0x30] sm:$0xff]
  %v59 = vld [vmem:[%s1 + $0x38] sm:$0xff]
  %v60 = vld [vmem:[%s1 + $0x40] sm:$0xff]
  %v61 = vld [vmem:[%s1 + $0x48] sm:$0xff]
  %v62 = vld [vmem:[%s1 + $0x50] sm:$0xff]
  %v63 = vld [vmem:[%s1 + $0x58] sm:$0xff]
  %v64 = vld [vmem:[%s1 + $0x60] sm:$0xff]
  %v65 = vld [vmem:[%s1 + $0x68] sm:$0xff]
  %v66 = vld [vmem:[%s1 + $0x70] sm:$0xff]
  %v67 = vld [vmem:[%s1 + $0x78] sm:$0xff]
  %v68 = vld [vmem:[%s2] sm:$0x3]
  %v70 = vlaneseq
  %v71 = vshrl.u32 %v70, 7
  %v72 = vsub.s32 0, %v71
  %v73 = vrot.slane %v68, %v72
  %v74 = vlaneseq
  %v75 = vshrl.u32 %v74, 7
  %v76 = vsub.s32 1, %v75
  %v77 = vrot.slane %v68, %v76
  %vm80 = vcmask 523264
  %v82 = vsel %vm80, %v14, 0
  %v85 = vsel %vm80, %v15, 0
  %v88 = vsel %vm80, %v16, 0
  %v91 = vsel %vm80, %v17, 0
  %v94 = vsel %vm80, %v18, 0
  %v97 = vsel %vm80, %v19, 0
  %v100 = vsel %vm80, %v20, 0
  %v103 = vsel %vm80, %v21, 0
  %v106 = vsel %vm80, %v22, 0
  %v109 = vsel %vm80, %v23, 0
  %v112 = vsel %vm80, %v24, 0
  %v115 = vsel %vm80, %v25, 0
  %v118 = vsel %vm80, %v26, 0
  %v121 = vsel %vm80, %v27, 0
  %v124 = vsel %vm80, %v28, 0
  %v127 = vsel %vm80, %v29, 0
  %v130 = vsel %vm80, %v30, 0
  %v133 = vsel %vm80, %v31, 0
  %v136 = vsel %vm80, %v32, 0
  %v139 = vsel %vm80, %v33, 0
  %v142 = vsel %vm80, %v34, 0
  %v145 = vsel %vm80, %v35, 0
  %v148 = vsel %vm80, %v36, 0
  %v151 = vsel %vm80, %v37, 0
  %v154 = vsel %vm80, %v38, 0
  %v157 = vsel %vm80, %v39, 0
  %v160 = vsel %vm80, %v40, 0
  %v163 = vsel %vm80, %v41, 0
  %v166 = vsel %vm80, %v42, 0
  %v169 = vsel %vm80, %v43, 0
  %v172 = vsel %vm80, %v44, 0
  %v175 = vsel %vm80, %v45, 0
  %v178 = vsel %vm80, %v46, 0
  %v181 = vsel %vm80, %v47, 0
  %v184 = vsel %vm80, %v48, 0
  %v187 = vsel %vm80, %v49, 0
  %v190 = vsel %vm80, %v50, 0
  %v193 = vsel %vm80, %v51, 0
  %195 = vmatprep.subr.mxu0 %v53
  %196 = vmatpush1.msra.mxu0 %v52
  %197 = vmatprep.subr.mxu0 %v55
  %198 = vmatpush1.msra.mxu0 %v54
  %199 = vmatprep.subr.mxu0 %v57
  %200 = vmatpush1.msra.mxu0 %v56
  %201 = vmatprep.subr.mxu0 %v59
  %202 = vmatpush1.msra.mxu0 %v58
  %203 = vmatprep.subr.mxu0 %v61
  %204 = vmatpush1.msra.mxu0 %v60
  %205 = vmatprep.subr.mxu0 %v63
  %206 = vmatpush1.msra.mxu0 %v62
  %207 = vmatprep.subr.mxu0 %v65
  %208 = vmatpush1.msra.mxu0 %v64
  %209 = vmatprep.subr.mxu0 %v67
  %210 = vmatpush1.msra.mxu0 %v66
  %211 = vmatprep.subr.mxu0 0.0
  %212 = vmatpush1.msra.mxu0 0.0
  %213 = vmatprep.subr.mxu0 0.0
  %214 = vmatpush1.msra.mxu0 0.0
  %215 = vmatprep.subr.mxu0 0.0
  %216 = vmatpush1.msra.mxu0 0.0
  %217 = vmatprep.subr.mxu0 0.0
  %218 = vmatpush1.msra.mxu0 0.0
  %219 = vmatprep.subr.mxu0 0.0
  %220 = vmatpush1.msra.mxu0 0.0
  %221 = vmatprep.subr.mxu0 0.0
  %222 = vmatpush1.msra.mxu0 0.0
  %223 = vmatprep.subr.mxu0 0.0
  %224 = vmatpush1.msra.mxu0 0.0
  %225 = vmatprep.subr.mxu0 0.0
  %226 = vmatpush1.msra.mxu0 0.0
  %227 = vmatprep.subr.mxu0 0.0
  %228 = vmatpush1.msra.mxu0 0.0
  %229 = vmatprep.subr.mxu0 0.0
  %230 = vmatpush1.msra.mxu0 0.0
  %231 = vmatprep.subr.mxu0 0.0
  %232 = vmatpush1.msra.mxu0 0.0
  %233 = vmatprep.subr.mxu0 0.0
  %234 = vmatpush1.msra.mxu0 0.0
  %235 = vmatprep.subr.mxu0 0.0
  %236 = vmatpush1.msra.mxu0 0.0
  %237 = vmatprep.subr.mxu0 0.0
  %238 = vmatpush1.msra.mxu0 0.0
  %239 = vmatprep.subr.mxu0 0.0
  %240 = vmatpush1.msra.mxu0 0.0
  %241 = vmatprep.subr.mxu0 0.0
  %242 = vmatpush1.msra.mxu0 0.0
  %243 = vmatprep.subr.mxu0 0.0
  %244 = vmatpush1.msra.mxu0 0.0
  %245 = vmatprep.subr.mxu0 0.0
  %246 = vmatpush1.msra.mxu0 0.0
  %247 = vmatprep.subr.mxu0 0.0
  %248 = vmatpush1.msra.mxu0 0.0
  %249 = vmatprep.subr.mxu0 0.0
  %250 = vmatpush1.msra.mxu0 0.0
  %251 = vmatprep.subr.mxu0 0.0
  %252 = vmatpush1.msra.mxu0 0.0
  %253 = vmatprep.subr.mxu0 0.0
  %254 = vmatpush1.msra.mxu0 0.0
  %255 = vmatprep.subr.mxu0 0.0
  %256 = vmatpush1.msra.mxu0 0.0
  %257 = vmatprep.subr.mxu0 0.0
  %258 = vmatpush1.msra.mxu0 0.0
  %259 = vmatprep.mubr.f32.mxu0 0.0
  %260 = vmatmul.mubr.f32.gmra.mrb[0].mxu0 %v82
  %v261 = vpop.f32.mrb[0].mxu0
  %v262 = vadd.f32 %v73, %v261
  %v263 = vpop.f32.mrb[0].mxu0
  %v264 = vadd.f32 %v77, %v263
  %265 = vmatprep.mubr.f32.mxu0 0.0
  %266 = vmatmul.mubr.f32.gmra.mrb[0].mxu0 %v85
  %v267 = vpop.f32.mrb[0].mxu0
  %v268 = vadd.f32 %v73, %v267
  %v269 = vpop.f32.mrb[0].mxu0
  %v270 = vadd.f32 %v77, %v269
  %271 = vmatprep.mubr.f32.mxu0 0.0
  %272 = vmatmul.mubr.f32.gmra.mrb[0].mxu0 %v88
  %v273 = vpop.f32.mrb[0].mxu0
  %v274 = vadd.f32 %v73, %v273
  %v275 = vpop.f32.mrb[0].mxu0
  %v276 = vadd.f32 %v77, %v275
  %277 = vmatprep.mubr.f32.mxu0 0.0
  %278 = vmatmul.mubr.f32.gmra.mrb[0].mxu0 %v91
  %v279 = vpop.f32.mrb[0].mxu0
  %v280 = vadd.f32 %v73, %v279
  %v281 = vpop.f32.mrb[0].mxu0
  %v282 = vadd.f32 %v77, %v281
  %283 = vmatprep.mubr.f32.mxu0 0.0
  %284 = vmatmul.mubr.f32.gmra.mrb[0].mxu0 %v94
  %v285 = vpop.f32.mrb[0].mxu0
  %v286 = vadd.f32 %v73, %v285
  %v287 = vpop.f32.mrb[0].mxu0
  %v288 = vadd.f32 %v77, %v287
  %289 = vmatprep.mubr.f32.mxu0 0.0
  %290 = vmatmul.mubr.f32.gmra.mrb[0].mxu0 %v97
  %v291 = vpop.f32.mrb[0].mxu0
  %v292 = vadd.f32 %v73, %v291
  %v293 = vpop.f32.mrb[0].mxu0
  %v294 = vadd.f32 %v77, %v293
  %295 = vmatprep.mubr.f32.mxu0 0.0
  %296 = vmatmul.mubr.f32.gmra.mrb[0].mxu0 %v100
  %v297 = vpop.f32.mrb[0].mxu0
  %v298 = vadd.f32 %v73, %v297
  %v299 = vpop.f32.mrb[0].mxu0
  %v300 = vadd.f32 %v77, %v299
  %301 = vmatprep.mubr.f32.mxu0 0.0
  %302 = vmatmul.mubr.f32.gmra.mrb[0].mxu0 %v103
  %v303 = vpop.f32.mrb[0].mxu0
  %v304 = vadd.f32 %v73, %v303
  %v305 = vpop.f32.mrb[0].mxu0
  %v306 = vadd.f32 %v77, %v305
  %307 = vmatprep.mubr.f32.mxu0 0.0
  %308 = vmatmul.mubr.f32.gmra.mrb[0].mxu0 %v106
  %v309 = vpop.f32.mrb[0].mxu0
  %v310 = vadd.f32 %v73, %v309
  %v311 = vpop.f32.mrb[0].mxu0
  %v312 = vadd.f32 %v77, %v311
  %313 = vmatprep.mubr.f32.mxu0 0.0
  %314 = vmatmul.mubr.f32.gmra.mrb[0].mxu0 %v109
  %v315 = vpop.f32.mrb[0].mxu0
  %v316 = vadd.f32 %v73, %v315
  %v317 = vpop.f32.mrb[0].mxu0
  %v318 = vadd.f32 %v77, %v317
  %319 = vmatprep.mubr.f32.mxu0 0.0
  %320 = vmatmul.mubr.f32.gmra.mrb[0].mxu0 %v112
  %v321 = vpop.f32.mrb[0].mxu0
  %v322 = vadd.f32 %v73, %v321
  %v323 = vpop.f32.mrb[0].mxu0
  %v324 = vadd.f32 %v77, %v323
  %325 = vmatprep.mubr.f32.mxu0 0.0
  %326 = vmatmul.mubr.f32.gmra.mrb[0].mxu0 %v115
  %v327 = vpop.f32.mrb[0].mxu0
  %v328 = vadd.f32 %v73, %v327
  %v329 = vpop.f32.mrb[0].mxu0
  %v330 = vadd.f32 %v77, %v329
  %331 = vmatprep.mubr.f32.mxu0 0.0
  %332 = vmatmul.mubr.f32.gmra.mrb[0].mxu0 %v118
  %v333 = vpop.f32.mrb[0].mxu0
  %v334 = vadd.f32 %v73, %v333
  %v335 = vpop.f32.mrb[0].mxu0
  %v336 = vadd.f32 %v77, %v335
  %337 = vmatprep.mubr.f32.mxu0 0.0
  %338 = vmatmul.mubr.f32.gmra.mrb[0].mxu0 %v121
  %v339 = vpop.f32.mrb[0].mxu0
  %v340 = vadd.f32 %v73, %v339
  %v341 = vpop.f32.mrb[0].mxu0
  %v342 = vadd.f32 %v77, %v341
  %343 = vmatprep.mubr.f32.mxu0 0.0
  %344 = vmatmul.mubr.f32.gmra.mrb[0].mxu0 %v124
  %v345 = vpop.f32.mrb[0].mxu0
  %v346 = vadd.f32 %v73, %v345
  %v347 = vpop.f32.mrb[0].mxu0
  %v348 = vadd.f32 %v77, %v347
  %349 = vmatprep.mubr.f32.mxu0 0.0
  %350 = vmatmul.mubr.f32.gmra.mrb[0].mxu0 %v127
  %v351 = vpop.f32.mrb[0].mxu0
  %v352 = vadd.f32 %v73, %v351
  %v353 = vpop.f32.mrb[0].mxu0
  %v354 = vadd.f32 %v77, %v353
  %355 = vmatprep.mubr.f32.mxu0 0.0
  %356 = vmatmul.mubr.f32.gmra.mrb[0].mxu0 %v130
  %v357 = vpop.f32.mrb[0].mxu0
  %v358 = vadd.f32 %v73, %v357
  %v359 = vpop.f32.mrb[0].mxu0
  %v360 = vadd.f32 %v77, %v359
  %361 = vmatprep.mubr.f32.mxu0 0.0
  %362 = vmatmul.mubr.f32.gmra.mrb[0].mxu0 %v133
  %v363 = vpop.f32.mrb[0].mxu0
  %v364 = vadd.f32 %v73, %v363
  %v365 = vpop.f32.mrb[0].mxu0
  %v366 = vadd.f32 %v77, %v365
  %367 = vmatprep.mubr.f32.mxu0 0.0
  %368 = vmatmul.mubr.f32.gmra.mrb[0].mxu0 %v136
  %v369 = vpop.f32.mrb[0].mxu0
  %v370 = vadd.f32 %v73, %v369
  %v371 = vpop.f32.mrb[0].mxu0
  %v372 = vadd.f32 %v77, %v371
  %373 = vmatprep.mubr.f32.mxu0 0.0
  %374 = vmatmul.mubr.f32.gmra.mrb[0].mxu0 %v139
  %v375 = vpop.f32.mrb[0].mxu0
  %v376 = vadd.f32 %v73, %v375
  %v377 = vpop.f32.mrb[0].mxu0
  %v378 = vadd.f32 %v77, %v377
  %379 = vmatprep.mubr.f32.mxu0 0.0
  %380 = vmatmul.mubr.f32.gmra.mrb[0].mxu0 %v142
  %v381 = vpop.f32.mrb[0].mxu0
  %v382 = vadd.f32 %v73, %v381
  %v383 = vpop.f32.mrb[0].mxu0
  %v384 = vadd.f32 %v77, %v383
  %385 = vmatprep.mubr.f32.mxu0 0.0
  %386 = vmatmul.mubr.f32.gmra.mrb[0].mxu0 %v145
  %v387 = vpop.f32.mrb[0].mxu0
  %v388 = vadd.f32 %v73, %v387
  %v389 = vpop.f32.mrb[0].mxu0
  %v390 = vadd.f32 %v77, %v389
  %391 = vmatprep.mubr.f32.mxu0 0.0
  %392 = vmatmul.mubr.f32.gmra.mrb[0].mxu0 %v148
  %v393 = vpop.f32.mrb[0].mxu0
  %v394 = vadd.f32 %v73, %v393
  %v395 = vpop.f32.mrb[0].mxu0
  %v396 = vadd.f32 %v77, %v395
  %397 = vmatprep.mubr.f32.mxu0 0.0
  %398 = vmatmul.mubr.f32.gmra.mrb[0].mxu0 %v151
  %v399 = vpop.f32.mrb[0].mxu0
  %v400 = vadd.f32 %v73, %v399
  %v401 = vpop.f32.mrb[0].mxu0
  %v402 = vadd.f32 %v77, %v401
  %403 = vmatprep.mubr.f32.mxu0 0.0
  %404 = vmatmul.mubr.f32.gmra.mrb[0].mxu0 %v154
  %v405 = vpop.f32.mrb[0].mxu0
  %v406 = vadd.f32 %v73, %v405
  %v407 = vpop.f32.mrb[0].mxu0
  %v408 = vadd.f32 %v77, %v407
  %409 = vmatprep.mubr.f32.mxu0 0.0
  %410 = vmatmul.mubr.f32.gmra.mrb[0].mxu0 %v157
  %v411 = vpop.f32.mrb[0].mxu0
  %v412 = vadd.f32 %v73, %v411
  %v413 = vpop.f32.mrb[0].mxu0
  %v414 = vadd.f32 %v77, %v413
  %415 = vmatprep.mubr.f32.mxu0 0.0
  %416 = vmatmul.mubr.f32.gmra.mrb[0].mxu0 %v160
  %v417 = vpop.f32.mrb[0].mxu0
  %v418 = vadd.f32 %v73, %v417
  %v419 = vpop.f32.mrb[0].mxu0
  %v420 = vadd.f32 %v77, %v419
  %421 = vmatprep.mubr.f32.mxu0 0.0
  %422 = vmatmul.mubr.f32.gmra.mrb[0].mxu0 %v163
  %v423 = vpop.f32.mrb[0].mxu0
  %v424 = vadd.f32 %v73, %v423
  %v425 = vpop.f32.mrb[0].mxu0
  %v426 = vadd.f32 %v77, %v425
  %427 = vmatprep.mubr.f32.mxu0 0.0
  %428 = vmatmul.mubr.f32.gmra.mrb[0].mxu0 %v166
  %v429 = vpop.f32.mrb[0].mxu0
  %v430 = vadd.f32 %v73, %v429
  %v431 = vpop.f32.mrb[0].mxu0
  %v432 = vadd.f32 %v77, %v431
  %433 = vmatprep.mubr.f32.mxu0 0.0
  %434 = vmatmul.mubr.f32.gmra.mrb[0].mxu0 %v169
  %v435 = vpop.f32.mrb[0].mxu0
  %v436 = vadd.f32 %v73, %v435
  %v437 = vpop.f32.mrb[0].mxu0
  %v438 = vadd.f32 %v77, %v437
  %439 = vmatprep.mubr.f32.mxu0 0.0
  %440 = vmatmul.mubr.f32.gmra.mrb[0].mxu0 %v172
  %v441 = vpop.f32.mrb[0].mxu0
  %v442 = vadd.f32 %v73, %v441
  %v443 = vpop.f32.mrb[0].mxu0
  %v444 = vadd.f32 %v77, %v443
  %445 = vmatprep.mubr.f32.mxu0 0.0
  %446 = vmatmul.mubr.f32.gmra.mrb[0].mxu0 %v175
  %v447 = vpop.f32.mrb[0].mxu0
  %v448 = vadd.f32 %v73, %v447
  %v449 = vpop.f32.mrb[0].mxu0
  %v450 = vadd.f32 %v77, %v449
  %451 = vmatprep.mubr.f32.mxu0 0.0
  %452 = vmatmul.mubr.f32.gmra.mrb[0].mxu0 %v178
  %v453 = vpop.f32.mrb[0].mxu0
  %v454 = vadd.f32 %v73, %v453
  %v455 = vpop.f32.mrb[0].mxu0
  %v456 = vadd.f32 %v77, %v455
  %457 = vmatprep.mubr.f32.mxu0 0.0
  %458 = vmatmul.mubr.f32.gmra.mrb[0].mxu0 %v181
  %v459 = vpop.f32.mrb[0].mxu0
  %v460 = vadd.f32 %v73, %v459
  %v461 = vpop.f32.mrb[0].mxu0
  %v462 = vadd.f32 %v77, %v461
  %463 = vmatprep.mubr.f32.mxu0 0.0
  %464 = vmatmul.mubr.f32.gmra.mrb[0].mxu0 %v184
  %v465 = vpop.f32.mrb[0].mxu0
  %v466 = vadd.f32 %v73, %v465
  %v467 = vpop.f32.mrb[0].mxu0
  %v468 = vadd.f32 %v77, %v467
  %469 = vmatprep.mubr.f32.mxu0 0.0
  %470 = vmatmul.mubr.f32.gmra.mrb[0].mxu0 %v187
  %v471 = vpop.f32.mrb[0].mxu0
  %v472 = vadd.f32 %v73, %v471
  %v473 = vpop.f32.mrb[0].mxu0
  %v474 = vadd.f32 %v77, %v473
  %475 = vmatprep.mubr.f32.mxu0 0.0
  %476 = vmatmul.mubr.f32.gmra.mrb[0].mxu0 %v190
  %v477 = vpop.f32.mrb[0].mxu0
  %v478 = vadd.f32 %v73, %v477
  %v479 = vpop.f32.mrb[0].mxu0
  %v480 = vadd.f32 %v77, %v479
  %481 = vmatprep.mubr.f32.mxu0 0.0
  %482 = vmatmul.mubr.f32.gmra.mrb[0].mxu0 %v193
  %v483 = vpop.f32.mrb[0].mxu0
  %v484 = vadd.f32 %v73, %v483
  %v485 = vpop.f32.mrb[0].mxu0
  %v486 = vadd.f32 %v77, %v485
  %487 = vdwg.mxu0
  %v488 = vand.u32 2147483647, %v262
  %vm489 = vcmp.le.f32.partialorder %v488, 0.7853982
  %vm490 = vcmp.lt.s32.totalorder %v262, 0
  %v491 = vand.u32 %v262, 2139095040
  %v492 = vshrl.u32 %v491, 23
  %v493 = vsub.s32 %v492, 127
  %v494 = vand.u32 2147483647, %v262
  %v495 = vand.u32 %v494, 8388607
  %v496 = vor.u32 %v495, 8388608
  %v497 = vsub.s32 0, %v496
  %v498 = vadd.s32 %v493, 1
  %vm499 = vcmp.gt.s32.totalorder %v498, 0
  %v500 = vsel %vm499, %v498, 0
  %v501 = vshrl.u32 %v500, 5
  %v502 = vand.u32 %v500, 31
  %v503 = vsub.s32 32, %v502
  %v504 = vshrl.u32 683565275, %v503
  %v505 = vshll.u32 683565275, %v502
  %v506 = vshrl.u32 2475754826, %v503
  %v507 = vor.u32 %v505, %v506
  %v508 = vshll.u32 2475754826, %v502
  %v509 = vshrl.u32 2131351028, %v503
  %v510 = vor.u32 %v508, %v509
  %v511 = vshll.u32 2131351028, %v502
  %v512 = vshrl.u32 2102212464, %v503
  %v513 = vor.u32 %v511, %v512
  %v514 = vshll.u32 2102212464, %v502
  %v515 = vshrl.u32 920167782, %v503
  %v516 = vor.u32 %v514, %v515
  %v517 = vshll.u32 920167782, %v502
  %v518 = vshrl.u32 1326507024, %v503
  %v519 = vor.u32 %v517, %v518
  %vm520 = vcmp.lt.s32.totalorder %v501, 1
  %vm521 = vcmp.lt.s32.totalorder %v501, 2
  %vm522 = vcmp.lt.s32.totalorder %v501, 3
  %vm523 = vcmp.lt.s32.totalorder %v501, 4
  %v524 = vsel %vm520, %v504, %v507
  %v525 = vsel %vm523, %v513, 2102212464
  %v526 = vsel %vm522, %v510, %v525
  %v527 = vsel %vm521, %v524, %v526
  %v528 = vsel %vm520, %v507, %v510
  %v529 = vsel %vm523, %v516, 920167782
  %v530 = vsel %vm522, %v513, %v529
  %v531 = vsel %vm521, %v528, %v530
  %v532 = vsel %vm520, %v510, %v513
  %v533 = vsel %vm523, %v519, 1326507024
  %v534 = vsel %vm522, %v516, %v533
  %v535 = vsel %vm521, %v532, %v534
  %v536 = vshll.u32 %v496, 8
  %v537 = vmul.u32.u64.compose %v536, %v535
  %v538 = vextract.low.u32 %v537
  %v539 = vextract.high.u32 %v537
  %v540 = vmul.u32.u64.compose %v536, %v531
  %v541 = vextract.low.u32 %v540
  %v542 = vextract.high.u32 %v540
  %v543 = vmul.u32 %v536, %v527
  %v544 = vadd.s32 %v539, %v541
  %vm545 = vc.u32 %v539, %v541
  %v546 = vadd.s32 %v542, 1
  %v547 = vsel %vm545, %v546, %v542
  %v548 = vadd.s32 %v543, %v547
  %v549 = vadd.s32 %v548, 536870912
  %v550 = vshrl.u32 %v549, 30
  %v551 = vshll.u32 %v550, 30
  %v552 = vsub.s32 %v548, %v551
  %vm553 = vcmp.lt.s32.totalorder %v552, 0
  %v554 = vsub.s32 0, %v552
  %v555 = vsel %vm553, %v554, %v552
  %v556 = vclz %v555
  %v557 = vsub.s32 %v556, 2
  %vm558 = vcmp.gt.s32.totalorder 0, %v557
  %v559 = vsel %vm558, 0, %v557
  %v560 = vsub.s32 32, %v559
  %v561 = vshll.u32 %v552, %v559
  %v562 = vshrl.u32 %v544, %v560
  %v563 = vor.u32 %v561, %v562
  %v564 = vsub.s32 4294967266, %v559
  %v565 = vadd.s32 %v564, 127
  %v566 = vshll.u32 %v565, 23
  %v567 = vor.u32 4788187, %v566
  %v568 = vand.u32 2147483647, %v567
  %v570 = vcvt.s32.f32 %v563
  %v571 = vmul.f32 %v570, %v568
  %v572 = vxor.u32 %v571, 2147483648
  %v573 = vsel %vm490, %v572, %v571
  %v574 = vsub.s32 4, %v550
  %v575 = vsel %vm490, %v574, %v550
  %v576 = vsel %vm489, %v262, %v573
  %v577 = vsel %vm489, 0, %v575
  %v578 = vcosq.f32.pop %v576
  %v579 = vsinq.f32.pop %v576
  %vm580 = vweird.f32 %v262
  %v581 = vadd.s32 %v577, 3
  %v582 = vand.u32 %v581, 3
  %vm583 = vcmp.lt.s32.totalorder %v582, 2
  %vm584 = vcmp.eq.s32.totalorder %v582, 0
  %v585 = vxor.u32 %v579, 2147483648
  %v586 = vsel %vm584, %v578, %v585
  %vm587 = vcmp.eq.s32.totalorder %v582, 2
  %v588 = vxor.u32 %v578, 2147483648
  %v589 = vsel %vm587, %v588, %v579
  %v590 = vsel %vm583, %v586, %v589
  %v591 = vsel %vm580, nan, %v590
  %v592 = vand.u32 2147483647, %v264
  %vm593 = vcmp.le.f32.partialorder %v592, 0.7853982
  %vm594 = vcmp.lt.s32.totalorder %v264, 0
  %v595 = vand.u32 %v264, 2139095040
  %v596 = vshrl.u32 %v595, 23
  %v597 = vsub.s32 %v596, 127
  %v598 = vand.u32 2147483647, %v264
  %v599 = vand.u32 %v598, 8388607
  %v600 = vor.u32 %v599, 8388608
  %v601 = vsub.s32 0, %v600
  %v602 = vadd.s32 %v597, 1
  %vm603 = vcmp.gt.s32.totalorder %v602, 0
  %v604 = vsel %vm603, %v602, 0
  %v605 = vshrl.u32 %v604, 5
  %v606 = vand.u32 %v604, 31
  %v607 = vsub.s32 32, %v606
  %v608 = vshrl.u32 683565275, %v607
  %v609 = vshll.u32 683565275, %v606
  %v610 = vshrl.u32 2475754826, %v607
  %v611 = vor.u32 %v609, %v610
  %v612 = vshll.u32 2475754826, %v606
  %v613 = vshrl.u32 2131351028, %v607
  %v614 = vor.u32 %v612, %v613
  %v615 = vshll.u32 2131351028, %v606
  %v616 = vshrl.u32 2102212464, %v607
  %v617 = vor.u32 %v615, %v616
  %v618 = vshll.u32 2102212464, %v606
  %v619 = vshrl.u32 920167782, %v607
  %v620 = vor.u32 %v618, %v619
  %v621 = vshll.u32 920167782, %v606
  %v622 = vshrl.u32 1326507024, %v607
  %v623 = vor.u32 %v621, %v622
  %vm624 = vcmp.lt.s32.totalorder %v605, 1
  %vm625 = vcmp.lt.s32.totalorder %v605, 2
  %vm626 = vcmp.lt.s32.totalorder %v605, 3
  %vm627 = vcmp.lt.s32.totalorder %v605, 4
  %v628 = vsel %vm624, %v608, %v611
  %v629 = vsel %vm627, %v617, 2102212464
  %v630 = vsel %vm626, %v614, %v629
  %v631 = vsel %vm625, %v628, %v630
  %v632 = vsel %vm624, %v611, %v614
  %v633 = vsel %vm627, %v620, 920167782
  %v634 = vsel %vm626, %v617, %v633
  %v635 = vsel %vm625, %v632, %v634
  %v636 = vsel %vm624, %v614, %v617
  %v637 = vsel %vm627, %v623, 1326507024
  %v638 = vsel %vm626, %v620, %v637
  %v639 = vsel %vm625, %v636, %v638
  %v640 = vshll.u32 %v600, 8
  %v641 = vmul.u32.u64.compose %v640, %v639
  %v642 = vextract.low.u32 %v641
  %v643 = vextract.high.u32 %v641
  %v644 = vmul.u32.u64.compose %v640, %v635
  %v645 = vextract.low.u32 %v644
  %v646 = vextract.high.u32 %v644
  %v647 = vmul.u32 %v640, %v631
  %v648 = vadd.s32 %v643, %v645
  %vm649 = vc.u32 %v643, %v645
  %v650 = vadd.s32 %v646, 1
  %v651 = vsel %vm649, %v650, %v646
  %v652 = vadd.s32 %v647, %v651
  %v653 = vadd.s32 %v652, 536870912
  %v654 = vshrl.u32 %v653, 30
  %v655 = vshll.u32 %v654, 30
  %v656 = vsub.s32 %v652, %v655
  %vm657 = vcmp.lt.s32.totalorder %v656, 0
  %v658 = vsub.s32 0, %v656
  %v659 = vsel %vm657, %v658, %v656
  %v660 = vclz %v659
  %v661 = vsub.s32 %v660, 2
  %vm662 = vcmp.gt.s32.totalorder 0, %v661
  %v663 = vsel %vm662, 0, %v661
  %v664 = vsub.s32 32, %v663
  %v665 = vshll.u32 %v656, %v663
  %v666 = vshrl.u32 %v648, %v664
  %v667 = vor.u32 %v665, %v666
  %v668 = vsub.s32 4294967266, %v663
  %v669 = vadd.s32 %v668, 127
  %v670 = vshll.u32 %v669, 23
  %v671 = vor.u32 4788187, %v670
  %v672 = vand.u32 2147483647, %v671
  %v674 = vcvt.s32.f32 %v667
  %v675 = vmul.f32 %v674, %v672
  %v676 = vxor.u32 %v675, 2147483648
  %v677 = vsel %vm594, %v676, %v675
  %v678 = vsub.s32 4, %v654
  %v679 = vsel %vm594, %v678, %v654
  %v680 = vsel %vm593, %v264, %v677
  %v681 = vsel %vm593, 0, %v679
  %v682 = vcosq.f32.pop %v680
  %v683 = vsinq.f32.pop %v680
  %vm684 = vweird.f32 %v264
  %v685 = vadd.s32 %v681, 3
  %v686 = vand.u32 %v685, 3
  %vm687 = vcmp.lt.s32.totalorder %v686, 2
  %vm688 = vcmp.eq.s32.totalorder %v686, 0
  %v689 = vxor.u32 %v683, 2147483648
  %v690 = vsel %vm688, %v682, %v689
  %vm691 = vcmp.eq.s32.totalorder %v686, 2
  %v692 = vxor.u32 %v682, 2147483648
  %v693 = vsel %vm691, %v692, %v683
  %v694 = vsel %vm687, %v690, %v693
  %v695 = vsel %vm684, nan, %v694
  %v696 = vand.u32 2147483647, %v268
  %vm697 = vcmp.le.f32.partialorder %v696, 0.7853982
  %vm698 = vcmp.lt.s32.totalorder %v268, 0
  %v699 = vand.u32 %v268, 2139095040
  %v700 = vshrl.u32 %v699, 23
  %v701 = vsub.s32 %v700, 127
  %v702 = vand.u32 2147483647, %v268
  %v703 = vand.u32 %v702, 8388607
  %v704 = vor.u32 %v703, 8388608
  %v705 = vsub.s32 0, %v704
  %v706 = vadd.s32 %v701, 1
  %vm707 = vcmp.gt.s32.totalorder %v706, 0
  %v708 = vsel %vm707, %v706, 0
  %v709 = vshrl.u32 %v708, 5
  %v710 = vand.u32 %v708, 31
  %v711 = vsub.s32 32, %v710
  %v712 = vshrl.u32 683565275, %v711
  %v713 = vshll.u32 683565275, %v710
  %v714 = vshrl.u32 2475754826, %v711
  %v715 = vor.u32 %v713, %v714
  %v716 = vshll.u32 2475754826, %v710
  %v717 = vshrl.u32 2131351028, %v711
  %v718 = vor.u32 %v716, %v717
  %v719 = vshll.u32 2131351028, %v710
  %v720 = vshrl.u32 2102212464, %v711
  %v721 = vor.u32 %v719, %v720
  %v722 = vshll.u32 2102212464, %v710
  %v723 = vshrl.u32 920167782, %v711
  %v724 = vor.u32 %v722, %v723
  %v725 = vshll.u32 920167782, %v710
  %v726 = vshrl.u32 1326507024, %v711
  %v727 = vor.u32 %v725, %v726
  %vm728 = vcmp.lt.s32.totalorder %v709, 1
  %vm729 = vcmp.lt.s32.totalorder %v709, 2
  %vm730 = vcmp.lt.s32.totalorder %v709, 3
  %vm731 = vcmp.lt.s32.totalorder %v709, 4
  %v732 = vsel %vm728, %v712, %v715
  %v733 = vsel %vm731, %v721, 2102212464
  %v734 = vsel %vm730, %v718, %v733
  %v735 = vsel %vm729, %v732, %v734
  %v736 = vsel %vm728, %v715, %v718
  %v737 = vsel %vm731, %v724, 920167782
  %v738 = vsel %vm730, %v721, %v737
  %v739 = vsel %vm729, %v736, %v738
  %v740 = vsel %vm728, %v718, %v721
  %v741 = vsel %vm731, %v727, 1326507024
  %v742 = vsel %vm730, %v724, %v741
  %v743 = vsel %vm729, %v740, %v742
  %v744 = vshll.u32 %v704, 8
  %v745 = vmul.u32.u64.compose %v744, %v743
  %v746 = vextract.low.u32 %v745
  %v747 = vextract.high.u32 %v745
  %v748 = vmul.u32.u64.compose %v744, %v739
  %v749 = vextract.low.u32 %v748
  %v750 = vextract.high.u32 %v748
  %v751 = vmul.u32 %v744, %v735
  %v752 = vadd.s32 %v747, %v749
  %vm753 = vc.u32 %v747, %v749
  %v754 = vadd.s32 %v750, 1
  %v755 = vsel %vm753, %v754, %v750
  %v756 = vadd.s32 %v751, %v755
  %v757 = vadd.s32 %v756, 536870912
  %v758 = vshrl.u32 %v757, 30
  %v759 = vshll.u32 %v758, 30
  %v760 = vsub.s32 %v756, %v759
  %vm761 = vcmp.lt.s32.totalorder %v760, 0
  %v762 = vsub.s32 0, %v760
  %v763 = vsel %vm761, %v762, %v760
  %v764 = vclz %v763
  %v765 = vsub.s32 %v764, 2
  %vm766 = vcmp.gt.s32.totalorder 0, %v765
  %v767 = vsel %vm766, 0, %v765
  %v768 = vsub.s32 32, %v767
  %v769 = vshll.u32 %v760, %v767
  %v770 = vshrl.u32 %v752, %v768
  %v771 = vor.u32 %v769, %v770
  %v772 = vsub.s32 4294967266, %v767
  %v773 = vadd.s32 %v772, 127
  %v774 = vshll.u32 %v773, 23
  %v775 = vor.u32 4788187, %v774
  %v776 = vand.u32 2147483647, %v775
  %v778 = vcvt.s32.f32 %v771
  %v779 = vmul.f32 %v778, %v776
  %v780 = vxor.u32 %v779, 2147483648
  %v781 = vsel %vm698, %v780, %v779
  %v782 = vsub.s32 4, %v758
  %v783 = vsel %vm698, %v782, %v758
  %v784 = vsel %vm697, %v268, %v781
  %v785 = vsel %vm697, 0, %v783
  %v786 = vcosq.f32.pop %v784
  %v787 = vsinq.f32.pop %v784
  %vm788 = vweird.f32 %v268
  %v789 = vadd.s32 %v785, 3
  %v790 = vand.u32 %v789, 3
  %vm791 = vcmp.lt.s32.totalorder %v790, 2
  %vm792 = vcmp.eq.s32.totalorder %v790, 0
  %v793 = vxor.u32 %v787, 2147483648
  %v794 = vsel %vm792, %v786, %v793
  %vm795 = vcmp.eq.s32.totalorder %v790, 2
  %v796 = vxor.u32 %v786, 2147483648
  %v797 = vsel %vm795, %v796, %v787
  %v798 = vsel %vm791, %v794, %v797
  %v799 = vsel %vm788, nan, %v798
  %v800 = vand.u32 2147483647, %v270
  %vm801 = vcmp.le.f32.partialorder %v800, 0.7853982
  %vm802 = vcmp.lt.s32.totalorder %v270, 0
  %v803 = vand.u32 %v270, 2139095040
  %v804 = vshrl.u32 %v803, 23
  %v805 = vsub.s32 %v804, 127
  %v806 = vand.u32 2147483647, %v270
  %v807 = vand.u32 %v806, 8388607
  %v808 = vor.u32 %v807, 8388608
  %v809 = vsub.s32 0, %v808
  %v810 = vadd.s32 %v805, 1
  %vm811 = vcmp.gt.s32.totalorder %v810, 0
  %v812 = vsel %vm811, %v810, 0
  %v813 = vshrl.u32 %v812, 5
  %v814 = vand.u32 %v812, 31
  %v815 = vsub.s32 32, %v814
  %v816 = vshrl.u32 683565275, %v815
  %v817 = vshll.u32 683565275, %v814
  %v818 = vshrl.u32 2475754826, %v815
  %v819 = vor.u32 %v817, %v818
  %v820 = vshll.u32 2475754826, %v814
  %v821 = vshrl.u32 2131351028, %v815
  %v822 = vor.u32 %v820, %v821
  %v823 = vshll.u32 2131351028, %v814
  %v824 = vshrl.u32 2102212464, %v815
  %v825 = vor.u32 %v823, %v824
  %v826 = vshll.u32 2102212464, %v814
  %v827 = vshrl.u32 920167782, %v815
  %v828 = vor.u32 %v826, %v827
  %v829 = vshll.u32 920167782, %v814
  %v830 = vshrl.u32 1326507024, %v815
  %v831 = vor.u32 %v829, %v830
  %vm832 = vcmp.lt.s32.totalorder %v813, 1
  %vm833 = vcmp.lt.s32.totalorder %v813, 2
  %vm834 = vcmp.lt.s32.totalorder %v813, 3
  %vm835 = vcmp.lt.s32.totalorder %v813, 4
  %v836 = vsel %vm832, %v816, %v819
  %v837 = vsel %vm835, %v825, 2102212464
  %v838 = vsel %vm834, %v822, %v837
  %v839 = vsel %vm833, %v836, %v838
  %v840 = vsel %vm832, %v819, %v822
  %v841 = vsel %vm835, %v828, 920167782
  %v842 = vsel %vm834, %v825, %v841
  %v843 = vsel %vm833, %v840, %v842
  %v844 = vsel %vm832, %v822, %v825
  %v845 = vsel %vm835, %v831, 1326507024
  %v846 = vsel %vm834, %v828, %v845
  %v847 = vsel %vm833, %v844, %v846
  %v848 = vshll.u32 %v808, 8
  %v849 = vmul.u32.u64.compose %v848, %v847
  %v850 = vextract.low.u32 %v849
  %v851 = vextract.high.u32 %v849
  %v852 = vmul.u32.u64.compose %v848, %v843
  %v853 = vextract.low.u32 %v852
  %v854 = vextract.high.u32 %v852
  %v855 = vmul.u32 %v848, %v839
  %v856 = vadd.s32 %v851, %v853
  %vm857 = vc.u32 %v851, %v853
  %v858 = vadd.s32 %v854, 1
  %v859 = vsel %vm857, %v858, %v854
  %v860 = vadd.s32 %v855, %v859
  %v861 = vadd.s32 %v860, 536870912
  %v862 = vshrl.u32 %v861, 30
  %v863 = vshll.u32 %v862, 30
  %v864 = vsub.s32 %v860, %v863
  %vm865 = vcmp.lt.s32.totalorder %v864, 0
  %v866 = vsub.s32 0, %v864
  %v867 = vsel %vm865, %v866, %v864
  %v868 = vclz %v867
  %v869 = vsub.s32 %v868, 2
  %vm870 = vcmp.gt.s32.totalorder 0, %v869
  %v871 = vsel %vm870, 0, %v869
  %v872 = vsub.s32 32, %v871
  %v873 = vshll.u32 %v864, %v871
  %v874 = vshrl.u32 %v856, %v872
  %v875 = vor.u32 %v873, %v874
  %v876 = vsub.s32 4294967266, %v871
  %v877 = vadd.s32 %v876, 127
  %v878 = vshll.u32 %v877, 23
  %v879 = vor.u32 4788187, %v878
  %v880 = vand.u32 2147483647, %v879
  %v882 = vcvt.s32.f32 %v875
  %v883 = vmul.f32 %v882, %v880
  %v884 = vxor.u32 %v883, 2147483648
  %v885 = vsel %vm802, %v884, %v883
  %v886 = vsub.s32 4, %v862
  %v887 = vsel %vm802, %v886, %v862
  %v888 = vsel %vm801, %v270, %v885
  %v889 = vsel %vm801, 0, %v887
  %v890 = vcosq.f32.pop %v888
  %v891 = vsinq.f32.pop %v888
  %vm892 = vweird.f32 %v270
  %v893 = vadd.s32 %v889, 3
  %v894 = vand.u32 %v893, 3
  %vm895 = vcmp.lt.s32.totalorder %v894, 2
  %vm896 = vcmp.eq.s32.totalorder %v894, 0
  %v897 = vxor.u32 %v891, 2147483648
  %v898 = vsel %vm896, %v890, %v897
  %vm899 = vcmp.eq.s32.totalorder %v894, 2
  %v900 = vxor.u32 %v890, 2147483648
  %v901 = vsel %vm899, %v900, %v891
  %v902 = vsel %vm895, %v898, %v901
  %v903 = vsel %vm892, nan, %v902
  %v904 = vand.u32 2147483647, %v274
  %vm905 = vcmp.le.f32.partialorder %v904, 0.7853982
  %vm906 = vcmp.lt.s32.totalorder %v274, 0
  %v907 = vand.u32 %v274, 2139095040
  %v908 = vshrl.u32 %v907, 23
  %v909 = vsub.s32 %v908, 127
  %v910 = vand.u32 2147483647, %v274
  %v911 = vand.u32 %v910, 8388607
  %v912 = vor.u32 %v911, 8388608
  %v913 = vsub.s32 0, %v912
  %v914 = vadd.s32 %v909, 1
  %vm915 = vcmp.gt.s32.totalorder %v914, 0
  %v916 = vsel %vm915, %v914, 0
  %v917 = vshrl.u32 %v916, 5
  %v918 = vand.u32 %v916, 31
  %v919 = vsub.s32 32, %v918
  %v920 = vshrl.u32 683565275, %v919
  %v921 = vshll.u32 683565275, %v918
  %v922 = vshrl.u32 2475754826, %v919
  %v923 = vor.u32 %v921, %v922
  %v924 = vshll.u32 2475754826, %v918
  %v925 = vshrl.u32 2131351028, %v919
  %v926 = vor.u32 %v924, %v925
  %v927 = vshll.u32 2131351028, %v918
  %v928 = vshrl.u32 2102212464, %v919
  %v929 = vor.u32 %v927, %v928
  %v930 = vshll.u32 2102212464, %v918
  %v931 = vshrl.u32 920167782, %v919
  %v932 = vor.u32 %v930, %v931
  %v933 = vshll.u32 920167782, %v918
  %v934 = vshrl.u32 1326507024, %v919
  %v935 = vor.u32 %v933, %v934
  %vm936 = vcmp.lt.s32.totalorder %v917, 1
  %vm937 = vcmp.lt.s32.totalorder %v917, 2
  %vm938 = vcmp.lt.s32.totalorder %v917, 3
  %vm939 = vcmp.lt.s32.totalorder %v917, 4
  %v940 = vsel %vm936, %v920, %v923
  %v941 = vsel %vm939, %v929, 2102212464
  %v942 = vsel %vm938, %v926, %v941
  %v943 = vsel %vm937, %v940, %v942
  %v944 = vsel %vm936, %v923, %v926
  %v945 = vsel %vm939, %v932, 920167782
  %v946 = vsel %vm938, %v929, %v945
  %v947 = vsel %vm937, %v944, %v946
  %v948 = vsel %vm936, %v926, %v929
  %v949 = vsel %vm939, %v935, 1326507024
  %v950 = vsel %vm938, %v932, %v949
  %v951 = vsel %vm937, %v948, %v950
  %v952 = vshll.u32 %v912, 8
  %v953 = vmul.u32.u64.compose %v952, %v951
  %v954 = vextract.low.u32 %v953
  %v955 = vextract.high.u32 %v953
  %v956 = vmul.u32.u64.compose %v952, %v947
  %v957 = vextract.low.u32 %v956
  %v958 = vextract.high.u32 %v956
  %v959 = vmul.u32 %v952, %v943
  %v960 = vadd.s32 %v955, %v957
  %vm961 = vc.u32 %v955, %v957
  %v962 = vadd.s32 %v958, 1
  %v963 = vsel %vm961, %v962, %v958
  %v964 = vadd.s32 %v959, %v963
  %v965 = vadd.s32 %v964, 536870912
  %v966 = vshrl.u32 %v965, 30
  %v967 = vshll.u32 %v966, 30
  %v968 = vsub.s32 %v964, %v967
  %vm969 = vcmp.lt.s32.totalorder %v968, 0
  %v970 = vsub.s32 0, %v968
  %v971 = vsel %vm969, %v970, %v968
  %v972 = vclz %v971
  %v973 = vsub.s32 %v972, 2
  %vm974 = vcmp.gt.s32.totalorder 0, %v973
  %v975 = vsel %vm974, 0, %v973
  %v976 = vsub.s32 32, %v975
  %v977 = vshll.u32 %v968, %v975
  %v978 = vshrl.u32 %v960, %v976
  %v979 = vor.u32 %v977, %v978
  %v980 = vsub.s32 4294967266, %v975
  %v981 = vadd.s32 %v980, 127
  %v982 = vshll.u32 %v981, 23
  %v983 = vor.u32 4788187, %v982
  %v984 = vand.u32 2147483647, %v983
  %v986 = vcvt.s32.f32 %v979
  %v987 = vmul.f32 %v986, %v984
  %v988 = vxor.u32 %v987, 2147483648
  %v989 = vsel %vm906, %v988, %v987
  %v990 = vsub.s32 4, %v966
  %v991 = vsel %vm906, %v990, %v966
  %v992 = vsel %vm905, %v274, %v989
  %v993 = vsel %vm905, 0, %v991
  %v994 = vcosq.f32.pop %v992
  %v995 = vsinq.f32.pop %v992
  %vm996 = vweird.f32 %v274
  %v997 = vadd.s32 %v993, 3
  %v998 = vand.u32 %v997, 3
  %vm999 = vcmp.lt.s32.totalorder %v998, 2
  %vm1000 = vcmp.eq.s32.totalorder %v998, 0
  %v1001 = vxor.u32 %v995, 2147483648
  %v1002 = vsel %vm1000, %v994, %v1001
  %vm1003 = vcmp.eq.s32.totalorder %v998, 2
  %v1004 = vxor.u32 %v994, 2147483648
  %v1005 = vsel %vm1003, %v1004, %v995
  %v1006 = vsel %vm999, %v1002, %v1005
  %v1007 = vsel %vm996, nan, %v1006
  %v1008 = vand.u32 2147483647, %v276
  %vm1009 = vcmp.le.f32.partialorder %v1008, 0.7853982
  %vm1010 = vcmp.lt.s32.totalorder %v276, 0
  %v1011 = vand.u32 %v276, 2139095040
  %v1012 = vshrl.u32 %v1011, 23
  %v1013 = vsub.s32 %v1012, 127
  %v1014 = vand.u32 2147483647, %v276
  %v1015 = vand.u32 %v1014, 8388607
  %v1016 = vor.u32 %v1015, 8388608
  %v1017 = vsub.s32 0, %v1016
  %v1018 = vadd.s32 %v1013, 1
  %vm1019 = vcmp.gt.s32.totalorder %v1018, 0
  %v1020 = vsel %vm1019, %v1018, 0
  %v1021 = vshrl.u32 %v1020, 5
  %v1022 = vand.u32 %v1020, 31
  %v1023 = vsub.s32 32, %v1022
  %v1024 = vshrl.u32 683565275, %v1023
  %v1025 = vshll.u32 683565275, %v1022
  %v1026 = vshrl.u32 2475754826, %v1023
  %v1027 = vor.u32 %v1025, %v1026
  %v1028 = vshll.u32 2475754826, %v1022
  %v1029 = vshrl.u32 2131351028, %v1023
  %v1030 = vor.u32 %v1028, %v1029
  %v1031 = vshll.u32 2131351028, %v1022
  %v1032 = vshrl.u32 2102212464, %v1023
  %v1033 = vor.u32 %v1031, %v1032
  %v1034 = vshll.u32 2102212464, %v1022
  %v1035 = vshrl.u32 920167782, %v1023
  %v1036 = vor.u32 %v1034, %v1035
  %v1037 = vshll.u32 920167782, %v1022
  %v1038 = vshrl.u32 1326507024, %v1023
  %v1039 = vor.u32 %v1037, %v1038
  %vm1040 = vcmp.lt.s32.totalorder %v1021, 1
  %vm1041 = vcmp.lt.s32.totalorder %v1021, 2
  %vm1042 = vcmp.lt.s32.totalorder %v1021, 3
  %vm1043 = vcmp.lt.s32.totalorder %v1021, 4
  %v1044 = vsel %vm1040, %v1024, %v1027
  %v1045 = vsel %vm1043, %v1033, 2102212464
  %v1046 = vsel %vm1042, %v1030, %v1045
  %v1047 = vsel %vm1041, %v1044, %v1046
  %v1048 = vsel %vm1040, %v1027, %v1030
  %v1049 = vsel %vm1043, %v1036, 920167782
  %v1050 = vsel %vm1042, %v1033, %v1049
  %v1051 = vsel %vm1041, %v1048, %v1050
  %v1052 = vsel %vm1040, %v1030, %v1033
  %v1053 = vsel %vm1043, %v1039, 1326507024
  %v1054 = vsel %vm1042, %v1036, %v1053
  %v1055 = vsel %vm1041, %v1052, %v1054
  %v1056 = vshll.u32 %v1016, 8
  %v1057 = vmul.u32.u64.compose %v1056, %v1055
  %v1058 = vextract.low.u32 %v1057
  %v1059 = vextract.high.u32 %v1057
  %v1060 = vmul.u32.u64.compose %v1056, %v1051
  %v1061 = vextract.low.u32 %v1060
  %v1062 = vextract.high.u32 %v1060
  %v1063 = vmul.u32 %v1056, %v1047
  %v1064 = vadd.s32 %v1059, %v1061
  %vm1065 = vc.u32 %v1059, %v1061
  %v1066 = vadd.s32 %v1062, 1
  %v1067 = vsel %vm1065, %v1066, %v1062
  %v1068 = vadd.s32 %v1063, %v1067
  %v1069 = vadd.s32 %v1068, 536870912
  %v1070 = vshrl.u32 %v1069, 30
  %v1071 = vshll.u32 %v1070, 30
  %v1072 = vsub.s32 %v1068, %v1071
  %vm1073 = vcmp.lt.s32.totalorder %v1072, 0
  %v1074 = vsub.s32 0, %v1072
  %v1075 = vsel %vm1073, %v1074, %v1072
  %v1076 = vclz %v1075
  %v1077 = vsub.s32 %v1076, 2
  %vm1078 = vcmp.gt.s32.totalorder 0, %v1077
  %v1079 = vsel %vm1078, 0, %v1077
  %v1080 = vsub.s32 32, %v1079
  %v1081 = vshll.u32 %v1072, %v1079
  %v1082 = vshrl.u32 %v1064, %v1080
  %v1083 = vor.u32 %v1081, %v1082
  %v1084 = vsub.s32 4294967266, %v1079
  %v1085 = vadd.s32 %v1084, 127
  %v1086 = vshll.u32 %v1085, 23
  %v1087 = vor.u32 4788187, %v1086
  %v1088 = vand.u32 2147483647, %v1087
  %v1090 = vcvt.s32.f32 %v1083
  %v1091 = vmul.f32 %v1090, %v1088
  %v1092 = vxor.u32 %v1091, 2147483648
  %v1093 = vsel %vm1010, %v1092, %v1091
  %v1094 = vsub.s32 4, %v1070
  %v1095 = vsel %vm1010, %v1094, %v1070
  %v1096 = vsel %vm1009, %v276, %v1093
  %v1097 = vsel %vm1009, 0, %v1095
  %v1098 = vcosq.f32.pop %v1096
  %v1099 = vsinq.f32.pop %v1096
  %vm1100 = vweird.f32 %v276
  %v1101 = vadd.s32 %v1097, 3
  %v1102 = vand.u32 %v1101, 3
  %vm1103 = vcmp.lt.s32.totalorder %v1102, 2
  %vm1104 = vcmp.eq.s32.totalorder %v1102, 0
  %v1105 = vxor.u32 %v1099, 2147483648
  %v1106 = vsel %vm1104, %v1098, %v1105
  %vm1107 = vcmp.eq.s32.totalorder %v1102, 2
  %v1108 = vxor.u32 %v1098, 2147483648
  %v1109 = vsel %vm1107, %v1108, %v1099
  %v1110 = vsel %vm1103, %v1106, %v1109
  %v1111 = vsel %vm1100, nan, %v1110
  %v1112 = vand.u32 2147483647, %v280
  %vm1113 = vcmp.le.f32.partialorder %v1112, 0.7853982
  %vm1114 = vcmp.lt.s32.totalorder %v280, 0
  %v1115 = vand.u32 %v280, 2139095040
  %v1116 = vshrl.u32 %v1115, 23
  %v1117 = vsub.s32 %v1116, 127
  %v1118 = vand.u32 2147483647, %v280
  %v1119 = vand.u32 %v1118, 8388607
  %v1120 = vor.u32 %v1119, 8388608
  %v1121 = vsub.s32 0, %v1120
  %v1122 = vadd.s32 %v1117, 1
  %vm1123 = vcmp.gt.s32.totalorder %v1122, 0
  %v1124 = vsel %vm1123, %v1122, 0
  %v1125 = vshrl.u32 %v1124, 5
  %v1126 = vand.u32 %v1124, 31
  %v1127 = vsub.s32 32, %v1126
  %v1128 = vshrl.u32 683565275, %v1127
  %v1129 = vshll.u32 683565275, %v1126
  %v1130 = vshrl.u32 2475754826, %v1127
  %v1131 = vor.u32 %v1129, %v1130
  %v1132 = vshll.u32 2475754826, %v1126
  %v1133 = vshrl.u32 2131351028, %v1127
  %v1134 = vor.u32 %v1132, %v1133
  %v1135 = vshll.u32 2131351028, %v1126
  %v1136 = vshrl.u32 2102212464, %v1127
  %v1137 = vor.u32 %v1135, %v1136
  %v1138 = vshll.u32 2102212464, %v1126
  %v1139 = vshrl.u32 920167782, %v1127
  %v1140 = vor.u32 %v1138, %v1139
  %v1141 = vshll.u32 920167782, %v1126
  %v1142 = vshrl.u32 1326507024, %v1127
  %v1143 = vor.u32 %v1141, %v1142
  %vm1144 = vcmp.lt.s32.totalorder %v1125, 1
  %vm1145 = vcmp.lt.s32.totalorder %v1125, 2
  %vm1146 = vcmp.lt.s32.totalorder %v1125, 3
  %vm1147 = vcmp.lt.s32.totalorder %v1125, 4
  %v1148 = vsel %vm1144, %v1128, %v1131
  %v1149 = vsel %vm1147, %v1137, 2102212464
  %v1150 = vsel %vm1146, %v1134, %v1149
  %v1151 = vsel %vm1145, %v1148, %v1150
  %v1152 = vsel %vm1144, %v1131, %v1134
  %v1153 = vsel %vm1147, %v1140, 920167782
  %v1154 = vsel %vm1146, %v1137, %v1153
  %v1155 = vsel %vm1145, %v1152, %v1154
  %v1156 = vsel %vm1144, %v1134, %v1137
  %v1157 = vsel %vm1147, %v1143, 1326507024
  %v1158 = vsel %vm1146, %v1140, %v1157
  %v1159 = vsel %vm1145, %v1156, %v1158
  %v1160 = vshll.u32 %v1120, 8
  %v1161 = vmul.u32.u64.compose %v1160, %v1159
  %v1162 = vextract.low.u32 %v1161
  %v1163 = vextract.high.u32 %v1161
  %v1164 = vmul.u32.u64.compose %v1160, %v1155
  %v1165 = vextract.low.u32 %v1164
  %v1166 = vextract.high.u32 %v1164
  %v1167 = vmul.u32 %v1160, %v1151
  %v1168 = vadd.s32 %v1163, %v1165
  %vm1169 = vc.u32 %v1163, %v1165
  %v1170 = vadd.s32 %v1166, 1
  %v1171 = vsel %vm1169, %v1170, %v1166
  %v1172 = vadd.s32 %v1167, %v1171
  %v1173 = vadd.s32 %v1172, 536870912
  %v1174 = vshrl.u32 %v1173, 30
  %v1175 = vshll.u32 %v1174, 30
  %v1176 = vsub.s32 %v1172, %v1175
  %vm1177 = vcmp.lt.s32.totalorder %v1176, 0
  %v1178 = vsub.s32 0, %v1176
  %v1179 = vsel %vm1177, %v1178, %v1176
  %v1180 = vclz %v1179
  %v1181 = vsub.s32 %v1180, 2
  %vm1182 = vcmp.gt.s32.totalorder 0, %v1181
  %v1183 = vsel %vm1182, 0, %v1181
  %v1184 = vsub.s32 32, %v1183
  %v1185 = vshll.u32 %v1176, %v1183
  %v1186 = vshrl.u32 %v1168, %v1184
  %v1187 = vor.u32 %v1185, %v1186
  %v1188 = vsub.s32 4294967266, %v1183
  %v1189 = vadd.s32 %v1188, 127
  %v1190 = vshll.u32 %v1189, 23
  %v1191 = vor.u32 4788187, %v1190
  %v1192 = vand.u32 2147483647, %v1191
  %v1194 = vcvt.s32.f32 %v1187
  %v1195 = vmul.f32 %v1194, %v1192
  %v1196 = vxor.u32 %v1195, 2147483648
  %v1197 = vsel %vm1114, %v1196, %v1195
  %v1198 = vsub.s32 4, %v1174
  %v1199 = vsel %vm1114, %v1198, %v1174
  %v1200 = vsel %vm1113, %v280, %v1197
  %v1201 = vsel %vm1113, 0, %v1199
  %v1202 = vcosq.f32.pop %v1200
  %v1203 = vsinq.f32.pop %v1200
  %vm1204 = vweird.f32 %v280
  %v1205 = vadd.s32 %v1201, 3
  %v1206 = vand.u32 %v1205, 3
  %vm1207 = vcmp.lt.s32.totalorder %v1206, 2
  %vm1208 = vcmp.eq.s32.totalorder %v1206, 0
  %v1209 = vxor.u32 %v1203, 2147483648
  %v1210 = vsel %vm1208, %v1202, %v1209
  %vm1211 = vcmp.eq.s32.totalorder %v1206, 2
  %v1212 = vxor.u32 %v1202, 2147483648
  %v1213 = vsel %vm1211, %v1212, %v1203
  %v1214 = vsel %vm1207, %v1210, %v1213
  %v1215 = vsel %vm1204, nan, %v1214
  %v1216 = vand.u32 2147483647, %v282
  %vm1217 = vcmp.le.f32.partialorder %v1216, 0.7853982
  %vm1218 = vcmp.lt.s32.totalorder %v282, 0
  %v1219 = vand.u32 %v282, 2139095040
  %v1220 = vshrl.u32 %v1219, 23
  %v1221 = vsub.s32 %v1220, 127
  %v1222 = vand.u32 2147483647, %v282
  %v1223 = vand.u32 %v1222, 8388607
  %v1224 = vor.u32 %v1223, 8388608
  %v1225 = vsub.s32 0, %v1224
  %v1226 = vadd.s32 %v1221, 1
  %vm1227 = vcmp.gt.s32.totalorder %v1226, 0
  %v1228 = vsel %vm1227, %v1226, 0
  %v1229 = vshrl.u32 %v1228, 5
  %v1230 = vand.u32 %v1228, 31
  %v1231 = vsub.s32 32, %v1230
  %v1232 = vshrl.u32 683565275, %v1231
  %v1233 = vshll.u32 683565275, %v1230
  %v1234 = vshrl.u32 2475754826, %v1231
  %v1235 = vor.u32 %v1233, %v1234
  %v1236 = vshll.u32 2475754826, %v1230
  %v1237 = vshrl.u32 2131351028, %v1231
  %v1238 = vor.u32 %v1236, %v1237
  %v1239 = vshll.u32 2131351028, %v1230
  %v1240 = vshrl.u32 2102212464, %v1231
  %v1241 = vor.u32 %v1239, %v1240
  %v1242 = vshll.u32 2102212464, %v1230
  %v1243 = vshrl.u32 920167782, %v1231
  %v1244 = vor.u32 %v1242, %v1243
  %v1245 = vshll.u32 920167782, %v1230
  %v1246 = vshrl.u32 1326507024, %v1231
  %v1247 = vor.u32 %v1245, %v1246
  %vm1248 = vcmp.lt.s32.totalorder %v1229, 1
  %vm1249 = vcmp.lt.s32.totalorder %v1229, 2
  %vm1250 = vcmp.lt.s32.totalorder %v1229, 3
  %vm1251 = vcmp.lt.s32.totalorder %v1229, 4
  %v1252 = vsel %vm1248, %v1232, %v1235
  %v1253 = vsel %vm1251, %v1241, 2102212464
  %v1254 = vsel %vm1250, %v1238, %v1253
  %v1255 = vsel %vm1249, %v1252, %v1254
  %v1256 = vsel %vm1248, %v1235, %v1238
  %v1257 = vsel %vm1251, %v1244, 920167782
  %v1258 = vsel %vm1250, %v1241, %v1257
  %v1259 = vsel %vm1249, %v1256, %v1258
  %v1260 = vsel %vm1248, %v1238, %v1241
  %v1261 = vsel %vm1251, %v1247, 1326507024
  %v1262 = vsel %vm1250, %v1244, %v1261
  %v1263 = vsel %vm1249, %v1260, %v1262
  %v1264 = vshll.u32 %v1224, 8
  %v1265 = vmul.u32.u64.compose %v1264, %v1263
  %v1266 = vextract.low.u32 %v1265
  %v1267 = vextract.high.u32 %v1265
  %v1268 = vmul.u32.u64.compose %v1264, %v1259
  %v1269 = vextract.low.u32 %v1268
  %v1270 = vextract.high.u32 %v1268
  %v1271 = vmul.u32 %v1264, %v1255
  %v1272 = vadd.s32 %v1267, %v1269
  %vm1273 = vc.u32 %v1267, %v1269
  %v1274 = vadd.s32 %v1270, 1
  %v1275 = vsel %vm1273, %v1274, %v1270
  %v1276 = vadd.s32 %v1271, %v1275
  %v1277 = vadd.s32 %v1276, 536870912
  %v1278 = vshrl.u32 %v1277, 30
  %v1279 = vshll.u32 %v1278, 30
  %v1280 = vsub.s32 %v1276, %v1279
  %vm1281 = vcmp.lt.s32.totalorder %v1280, 0
  %v1282 = vsub.s32 0, %v1280
  %v1283 = vsel %vm1281, %v1282, %v1280
  %v1284 = vclz %v1283
  %v1285 = vsub.s32 %v1284, 2
  %vm1286 = vcmp.gt.s32.totalorder 0, %v1285
  %v1287 = vsel %vm1286, 0, %v1285
  %v1288 = vsub.s32 32, %v1287
  %v1289 = vshll.u32 %v1280, %v1287
  %v1290 = vshrl.u32 %v1272, %v1288
  %v1291 = vor.u32 %v1289, %v1290
  %v1292 = vsub.s32 4294967266, %v1287
  %v1293 = vadd.s32 %v1292, 127
  %v1294 = vshll.u32 %v1293, 23
  %v1295 = vor.u32 4788187, %v1294
  %v1296 = vand.u32 2147483647, %v1295
  %v1298 = vcvt.s32.f32 %v1291
  %v1299 = vmul.f32 %v1298, %v1296
  %v1300 = vxor.u32 %v1299, 2147483648
  %v1301 = vsel %vm1218, %v1300, %v1299
  %v1302 = vsub.s32 4, %v1278
  %v1303 = vsel %vm1218, %v1302, %v1278
  %v1304 = vsel %vm1217, %v282, %v1301
  %v1305 = vsel %vm1217, 0, %v1303
  %v1306 = vcosq.f32.pop %v1304
  %v1307 = vsinq.f32.pop %v1304
  %vm1308 = vweird.f32 %v282
  %v1309 = vadd.s32 %v1305, 3
  %v1310 = vand.u32 %v1309, 3
  %vm1311 = vcmp.lt.s32.totalorder %v1310, 2
  %vm1312 = vcmp.eq.s32.totalorder %v1310, 0
  %v1313 = vxor.u32 %v1307, 2147483648
  %v1314 = vsel %vm1312, %v1306, %v1313
  %vm1315 = vcmp.eq.s32.totalorder %v1310, 2
  %v1316 = vxor.u32 %v1306, 2147483648
  %v1317 = vsel %vm1315, %v1316, %v1307
  %v1318 = vsel %vm1311, %v1314, %v1317
  %v1319 = vsel %vm1308, nan, %v1318
  %v1320 = vand.u32 2147483647, %v286
  %vm1321 = vcmp.le.f32.partialorder %v1320, 0.7853982
  %vm1322 = vcmp.lt.s32.totalorder %v286, 0
  %v1323 = vand.u32 %v286, 2139095040
  %v1324 = vshrl.u32 %v1323, 23
  %v1325 = vsub.s32 %v1324, 127
  %v1326 = vand.u32 2147483647, %v286
  %v1327 = vand.u32 %v1326, 8388607
  %v1328 = vor.u32 %v1327, 8388608
  %v1329 = vsub.s32 0, %v1328
  %v1330 = vadd.s32 %v1325, 1
  %vm1331 = vcmp.gt.s32.totalorder %v1330, 0
  %v1332 = vsel %vm1331, %v1330, 0
  %v1333 = vshrl.u32 %v1332, 5
  %v1334 = vand.u32 %v1332, 31
  %v1335 = vsub.s32 32, %v1334
  %v1336 = vshrl.u32 683565275, %v1335
  %v1337 = vshll.u32 683565275, %v1334
  %v1338 = vshrl.u32 2475754826, %v1335
  %v1339 = vor.u32 %v1337, %v1338
  %v1340 = vshll.u32 2475754826, %v1334
  %v1341 = vshrl.u32 2131351028, %v1335
  %v1342 = vor.u32 %v1340, %v1341
  %v1343 = vshll.u32 2131351028, %v1334
  %v1344 = vshrl.u32 2102212464, %v1335
  %v1345 = vor.u32 %v1343, %v1344
  %v1346 = vshll.u32 2102212464, %v1334
  %v1347 = vshrl.u32 920167782, %v1335
  %v1348 = vor.u32 %v1346, %v1347
  %v1349 = vshll.u32 920167782, %v1334
  %v1350 = vshrl.u32 1326507024, %v1335
  %v1351 = vor.u32 %v1349, %v1350
  %vm1352 = vcmp.lt.s32.totalorder %v1333, 1
  %vm1353 = vcmp.lt.s32.totalorder %v1333, 2
  %vm1354 = vcmp.lt.s32.totalorder %v1333, 3
  %vm1355 = vcmp.lt.s32.totalorder %v1333, 4
  %v1356 = vsel %vm1352, %v1336, %v1339
  %v1357 = vsel %vm1355, %v1345, 2102212464
  %v1358 = vsel %vm1354, %v1342, %v1357
  %v1359 = vsel %vm1353, %v1356, %v1358
  %v1360 = vsel %vm1352, %v1339, %v1342
  %v1361 = vsel %vm1355, %v1348, 920167782
  %v1362 = vsel %vm1354, %v1345, %v1361
  %v1363 = vsel %vm1353, %v1360, %v1362
  %v1364 = vsel %vm1352, %v1342, %v1345
  %v1365 = vsel %vm1355, %v1351, 1326507024
  %v1366 = vsel %vm1354, %v1348, %v1365
  %v1367 = vsel %vm1353, %v1364, %v1366
  %v1368 = vshll.u32 %v1328, 8
  %v1369 = vmul.u32.u64.compose %v1368, %v1367
  %v1370 = vextract.low.u32 %v1369
  %v1371 = vextract.high.u32 %v1369
  %v1372 = vmul.u32.u64.compose %v1368, %v1363
  %v1373 = vextract.low.u32 %v1372
  %v1374 = vextract.high.u32 %v1372
  %v1375 = vmul.u32 %v1368, %v1359
  %v1376 = vadd.s32 %v1371, %v1373
  %vm1377 = vc.u32 %v1371, %v1373
  %v1378 = vadd.s32 %v1374, 1
  %v1379 = vsel %vm1377, %v1378, %v1374
  %v1380 = vadd.s32 %v1375, %v1379
  %v1381 = vadd.s32 %v1380, 536870912
  %v1382 = vshrl.u32 %v1381, 30
  %v1383 = vshll.u32 %v1382, 30
  %v1384 = vsub.s32 %v1380, %v1383
  %vm1385 = vcmp.lt.s32.totalorder %v1384, 0
  %v1386 = vsub.s32 0, %v1384
  %v1387 = vsel %vm1385, %v1386, %v1384
  %v1388 = vclz %v1387
  %v1389 = vsub.s32 %v1388, 2
  %vm1390 = vcmp.gt.s32.totalorder 0, %v1389
  %v1391 = vsel %vm1390, 0, %v1389
  %v1392 = vsub.s32 32, %v1391
  %v1393 = vshll.u32 %v1384, %v1391
  %v1394 = vshrl.u32 %v1376, %v1392
  %v1395 = vor.u32 %v1393, %v1394
  %v1396 = vsub.s32 4294967266, %v1391
  %v1397 = vadd.s32 %v1396, 127
  %v1398 = vshll.u32 %v1397, 23
  %v1399 = vor.u32 4788187, %v1398
  %v1400 = vand.u32 2147483647, %v1399
  %v1402 = vcvt.s32.f32 %v1395
  %v1403 = vmul.f32 %v1402, %v1400
  %v1404 = vxor.u32 %v1403, 2147483648
  %v1405 = vsel %vm1322, %v1404, %v1403
  %v1406 = vsub.s32 4, %v1382
  %v1407 = vsel %vm1322, %v1406, %v1382
  %v1408 = vsel %vm1321, %v286, %v1405
  %v1409 = vsel %vm1321, 0, %v1407
  %v1410 = vcosq.f32.pop %v1408
  %v1411 = vsinq.f32.pop %v1408
  %vm1412 = vweird.f32 %v286
  %v1413 = vadd.s32 %v1409, 3
  %v1414 = vand.u32 %v1413, 3
  %vm1415 = vcmp.lt.s32.totalorder %v1414, 2
  %vm1416 = vcmp.eq.s32.totalorder %v1414, 0
  %v1417 = vxor.u32 %v1411, 2147483648
  %v1418 = vsel %vm1416, %v1410, %v1417
  %vm1419 = vcmp.eq.s32.totalorder %v1414, 2
  %v1420 = vxor.u32 %v1410, 2147483648
  %v1421 = vsel %vm1419, %v1420, %v1411
  %v1422 = vsel %vm1415, %v1418, %v1421
  %v1423 = vsel %vm1412, nan, %v1422
  %v1424 = vand.u32 2147483647, %v288
  %vm1425 = vcmp.le.f32.partialorder %v1424, 0.7853982
  %vm1426 = vcmp.lt.s32.totalorder %v288, 0
  %v1427 = vand.u32 %v288, 2139095040
  %v1428 = vshrl.u32 %v1427, 23
  %v1429 = vsub.s32 %v1428, 127
  %v1430 = vand.u32 2147483647, %v288
  %v1431 = vand.u32 %v1430, 8388607
  %v1432 = vor.u32 %v1431, 8388608
  %v1433 = vsub.s32 0, %v1432
  %v1434 = vadd.s32 %v1429, 1
  %vm1435 = vcmp.gt.s32.totalorder %v1434, 0
  %v1436 = vsel %vm1435, %v1434, 0
  %v1437 = vshrl.u32 %v1436, 5
  %v1438 = vand.u32 %v1436, 31
  %v1439 = vsub.s32 32, %v1438
  %v1440 = vshrl.u32 683565275, %v1439
  %v1441 = vshll.u32 683565275, %v1438
  %v1442 = vshrl.u32 2475754826, %v1439
  %v1443 = vor.u32 %v1441, %v1442
  %v1444 = vshll.u32 2475754826, %v1438
  %v1445 = vshrl.u32 2131351028, %v1439
  %v1446 = vor.u32 %v1444, %v1445
  %v1447 = vshll.u32 2131351028, %v1438
  %v1448 = vshrl.u32 2102212464, %v1439
  %v1449 = vor.u32 %v1447, %v1448
  %v1450 = vshll.u32 2102212464, %v1438
  %v1451 = vshrl.u32 920167782, %v1439
  %v1452 = vor.u32 %v1450, %v1451
  %v1453 = vshll.u32 920167782, %v1438
  %v1454 = vshrl.u32 1326507024, %v1439
  %v1455 = vor.u32 %v1453, %v1454
  %vm1456 = vcmp.lt.s32.totalorder %v1437, 1
  %vm1457 = vcmp.lt.s32.totalorder %v1437, 2
  %vm1458 = vcmp.lt.s32.totalorder %v1437, 3
  %vm1459 = vcmp.lt.s32.totalorder %v1437, 4
  %v1460 = vsel %vm1456, %v1440, %v1443
  %v1461 = vsel %vm1459, %v1449, 2102212464
  %v1462 = vsel %vm1458, %v1446, %v1461
  %v1463 = vsel %vm1457, %v1460, %v1462
  %v1464 = vsel %vm1456, %v1443, %v1446
  %v1465 = vsel %vm1459, %v1452, 920167782
  %v1466 = vsel %vm1458, %v1449, %v1465
  %v1467 = vsel %vm1457, %v1464, %v1466
  %v1468 = vsel %vm1456, %v1446, %v1449
  %v1469 = vsel %vm1459, %v1455, 1326507024
  %v1470 = vsel %vm1458, %v1452, %v1469
  %v1471 = vsel %vm1457, %v1468, %v1470
  %v1472 = vshll.u32 %v1432, 8
  %v1473 = vmul.u32.u64.compose %v1472, %v1471
  %v1474 = vextract.low.u32 %v1473
  %v1475 = vextract.high.u32 %v1473
  %v1476 = vmul.u32.u64.compose %v1472, %v1467
  %v1477 = vextract.low.u32 %v1476
  %v1478 = vextract.high.u32 %v1476
  %v1479 = vmul.u32 %v1472, %v1463
  %v1480 = vadd.s32 %v1475, %v1477
  %vm1481 = vc.u32 %v1475, %v1477
  %v1482 = vadd.s32 %v1478, 1
  %v1483 = vsel %vm1481, %v1482, %v1478
  %v1484 = vadd.s32 %v1479, %v1483
  %v1485 = vadd.s32 %v1484, 536870912
  %v1486 = vshrl.u32 %v1485, 30
  %v1487 = vshll.u32 %v1486, 30
  %v1488 = vsub.s32 %v1484, %v1487
  %vm1489 = vcmp.lt.s32.totalorder %v1488, 0
  %v1490 = vsub.s32 0, %v1488
  %v1491 = vsel %vm1489, %v1490, %v1488
  %v1492 = vclz %v1491
  %v1493 = vsub.s32 %v1492, 2
  %vm1494 = vcmp.gt.s32.totalorder 0, %v1493
  %v1495 = vsel %vm1494, 0, %v1493
  %v1496 = vsub.s32 32, %v1495
  %v1497 = vshll.u32 %v1488, %v1495
  %v1498 = vshrl.u32 %v1480, %v1496
  %v1499 = vor.u32 %v1497, %v1498
  %v1500 = vsub.s32 4294967266, %v1495
  %v1501 = vadd.s32 %v1500, 127
  %v1502 = vshll.u32 %v1501, 23
  %v1503 = vor.u32 4788187, %v1502
  %v1504 = vand.u32 2147483647, %v1503
  %v1506 = vcvt.s32.f32 %v1499
  %v1507 = vmul.f32 %v1506, %v1504
  %v1508 = vxor.u32 %v1507, 2147483648
  %v1509 = vsel %vm1426, %v1508, %v1507
  %v1510 = vsub.s32 4, %v1486
  %v1511 = vsel %vm1426, %v1510, %v1486
  %v1512 = vsel %vm1425, %v288, %v1509
  %v1513 = vsel %vm1425, 0, %v1511
  %v1514 = vcosq.f32.pop %v1512
  %v1515 = vsinq.f32.pop %v1512
  %vm1516 = vweird.f32 %v288
  %v1517 = vadd.s32 %v1513, 3
  %v1518 = vand.u32 %v1517, 3
  %vm1519 = vcmp.lt.s32.totalorder %v1518, 2
  %vm1520 = vcmp.eq.s32.totalorder %v1518, 0
  %v1521 = vxor.u32 %v1515, 2147483648
  %v1522 = vsel %vm1520, %v1514, %v1521
  %vm1523 = vcmp.eq.s32.totalorder %v1518, 2
  %v1524 = vxor.u32 %v1514, 2147483648
  %v1525 = vsel %vm1523, %v1524, %v1515
  %v1526 = vsel %vm1519, %v1522, %v1525
  %v1527 = vsel %vm1516, nan, %v1526
  %v1528 = vand.u32 2147483647, %v292
  %vm1529 = vcmp.le.f32.partialorder %v1528, 0.7853982
  %vm1530 = vcmp.lt.s32.totalorder %v292, 0
  %v1531 = vand.u32 %v292, 2139095040
  %v1532 = vshrl.u32 %v1531, 23
  %v1533 = vsub.s32 %v1532, 127
  %v1534 = vand.u32 2147483647, %v292
  %v1535 = vand.u32 %v1534, 8388607
  %v1536 = vor.u32 %v1535, 8388608
  %v1537 = vsub.s32 0, %v1536
  %v1538 = vadd.s32 %v1533, 1
  %vm1539 = vcmp.gt.s32.totalorder %v1538, 0
  %v1540 = vsel %vm1539, %v1538, 0
  %v1541 = vshrl.u32 %v1540, 5
  %v1542 = vand.u32 %v1540, 31
  %v1543 = vsub.s32 32, %v1542
  %v1544 = vshrl.u32 683565275, %v1543
  %v1545 = vshll.u32 683565275, %v1542
  %v1546 = vshrl.u32 2475754826, %v1543
  %v1547 = vor.u32 %v1545, %v1546
  %v1548 = vshll.u32 2475754826, %v1542
  %v1549 = vshrl.u32 2131351028, %v1543
  %v1550 = vor.u32 %v1548, %v1549
  %v1551 = vshll.u32 2131351028, %v1542
  %v1552 = vshrl.u32 2102212464, %v1543
  %v1553 = vor.u32 %v1551, %v1552
  %v1554 = vshll.u32 2102212464, %v1542
  %v1555 = vshrl.u32 920167782, %v1543
  %v1556 = vor.u32 %v1554, %v1555
  %v1557 = vshll.u32 920167782, %v1542
  %v1558 = vshrl.u32 1326507024, %v1543
  %v1559 = vor.u32 %v1557, %v1558
  %vm1560 = vcmp.lt.s32.totalorder %v1541, 1
  %vm1561 = vcmp.lt.s32.totalorder %v1541, 2
  %vm1562 = vcmp.lt.s32.totalorder %v1541, 3
  %vm1563 = vcmp.lt.s32.totalorder %v1541, 4
  %v1564 = vsel %vm1560, %v1544, %v1547
  %v1565 = vsel %vm1563, %v1553, 2102212464
  %v1566 = vsel %vm1562, %v1550, %v1565
  %v1567 = vsel %vm1561, %v1564, %v1566
  %v1568 = vsel %vm1560, %v1547, %v1550
  %v1569 = vsel %vm1563, %v1556, 920167782
  %v1570 = vsel %vm1562, %v1553, %v1569
  %v1571 = vsel %vm1561, %v1568, %v1570
  %v1572 = vsel %vm1560, %v1550, %v1553
  %v1573 = vsel %vm1563, %v1559, 1326507024
  %v1574 = vsel %vm1562, %v1556, %v1573
  %v1575 = vsel %vm1561, %v1572, %v1574
  %v1576 = vshll.u32 %v1536, 8
  %v1577 = vmul.u32.u64.compose %v1576, %v1575
  %v1578 = vextract.low.u32 %v1577
  %v1579 = vextract.high.u32 %v1577
  %v1580 = vmul.u32.u64.compose %v1576, %v1571
  %v1581 = vextract.low.u32 %v1580
  %v1582 = vextract.high.u32 %v1580
  %v1583 = vmul.u32 %v1576, %v1567
  %v1584 = vadd.s32 %v1579, %v1581
  %vm1585 = vc.u32 %v1579, %v1581
  %v1586 = vadd.s32 %v1582, 1
  %v1587 = vsel %vm1585, %v1586, %v1582
  %v1588 = vadd.s32 %v1583, %v1587
  %v1589 = vadd.s32 %v1588, 536870912
  %v1590 = vshrl.u32 %v1589, 30
  %v1591 = vshll.u32 %v1590, 30
  %v1592 = vsub.s32 %v1588, %v1591
  %vm1593 = vcmp.lt.s32.totalorder %v1592, 0
  %v1594 = vsub.s32 0, %v1592
  %v1595 = vsel %vm1593, %v1594, %v1592
  %v1596 = vclz %v1595
  %v1597 = vsub.s32 %v1596, 2
  %vm1598 = vcmp.gt.s32.totalorder 0, %v1597
  %v1599 = vsel %vm1598, 0, %v1597
  %v1600 = vsub.s32 32, %v1599
  %v1601 = vshll.u32 %v1592, %v1599
  %v1602 = vshrl.u32 %v1584, %v1600
  %v1603 = vor.u32 %v1601, %v1602
  %v1604 = vsub.s32 4294967266, %v1599
  %v1605 = vadd.s32 %v1604, 127
  %v1606 = vshll.u32 %v1605, 23
  %v1607 = vor.u32 4788187, %v1606
  %v1608 = vand.u32 2147483647, %v1607
  %v1610 = vcvt.s32.f32 %v1603
  %v1611 = vmul.f32 %v1610, %v1608
  %v1612 = vxor.u32 %v1611, 2147483648
  %v1613 = vsel %vm1530, %v1612, %v1611
  %v1614 = vsub.s32 4, %v1590
  %v1615 = vsel %vm1530, %v1614, %v1590
  %v1616 = vsel %vm1529, %v292, %v1613
  %v1617 = vsel %vm1529, 0, %v1615
  %v1618 = vcosq.f32.pop %v1616
  %v1619 = vsinq.f32.pop %v1616
  %vm1620 = vweird.f32 %v292
  %v1621 = vadd.s32 %v1617, 3
  %v1622 = vand.u32 %v1621, 3
  %vm1623 = vcmp.lt.s32.totalorder %v1622, 2
  %vm1624 = vcmp.eq.s32.totalorder %v1622, 0
  %v1625 = vxor.u32 %v1619, 2147483648
  %v1626 = vsel %vm1624, %v1618, %v1625
  %vm1627 = vcmp.eq.s32.totalorder %v1622, 2
  %v1628 = vxor.u32 %v1618, 2147483648
  %v1629 = vsel %vm1627, %v1628, %v1619
  %v1630 = vsel %vm1623, %v1626, %v1629
  %v1631 = vsel %vm1620, nan, %v1630
  %v1632 = vand.u32 2147483647, %v294
  %vm1633 = vcmp.le.f32.partialorder %v1632, 0.7853982
  %vm1634 = vcmp.lt.s32.totalorder %v294, 0
  %v1635 = vand.u32 %v294, 2139095040
  %v1636 = vshrl.u32 %v1635, 23
  %v1637 = vsub.s32 %v1636, 127
  %v1638 = vand.u32 2147483647, %v294
  %v1639 = vand.u32 %v1638, 8388607
  %v1640 = vor.u32 %v1639, 8388608
  %v1641 = vsub.s32 0, %v1640
  %v1642 = vadd.s32 %v1637, 1
  %vm1643 = vcmp.gt.s32.totalorder %v1642, 0
  %v1644 = vsel %vm1643, %v1642, 0
  %v1645 = vshrl.u32 %v1644, 5
  %v1646 = vand.u32 %v1644, 31
  %v1647 = vsub.s32 32, %v1646
  %v1648 = vshrl.u32 683565275, %v1647
  %v1649 = vshll.u32 683565275, %v1646
  %v1650 = vshrl.u32 2475754826, %v1647
  %v1651 = vor.u32 %v1649, %v1650
  %v1652 = vshll.u32 2475754826, %v1646
  %v1653 = vshrl.u32 2131351028, %v1647
  %v1654 = vor.u32 %v1652, %v1653
  %v1655 = vshll.u32 2131351028, %v1646
  %v1656 = vshrl.u32 2102212464, %v1647
  %v1657 = vor.u32 %v1655, %v1656
  %v1658 = vshll.u32 2102212464, %v1646
  %v1659 = vshrl.u32 920167782, %v1647
  %v1660 = vor.u32 %v1658, %v1659
  %v1661 = vshll.u32 920167782, %v1646
  %v1662 = vshrl.u32 1326507024, %v1647
  %v1663 = vor.u32 %v1661, %v1662
  %vm1664 = vcmp.lt.s32.totalorder %v1645, 1
  %vm1665 = vcmp.lt.s32.totalorder %v1645, 2
  %vm1666 = vcmp.lt.s32.totalorder %v1645, 3
  %vm1667 = vcmp.lt.s32.totalorder %v1645, 4
  %v1668 = vsel %vm1664, %v1648, %v1651
  %v1669 = vsel %vm1667, %v1657, 2102212464
  %v1670 = vsel %vm1666, %v1654, %v1669
  %v1671 = vsel %vm1665, %v1668, %v1670
  %v1672 = vsel %vm1664, %v1651, %v1654
  %v1673 = vsel %vm1667, %v1660, 920167782
  %v1674 = vsel %vm1666, %v1657, %v1673
  %v1675 = vsel %vm1665, %v1672, %v1674
  %v1676 = vsel %vm1664, %v1654, %v1657
  %v1677 = vsel %vm1667, %v1663, 1326507024
  %v1678 = vsel %vm1666, %v1660, %v1677
  %v1679 = vsel %vm1665, %v1676, %v1678
  %v1680 = vshll.u32 %v1640, 8
  %v1681 = vmul.u32.u64.compose %v1680, %v1679
  %v1682 = vextract.low.u32 %v1681
  %v1683 = vextract.high.u32 %v1681
  %v1684 = vmul.u32.u64.compose %v1680, %v1675
  %v1685 = vextract.low.u32 %v1684
  %v1686 = vextract.high.u32 %v1684
  %v1687 = vmul.u32 %v1680, %v1671
  %v1688 = vadd.s32 %v1683, %v1685
  %vm1689 = vc.u32 %v1683, %v1685
  %v1690 = vadd.s32 %v1686, 1
  %v1691 = vsel %vm1689, %v1690, %v1686
  %v1692 = vadd.s32 %v1687, %v1691
  %v1693 = vadd.s32 %v1692, 536870912
  %v1694 = vshrl.u32 %v1693, 30
  %v1695 = vshll.u32 %v1694, 30
  %v1696 = vsub.s32 %v1692, %v1695
  %vm1697 = vcmp.lt.s32.totalorder %v1696, 0
  %v1698 = vsub.s32 0, %v1696
  %v1699 = vsel %vm1697, %v1698, %v1696
  %v1700 = vclz %v1699
  %v1701 = vsub.s32 %v1700, 2
  %vm1702 = vcmp.gt.s32.totalorder 0, %v1701
  %v1703 = vsel %vm1702, 0, %v1701
  %v1704 = vsub.s32 32, %v1703
  %v1705 = vshll.u32 %v1696, %v1703
  %v1706 = vshrl.u32 %v1688, %v1704
  %v1707 = vor.u32 %v1705, %v1706
  %v1708 = vsub.s32 4294967266, %v1703
  %v1709 = vadd.s32 %v1708, 127
  %v1710 = vshll.u32 %v1709, 23
  %v1711 = vor.u32 4788187, %v1710
  %v1712 = vand.u32 2147483647, %v1711
  %v1714 = vcvt.s32.f32 %v1707
  %v1715 = vmul.f32 %v1714, %v1712
  %v1716 = vxor.u32 %v1715, 2147483648
  %v1717 = vsel %vm1634, %v1716, %v1715
  %v1718 = vsub.s32 4, %v1694
  %v1719 = vsel %vm1634, %v1718, %v1694
  %v1720 = vsel %vm1633, %v294, %v1717
  %v1721 = vsel %vm1633, 0, %v1719
  %v1722 = vcosq.f32.pop %v1720
  %v1723 = vsinq.f32.pop %v1720
  %vm1724 = vweird.f32 %v294
  %v1725 = vadd.s32 %v1721, 3
  %v1726 = vand.u32 %v1725, 3
  %vm1727 = vcmp.lt.s32.totalorder %v1726, 2
  %vm1728 = vcmp.eq.s32.totalorder %v1726, 0
  %v1729 = vxor.u32 %v1723, 2147483648
  %v1730 = vsel %vm1728, %v1722, %v1729
  %vm1731 = vcmp.eq.s32.totalorder %v1726, 2
  %v1732 = vxor.u32 %v1722, 2147483648
  %v1733 = vsel %vm1731, %v1732, %v1723
  %v1734 = vsel %vm1727, %v1730, %v1733
  %v1735 = vsel %vm1724, nan, %v1734
  %v1736 = vand.u32 2147483647, %v298
  %vm1737 = vcmp.le.f32.partialorder %v1736, 0.7853982
  %vm1738 = vcmp.lt.s32.totalorder %v298, 0
  %v1739 = vand.u32 %v298, 2139095040
  %v1740 = vshrl.u32 %v1739, 23
  %v1741 = vsub.s32 %v1740, 127
  %v1742 = vand.u32 2147483647, %v298
  %v1743 = vand.u32 %v1742, 8388607
  %v1744 = vor.u32 %v1743, 8388608
  %v1745 = vsub.s32 0, %v1744
  %v1746 = vadd.s32 %v1741, 1
  %vm1747 = vcmp.gt.s32.totalorder %v1746, 0
  %v1748 = vsel %vm1747, %v1746, 0
  %v1749 = vshrl.u32 %v1748, 5
  %v1750 = vand.u32 %v1748, 31
  %v1751 = vsub.s32 32, %v1750
  %v1752 = vshrl.u32 683565275, %v1751
  %v1753 = vshll.u32 683565275, %v1750
  %v1754 = vshrl.u32 2475754826, %v1751
  %v1755 = vor.u32 %v1753, %v1754
  %v1756 = vshll.u32 2475754826, %v1750
  %v1757 = vshrl.u32 2131351028, %v1751
  %v1758 = vor.u32 %v1756, %v1757
  %v1759 = vshll.u32 2131351028, %v1750
  %v1760 = vshrl.u32 2102212464, %v1751
  %v1761 = vor.u32 %v1759, %v1760
  %v1762 = vshll.u32 2102212464, %v1750
  %v1763 = vshrl.u32 920167782, %v1751
  %v1764 = vor.u32 %v1762, %v1763
  %v1765 = vshll.u32 920167782, %v1750
  %v1766 = vshrl.u32 1326507024, %v1751
  %v1767 = vor.u32 %v1765, %v1766
  %vm1768 = vcmp.lt.s32.totalorder %v1749, 1
  %vm1769 = vcmp.lt.s32.totalorder %v1749, 2
  %vm1770 = vcmp.lt.s32.totalorder %v1749, 3
  %vm1771 = vcmp.lt.s32.totalorder %v1749, 4
  %v1772 = vsel %vm1768, %v1752, %v1755
  %v1773 = vsel %vm1771, %v1761, 2102212464
  %v1774 = vsel %vm1770, %v1758, %v1773
  %v1775 = vsel %vm1769, %v1772, %v1774
  %v1776 = vsel %vm1768, %v1755, %v1758
  %v1777 = vsel %vm1771, %v1764, 920167782
  %v1778 = vsel %vm1770, %v1761, %v1777
  %v1779 = vsel %vm1769, %v1776, %v1778
  %v1780 = vsel %vm1768, %v1758, %v1761
  %v1781 = vsel %vm1771, %v1767, 1326507024
  %v1782 = vsel %vm1770, %v1764, %v1781
  %v1783 = vsel %vm1769, %v1780, %v1782
  %v1784 = vshll.u32 %v1744, 8
  %v1785 = vmul.u32.u64.compose %v1784, %v1783
  %v1786 = vextract.low.u32 %v1785
  %v1787 = vextract.high.u32 %v1785
  %v1788 = vmul.u32.u64.compose %v1784, %v1779
  %v1789 = vextract.low.u32 %v1788
  %v1790 = vextract.high.u32 %v1788
  %v1791 = vmul.u32 %v1784, %v1775
  %v1792 = vadd.s32 %v1787, %v1789
  %vm1793 = vc.u32 %v1787, %v1789
  %v1794 = vadd.s32 %v1790, 1
  %v1795 = vsel %vm1793, %v1794, %v1790
  %v1796 = vadd.s32 %v1791, %v1795
  %v1797 = vadd.s32 %v1796, 536870912
  %v1798 = vshrl.u32 %v1797, 30
  %v1799 = vshll.u32 %v1798, 30
  %v1800 = vsub.s32 %v1796, %v1799
  %vm1801 = vcmp.lt.s32.totalorder %v1800, 0
  %v1802 = vsub.s32 0, %v1800
  %v1803 = vsel %vm1801, %v1802, %v1800
  %v1804 = vclz %v1803
  %v1805 = vsub.s32 %v1804, 2
  %vm1806 = vcmp.gt.s32.totalorder 0, %v1805
  %v1807 = vsel %vm1806, 0, %v1805
  %v1808 = vsub.s32 32, %v1807
  %v1809 = vshll.u32 %v1800, %v1807
  %v1810 = vshrl.u32 %v1792, %v1808
  %v1811 = vor.u32 %v1809, %v1810
  %v1812 = vsub.s32 4294967266, %v1807
  %v1813 = vadd.s32 %v1812, 127
  %v1814 = vshll.u32 %v1813, 23
  %v1815 = vor.u32 4788187, %v1814
  %v1816 = vand.u32 2147483647, %v1815
  %v1818 = vcvt.s32.f32 %v1811
  %v1819 = vmul.f32 %v1818, %v1816
  %v1820 = vxor.u32 %v1819, 2147483648
  %v1821 = vsel %vm1738, %v1820, %v1819
  %v1822 = vsub.s32 4, %v1798
  %v1823 = vsel %vm1738, %v1822, %v1798
  %v1824 = vsel %vm1737, %v298, %v1821
  %v1825 = vsel %vm1737, 0, %v1823
  %v1826 = vcosq.f32.pop %v1824
  %v1827 = vsinq.f32.pop %v1824
  %vm1828 = vweird.f32 %v298
  %v1829 = vadd.s32 %v1825, 3
  %v1830 = vand.u32 %v1829, 3
  %vm1831 = vcmp.lt.s32.totalorder %v1830, 2
  %vm1832 = vcmp.eq.s32.totalorder %v1830, 0
  %v1833 = vxor.u32 %v1827, 2147483648
  %v1834 = vsel %vm1832, %v1826, %v1833
  %vm1835 = vcmp.eq.s32.totalorder %v1830, 2
  %v1836 = vxor.u32 %v1826, 2147483648
  %v1837 = vsel %vm1835, %v1836, %v1827
  %v1838 = vsel %vm1831, %v1834, %v1837
  %v1839 = vsel %vm1828, nan, %v1838
  %v1840 = vand.u32 2147483647, %v300
  %vm1841 = vcmp.le.f32.partialorder %v1840, 0.7853982
  %vm1842 = vcmp.lt.s32.totalorder %v300, 0
  %v1843 = vand.u32 %v300, 2139095040
  %v1844 = vshrl.u32 %v1843, 23
  %v1845 = vsub.s32 %v1844, 127
  %v1846 = vand.u32 2147483647, %v300
  %v1847 = vand.u32 %v1846, 8388607
  %v1848 = vor.u32 %v1847, 8388608
  %v1849 = vsub.s32 0, %v1848
  %v1850 = vadd.s32 %v1845, 1
  %vm1851 = vcmp.gt.s32.totalorder %v1850, 0
  %v1852 = vsel %vm1851, %v1850, 0
  %v1853 = vshrl.u32 %v1852, 5
  %v1854 = vand.u32 %v1852, 31
  %v1855 = vsub.s32 32, %v1854
  %v1856 = vshrl.u32 683565275, %v1855
  %v1857 = vshll.u32 683565275, %v1854
  %v1858 = vshrl.u32 2475754826, %v1855
  %v1859 = vor.u32 %v1857, %v1858
  %v1860 = vshll.u32 2475754826, %v1854
  %v1861 = vshrl.u32 2131351028, %v1855
  %v1862 = vor.u32 %v1860, %v1861
  %v1863 = vshll.u32 2131351028, %v1854
  %v1864 = vshrl.u32 2102212464, %v1855
  %v1865 = vor.u32 %v1863, %v1864
  %v1866 = vshll.u32 2102212464, %v1854
  %v1867 = vshrl.u32 920167782, %v1855
  %v1868 = vor.u32 %v1866, %v1867
  %v1869 = vshll.u32 920167782, %v1854
  %v1870 = vshrl.u32 1326507024, %v1855
  %v1871 = vor.u32 %v1869, %v1870
  %vm1872 = vcmp.lt.s32.totalorder %v1853, 1
  %vm1873 = vcmp.lt.s32.totalorder %v1853, 2
  %vm1874 = vcmp.lt.s32.totalorder %v1853, 3
  %vm1875 = vcmp.lt.s32.totalorder %v1853, 4
  %v1876 = vsel %vm1872, %v1856, %v1859
  %v1877 = vsel %vm1875, %v1865, 2102212464
  %v1878 = vsel %vm1874, %v1862, %v1877
  %v1879 = vsel %vm1873, %v1876, %v1878
  %v1880 = vsel %vm1872, %v1859, %v1862
  %v1881 = vsel %vm1875, %v1868, 920167782
  %v1882 = vsel %vm1874, %v1865, %v1881
  %v1883 = vsel %vm1873, %v1880, %v1882
  %v1884 = vsel %vm1872, %v1862, %v1865
  %v1885 = vsel %vm1875, %v1871, 1326507024
  %v1886 = vsel %vm1874, %v1868, %v1885
  %v1887 = vsel %vm1873, %v1884, %v1886
  %v1888 = vshll.u32 %v1848, 8
  %v1889 = vmul.u32.u64.compose %v1888, %v1887
  %v1890 = vextract.low.u32 %v1889
  %v1891 = vextract.high.u32 %v1889
  %v1892 = vmul.u32.u64.compose %v1888, %v1883
  %v1893 = vextract.low.u32 %v1892
  %v1894 = vextract.high.u32 %v1892
  %v1895 = vmul.u32 %v1888, %v1879
  %v1896 = vadd.s32 %v1891, %v1893
  %vm1897 = vc.u32 %v1891, %v1893
  %v1898 = vadd.s32 %v1894, 1
  %v1899 = vsel %vm1897, %v1898, %v1894
  %v1900 = vadd.s32 %v1895, %v1899
  %v1901 = vadd.s32 %v1900, 536870912
  %v1902 = vshrl.u32 %v1901, 30
  %v1903 = vshll.u32 %v1902, 30
  %v1904 = vsub.s32 %v1900, %v1903
  %vm1905 = vcmp.lt.s32.totalorder %v1904, 0
  %v1906 = vsub.s32 0, %v1904
  %v1907 = vsel %vm1905, %v1906, %v1904
  %v1908 = vclz %v1907
  %v1909 = vsub.s32 %v1908, 2
  %vm1910 = vcmp.gt.s32.totalorder 0, %v1909
  %v1911 = vsel %vm1910, 0, %v1909
  %v1912 = vsub.s32 32, %v1911
  %v1913 = vshll.u32 %v1904, %v1911
  %v1914 = vshrl.u32 %v1896, %v1912
  %v1915 = vor.u32 %v1913, %v1914
  %v1916 = vsub.s32 4294967266, %v1911
  %v1917 = vadd.s32 %v1916, 127
  %v1918 = vshll.u32 %v1917, 23
  %v1919 = vor.u32 4788187, %v1918
  %v1920 = vand.u32 2147483647, %v1919
  %v1922 = vcvt.s32.f32 %v1915
  %v1923 = vmul.f32 %v1922, %v1920
  %v1924 = vxor.u32 %v1923, 2147483648
  %v1925 = vsel %vm1842, %v1924, %v1923
  %v1926 = vsub.s32 4, %v1902
  %v1927 = vsel %vm1842, %v1926, %v1902
  %v1928 = vsel %vm1841, %v300, %v1925
  %v1929 = vsel %vm1841, 0, %v1927
  %v1930 = vcosq.f32.pop %v1928
  %v1931 = vsinq.f32.pop %v1928
  %vm1932 = vweird.f32 %v300
  %v1933 = vadd.s32 %v1929, 3
  %v1934 = vand.u32 %v1933, 3
  %vm1935 = vcmp.lt.s32.totalorder %v1934, 2
  %vm1936 = vcmp.eq.s32.totalorder %v1934, 0
  %v1937 = vxor.u32 %v1931, 2147483648
  %v1938 = vsel %vm1936, %v1930, %v1937
  %vm1939 = vcmp.eq.s32.totalorder %v1934, 2
  %v1940 = vxor.u32 %v1930, 2147483648
  %v1941 = vsel %vm1939, %v1940, %v1931
  %v1942 = vsel %vm1935, %v1938, %v1941
  %v1943 = vsel %vm1932, nan, %v1942
  %v1944 = vand.u32 2147483647, %v304
  %vm1945 = vcmp.le.f32.partialorder %v1944, 0.7853982
  %vm1946 = vcmp.lt.s32.totalorder %v304, 0
  %v1947 = vand.u32 %v304, 2139095040
  %v1948 = vshrl.u32 %v1947, 23
  %v1949 = vsub.s32 %v1948, 127
  %v1950 = vand.u32 2147483647, %v304
  %v1951 = vand.u32 %v1950, 8388607
  %v1952 = vor.u32 %v1951, 8388608
  %v1953 = vsub.s32 0, %v1952
  %v1954 = vadd.s32 %v1949, 1
  %vm1955 = vcmp.gt.s32.totalorder %v1954, 0
  %v1956 = vsel %vm1955, %v1954, 0
  %v1957 = vshrl.u32 %v1956, 5
  %v1958 = vand.u32 %v1956, 31
  %v1959 = vsub.s32 32, %v1958
  %v1960 = vshrl.u32 683565275, %v1959
  %v1961 = vshll.u32 683565275, %v1958
  %v1962 = vshrl.u32 2475754826, %v1959
  %v1963 = vor.u32 %v1961, %v1962
  %v1964 = vshll.u32 2475754826, %v1958
  %v1965 = vshrl.u32 2131351028, %v1959
  %v1966 = vor.u32 %v1964, %v1965
  %v1967 = vshll.u32 2131351028, %v1958
  %v1968 = vshrl.u32 2102212464, %v1959
  %v1969 = vor.u32 %v1967, %v1968
  %v1970 = vshll.u32 2102212464, %v1958
  %v1971 = vshrl.u32 920167782, %v1959
  %v1972 = vor.u32 %v1970, %v1971
  %v1973 = vshll.u32 920167782, %v1958
  %v1974 = vshrl.u32 1326507024, %v1959
  %v1975 = vor.u32 %v1973, %v1974
  %vm1976 = vcmp.lt.s32.totalorder %v1957, 1
  %vm1977 = vcmp.lt.s32.totalorder %v1957, 2
  %vm1978 = vcmp.lt.s32.totalorder %v1957, 3
  %vm1979 = vcmp.lt.s32.totalorder %v1957, 4
  %v1980 = vsel %vm1976, %v1960, %v1963
  %v1981 = vsel %vm1979, %v1969, 2102212464
  %v1982 = vsel %vm1978, %v1966, %v1981
  %v1983 = vsel %vm1977, %v1980, %v1982
  %v1984 = vsel %vm1976, %v1963, %v1966
  %v1985 = vsel %vm1979, %v1972, 920167782
  %v1986 = vsel %vm1978, %v1969, %v1985
  %v1987 = vsel %vm1977, %v1984, %v1986
  %v1988 = vsel %vm1976, %v1966, %v1969
  %v1989 = vsel %vm1979, %v1975, 1326507024
  %v1990 = vsel %vm1978, %v1972, %v1989
  %v1991 = vsel %vm1977, %v1988, %v1990
  %v1992 = vshll.u32 %v1952, 8
  %v1993 = vmul.u32.u64.compose %v1992, %v1991
  %v1994 = vextract.low.u32 %v1993
  %v1995 = vextract.high.u32 %v1993
  %v1996 = vmul.u32.u64.compose %v1992, %v1987
  %v1997 = vextract.low.u32 %v1996
  %v1998 = vextract.high.u32 %v1996
  %v1999 = vmul.u32 %v1992, %v1983
  %v2000 = vadd.s32 %v1995, %v1997
  %vm2001 = vc.u32 %v1995, %v1997
  %v2002 = vadd.s32 %v1998, 1
  %v2003 = vsel %vm2001, %v2002, %v1998
  %v2004 = vadd.s32 %v1999, %v2003
  %v2005 = vadd.s32 %v2004, 536870912
  %v2006 = vshrl.u32 %v2005, 30
  %v2007 = vshll.u32 %v2006, 30
  %v2008 = vsub.s32 %v2004, %v2007
  %vm2009 = vcmp.lt.s32.totalorder %v2008, 0
  %v2010 = vsub.s32 0, %v2008
  %v2011 = vsel %vm2009, %v2010, %v2008
  %v2012 = vclz %v2011
  %v2013 = vsub.s32 %v2012, 2
  %vm2014 = vcmp.gt.s32.totalorder 0, %v2013
  %v2015 = vsel %vm2014, 0, %v2013
  %v2016 = vsub.s32 32, %v2015
  %v2017 = vshll.u32 %v2008, %v2015
  %v2018 = vshrl.u32 %v2000, %v2016
  %v2019 = vor.u32 %v2017, %v2018
  %v2020 = vsub.s32 4294967266, %v2015
  %v2021 = vadd.s32 %v2020, 127
  %v2022 = vshll.u32 %v2021, 23
  %v2023 = vor.u32 4788187, %v2022
  %v2024 = vand.u32 2147483647, %v2023
  %v2026 = vcvt.s32.f32 %v2019
  %v2027 = vmul.f32 %v2026, %v2024
  %v2028 = vxor.u32 %v2027, 2147483648
  %v2029 = vsel %vm1946, %v2028, %v2027
  %v2030 = vsub.s32 4, %v2006
  %v2031 = vsel %vm1946, %v2030, %v2006
  %v2032 = vsel %vm1945, %v304, %v2029
  %v2033 = vsel %vm1945, 0, %v2031
  %v2034 = vcosq.f32.pop %v2032
  %v2035 = vsinq.f32.pop %v2032
  %vm2036 = vweird.f32 %v304
  %v2037 = vadd.s32 %v2033, 3
  %v2038 = vand.u32 %v2037, 3
  %vm2039 = vcmp.lt.s32.totalorder %v2038, 2
  %vm2040 = vcmp.eq.s32.totalorder %v2038, 0
  %v2041 = vxor.u32 %v2035, 2147483648
  %v2042 = vsel %vm2040, %v2034, %v2041
  %vm2043 = vcmp.eq.s32.totalorder %v2038, 2
  %v2044 = vxor.u32 %v2034, 2147483648
  %v2045 = vsel %vm2043, %v2044, %v2035
  %v2046 = vsel %vm2039, %v2042, %v2045
  %v2047 = vsel %vm2036, nan, %v2046
  %v2048 = vand.u32 2147483647, %v306
  %vm2049 = vcmp.le.f32.partialorder %v2048, 0.7853982
  %vm2050 = vcmp.lt.s32.totalorder %v306, 0
  %v2051 = vand.u32 %v306, 2139095040
  %v2052 = vshrl.u32 %v2051, 23
  %v2053 = vsub.s32 %v2052, 127
  %v2054 = vand.u32 2147483647, %v306
  %v2055 = vand.u32 %v2054, 8388607
  %v2056 = vor.u32 %v2055, 8388608
  %v2057 = vsub.s32 0, %v2056
  %v2058 = vadd.s32 %v2053, 1
  %vm2059 = vcmp.gt.s32.totalorder %v2058, 0
  %v2060 = vsel %vm2059, %v2058, 0
  %v2061 = vshrl.u32 %v2060, 5
  %v2062 = vand.u32 %v2060, 31
  %v2063 = vsub.s32 32, %v2062
  %v2064 = vshrl.u32 683565275, %v2063
  %v2065 = vshll.u32 683565275, %v2062
  %v2066 = vshrl.u32 2475754826, %v2063
  %v2067 = vor.u32 %v2065, %v2066
  %v2068 = vshll.u32 2475754826, %v2062
  %v2069 = vshrl.u32 2131351028, %v2063
  %v2070 = vor.u32 %v2068, %v2069
  %v2071 = vshll.u32 2131351028, %v2062
  %v2072 = vshrl.u32 2102212464, %v2063
  %v2073 = vor.u32 %v2071, %v2072
  %v2074 = vshll.u32 2102212464, %v2062
  %v2075 = vshrl.u32 920167782, %v2063
  %v2076 = vor.u32 %v2074, %v2075
  %v2077 = vshll.u32 920167782, %v2062
  %v2078 = vshrl.u32 1326507024, %v2063
  %v2079 = vor.u32 %v2077, %v2078
  %vm2080 = vcmp.lt.s32.totalorder %v2061, 1
  %vm2081 = vcmp.lt.s32.totalorder %v2061, 2
  %vm2082 = vcmp.lt.s32.totalorder %v2061, 3
  %vm2083 = vcmp.lt.s32.totalorder %v2061, 4
  %v2084 = vsel %vm2080, %v2064, %v2067
  %v2085 = vsel %vm2083, %v2073, 2102212464
  %v2086 = vsel %vm2082, %v2070, %v2085
  %v2087 = vsel %vm2081, %v2084, %v2086
  %v2088 = vsel %vm2080, %v2067, %v2070
  %v2089 = vsel %vm2083, %v2076, 920167782
  %v2090 = vsel %vm2082, %v2073, %v2089
  %v2091 = vsel %vm2081, %v2088, %v2090
  %v2092 = vsel %vm2080, %v2070, %v2073
  %v2093 = vsel %vm2083, %v2079, 1326507024
  %v2094 = vsel %vm2082, %v2076, %v2093
  %v2095 = vsel %vm2081, %v2092, %v2094
  %v2096 = vshll.u32 %v2056, 8
  %v2097 = vmul.u32.u64.compose %v2096, %v2095
  %v2098 = vextract.low.u32 %v2097
  %v2099 = vextract.high.u32 %v2097
  %v2100 = vmul.u32.u64.compose %v2096, %v2091
  %v2101 = vextract.low.u32 %v2100
  %v2102 = vextract.high.u32 %v2100
  %v2103 = vmul.u32 %v2096, %v2087
  %v2104 = vadd.s32 %v2099, %v2101
  %vm2105 = vc.u32 %v2099, %v2101
  %v2106 = vadd.s32 %v2102, 1
  %v2107 = vsel %vm2105, %v2106, %v2102
  %v2108 = vadd.s32 %v2103, %v2107
  %v2109 = vadd.s32 %v2108, 536870912
  %v2110 = vshrl.u32 %v2109, 30
  %v2111 = vshll.u32 %v2110, 30
  %v2112 = vsub.s32 %v2108, %v2111
  %vm2113 = vcmp.lt.s32.totalorder %v2112, 0
  %v2114 = vsub.s32 0, %v2112
  %v2115 = vsel %vm2113, %v2114, %v2112
  %v2116 = vclz %v2115
  %v2117 = vsub.s32 %v2116, 2
  %vm2118 = vcmp.gt.s32.totalorder 0, %v2117
  %v2119 = vsel %vm2118, 0, %v2117
  %v2120 = vsub.s32 32, %v2119
  %v2121 = vshll.u32 %v2112, %v2119
  %v2122 = vshrl.u32 %v2104, %v2120
  %v2123 = vor.u32 %v2121, %v2122
  %v2124 = vsub.s32 4294967266, %v2119
  %v2125 = vadd.s32 %v2124, 127
  %v2126 = vshll.u32 %v2125, 23
  %v2127 = vor.u32 4788187, %v2126
  %v2128 = vand.u32 2147483647, %v2127
  %v2130 = vcvt.s32.f32 %v2123
  %v2131 = vmul.f32 %v2130, %v2128
  %v2132 = vxor.u32 %v2131, 2147483648
  %v2133 = vsel %vm2050, %v2132, %v2131
  %v2134 = vsub.s32 4, %v2110
  %v2135 = vsel %vm2050, %v2134, %v2110
  %v2136 = vsel %vm2049, %v306, %v2133
  %v2137 = vsel %vm2049, 0, %v2135
  %v2138 = vcosq.f32.pop %v2136
  %v2139 = vsinq.f32.pop %v2136
  %vm2140 = vweird.f32 %v306
  %v2141 = vadd.s32 %v2137, 3
  %v2142 = vand.u32 %v2141, 3
  %vm2143 = vcmp.lt.s32.totalorder %v2142, 2
  %vm2144 = vcmp.eq.s32.totalorder %v2142, 0
  %v2145 = vxor.u32 %v2139, 2147483648
  %v2146 = vsel %vm2144, %v2138, %v2145
  %vm2147 = vcmp.eq.s32.totalorder %v2142, 2
  %v2148 = vxor.u32 %v2138, 2147483648
  %v2149 = vsel %vm2147, %v2148, %v2139
  %v2150 = vsel %vm2143, %v2146, %v2149
  %v2151 = vsel %vm2140, nan, %v2150
  %v2152 = vand.u32 2147483647, %v310
  %vm2153 = vcmp.le.f32.partialorder %v2152, 0.7853982
  %vm2154 = vcmp.lt.s32.totalorder %v310, 0
  %v2155 = vand.u32 %v310, 2139095040
  %v2156 = vshrl.u32 %v2155, 23
  %v2157 = vsub.s32 %v2156, 127
  %v2158 = vand.u32 2147483647, %v310
  %v2159 = vand.u32 %v2158, 8388607
  %v2160 = vor.u32 %v2159, 8388608
  %v2161 = vsub.s32 0, %v2160
  %v2162 = vadd.s32 %v2157, 1
  %vm2163 = vcmp.gt.s32.totalorder %v2162, 0
  %v2164 = vsel %vm2163, %v2162, 0
  %v2165 = vshrl.u32 %v2164, 5
  %v2166 = vand.u32 %v2164, 31
  %v2167 = vsub.s32 32, %v2166
  %v2168 = vshrl.u32 683565275, %v2167
  %v2169 = vshll.u32 683565275, %v2166
  %v2170 = vshrl.u32 2475754826, %v2167
  %v2171 = vor.u32 %v2169, %v2170
  %v2172 = vshll.u32 2475754826, %v2166
  %v2173 = vshrl.u32 2131351028, %v2167
  %v2174 = vor.u32 %v2172, %v2173
  %v2175 = vshll.u32 2131351028, %v2166
  %v2176 = vshrl.u32 2102212464, %v2167
  %v2177 = vor.u32 %v2175, %v2176
  %v2178 = vshll.u32 2102212464, %v2166
  %v2179 = vshrl.u32 920167782, %v2167
  %v2180 = vor.u32 %v2178, %v2179
  %v2181 = vshll.u32 920167782, %v2166
  %v2182 = vshrl.u32 1326507024, %v2167
  %v2183 = vor.u32 %v2181, %v2182
  %vm2184 = vcmp.lt.s32.totalorder %v2165, 1
  %vm2185 = vcmp.lt.s32.totalorder %v2165, 2
  %vm2186 = vcmp.lt.s32.totalorder %v2165, 3
  %vm2187 = vcmp.lt.s32.totalorder %v2165, 4
  %v2188 = vsel %vm2184, %v2168, %v2171
  %v2189 = vsel %vm2187, %v2177, 2102212464
  %v2190 = vsel %vm2186, %v2174, %v2189
  %v2191 = vsel %vm2185, %v2188, %v2190
  %v2192 = vsel %vm2184, %v2171, %v2174
  %v2193 = vsel %vm2187, %v2180, 920167782
  %v2194 = vsel %vm2186, %v2177, %v2193
  %v2195 = vsel %vm2185, %v2192, %v2194
  %v2196 = vsel %vm2184, %v2174, %v2177
  %v2197 = vsel %vm2187, %v2183, 1326507024
  %v2198 = vsel %vm2186, %v2180, %v2197
  %v2199 = vsel %vm2185, %v2196, %v2198
  %v2200 = vshll.u32 %v2160, 8
  %v2201 = vmul.u32.u64.compose %v2200, %v2199
  %v2202 = vextract.low.u32 %v2201
  %v2203 = vextract.high.u32 %v2201
  %v2204 = vmul.u32.u64.compose %v2200, %v2195
  %v2205 = vextract.low.u32 %v2204
  %v2206 = vextract.high.u32 %v2204
  %v2207 = vmul.u32 %v2200, %v2191
  %v2208 = vadd.s32 %v2203, %v2205
  %vm2209 = vc.u32 %v2203, %v2205
  %v2210 = vadd.s32 %v2206, 1
  %v2211 = vsel %vm2209, %v2210, %v2206
  %v2212 = vadd.s32 %v2207, %v2211
  %v2213 = vadd.s32 %v2212, 536870912
  %v2214 = vshrl.u32 %v2213, 30
  %v2215 = vshll.u32 %v2214, 30
  %v2216 = vsub.s32 %v2212, %v2215
  %vm2217 = vcmp.lt.s32.totalorder %v2216, 0
  %v2218 = vsub.s32 0, %v2216
  %v2219 = vsel %vm2217, %v2218, %v2216
  %v2220 = vclz %v2219
  %v2221 = vsub.s32 %v2220, 2
  %vm2222 = vcmp.gt.s32.totalorder 0, %v2221
  %v2223 = vsel %vm2222, 0, %v2221
  %v2224 = vsub.s32 32, %v2223
  %v2225 = vshll.u32 %v2216, %v2223
  %v2226 = vshrl.u32 %v2208, %v2224
  %v2227 = vor.u32 %v2225, %v2226
  %v2228 = vsub.s32 4294967266, %v2223
  %v2229 = vadd.s32 %v2228, 127
  %v2230 = vshll.u32 %v2229, 23
  %v2231 = vor.u32 4788187, %v2230
  %v2232 = vand.u32 2147483647, %v2231
  %v2234 = vcvt.s32.f32 %v2227
  %v2235 = vmul.f32 %v2234, %v2232
  %v2236 = vxor.u32 %v2235, 2147483648
  %v2237 = vsel %vm2154, %v2236, %v2235
  %v2238 = vsub.s32 4, %v2214
  %v2239 = vsel %vm2154, %v2238, %v2214
  %v2240 = vsel %vm2153, %v310, %v2237
  %v2241 = vsel %vm2153, 0, %v2239
  %v2242 = vcosq.f32.pop %v2240
  %v2243 = vsinq.f32.pop %v2240
  %vm2244 = vweird.f32 %v310
  %v2245 = vadd.s32 %v2241, 3
  %v2246 = vand.u32 %v2245, 3
  %vm2247 = vcmp.lt.s32.totalorder %v2246, 2
  %vm2248 = vcmp.eq.s32.totalorder %v2246, 0
  %v2249 = vxor.u32 %v2243, 2147483648
  %v2250 = vsel %vm2248, %v2242, %v2249
  %vm2251 = vcmp.eq.s32.totalorder %v2246, 2
  %v2252 = vxor.u32 %v2242, 2147483648
  %v2253 = vsel %vm2251, %v2252, %v2243
  %v2254 = vsel %vm2247, %v2250, %v2253
  %v2255 = vsel %vm2244, nan, %v2254
  %v2256 = vand.u32 2147483647, %v312
  %vm2257 = vcmp.le.f32.partialorder %v2256, 0.7853982
  %vm2258 = vcmp.lt.s32.totalorder %v312, 0
  %v2259 = vand.u32 %v312, 2139095040
  %v2260 = vshrl.u32 %v2259, 23
  %v2261 = vsub.s32 %v2260, 127
  %v2262 = vand.u32 2147483647, %v312
  %v2263 = vand.u32 %v2262, 8388607
  %v2264 = vor.u32 %v2263, 8388608
  %v2265 = vsub.s32 0, %v2264
  %v2266 = vadd.s32 %v2261, 1
  %vm2267 = vcmp.gt.s32.totalorder %v2266, 0
  %v2268 = vsel %vm2267, %v2266, 0
  %v2269 = vshrl.u32 %v2268, 5
  %v2270 = vand.u32 %v2268, 31
  %v2271 = vsub.s32 32, %v2270
  %v2272 = vshrl.u32 683565275, %v2271
  %v2273 = vshll.u32 683565275, %v2270
  %v2274 = vshrl.u32 2475754826, %v2271
  %v2275 = vor.u32 %v2273, %v2274
  %v2276 = vshll.u32 2475754826, %v2270
  %v2277 = vshrl.u32 2131351028, %v2271
  %v2278 = vor.u32 %v2276, %v2277
  %v2279 = vshll.u32 2131351028, %v2270
  %v2280 = vshrl.u32 2102212464, %v2271
  %v2281 = vor.u32 %v2279, %v2280
  %v2282 = vshll.u32 2102212464, %v2270
  %v2283 = vshrl.u32 920167782, %v2271
  %v2284 = vor.u32 %v2282, %v2283
  %v2285 = vshll.u32 920167782, %v2270
  %v2286 = vshrl.u32 1326507024, %v2271
  %v2287 = vor.u32 %v2285, %v2286
  %vm2288 = vcmp.lt.s32.totalorder %v2269, 1
  %vm2289 = vcmp.lt.s32.totalorder %v2269, 2
  %vm2290 = vcmp.lt.s32.totalorder %v2269, 3
  %vm2291 = vcmp.lt.s32.totalorder %v2269, 4
  %v2292 = vsel %vm2288, %v2272, %v2275
  %v2293 = vsel %vm2291, %v2281, 2102212464
  %v2294 = vsel %vm2290, %v2278, %v2293
  %v2295 = vsel %vm2289, %v2292, %v2294
  %v2296 = vsel %vm2288, %v2275, %v2278
  %v2297 = vsel %vm2291, %v2284, 920167782
  %v2298 = vsel %vm2290, %v2281, %v2297
  %v2299 = vsel %vm2289, %v2296, %v2298
  %v2300 = vsel %vm2288, %v2278, %v2281
  %v2301 = vsel %vm2291, %v2287, 1326507024
  %v2302 = vsel %vm2290, %v2284, %v2301
  %v2303 = vsel %vm2289, %v2300, %v2302
  %v2304 = vshll.u32 %v2264, 8
  %v2305 = vmul.u32.u64.compose %v2304, %v2303
  %v2306 = vextract.low.u32 %v2305
  %v2307 = vextract.high.u32 %v2305
  %v2308 = vmul.u32.u64.compose %v2304, %v2299
  %v2309 = vextract.low.u32 %v2308
  %v2310 = vextract.high.u32 %v2308
  %v2311 = vmul.u32 %v2304, %v2295
  %v2312 = vadd.s32 %v2307, %v2309
  %vm2313 = vc.u32 %v2307, %v2309
  %v2314 = vadd.s32 %v2310, 1
  %v2315 = vsel %vm2313, %v2314, %v2310
  %v2316 = vadd.s32 %v2311, %v2315
  %v2317 = vadd.s32 %v2316, 536870912
  %v2318 = vshrl.u32 %v2317, 30
  %v2319 = vshll.u32 %v2318, 30
  %v2320 = vsub.s32 %v2316, %v2319
  %vm2321 = vcmp.lt.s32.totalorder %v2320, 0
  %v2322 = vsub.s32 0, %v2320
  %v2323 = vsel %vm2321, %v2322, %v2320
  %v2324 = vclz %v2323
  %v2325 = vsub.s32 %v2324, 2
  %vm2326 = vcmp.gt.s32.totalorder 0, %v2325
  %v2327 = vsel %vm2326, 0, %v2325
  %v2328 = vsub.s32 32, %v2327
  %v2329 = vshll.u32 %v2320, %v2327
  %v2330 = vshrl.u32 %v2312, %v2328
  %v2331 = vor.u32 %v2329, %v2330
  %v2332 = vsub.s32 4294967266, %v2327
  %v2333 = vadd.s32 %v2332, 127
  %v2334 = vshll.u32 %v2333, 23
  %v2335 = vor.u32 4788187, %v2334
  %v2336 = vand.u32 2147483647, %v2335
  %v2338 = vcvt.s32.f32 %v2331
  %v2339 = vmul.f32 %v2338, %v2336
  %v2340 = vxor.u32 %v2339, 2147483648
  %v2341 = vsel %vm2258, %v2340, %v2339
  %v2342 = vsub.s32 4, %v2318
  %v2343 = vsel %vm2258, %v2342, %v2318
  %v2344 = vsel %vm2257, %v312, %v2341
  %v2345 = vsel %vm2257, 0, %v2343
  %v2346 = vcosq.f32.pop %v2344
  %v2347 = vsinq.f32.pop %v2344
  %vm2348 = vweird.f32 %v312
  %v2349 = vadd.s32 %v2345, 3
  %v2350 = vand.u32 %v2349, 3
  %vm2351 = vcmp.lt.s32.totalorder %v2350, 2
  %vm2352 = vcmp.eq.s32.totalorder %v2350, 0
  %v2353 = vxor.u32 %v2347, 2147483648
  %v2354 = vsel %vm2352, %v2346, %v2353
  %vm2355 = vcmp.eq.s32.totalorder %v2350, 2
  %v2356 = vxor.u32 %v2346, 2147483648
  %v2357 = vsel %vm2355, %v2356, %v2347
  %v2358 = vsel %vm2351, %v2354, %v2357
  %v2359 = vsel %vm2348, nan, %v2358
  %v2360 = vand.u32 2147483647, %v316
  %vm2361 = vcmp.le.f32.partialorder %v2360, 0.7853982
  %vm2362 = vcmp.lt.s32.totalorder %v316, 0
  %v2363 = vand.u32 %v316, 2139095040
  %v2364 = vshrl.u32 %v2363, 23
  %v2365 = vsub.s32 %v2364, 127
  %v2366 = vand.u32 2147483647, %v316
  %v2367 = vand.u32 %v2366, 8388607
  %v2368 = vor.u32 %v2367, 8388608
  %v2369 = vsub.s32 0, %v2368
  %v2370 = vadd.s32 %v2365, 1
  %vm2371 = vcmp.gt.s32.totalorder %v2370, 0
  %v2372 = vsel %vm2371, %v2370, 0
  %v2373 = vshrl.u32 %v2372, 5
  %v2374 = vand.u32 %v2372, 31
  %v2375 = vsub.s32 32, %v2374
  %v2376 = vshrl.u32 683565275, %v2375
  %v2377 = vshll.u32 683565275, %v2374
  %v2378 = vshrl.u32 2475754826, %v2375
  %v2379 = vor.u32 %v2377, %v2378
  %v2380 = vshll.u32 2475754826, %v2374
  %v2381 = vshrl.u32 2131351028, %v2375
  %v2382 = vor.u32 %v2380, %v2381
  %v2383 = vshll.u32 2131351028, %v2374
  %v2384 = vshrl.u32 2102212464, %v2375
  %v2385 = vor.u32 %v2383, %v2384
  %v2386 = vshll.u32 2102212464, %v2374
  %v2387 = vshrl.u32 920167782, %v2375
  %v2388 = vor.u32 %v2386, %v2387
  %v2389 = vshll.u32 920167782, %v2374
  %v2390 = vshrl.u32 1326507024, %v2375
  %v2391 = vor.u32 %v2389, %v2390
  %vm2392 = vcmp.lt.s32.totalorder %v2373, 1
  %vm2393 = vcmp.lt.s32.totalorder %v2373, 2
  %vm2394 = vcmp.lt.s32.totalorder %v2373, 3
  %vm2395 = vcmp.lt.s32.totalorder %v2373, 4
  %v2396 = vsel %vm2392, %v2376, %v2379
  %v2397 = vsel %vm2395, %v2385, 2102212464
  %v2398 = vsel %vm2394, %v2382, %v2397
  %v2399 = vsel %vm2393, %v2396, %v2398
  %v2400 = vsel %vm2392, %v2379, %v2382
  %v2401 = vsel %vm2395, %v2388, 920167782
  %v2402 = vsel %vm2394, %v2385, %v2401
  %v2403 = vsel %vm2393, %v2400, %v2402
  %v2404 = vsel %vm2392, %v2382, %v2385
  %v2405 = vsel %vm2395, %v2391, 1326507024
  %v2406 = vsel %vm2394, %v2388, %v2405
  %v2407 = vsel %vm2393, %v2404, %v2406
  %v2408 = vshll.u32 %v2368, 8
  %v2409 = vmul.u32.u64.compose %v2408, %v2407
  %v2410 = vextract.low.u32 %v2409
  %v2411 = vextract.high.u32 %v2409
  %v2412 = vmul.u32.u64.compose %v2408, %v2403
  %v2413 = vextract.low.u32 %v2412
  %v2414 = vextract.high.u32 %v2412
  %v2415 = vmul.u32 %v2408, %v2399
  %v2416 = vadd.s32 %v2411, %v2413
  %vm2417 = vc.u32 %v2411, %v2413
  %v2418 = vadd.s32 %v2414, 1
  %v2419 = vsel %vm2417, %v2418, %v2414
  %v2420 = vadd.s32 %v2415, %v2419
  %v2421 = vadd.s32 %v2420, 536870912
  %v2422 = vshrl.u32 %v2421, 30
  %v2423 = vshll.u32 %v2422, 30
  %v2424 = vsub.s32 %v2420, %v2423
  %vm2425 = vcmp.lt.s32.totalorder %v2424, 0
  %v2426 = vsub.s32 0, %v2424
  %v2427 = vsel %vm2425, %v2426, %v2424
  %v2428 = vclz %v2427
  %v2429 = vsub.s32 %v2428, 2
  %vm2430 = vcmp.gt.s32.totalorder 0, %v2429
  %v2431 = vsel %vm2430, 0, %v2429
  %v2432 = vsub.s32 32, %v2431
  %v2433 = vshll.u32 %v2424, %v2431
  %v2434 = vshrl.u32 %v2416, %v2432
  %v2435 = vor.u32 %v2433, %v2434
  %v2436 = vsub.s32 4294967266, %v2431
  %v2437 = vadd.s32 %v2436, 127
  %v2438 = vshll.u32 %v2437, 23
  %v2439 = vor.u32 4788187, %v2438
  %v2440 = vand.u32 2147483647, %v2439
  %v2442 = vcvt.s32.f32 %v2435
  %v2443 = vmul.f32 %v2442, %v2440
  %v2444 = vxor.u32 %v2443, 2147483648
  %v2445 = vsel %vm2362, %v2444, %v2443
  %v2446 = vsub.s32 4, %v2422
  %v2447 = vsel %vm2362, %v2446, %v2422
  %v2448 = vsel %vm2361, %v316, %v2445
  %v2449 = vsel %vm2361, 0, %v2447
  %v2450 = vcosq.f32.pop %v2448
  %v2451 = vsinq.f32.pop %v2448
  %vm2452 = vweird.f32 %v316
  %v2453 = vadd.s32 %v2449, 3
  %v2454 = vand.u32 %v2453, 3
  %vm2455 = vcmp.lt.s32.totalorder %v2454, 2
  %vm2456 = vcmp.eq.s32.totalorder %v2454, 0
  %v2457 = vxor.u32 %v2451, 2147483648
  %v2458 = vsel %vm2456, %v2450, %v2457
  %vm2459 = vcmp.eq.s32.totalorder %v2454, 2
  %v2460 = vxor.u32 %v2450, 2147483648
  %v2461 = vsel %vm2459, %v2460, %v2451
  %v2462 = vsel %vm2455, %v2458, %v2461
  %v2463 = vsel %vm2452, nan, %v2462
  %v2464 = vand.u32 2147483647, %v318
  %vm2465 = vcmp.le.f32.partialorder %v2464, 0.7853982
  %vm2466 = vcmp.lt.s32.totalorder %v318, 0
  %v2467 = vand.u32 %v318, 2139095040
  %v2468 = vshrl.u32 %v2467, 23
  %v2469 = vsub.s32 %v2468, 127
  %v2470 = vand.u32 2147483647, %v318
  %v2471 = vand.u32 %v2470, 8388607
  %v2472 = vor.u32 %v2471, 8388608
  %v2473 = vsub.s32 0, %v2472
  %v2474 = vadd.s32 %v2469, 1
  %vm2475 = vcmp.gt.s32.totalorder %v2474, 0
  %v2476 = vsel %vm2475, %v2474, 0
  %v2477 = vshrl.u32 %v2476, 5
  %v2478 = vand.u32 %v2476, 31
  %v2479 = vsub.s32 32, %v2478
  %v2480 = vshrl.u32 683565275, %v2479
  %v2481 = vshll.u32 683565275, %v2478
  %v2482 = vshrl.u32 2475754826, %v2479
  %v2483 = vor.u32 %v2481, %v2482
  %v2484 = vshll.u32 2475754826, %v2478
  %v2485 = vshrl.u32 2131351028, %v2479
  %v2486 = vor.u32 %v2484, %v2485
  %v2487 = vshll.u32 2131351028, %v2478
  %v2488 = vshrl.u32 2102212464, %v2479
  %v2489 = vor.u32 %v2487, %v2488
  %v2490 = vshll.u32 2102212464, %v2478
  %v2491 = vshrl.u32 920167782, %v2479
  %v2492 = vor.u32 %v2490, %v2491
  %v2493 = vshll.u32 920167782, %v2478
  %v2494 = vshrl.u32 1326507024, %v2479
  %v2495 = vor.u32 %v2493, %v2494
  %vm2496 = vcmp.lt.s32.totalorder %v2477, 1
  %vm2497 = vcmp.lt.s32.totalorder %v2477, 2
  %vm2498 = vcmp.lt.s32.totalorder %v2477, 3
  %vm2499 = vcmp.lt.s32.totalorder %v2477, 4
  %v2500 = vsel %vm2496, %v2480, %v2483
  %v2501 = vsel %vm2499, %v2489, 2102212464
  %v2502 = vsel %vm2498, %v2486, %v2501
  %v2503 = vsel %vm2497, %v2500, %v2502
  %v2504 = vsel %vm2496, %v2483, %v2486
  %v2505 = vsel %vm2499, %v2492, 920167782
  %v2506 = vsel %vm2498, %v2489, %v2505
  %v2507 = vsel %vm2497, %v2504, %v2506
  %v2508 = vsel %vm2496, %v2486, %v2489
  %v2509 = vsel %vm2499, %v2495, 1326507024
  %v2510 = vsel %vm2498, %v2492, %v2509
  %v2511 = vsel %vm2497, %v2508, %v2510
  %v2512 = vshll.u32 %v2472, 8
  %v2513 = vmul.u32.u64.compose %v2512, %v2511
  %v2514 = vextract.low.u32 %v2513
  %v2515 = vextract.high.u32 %v2513
  %v2516 = vmul.u32.u64.compose %v2512, %v2507
  %v2517 = vextract.low.u32 %v2516
  %v2518 = vextract.high.u32 %v2516
  %v2519 = vmul.u32 %v2512, %v2503
  %v2520 = vadd.s32 %v2515, %v2517
  %vm2521 = vc.u32 %v2515, %v2517
  %v2522 = vadd.s32 %v2518, 1
  %v2523 = vsel %vm2521, %v2522, %v2518
  %v2524 = vadd.s32 %v2519, %v2523
  %v2525 = vadd.s32 %v2524, 536870912
  %v2526 = vshrl.u32 %v2525, 30
  %v2527 = vshll.u32 %v2526, 30
  %v2528 = vsub.s32 %v2524, %v2527
  %vm2529 = vcmp.lt.s32.totalorder %v2528, 0
  %v2530 = vsub.s32 0, %v2528
  %v2531 = vsel %vm2529, %v2530, %v2528
  %v2532 = vclz %v2531
  %v2533 = vsub.s32 %v2532, 2
  %vm2534 = vcmp.gt.s32.totalorder 0, %v2533
  %v2535 = vsel %vm2534, 0, %v2533
  %v2536 = vsub.s32 32, %v2535
  %v2537 = vshll.u32 %v2528, %v2535
  %v2538 = vshrl.u32 %v2520, %v2536
  %v2539 = vor.u32 %v2537, %v2538
  %v2540 = vsub.s32 4294967266, %v2535
  %v2541 = vadd.s32 %v2540, 127
  %v2542 = vshll.u32 %v2541, 23
  %v2543 = vor.u32 4788187, %v2542
  %v2544 = vand.u32 2147483647, %v2543
  %v2546 = vcvt.s32.f32 %v2539
  %v2547 = vmul.f32 %v2546, %v2544
  %v2548 = vxor.u32 %v2547, 2147483648
  %v2549 = vsel %vm2466, %v2548, %v2547
  %v2550 = vsub.s32 4, %v2526
  %v2551 = vsel %vm2466, %v2550, %v2526
  %v2552 = vsel %vm2465, %v318, %v2549
  %v2553 = vsel %vm2465, 0, %v2551
  %v2554 = vcosq.f32.pop %v2552
  %v2555 = vsinq.f32.pop %v2552
  %vm2556 = vweird.f32 %v318
  %v2557 = vadd.s32 %v2553, 3
  %v2558 = vand.u32 %v2557, 3
  %vm2559 = vcmp.lt.s32.totalorder %v2558, 2
  %vm2560 = vcmp.eq.s32.totalorder %v2558, 0
  %v2561 = vxor.u32 %v2555, 2147483648
  %v2562 = vsel %vm2560, %v2554, %v2561
  %vm2563 = vcmp.eq.s32.totalorder %v2558, 2
  %v2564 = vxor.u32 %v2554, 2147483648
  %v2565 = vsel %vm2563, %v2564, %v2555
  %v2566 = vsel %vm2559, %v2562, %v2565
  %v2567 = vsel %vm2556, nan, %v2566
  %v2568 = vand.u32 2147483647, %v322
  %vm2569 = vcmp.le.f32.partialorder %v2568, 0.7853982
  %vm2570 = vcmp.lt.s32.totalorder %v322, 0
  %v2571 = vand.u32 %v322, 2139095040
  %v2572 = vshrl.u32 %v2571, 23
  %v2573 = vsub.s32 %v2572, 127
  %v2574 = vand.u32 2147483647, %v322
  %v2575 = vand.u32 %v2574, 8388607
  %v2576 = vor.u32 %v2575, 8388608
  %v2577 = vsub.s32 0, %v2576
  %v2578 = vadd.s32 %v2573, 1
  %vm2579 = vcmp.gt.s32.totalorder %v2578, 0
  %v2580 = vsel %vm2579, %v2578, 0
  %v2581 = vshrl.u32 %v2580, 5
  %v2582 = vand.u32 %v2580, 31
  %v2583 = vsub.s32 32, %v2582
  %v2584 = vshrl.u32 683565275, %v2583
  %v2585 = vshll.u32 683565275, %v2582
  %v2586 = vshrl.u32 2475754826, %v2583
  %v2587 = vor.u32 %v2585, %v2586
  %v2588 = vshll.u32 2475754826, %v2582
  %v2589 = vshrl.u32 2131351028, %v2583
  %v2590 = vor.u32 %v2588, %v2589
  %v2591 = vshll.u32 2131351028, %v2582
  %v2592 = vshrl.u32 2102212464, %v2583
  %v2593 = vor.u32 %v2591, %v2592
  %v2594 = vshll.u32 2102212464, %v2582
  %v2595 = vshrl.u32 920167782, %v2583
  %v2596 = vor.u32 %v2594, %v2595
  %v2597 = vshll.u32 920167782, %v2582
  %v2598 = vshrl.u32 1326507024, %v2583
  %v2599 = vor.u32 %v2597, %v2598
  %vm2600 = vcmp.lt.s32.totalorder %v2581, 1
  %vm2601 = vcmp.lt.s32.totalorder %v2581, 2
  %vm2602 = vcmp.lt.s32.totalorder %v2581, 3
  %vm2603 = vcmp.lt.s32.totalorder %v2581, 4
  %v2604 = vsel %vm2600, %v2584, %v2587
  %v2605 = vsel %vm2603, %v2593, 2102212464
  %v2606 = vsel %vm2602, %v2590, %v2605
  %v2607 = vsel %vm2601, %v2604, %v2606
  %v2608 = vsel %vm2600, %v2587, %v2590
  %v2609 = vsel %vm2603, %v2596, 920167782
  %v2610 = vsel %vm2602, %v2593, %v2609
  %v2611 = vsel %vm2601, %v2608, %v2610
  %v2612 = vsel %vm2600, %v2590, %v2593
  %v2613 = vsel %vm2603, %v2599, 1326507024
  %v2614 = vsel %vm2602, %v2596, %v2613
  %v2615 = vsel %vm2601, %v2612, %v2614
  %v2616 = vshll.u32 %v2576, 8
  %v2617 = vmul.u32.u64.compose %v2616, %v2615
  %v2618 = vextract.low.u32 %v2617
  %v2619 = vextract.high.u32 %v2617
  %v2620 = vmul.u32.u64.compose %v2616, %v2611
  %v2621 = vextract.low.u32 %v2620
  %v2622 = vextract.high.u32 %v2620
  %v2623 = vmul.u32 %v2616, %v2607
  %v2624 = vadd.s32 %v2619, %v2621
  %vm2625 = vc.u32 %v2619, %v2621
  %v2626 = vadd.s32 %v2622, 1
  %v2627 = vsel %vm2625, %v2626, %v2622
  %v2628 = vadd.s32 %v2623, %v2627
  %v2629 = vadd.s32 %v2628, 536870912
  %v2630 = vshrl.u32 %v2629, 30
  %v2631 = vshll.u32 %v2630, 30
  %v2632 = vsub.s32 %v2628, %v2631
  %vm2633 = vcmp.lt.s32.totalorder %v2632, 0
  %v2634 = vsub.s32 0, %v2632
  %v2635 = vsel %vm2633, %v2634, %v2632
  %v2636 = vclz %v2635
  %v2637 = vsub.s32 %v2636, 2
  %vm2638 = vcmp.gt.s32.totalorder 0, %v2637
  %v2639 = vsel %vm2638, 0, %v2637
  %v2640 = vsub.s32 32, %v2639
  %v2641 = vshll.u32 %v2632, %v2639
  %v2642 = vshrl.u32 %v2624, %v2640
  %v2643 = vor.u32 %v2641, %v2642
  %v2644 = vsub.s32 4294967266, %v2639
  %v2645 = vadd.s32 %v2644, 127
  %v2646 = vshll.u32 %v2645, 23
  %v2647 = vor.u32 4788187, %v2646
  %v2648 = vand.u32 2147483647, %v2647
  %v2650 = vcvt.s32.f32 %v2643
  %v2651 = vmul.f32 %v2650, %v2648
  %v2652 = vxor.u32 %v2651, 2147483648
  %v2653 = vsel %vm2570, %v2652, %v2651
  %v2654 = vsub.s32 4, %v2630
  %v2655 = vsel %vm2570, %v2654, %v2630
  %v2656 = vsel %vm2569, %v322, %v2653
  %v2657 = vsel %vm2569, 0, %v2655
  %v2658 = vcosq.f32.pop %v2656
  %v2659 = vsinq.f32.pop %v2656
  %vm2660 = vweird.f32 %v322
  %v2661 = vadd.s32 %v2657, 3
  %v2662 = vand.u32 %v2661, 3
  %vm2663 = vcmp.lt.s32.totalorder %v2662, 2
  %vm2664 = vcmp.eq.s32.totalorder %v2662, 0
  %v2665 = vxor.u32 %v2659, 2147483648
  %v2666 = vsel %vm2664, %v2658, %v2665
  %vm2667 = vcmp.eq.s32.totalorder %v2662, 2
  %v2668 = vxor.u32 %v2658, 2147483648
  %v2669 = vsel %vm2667, %v2668, %v2659
  %v2670 = vsel %vm2663, %v2666, %v2669
  %v2671 = vsel %vm2660, nan, %v2670
  %v2672 = vand.u32 2147483647, %v324
  %vm2673 = vcmp.le.f32.partialorder %v2672, 0.7853982
  %vm2674 = vcmp.lt.s32.totalorder %v324, 0
  %v2675 = vand.u32 %v324, 2139095040
  %v2676 = vshrl.u32 %v2675, 23
  %v2677 = vsub.s32 %v2676, 127
  %v2678 = vand.u32 2147483647, %v324
  %v2679 = vand.u32 %v2678, 8388607
  %v2680 = vor.u32 %v2679, 8388608
  %v2681 = vsub.s32 0, %v2680
  %v2682 = vadd.s32 %v2677, 1
  %vm2683 = vcmp.gt.s32.totalorder %v2682, 0
  %v2684 = vsel %vm2683, %v2682, 0
  %v2685 = vshrl.u32 %v2684, 5
  %v2686 = vand.u32 %v2684, 31
  %v2687 = vsub.s32 32, %v2686
  %v2688 = vshrl.u32 683565275, %v2687
  %v2689 = vshll.u32 683565275, %v2686
  %v2690 = vshrl.u32 2475754826, %v2687
  %v2691 = vor.u32 %v2689, %v2690
  %v2692 = vshll.u32 2475754826, %v2686
  %v2693 = vshrl.u32 2131351028, %v2687
  %v2694 = vor.u32 %v2692, %v2693
  %v2695 = vshll.u32 2131351028, %v2686
  %v2696 = vshrl.u32 2102212464, %v2687
  %v2697 = vor.u32 %v2695, %v2696
  %v2698 = vshll.u32 2102212464, %v2686
  %v2699 = vshrl.u32 920167782, %v2687
  %v2700 = vor.u32 %v2698, %v2699
  %v2701 = vshll.u32 920167782, %v2686
  %v2702 = vshrl.u32 1326507024, %v2687
  %v2703 = vor.u32 %v2701, %v2702
  %vm2704 = vcmp.lt.s32.totalorder %v2685, 1
  %vm2705 = vcmp.lt.s32.totalorder %v2685, 2
  %vm2706 = vcmp.lt.s32.totalorder %v2685, 3
  %vm2707 = vcmp.lt.s32.totalorder %v2685, 4
  %v2708 = vsel %vm2704, %v2688, %v2691
  %v2709 = vsel %vm2707, %v2697, 2102212464
  %v2710 = vsel %vm2706, %v2694, %v2709
  %v2711 = vsel %vm2705, %v2708, %v2710
  %v2712 = vsel %vm2704, %v2691, %v2694
  %v2713 = vsel %vm2707, %v2700, 920167782
  %v2714 = vsel %vm2706, %v2697, %v2713
  %v2715 = vsel %vm2705, %v2712, %v2714
  %v2716 = vsel %vm2704, %v2694, %v2697
  %v2717 = vsel %vm2707, %v2703, 1326507024
  %v2718 = vsel %vm2706, %v2700, %v2717
  %v2719 = vsel %vm2705, %v2716, %v2718
  %v2720 = vshll.u32 %v2680, 8
  %v2721 = vmul.u32.u64.compose %v2720, %v2719
  %v2722 = vextract.low.u32 %v2721
  %v2723 = vextract.high.u32 %v2721
  %v2724 = vmul.u32.u64.compose %v2720, %v2715
  %v2725 = vextract.low.u32 %v2724
  %v2726 = vextract.high.u32 %v2724
  %v2727 = vmul.u32 %v2720, %v2711
  %v2728 = vadd.s32 %v2723, %v2725
  %vm2729 = vc.u32 %v2723, %v2725
  %v2730 = vadd.s32 %v2726, 1
  %v2731 = vsel %vm2729, %v2730, %v2726
  %v2732 = vadd.s32 %v2727, %v2731
  %v2733 = vadd.s32 %v2732, 536870912
  %v2734 = vshrl.u32 %v2733, 30
  %v2735 = vshll.u32 %v2734, 30
  %v2736 = vsub.s32 %v2732, %v2735
  %vm2737 = vcmp.lt.s32.totalorder %v2736, 0
  %v2738 = vsub.s32 0, %v2736
  %v2739 = vsel %vm2737, %v2738, %v2736
  %v2740 = vclz %v2739
  %v2741 = vsub.s32 %v2740, 2
  %vm2742 = vcmp.gt.s32.totalorder 0, %v2741
  %v2743 = vsel %vm2742, 0, %v2741
  %v2744 = vsub.s32 32, %v2743
  %v2745 = vshll.u32 %v2736, %v2743
  %v2746 = vshrl.u32 %v2728, %v2744
  %v2747 = vor.u32 %v2745, %v2746
  %v2748 = vsub.s32 4294967266, %v2743
  %v2749 = vadd.s32 %v2748, 127
  %v2750 = vshll.u32 %v2749, 23
  %v2751 = vor.u32 4788187, %v2750
  %v2752 = vand.u32 2147483647, %v2751
  %v2754 = vcvt.s32.f32 %v2747
  %v2755 = vmul.f32 %v2754, %v2752
  %v2756 = vxor.u32 %v2755, 2147483648
  %v2757 = vsel %vm2674, %v2756, %v2755
  %v2758 = vsub.s32 4, %v2734
  %v2759 = vsel %vm2674, %v2758, %v2734
  %v2760 = vsel %vm2673, %v324, %v2757
  %v2761 = vsel %vm2673, 0, %v2759
  %v2762 = vcosq.f32.pop %v2760
  %v2763 = vsinq.f32.pop %v2760
  %vm2764 = vweird.f32 %v324
  %v2765 = vadd.s32 %v2761, 3
  %v2766 = vand.u32 %v2765, 3
  %vm2767 = vcmp.lt.s32.totalorder %v2766, 2
  %vm2768 = vcmp.eq.s32.totalorder %v2766, 0
  %v2769 = vxor.u32 %v2763, 2147483648
  %v2770 = vsel %vm2768, %v2762, %v2769
  %vm2771 = vcmp.eq.s32.totalorder %v2766, 2
  %v2772 = vxor.u32 %v2762, 2147483648
  %v2773 = vsel %vm2771, %v2772, %v2763
  %v2774 = vsel %vm2767, %v2770, %v2773
  %v2775 = vsel %vm2764, nan, %v2774
  %v2776 = vand.u32 2147483647, %v328
  %vm2777 = vcmp.le.f32.partialorder %v2776, 0.7853982
  %vm2778 = vcmp.lt.s32.totalorder %v328, 0
  %v2779 = vand.u32 %v328, 2139095040
  %v2780 = vshrl.u32 %v2779, 23
  %v2781 = vsub.s32 %v2780, 127
  %v2782 = vand.u32 2147483647, %v328
  %v2783 = vand.u32 %v2782, 8388607
  %v2784 = vor.u32 %v2783, 8388608
  %v2785 = vsub.s32 0, %v2784
  %v2786 = vadd.s32 %v2781, 1
  %vm2787 = vcmp.gt.s32.totalorder %v2786, 0
  %v2788 = vsel %vm2787, %v2786, 0
  %v2789 = vshrl.u32 %v2788, 5
  %v2790 = vand.u32 %v2788, 31
  %v2791 = vsub.s32 32, %v2790
  %v2792 = vshrl.u32 683565275, %v2791
  %v2793 = vshll.u32 683565275, %v2790
  %v2794 = vshrl.u32 2475754826, %v2791
  %v2795 = vor.u32 %v2793, %v2794
  %v2796 = vshll.u32 2475754826, %v2790
  %v2797 = vshrl.u32 2131351028, %v2791
  %v2798 = vor.u32 %v2796, %v2797
  %v2799 = vshll.u32 2131351028, %v2790
  %v2800 = vshrl.u32 2102212464, %v2791
  %v2801 = vor.u32 %v2799, %v2800
  %v2802 = vshll.u32 2102212464, %v2790
  %v2803 = vshrl.u32 920167782, %v2791
  %v2804 = vor.u32 %v2802, %v2803
  %v2805 = vshll.u32 920167782, %v2790
  %v2806 = vshrl.u32 1326507024, %v2791
  %v2807 = vor.u32 %v2805, %v2806
  %vm2808 = vcmp.lt.s32.totalorder %v2789, 1
  %vm2809 = vcmp.lt.s32.totalorder %v2789, 2
  %vm2810 = vcmp.lt.s32.totalorder %v2789, 3
  %vm2811 = vcmp.lt.s32.totalorder %v2789, 4
  %v2812 = vsel %vm2808, %v2792, %v2795
  %v2813 = vsel %vm2811, %v2801, 2102212464
  %v2814 = vsel %vm2810, %v2798, %v2813
  %v2815 = vsel %vm2809, %v2812, %v2814
  %v2816 = vsel %vm2808, %v2795, %v2798
  %v2817 = vsel %vm2811, %v2804, 920167782
  %v2818 = vsel %vm2810, %v2801, %v2817
  %v2819 = vsel %vm2809, %v2816, %v2818
  %v2820 = vsel %vm2808, %v2798, %v2801
  %v2821 = vsel %vm2811, %v2807, 1326507024
  %v2822 = vsel %vm2810, %v2804, %v2821
  %v2823 = vsel %vm2809, %v2820, %v2822
  %v2824 = vshll.u32 %v2784, 8
  %v2825 = vmul.u32.u64.compose %v2824, %v2823
  %v2826 = vextract.low.u32 %v2825
  %v2827 = vextract.high.u32 %v2825
  %v2828 = vmul.u32.u64.compose %v2824, %v2819
  %v2829 = vextract.low.u32 %v2828
  %v2830 = vextract.high.u32 %v2828
  %v2831 = vmul.u32 %v2824, %v2815
  %v2832 = vadd.s32 %v2827, %v2829
  %vm2833 = vc.u32 %v2827, %v2829
  %v2834 = vadd.s32 %v2830, 1
  %v2835 = vsel %vm2833, %v2834, %v2830
  %v2836 = vadd.s32 %v2831, %v2835
  %v2837 = vadd.s32 %v2836, 536870912
  %v2838 = vshrl.u32 %v2837, 30
  %v2839 = vshll.u32 %v2838, 30
  %v2840 = vsub.s32 %v2836, %v2839
  %vm2841 = vcmp.lt.s32.totalorder %v2840, 0
  %v2842 = vsub.s32 0, %v2840
  %v2843 = vsel %vm2841, %v2842, %v2840
  %v2844 = vclz %v2843
  %v2845 = vsub.s32 %v2844, 2
  %vm2846 = vcmp.gt.s32.totalorder 0, %v2845
  %v2847 = vsel %vm2846, 0, %v2845
  %v2848 = vsub.s32 32, %v2847
  %v2849 = vshll.u32 %v2840, %v2847
  %v2850 = vshrl.u32 %v2832, %v2848
  %v2851 = vor.u32 %v2849, %v2850
  %v2852 = vsub.s32 4294967266, %v2847
  %v2853 = vadd.s32 %v2852, 127
  %v2854 = vshll.u32 %v2853, 23
  %v2855 = vor.u32 4788187, %v2854
  %v2856 = vand.u32 2147483647, %v2855
  %v2858 = vcvt.s32.f32 %v2851
  %v2859 = vmul.f32 %v2858, %v2856
  %v2860 = vxor.u32 %v2859, 2147483648
  %v2861 = vsel %vm2778, %v2860, %v2859
  %v2862 = vsub.s32 4, %v2838
  %v2863 = vsel %vm2778, %v2862, %v2838
  %v2864 = vsel %vm2777, %v328, %v2861
  %v2865 = vsel %vm2777, 0, %v2863
  %v2866 = vcosq.f32.pop %v2864
  %v2867 = vsinq.f32.pop %v2864
  %vm2868 = vweird.f32 %v328
  %v2869 = vadd.s32 %v2865, 3
  %v2870 = vand.u32 %v2869, 3
  %vm2871 = vcmp.lt.s32.totalorder %v2870, 2
  %vm2872 = vcmp.eq.s32.totalorder %v2870, 0
  %v2873 = vxor.u32 %v2867, 2147483648
  %v2874 = vsel %vm2872, %v2866, %v2873
  %vm2875 = vcmp.eq.s32.totalorder %v2870, 2
  %v2876 = vxor.u32 %v2866, 2147483648
  %v2877 = vsel %vm2875, %v2876, %v2867
  %v2878 = vsel %vm2871, %v2874, %v2877
  %v2879 = vsel %vm2868, nan, %v2878
  %v2880 = vand.u32 2147483647, %v330
  %vm2881 = vcmp.le.f32.partialorder %v2880, 0.7853982
  %vm2882 = vcmp.lt.s32.totalorder %v330, 0
  %v2883 = vand.u32 %v330, 2139095040
  %v2884 = vshrl.u32 %v2883, 23
  %v2885 = vsub.s32 %v2884, 127
  %v2886 = vand.u32 2147483647, %v330
  %v2887 = vand.u32 %v2886, 8388607
  %v2888 = vor.u32 %v2887, 8388608
  %v2889 = vsub.s32 0, %v2888
  %v2890 = vadd.s32 %v2885, 1
  %vm2891 = vcmp.gt.s32.totalorder %v2890, 0
  %v2892 = vsel %vm2891, %v2890, 0
  %v2893 = vshrl.u32 %v2892, 5
  %v2894 = vand.u32 %v2892, 31
  %v2895 = vsub.s32 32, %v2894
  %v2896 = vshrl.u32 683565275, %v2895
  %v2897 = vshll.u32 683565275, %v2894
  %v2898 = vshrl.u32 2475754826, %v2895
  %v2899 = vor.u32 %v2897, %v2898
  %v2900 = vshll.u32 2475754826, %v2894
  %v2901 = vshrl.u32 2131351028, %v2895
  %v2902 = vor.u32 %v2900, %v2901
  %v2903 = vshll.u32 2131351028, %v2894
  %v2904 = vshrl.u32 2102212464, %v2895
  %v2905 = vor.u32 %v2903, %v2904
  %v2906 = vshll.u32 2102212464, %v2894
  %v2907 = vshrl.u32 920167782, %v2895
  %v2908 = vor.u32 %v2906, %v2907
  %v2909 = vshll.u32 920167782, %v2894
  %v2910 = vshrl.u32 1326507024, %v2895
  %v2911 = vor.u32 %v2909, %v2910
  %vm2912 = vcmp.lt.s32.totalorder %v2893, 1
  %vm2913 = vcmp.lt.s32.totalorder %v2893, 2
  %vm2914 = vcmp.lt.s32.totalorder %v2893, 3
  %vm2915 = vcmp.lt.s32.totalorder %v2893, 4
  %v2916 = vsel %vm2912, %v2896, %v2899
  %v2917 = vsel %vm2915, %v2905, 2102212464
  %v2918 = vsel %vm2914, %v2902, %v2917
  %v2919 = vsel %vm2913, %v2916, %v2918
  %v2920 = vsel %vm2912, %v2899, %v2902
  %v2921 = vsel %vm2915, %v2908, 920167782
  %v2922 = vsel %vm2914, %v2905, %v2921
  %v2923 = vsel %vm2913, %v2920, %v2922
  %v2924 = vsel %vm2912, %v2902, %v2905
  %v2925 = vsel %vm2915, %v2911, 1326507024
  %v2926 = vsel %vm2914, %v2908, %v2925
  %v2927 = vsel %vm2913, %v2924, %v2926
  %v2928 = vshll.u32 %v2888, 8
  %v2929 = vmul.u32.u64.compose %v2928, %v2927
  %v2930 = vextract.low.u32 %v2929
  %v2931 = vextract.high.u32 %v2929
  %v2932 = vmul.u32.u64.compose %v2928, %v2923
  %v2933 = vextract.low.u32 %v2932
  %v2934 = vextract.high.u32 %v2932
  %v2935 = vmul.u32 %v2928, %v2919
  %v2936 = vadd.s32 %v2931, %v2933
  %vm2937 = vc.u32 %v2931, %v2933
  %v2938 = vadd.s32 %v2934, 1
  %v2939 = vsel %vm2937, %v2938, %v2934
  %v2940 = vadd.s32 %v2935, %v2939
  %v2941 = vadd.s32 %v2940, 536870912
  %v2942 = vshrl.u32 %v2941, 30
  %v2943 = vshll.u32 %v2942, 30
  %v2944 = vsub.s32 %v2940, %v2943
  %vm2945 = vcmp.lt.s32.totalorder %v2944, 0
  %v2946 = vsub.s32 0, %v2944
  %v2947 = vsel %vm2945, %v2946, %v2944
  %v2948 = vclz %v2947
  %v2949 = vsub.s32 %v2948, 2
  %vm2950 = vcmp.gt.s32.totalorder 0, %v2949
  %v2951 = vsel %vm2950, 0, %v2949
  %v2952 = vsub.s32 32, %v2951
  %v2953 = vshll.u32 %v2944, %v2951
  %v2954 = vshrl.u32 %v2936, %v2952
  %v2955 = vor.u32 %v2953, %v2954
  %v2956 = vsub.s32 4294967266, %v2951
  %v2957 = vadd.s32 %v2956, 127
  %v2958 = vshll.u32 %v2957, 23
  %v2959 = vor.u32 4788187, %v2958
  %v2960 = vand.u32 2147483647, %v2959
  %v2962 = vcvt.s32.f32 %v2955
  %v2963 = vmul.f32 %v2962, %v2960
  %v2964 = vxor.u32 %v2963, 2147483648
  %v2965 = vsel %vm2882, %v2964, %v2963
  %v2966 = vsub.s32 4, %v2942
  %v2967 = vsel %vm2882, %v2966, %v2942
  %v2968 = vsel %vm2881, %v330, %v2965
  %v2969 = vsel %vm2881, 0, %v2967
  %v2970 = vcosq.f32.pop %v2968
  %v2971 = vsinq.f32.pop %v2968
  %vm2972 = vweird.f32 %v330
  %v2973 = vadd.s32 %v2969, 3
  %v2974 = vand.u32 %v2973, 3
  %vm2975 = vcmp.lt.s32.totalorder %v2974, 2
  %vm2976 = vcmp.eq.s32.totalorder %v2974, 0
  %v2977 = vxor.u32 %v2971, 2147483648
  %v2978 = vsel %vm2976, %v2970, %v2977
  %vm2979 = vcmp.eq.s32.totalorder %v2974, 2
  %v2980 = vxor.u32 %v2970, 2147483648
  %v2981 = vsel %vm2979, %v2980, %v2971
  %v2982 = vsel %vm2975, %v2978, %v2981
  %v2983 = vsel %vm2972, nan, %v2982
  %v2984 = vand.u32 2147483647, %v334
  %vm2985 = vcmp.le.f32.partialorder %v2984, 0.7853982
  %vm2986 = vcmp.lt.s32.totalorder %v334, 0
  %v2987 = vand.u32 %v334, 2139095040
  %v2988 = vshrl.u32 %v2987, 23
  %v2989 = vsub.s32 %v2988, 127
  %v2990 = vand.u32 2147483647, %v334
  %v2991 = vand.u32 %v2990, 8388607
  %v2992 = vor.u32 %v2991, 8388608
  %v2993 = vsub.s32 0, %v2992
  %v2994 = vadd.s32 %v2989, 1
  %vm2995 = vcmp.gt.s32.totalorder %v2994, 0
  %v2996 = vsel %vm2995, %v2994, 0
  %v2997 = vshrl.u32 %v2996, 5
  %v2998 = vand.u32 %v2996, 31
  %v2999 = vsub.s32 32, %v2998
  %v3000 = vshrl.u32 683565275, %v2999
  %v3001 = vshll.u32 683565275, %v2998
  %v3002 = vshrl.u32 2475754826, %v2999
  %v3003 = vor.u32 %v3001, %v3002
  %v3004 = vshll.u32 2475754826, %v2998
  %v3005 = vshrl.u32 2131351028, %v2999
  %v3006 = vor.u32 %v3004, %v3005
  %v3007 = vshll.u32 2131351028, %v2998
  %v3008 = vshrl.u32 2102212464, %v2999
  %v3009 = vor.u32 %v3007, %v3008
  %v3010 = vshll.u32 2102212464, %v2998
  %v3011 = vshrl.u32 920167782, %v2999
  %v3012 = vor.u32 %v3010, %v3011
  %v3013 = vshll.u32 920167782, %v2998
  %v3014 = vshrl.u32 1326507024, %v2999
  %v3015 = vor.u32 %v3013, %v3014
  %vm3016 = vcmp.lt.s32.totalorder %v2997, 1
  %vm3017 = vcmp.lt.s32.totalorder %v2997, 2
  %vm3018 = vcmp.lt.s32.totalorder %v2997, 3
  %vm3019 = vcmp.lt.s32.totalorder %v2997, 4
  %v3020 = vsel %vm3016, %v3000, %v3003
  %v3021 = vsel %vm3019, %v3009, 2102212464
  %v3022 = vsel %vm3018, %v3006, %v3021
  %v3023 = vsel %vm3017, %v3020, %v3022
  %v3024 = vsel %vm3016, %v3003, %v3006
  %v3025 = vsel %vm3019, %v3012, 920167782
  %v3026 = vsel %vm3018, %v3009, %v3025
  %v3027 = vsel %vm3017, %v3024, %v3026
  %v3028 = vsel %vm3016, %v3006, %v3009
  %v3029 = vsel %vm3019, %v3015, 1326507024
  %v3030 = vsel %vm3018, %v3012, %v3029
  %v3031 = vsel %vm3017, %v3028, %v3030
  %v3032 = vshll.u32 %v2992, 8
  %v3033 = vmul.u32.u64.compose %v3032, %v3031
  %v3034 = vextract.low.u32 %v3033
  %v3035 = vextract.high.u32 %v3033
  %v3036 = vmul.u32.u64.compose %v3032, %v3027
  %v3037 = vextract.low.u32 %v3036
  %v3038 = vextract.high.u32 %v3036
  %v3039 = vmul.u32 %v3032, %v3023
  %v3040 = vadd.s32 %v3035, %v3037
  %vm3041 = vc.u32 %v3035, %v3037
  %v3042 = vadd.s32 %v3038, 1
  %v3043 = vsel %vm3041, %v3042, %v3038
  %v3044 = vadd.s32 %v3039, %v3043
  %v3045 = vadd.s32 %v3044, 536870912
  %v3046 = vshrl.u32 %v3045, 30
  %v3047 = vshll.u32 %v3046, 30
  %v3048 = vsub.s32 %v3044, %v3047
  %vm3049 = vcmp.lt.s32.totalorder %v3048, 0
  %v3050 = vsub.s32 0, %v3048
  %v3051 = vsel %vm3049, %v3050, %v3048
  %v3052 = vclz %v3051
  %v3053 = vsub.s32 %v3052, 2
  %vm3054 = vcmp.gt.s32.totalorder 0, %v3053
  %v3055 = vsel %vm3054, 0, %v3053
  %v3056 = vsub.s32 32, %v3055
  %v3057 = vshll.u32 %v3048, %v3055
  %v3058 = vshrl.u32 %v3040, %v3056
  %v3059 = vor.u32 %v3057, %v3058
  %v3060 = vsub.s32 4294967266, %v3055
  %v3061 = vadd.s32 %v3060, 127
  %v3062 = vshll.u32 %v3061, 23
  %v3063 = vor.u32 4788187, %v3062
  %v3064 = vand.u32 2147483647, %v3063
  %v3066 = vcvt.s32.f32 %v3059
  %v3067 = vmul.f32 %v3066, %v3064
  %v3068 = vxor.u32 %v3067, 2147483648
  %v3069 = vsel %vm2986, %v3068, %v3067
  %v3070 = vsub.s32 4, %v3046
  %v3071 = vsel %vm2986, %v3070, %v3046
  %v3072 = vsel %vm2985, %v334, %v3069
  %v3073 = vsel %vm2985, 0, %v3071
  %v3074 = vcosq.f32.pop %v3072
  %v3075 = vsinq.f32.pop %v3072
  %vm3076 = vweird.f32 %v334
  %v3077 = vadd.s32 %v3073, 3
  %v3078 = vand.u32 %v3077, 3
  %vm3079 = vcmp.lt.s32.totalorder %v3078, 2
  %vm3080 = vcmp.eq.s32.totalorder %v3078, 0
  %v3081 = vxor.u32 %v3075, 2147483648
  %v3082 = vsel %vm3080, %v3074, %v3081
  %vm3083 = vcmp.eq.s32.totalorder %v3078, 2
  %v3084 = vxor.u32 %v3074, 2147483648
  %v3085 = vsel %vm3083, %v3084, %v3075
  %v3086 = vsel %vm3079, %v3082, %v3085
  %v3087 = vsel %vm3076, nan, %v3086
  %v3088 = vand.u32 2147483647, %v336
  %vm3089 = vcmp.le.f32.partialorder %v3088, 0.7853982
  %vm3090 = vcmp.lt.s32.totalorder %v336, 0
  %v3091 = vand.u32 %v336, 2139095040
  %v3092 = vshrl.u32 %v3091, 23
  %v3093 = vsub.s32 %v3092, 127
  %v3094 = vand.u32 2147483647, %v336
  %v3095 = vand.u32 %v3094, 8388607
  %v3096 = vor.u32 %v3095, 8388608
  %v3097 = vsub.s32 0, %v3096
  %v3098 = vadd.s32 %v3093, 1
  %vm3099 = vcmp.gt.s32.totalorder %v3098, 0
  %v3100 = vsel %vm3099, %v3098, 0
  %v3101 = vshrl.u32 %v3100, 5
  %v3102 = vand.u32 %v3100, 31
  %v3103 = vsub.s32 32, %v3102
  %v3104 = vshrl.u32 683565275, %v3103
  %v3105 = vshll.u32 683565275, %v3102
  %v3106 = vshrl.u32 2475754826, %v3103
  %v3107 = vor.u32 %v3105, %v3106
  %v3108 = vshll.u32 2475754826, %v3102
  %v3109 = vshrl.u32 2131351028, %v3103
  %v3110 = vor.u32 %v3108, %v3109
  %v3111 = vshll.u32 2131351028, %v3102
  %v3112 = vshrl.u32 2102212464, %v3103
  %v3113 = vor.u32 %v3111, %v3112
  %v3114 = vshll.u32 2102212464, %v3102
  %v3115 = vshrl.u32 920167782, %v3103
  %v3116 = vor.u32 %v3114, %v3115
  %v3117 = vshll.u32 920167782, %v3102
  %v3118 = vshrl.u32 1326507024, %v3103
  %v3119 = vor.u32 %v3117, %v3118
  %vm3120 = vcmp.lt.s32.totalorder %v3101, 1
  %vm3121 = vcmp.lt.s32.totalorder %v3101, 2
  %vm3122 = vcmp.lt.s32.totalorder %v3101, 3
  %vm3123 = vcmp.lt.s32.totalorder %v3101, 4
  %v3124 = vsel %vm3120, %v3104, %v3107
  %v3125 = vsel %vm3123, %v3113, 2102212464
  %v3126 = vsel %vm3122, %v3110, %v3125
  %v3127 = vsel %vm3121, %v3124, %v3126
  %v3128 = vsel %vm3120, %v3107, %v3110
  %v3129 = vsel %vm3123, %v3116, 920167782
  %v3130 = vsel %vm3122, %v3113, %v3129
  %v3131 = vsel %vm3121, %v3128, %v3130
  %v3132 = vsel %vm3120, %v3110, %v3113
  %v3133 = vsel %vm3123, %v3119, 1326507024
  %v3134 = vsel %vm3122, %v3116, %v3133
  %v3135 = vsel %vm3121, %v3132, %v3134
  %v3136 = vshll.u32 %v3096, 8
  %v3137 = vmul.u32.u64.compose %v3136, %v3135
  %v3138 = vextract.low.u32 %v3137
  %v3139 = vextract.high.u32 %v3137
  %v3140 = vmul.u32.u64.compose %v3136, %v3131
  %v3141 = vextract.low.u32 %v3140
  %v3142 = vextract.high.u32 %v3140
  %v3143 = vmul.u32 %v3136, %v3127
  %v3144 = vadd.s32 %v3139, %v3141
  %vm3145 = vc.u32 %v3139, %v3141
  %v3146 = vadd.s32 %v3142, 1
  %v3147 = vsel %vm3145, %v3146, %v3142
  %v3148 = vadd.s32 %v3143, %v3147
  %v3149 = vadd.s32 %v3148, 536870912
  %v3150 = vshrl.u32 %v3149, 30
  %v3151 = vshll.u32 %v3150, 30
  %v3152 = vsub.s32 %v3148, %v3151
  %vm3153 = vcmp.lt.s32.totalorder %v3152, 0
  %v3154 = vsub.s32 0, %v3152
  %v3155 = vsel %vm3153, %v3154, %v3152
  %v3156 = vclz %v3155
  %v3157 = vsub.s32 %v3156, 2
  %vm3158 = vcmp.gt.s32.totalorder 0, %v3157
  %v3159 = vsel %vm3158, 0, %v3157
  %v3160 = vsub.s32 32, %v3159
  %v3161 = vshll.u32 %v3152, %v3159
  %v3162 = vshrl.u32 %v3144, %v3160
  %v3163 = vor.u32 %v3161, %v3162
  %v3164 = vsub.s32 4294967266, %v3159
  %v3165 = vadd.s32 %v3164, 127
  %v3166 = vshll.u32 %v3165, 23
  %v3167 = vor.u32 4788187, %v3166
  %v3168 = vand.u32 2147483647, %v3167
  %v3170 = vcvt.s32.f32 %v3163
  %v3171 = vmul.f32 %v3170, %v3168
  %v3172 = vxor.u32 %v3171, 2147483648
  %v3173 = vsel %vm3090, %v3172, %v3171
  %v3174 = vsub.s32 4, %v3150
  %v3175 = vsel %vm3090, %v3174, %v3150
  %v3176 = vsel %vm3089, %v336, %v3173
  %v3177 = vsel %vm3089, 0, %v3175
  %v3178 = vcosq.f32.pop %v3176
  %v3179 = vsinq.f32.pop %v3176
  %vm3180 = vweird.f32 %v336
  %v3181 = vadd.s32 %v3177, 3
  %v3182 = vand.u32 %v3181, 3
  %vm3183 = vcmp.lt.s32.totalorder %v3182, 2
  %vm3184 = vcmp.eq.s32.totalorder %v3182, 0
  %v3185 = vxor.u32 %v3179, 2147483648
  %v3186 = vsel %vm3184, %v3178, %v3185
  %vm3187 = vcmp.eq.s32.totalorder %v3182, 2
  %v3188 = vxor.u32 %v3178, 2147483648
  %v3189 = vsel %vm3187, %v3188, %v3179
  %v3190 = vsel %vm3183, %v3186, %v3189
  %v3191 = vsel %vm3180, nan, %v3190
  %v3192 = vand.u32 2147483647, %v340
  %vm3193 = vcmp.le.f32.partialorder %v3192, 0.7853982
  %vm3194 = vcmp.lt.s32.totalorder %v340, 0
  %v3195 = vand.u32 %v340, 2139095040
  %v3196 = vshrl.u32 %v3195, 23
  %v3197 = vsub.s32 %v3196, 127
  %v3198 = vand.u32 2147483647, %v340
  %v3199 = vand.u32 %v3198, 8388607
  %v3200 = vor.u32 %v3199, 8388608
  %v3201 = vsub.s32 0, %v3200
  %v3202 = vadd.s32 %v3197, 1
  %vm3203 = vcmp.gt.s32.totalorder %v3202, 0
  %v3204 = vsel %vm3203, %v3202, 0
  %v3205 = vshrl.u32 %v3204, 5
  %v3206 = vand.u32 %v3204, 31
  %v3207 = vsub.s32 32, %v3206
  %v3208 = vshrl.u32 683565275, %v3207
  %v3209 = vshll.u32 683565275, %v3206
  %v3210 = vshrl.u32 2475754826, %v3207
  %v3211 = vor.u32 %v3209, %v3210
  %v3212 = vshll.u32 2475754826, %v3206
  %v3213 = vshrl.u32 2131351028, %v3207
  %v3214 = vor.u32 %v3212, %v3213
  %v3215 = vshll.u32 2131351028, %v3206
  %v3216 = vshrl.u32 2102212464, %v3207
  %v3217 = vor.u32 %v3215, %v3216
  %v3218 = vshll.u32 2102212464, %v3206
  %v3219 = vshrl.u32 920167782, %v3207
  %v3220 = vor.u32 %v3218, %v3219
  %v3221 = vshll.u32 920167782, %v3206
  %v3222 = vshrl.u32 1326507024, %v3207
  %v3223 = vor.u32 %v3221, %v3222
  %vm3224 = vcmp.lt.s32.totalorder %v3205, 1
  %vm3225 = vcmp.lt.s32.totalorder %v3205, 2
  %vm3226 = vcmp.lt.s32.totalorder %v3205, 3
  %vm3227 = vcmp.lt.s32.totalorder %v3205, 4
  %v3228 = vsel %vm3224, %v3208, %v3211
  %v3229 = vsel %vm3227, %v3217, 2102212464
  %v3230 = vsel %vm3226, %v3214, %v3229
  %v3231 = vsel %vm3225, %v3228, %v3230
  %v3232 = vsel %vm3224, %v3211, %v3214
  %v3233 = vsel %vm3227, %v3220, 920167782
  %v3234 = vsel %vm3226, %v3217, %v3233
  %v3235 = vsel %vm3225, %v3232, %v3234
  %v3236 = vsel %vm3224, %v3214, %v3217
  %v3237 = vsel %vm3227, %v3223, 1326507024
  %v3238 = vsel %vm3226, %v3220, %v3237
  %v3239 = vsel %vm3225, %v3236, %v3238
  %v3240 = vshll.u32 %v3200, 8
  %v3241 = vmul.u32.u64.compose %v3240, %v3239
  %v3242 = vextract.low.u32 %v3241
  %v3243 = vextract.high.u32 %v3241
  %v3244 = vmul.u32.u64.compose %v3240, %v3235
  %v3245 = vextract.low.u32 %v3244
  %v3246 = vextract.high.u32 %v3244
  %v3247 = vmul.u32 %v3240, %v3231
  %v3248 = vadd.s32 %v3243, %v3245
  %vm3249 = vc.u32 %v3243, %v3245
  %v3250 = vadd.s32 %v3246, 1
  %v3251 = vsel %vm3249, %v3250, %v3246
  %v3252 = vadd.s32 %v3247, %v3251
  %v3253 = vadd.s32 %v3252, 536870912
  %v3254 = vshrl.u32 %v3253, 30
  %v3255 = vshll.u32 %v3254, 30
  %v3256 = vsub.s32 %v3252, %v3255
  %vm3257 = vcmp.lt.s32.totalorder %v3256, 0
  %v3258 = vsub.s32 0, %v3256
  %v3259 = vsel %vm3257, %v3258, %v3256
  %v3260 = vclz %v3259
  %v3261 = vsub.s32 %v3260, 2
  %vm3262 = vcmp.gt.s32.totalorder 0, %v3261
  %v3263 = vsel %vm3262, 0, %v3261
  %v3264 = vsub.s32 32, %v3263
  %v3265 = vshll.u32 %v3256, %v3263
  %v3266 = vshrl.u32 %v3248, %v3264
  %v3267 = vor.u32 %v3265, %v3266
  %v3268 = vsub.s32 4294967266, %v3263
  %v3269 = vadd.s32 %v3268, 127
  %v3270 = vshll.u32 %v3269, 23
  %v3271 = vor.u32 4788187, %v3270
  %v3272 = vand.u32 2147483647, %v3271
  %v3274 = vcvt.s32.f32 %v3267
  %v3275 = vmul.f32 %v3274, %v3272
  %v3276 = vxor.u32 %v3275, 2147483648
  %v3277 = vsel %vm3194, %v3276, %v3275
  %v3278 = vsub.s32 4, %v3254
  %v3279 = vsel %vm3194, %v3278, %v3254
  %v3280 = vsel %vm3193, %v340, %v3277
  %v3281 = vsel %vm3193, 0, %v3279
  %v3282 = vcosq.f32.pop %v3280
  %v3283 = vsinq.f32.pop %v3280
  %vm3284 = vweird.f32 %v340
  %v3285 = vadd.s32 %v3281, 3
  %v3286 = vand.u32 %v3285, 3
  %vm3287 = vcmp.lt.s32.totalorder %v3286, 2
  %vm3288 = vcmp.eq.s32.totalorder %v3286, 0
  %v3289 = vxor.u32 %v3283, 2147483648
  %v3290 = vsel %vm3288, %v3282, %v3289
  %vm3291 = vcmp.eq.s32.totalorder %v3286, 2
  %v3292 = vxor.u32 %v3282, 2147483648
  %v3293 = vsel %vm3291, %v3292, %v3283
  %v3294 = vsel %vm3287, %v3290, %v3293
  %v3295 = vsel %vm3284, nan, %v3294
  %v3296 = vand.u32 2147483647, %v342
  %vm3297 = vcmp.le.f32.partialorder %v3296, 0.7853982
  %vm3298 = vcmp.lt.s32.totalorder %v342, 0
  %v3299 = vand.u32 %v342, 2139095040
  %v3300 = vshrl.u32 %v3299, 23
  %v3301 = vsub.s32 %v3300, 127
  %v3302 = vand.u32 2147483647, %v342
  %v3303 = vand.u32 %v3302, 8388607
  %v3304 = vor.u32 %v3303, 8388608
  %v3305 = vsub.s32 0, %v3304
  %v3306 = vadd.s32 %v3301, 1
  %vm3307 = vcmp.gt.s32.totalorder %v3306, 0
  %v3308 = vsel %vm3307, %v3306, 0
  %v3309 = vshrl.u32 %v3308, 5
  %v3310 = vand.u32 %v3308, 31
  %v3311 = vsub.s32 32, %v3310
  %v3312 = vshrl.u32 683565275, %v3311
  %v3313 = vshll.u32 683565275, %v3310
  %v3314 = vshrl.u32 2475754826, %v3311
  %v3315 = vor.u32 %v3313, %v3314
  %v3316 = vshll.u32 2475754826, %v3310
  %v3317 = vshrl.u32 2131351028, %v3311
  %v3318 = vor.u32 %v3316, %v3317
  %v3319 = vshll.u32 2131351028, %v3310
  %v3320 = vshrl.u32 2102212464, %v3311
  %v3321 = vor.u32 %v3319, %v3320
  %v3322 = vshll.u32 2102212464, %v3310
  %v3323 = vshrl.u32 920167782, %v3311
  %v3324 = vor.u32 %v3322, %v3323
  %v3325 = vshll.u32 920167782, %v3310
  %v3326 = vshrl.u32 1326507024, %v3311
  %v3327 = vor.u32 %v3325, %v3326
  %vm3328 = vcmp.lt.s32.totalorder %v3309, 1
  %vm3329 = vcmp.lt.s32.totalorder %v3309, 2
  %vm3330 = vcmp.lt.s32.totalorder %v3309, 3
  %vm3331 = vcmp.lt.s32.totalorder %v3309, 4
  %v3332 = vsel %vm3328, %v3312, %v3315
  %v3333 = vsel %vm3331, %v3321, 2102212464
  %v3334 = vsel %vm3330, %v3318, %v3333
  %v3335 = vsel %vm3329, %v3332, %v3334
  %v3336 = vsel %vm3328, %v3315, %v3318
  %v3337 = vsel %vm3331, %v3324, 920167782
  %v3338 = vsel %vm3330, %v3321, %v3337
  %v3339 = vsel %vm3329, %v3336, %v3338
  %v3340 = vsel %vm3328, %v3318, %v3321
  %v3341 = vsel %vm3331, %v3327, 1326507024
  %v3342 = vsel %vm3330, %v3324, %v3341
  %v3343 = vsel %vm3329, %v3340, %v3342
  %v3344 = vshll.u32 %v3304, 8
  %v3345 = vmul.u32.u64.compose %v3344, %v3343
  %v3346 = vextract.low.u32 %v3345
  %v3347 = vextract.high.u32 %v3345
  %v3348 = vmul.u32.u64.compose %v3344, %v3339
  %v3349 = vextract.low.u32 %v3348
  %v3350 = vextract.high.u32 %v3348
  %v3351 = vmul.u32 %v3344, %v3335
  %v3352 = vadd.s32 %v3347, %v3349
  %vm3353 = vc.u32 %v3347, %v3349
  %v3354 = vadd.s32 %v3350, 1
  %v3355 = vsel %vm3353, %v3354, %v3350
  %v3356 = vadd.s32 %v3351, %v3355
  %v3357 = vadd.s32 %v3356, 536870912
  %v3358 = vshrl.u32 %v3357, 30
  %v3359 = vshll.u32 %v3358, 30
  %v3360 = vsub.s32 %v3356, %v3359
  %vm3361 = vcmp.lt.s32.totalorder %v3360, 0
  %v3362 = vsub.s32 0, %v3360
  %v3363 = vsel %vm3361, %v3362, %v3360
  %v3364 = vclz %v3363
  %v3365 = vsub.s32 %v3364, 2
  %vm3366 = vcmp.gt.s32.totalorder 0, %v3365
  %v3367 = vsel %vm3366, 0, %v3365
  %v3368 = vsub.s32 32, %v3367
  %v3369 = vshll.u32 %v3360, %v3367
  %v3370 = vshrl.u32 %v3352, %v3368
  %v3371 = vor.u32 %v3369, %v3370
  %v3372 = vsub.s32 4294967266, %v3367
  %v3373 = vadd.s32 %v3372, 127
  %v3374 = vshll.u32 %v3373, 23
  %v3375 = vor.u32 4788187, %v3374
  %v3376 = vand.u32 2147483647, %v3375
  %v3378 = vcvt.s32.f32 %v3371
  %v3379 = vmul.f32 %v3378, %v3376
  %v3380 = vxor.u32 %v3379, 2147483648
  %v3381 = vsel %vm3298, %v3380, %v3379
  %v3382 = vsub.s32 4, %v3358
  %v3383 = vsel %vm3298, %v3382, %v3358
  %v3384 = vsel %vm3297, %v342, %v3381
  %v3385 = vsel %vm3297, 0, %v3383
  %v3386 = vcosq.f32.pop %v3384
  %v3387 = vsinq.f32.pop %v3384
  %vm3388 = vweird.f32 %v342
  %v3389 = vadd.s32 %v3385, 3
  %v3390 = vand.u32 %v3389, 3
  %vm3391 = vcmp.lt.s32.totalorder %v3390, 2
  %vm3392 = vcmp.eq.s32.totalorder %v3390, 0
  %v3393 = vxor.u32 %v3387, 2147483648
  %v3394 = vsel %vm3392, %v3386, %v3393
  %vm3395 = vcmp.eq.s32.totalorder %v3390, 2
  %v3396 = vxor.u32 %v3386, 2147483648
  %v3397 = vsel %vm3395, %v3396, %v3387
  %v3398 = vsel %vm3391, %v3394, %v3397
  %v3399 = vsel %vm3388, nan, %v3398
  %v3400 = vand.u32 2147483647, %v346
  %vm3401 = vcmp.le.f32.partialorder %v3400, 0.7853982
  %vm3402 = vcmp.lt.s32.totalorder %v346, 0
  %v3403 = vand.u32 %v346, 2139095040
  %v3404 = vshrl.u32 %v3403, 23
  %v3405 = vsub.s32 %v3404, 127
  %v3406 = vand.u32 2147483647, %v346
  %v3407 = vand.u32 %v3406, 8388607
  %v3408 = vor.u32 %v3407, 8388608
  %v3409 = vsub.s32 0, %v3408
  %v3410 = vadd.s32 %v3405, 1
  %vm3411 = vcmp.gt.s32.totalorder %v3410, 0
  %v3412 = vsel %vm3411, %v3410, 0
  %v3413 = vshrl.u32 %v3412, 5
  %v3414 = vand.u32 %v3412, 31
  %v3415 = vsub.s32 32, %v3414
  %v3416 = vshrl.u32 683565275, %v3415
  %v3417 = vshll.u32 683565275, %v3414
  %v3418 = vshrl.u32 2475754826, %v3415
  %v3419 = vor.u32 %v3417, %v3418
  %v3420 = vshll.u32 2475754826, %v3414
  %v3421 = vshrl.u32 2131351028, %v3415
  %v3422 = vor.u32 %v3420, %v3421
  %v3423 = vshll.u32 2131351028, %v3414
  %v3424 = vshrl.u32 2102212464, %v3415
  %v3425 = vor.u32 %v3423, %v3424
  %v3426 = vshll.u32 2102212464, %v3414
  %v3427 = vshrl.u32 920167782, %v3415
  %v3428 = vor.u32 %v3426, %v3427
  %v3429 = vshll.u32 920167782, %v3414
  %v3430 = vshrl.u32 1326507024, %v3415
  %v3431 = vor.u32 %v3429, %v3430
  %vm3432 = vcmp.lt.s32.totalorder %v3413, 1
  %vm3433 = vcmp.lt.s32.totalorder %v3413, 2
  %vm3434 = vcmp.lt.s32.totalorder %v3413, 3
  %vm3435 = vcmp.lt.s32.totalorder %v3413, 4
  %v3436 = vsel %vm3432, %v3416, %v3419
  %v3437 = vsel %vm3435, %v3425, 2102212464
  %v3438 = vsel %vm3434, %v3422, %v3437
  %v3439 = vsel %vm3433, %v3436, %v3438
  %v3440 = vsel %vm3432, %v3419, %v3422
  %v3441 = vsel %vm3435, %v3428, 920167782
  %v3442 = vsel %vm3434, %v3425, %v3441
  %v3443 = vsel %vm3433, %v3440, %v3442
  %v3444 = vsel %vm3432, %v3422, %v3425
  %v3445 = vsel %vm3435, %v3431, 1326507024
  %v3446 = vsel %vm3434, %v3428, %v3445
  %v3447 = vsel %vm3433, %v3444, %v3446
  %v3448 = vshll.u32 %v3408, 8
  %v3449 = vmul.u32.u64.compose %v3448, %v3447
  %v3450 = vextract.low.u32 %v3449
  %v3451 = vextract.high.u32 %v3449
  %v3452 = vmul.u32.u64.compose %v3448, %v3443
  %v3453 = vextract.low.u32 %v3452
  %v3454 = vextract.high.u32 %v3452
  %v3455 = vmul.u32 %v3448, %v3439
  %v3456 = vadd.s32 %v3451, %v3453
  %vm3457 = vc.u32 %v3451, %v3453
  %v3458 = vadd.s32 %v3454, 1
  %v3459 = vsel %vm3457, %v3458, %v3454
  %v3460 = vadd.s32 %v3455, %v3459
  %v3461 = vadd.s32 %v3460, 536870912
  %v3462 = vshrl.u32 %v3461, 30
  %v3463 = vshll.u32 %v3462, 30
  %v3464 = vsub.s32 %v3460, %v3463
  %vm3465 = vcmp.lt.s32.totalorder %v3464, 0
  %v3466 = vsub.s32 0, %v3464
  %v3467 = vsel %vm3465, %v3466, %v3464
  %v3468 = vclz %v3467
  %v3469 = vsub.s32 %v3468, 2
  %vm3470 = vcmp.gt.s32.totalorder 0, %v3469
  %v3471 = vsel %vm3470, 0, %v3469
  %v3472 = vsub.s32 32, %v3471
  %v3473 = vshll.u32 %v3464, %v3471
  %v3474 = vshrl.u32 %v3456, %v3472
  %v3475 = vor.u32 %v3473, %v3474
  %v3476 = vsub.s32 4294967266, %v3471
  %v3477 = vadd.s32 %v3476, 127
  %v3478 = vshll.u32 %v3477, 23
  %v3479 = vor.u32 4788187, %v3478
  %v3480 = vand.u32 2147483647, %v3479
  %v3482 = vcvt.s32.f32 %v3475
  %v3483 = vmul.f32 %v3482, %v3480
  %v3484 = vxor.u32 %v3483, 2147483648
  %v3485 = vsel %vm3402, %v3484, %v3483
  %v3486 = vsub.s32 4, %v3462
  %v3487 = vsel %vm3402, %v3486, %v3462
  %v3488 = vsel %vm3401, %v346, %v3485
  %v3489 = vsel %vm3401, 0, %v3487
  %v3490 = vcosq.f32.pop %v3488
  %v3491 = vsinq.f32.pop %v3488
  %vm3492 = vweird.f32 %v346
  %v3493 = vadd.s32 %v3489, 3
  %v3494 = vand.u32 %v3493, 3
  %vm3495 = vcmp.lt.s32.totalorder %v3494, 2
  %vm3496 = vcmp.eq.s32.totalorder %v3494, 0
  %v3497 = vxor.u32 %v3491, 2147483648
  %v3498 = vsel %vm3496, %v3490, %v3497
  %vm3499 = vcmp.eq.s32.totalorder %v3494, 2
  %v3500 = vxor.u32 %v3490, 2147483648
  %v3501 = vsel %vm3499, %v3500, %v3491
  %v3502 = vsel %vm3495, %v3498, %v3501
  %v3503 = vsel %vm3492, nan, %v3502
  %v3504 = vand.u32 2147483647, %v348
  %vm3505 = vcmp.le.f32.partialorder %v3504, 0.7853982
  %vm3506 = vcmp.lt.s32.totalorder %v348, 0
  %v3507 = vand.u32 %v348, 2139095040
  %v3508 = vshrl.u32 %v3507, 23
  %v3509 = vsub.s32 %v3508, 127
  %v3510 = vand.u32 2147483647, %v348
  %v3511 = vand.u32 %v3510, 8388607
  %v3512 = vor.u32 %v3511, 8388608
  %v3513 = vsub.s32 0, %v3512
  %v3514 = vadd.s32 %v3509, 1
  %vm3515 = vcmp.gt.s32.totalorder %v3514, 0
  %v3516 = vsel %vm3515, %v3514, 0
  %v3517 = vshrl.u32 %v3516, 5
  %v3518 = vand.u32 %v3516, 31
  %v3519 = vsub.s32 32, %v3518
  %v3520 = vshrl.u32 683565275, %v3519
  %v3521 = vshll.u32 683565275, %v3518
  %v3522 = vshrl.u32 2475754826, %v3519
  %v3523 = vor.u32 %v3521, %v3522
  %v3524 = vshll.u32 2475754826, %v3518
  %v3525 = vshrl.u32 2131351028, %v3519
  %v3526 = vor.u32 %v3524, %v3525
  %v3527 = vshll.u32 2131351028, %v3518
  %v3528 = vshrl.u32 2102212464, %v3519
  %v3529 = vor.u32 %v3527, %v3528
  %v3530 = vshll.u32 2102212464, %v3518
  %v3531 = vshrl.u32 920167782, %v3519
  %v3532 = vor.u32 %v3530, %v3531
  %v3533 = vshll.u32 920167782, %v3518
  %v3534 = vshrl.u32 1326507024, %v3519
  %v3535 = vor.u32 %v3533, %v3534
  %vm3536 = vcmp.lt.s32.totalorder %v3517, 1
  %vm3537 = vcmp.lt.s32.totalorder %v3517, 2
  %vm3538 = vcmp.lt.s32.totalorder %v3517, 3
  %vm3539 = vcmp.lt.s32.totalorder %v3517, 4
  %v3540 = vsel %vm3536, %v3520, %v3523
  %v3541 = vsel %vm3539, %v3529, 2102212464
  %v3542 = vsel %vm3538, %v3526, %v3541
  %v3543 = vsel %vm3537, %v3540, %v3542
  %v3544 = vsel %vm3536, %v3523, %v3526
  %v3545 = vsel %vm3539, %v3532, 920167782
  %v3546 = vsel %vm3538, %v3529, %v3545
  %v3547 = vsel %vm3537, %v3544, %v3546
  %v3548 = vsel %vm3536, %v3526, %v3529
  %v3549 = vsel %vm3539, %v3535, 1326507024
  %v3550 = vsel %vm3538, %v3532, %v3549
  %v3551 = vsel %vm3537, %v3548, %v3550
  %v3552 = vshll.u32 %v3512, 8
  %v3553 = vmul.u32.u64.compose %v3552, %v3551
  %v3554 = vextract.low.u32 %v3553
  %v3555 = vextract.high.u32 %v3553
  %v3556 = vmul.u32.u64.compose %v3552, %v3547
  %v3557 = vextract.low.u32 %v3556
  %v3558 = vextract.high.u32 %v3556
  %v3559 = vmul.u32 %v3552, %v3543
  %v3560 = vadd.s32 %v3555, %v3557
  %vm3561 = vc.u32 %v3555, %v3557
  %v3562 = vadd.s32 %v3558, 1
  %v3563 = vsel %vm3561, %v3562, %v3558
  %v3564 = vadd.s32 %v3559, %v3563
  %v3565 = vadd.s32 %v3564, 536870912
  %v3566 = vshrl.u32 %v3565, 30
  %v3567 = vshll.u32 %v3566, 30
  %v3568 = vsub.s32 %v3564, %v3567
  %vm3569 = vcmp.lt.s32.totalorder %v3568, 0
  %v3570 = vsub.s32 0, %v3568
  %v3571 = vsel %vm3569, %v3570, %v3568
  %v3572 = vclz %v3571
  %v3573 = vsub.s32 %v3572, 2
  %vm3574 = vcmp.gt.s32.totalorder 0, %v3573
  %v3575 = vsel %vm3574, 0, %v3573
  %v3576 = vsub.s32 32, %v3575
  %v3577 = vshll.u32 %v3568, %v3575
  %v3578 = vshrl.u32 %v3560, %v3576
  %v3579 = vor.u32 %v3577, %v3578
  %v3580 = vsub.s32 4294967266, %v3575
  %v3581 = vadd.s32 %v3580, 127
  %v3582 = vshll.u32 %v3581, 23
  %v3583 = vor.u32 4788187, %v3582
  %v3584 = vand.u32 2147483647, %v3583
  %v3586 = vcvt.s32.f32 %v3579
  %v3587 = vmul.f32 %v3586, %v3584
  %v3588 = vxor.u32 %v3587, 2147483648
  %v3589 = vsel %vm3506, %v3588, %v3587
  %v3590 = vsub.s32 4, %v3566
  %v3591 = vsel %vm3506, %v3590, %v3566
  %v3592 = vsel %vm3505, %v348, %v3589
  %v3593 = vsel %vm3505, 0, %v3591
  %v3594 = vcosq.f32.pop %v3592
  %v3595 = vsinq.f32.pop %v3592
  %vm3596 = vweird.f32 %v348
  %v3597 = vadd.s32 %v3593, 3
  %v3598 = vand.u32 %v3597, 3
  %vm3599 = vcmp.lt.s32.totalorder %v3598, 2
  %vm3600 = vcmp.eq.s32.totalorder %v3598, 0
  %v3601 = vxor.u32 %v3595, 2147483648
  %v3602 = vsel %vm3600, %v3594, %v3601
  %vm3603 = vcmp.eq.s32.totalorder %v3598, 2
  %v3604 = vxor.u32 %v3594, 2147483648
  %v3605 = vsel %vm3603, %v3604, %v3595
  %v3606 = vsel %vm3599, %v3602, %v3605
  %v3607 = vsel %vm3596, nan, %v3606
  %v3608 = vand.u32 2147483647, %v352
  %vm3609 = vcmp.le.f32.partialorder %v3608, 0.7853982
  %vm3610 = vcmp.lt.s32.totalorder %v352, 0
  %v3611 = vand.u32 %v352, 2139095040
  %v3612 = vshrl.u32 %v3611, 23
  %v3613 = vsub.s32 %v3612, 127
  %v3614 = vand.u32 2147483647, %v352
  %v3615 = vand.u32 %v3614, 8388607
  %v3616 = vor.u32 %v3615, 8388608
  %v3617 = vsub.s32 0, %v3616
  %v3618 = vadd.s32 %v3613, 1
  %vm3619 = vcmp.gt.s32.totalorder %v3618, 0
  %v3620 = vsel %vm3619, %v3618, 0
  %v3621 = vshrl.u32 %v3620, 5
  %v3622 = vand.u32 %v3620, 31
  %v3623 = vsub.s32 32, %v3622
  %v3624 = vshrl.u32 683565275, %v3623
  %v3625 = vshll.u32 683565275, %v3622
  %v3626 = vshrl.u32 2475754826, %v3623
  %v3627 = vor.u32 %v3625, %v3626
  %v3628 = vshll.u32 2475754826, %v3622
  %v3629 = vshrl.u32 2131351028, %v3623
  %v3630 = vor.u32 %v3628, %v3629
  %v3631 = vshll.u32 2131351028, %v3622
  %v3632 = vshrl.u32 2102212464, %v3623
  %v3633 = vor.u32 %v3631, %v3632
  %v3634 = vshll.u32 2102212464, %v3622
  %v3635 = vshrl.u32 920167782, %v3623
  %v3636 = vor.u32 %v3634, %v3635
  %v3637 = vshll.u32 920167782, %v3622
  %v3638 = vshrl.u32 1326507024, %v3623
  %v3639 = vor.u32 %v3637, %v3638
  %vm3640 = vcmp.lt.s32.totalorder %v3621, 1
  %vm3641 = vcmp.lt.s32.totalorder %v3621, 2
  %vm3642 = vcmp.lt.s32.totalorder %v3621, 3
  %vm3643 = vcmp.lt.s32.totalorder %v3621, 4
  %v3644 = vsel %vm3640, %v3624, %v3627
  %v3645 = vsel %vm3643, %v3633, 2102212464
  %v3646 = vsel %vm3642, %v3630, %v3645
  %v3647 = vsel %vm3641, %v3644, %v3646
  %v3648 = vsel %vm3640, %v3627, %v3630
  %v3649 = vsel %vm3643, %v3636, 920167782
  %v3650 = vsel %vm3642, %v3633, %v3649
  %v3651 = vsel %vm3641, %v3648, %v3650
  %v3652 = vsel %vm3640, %v3630, %v3633
  %v3653 = vsel %vm3643, %v3639, 1326507024
  %v3654 = vsel %vm3642, %v3636, %v3653
  %v3655 = vsel %vm3641, %v3652, %v3654
  %v3656 = vshll.u32 %v3616, 8
  %v3657 = vmul.u32.u64.compose %v3656, %v3655
  %v3658 = vextract.low.u32 %v3657
  %v3659 = vextract.high.u32 %v3657
  %v3660 = vmul.u32.u64.compose %v3656, %v3651
  %v3661 = vextract.low.u32 %v3660
  %v3662 = vextract.high.u32 %v3660
  %v3663 = vmul.u32 %v3656, %v3647
  %v3664 = vadd.s32 %v3659, %v3661
  %vm3665 = vc.u32 %v3659, %v3661
  %v3666 = vadd.s32 %v3662, 1
  %v3667 = vsel %vm3665, %v3666, %v3662
  %v3668 = vadd.s32 %v3663, %v3667
  %v3669 = vadd.s32 %v3668, 536870912
  %v3670 = vshrl.u32 %v3669, 30
  %v3671 = vshll.u32 %v3670, 30
  %v3672 = vsub.s32 %v3668, %v3671
  %vm3673 = vcmp.lt.s32.totalorder %v3672, 0
  %v3674 = vsub.s32 0, %v3672
  %v3675 = vsel %vm3673, %v3674, %v3672
  %v3676 = vclz %v3675
  %v3677 = vsub.s32 %v3676, 2
  %vm3678 = vcmp.gt.s32.totalorder 0, %v3677
  %v3679 = vsel %vm3678, 0, %v3677
  %v3680 = vsub.s32 32, %v3679
  %v3681 = vshll.u32 %v3672, %v3679
  %v3682 = vshrl.u32 %v3664, %v3680
  %v3683 = vor.u32 %v3681, %v3682
  %v3684 = vsub.s32 4294967266, %v3679
  %v3685 = vadd.s32 %v3684, 127
  %v3686 = vshll.u32 %v3685, 23
  %v3687 = vor.u32 4788187, %v3686
  %v3688 = vand.u32 2147483647, %v3687
  %v3690 = vcvt.s32.f32 %v3683
  %v3691 = vmul.f32 %v3690, %v3688
  %v3692 = vxor.u32 %v3691, 2147483648
  %v3693 = vsel %vm3610, %v3692, %v3691
  %v3694 = vsub.s32 4, %v3670
  %v3695 = vsel %vm3610, %v3694, %v3670
  %v3696 = vsel %vm3609, %v352, %v3693
  %v3697 = vsel %vm3609, 0, %v3695
  %v3698 = vcosq.f32.pop %v3696
  %v3699 = vsinq.f32.pop %v3696
  %vm3700 = vweird.f32 %v352
  %v3701 = vadd.s32 %v3697, 3
  %v3702 = vand.u32 %v3701, 3
  %vm3703 = vcmp.lt.s32.totalorder %v3702, 2
  %vm3704 = vcmp.eq.s32.totalorder %v3702, 0
  %v3705 = vxor.u32 %v3699, 2147483648
  %v3706 = vsel %vm3704, %v3698, %v3705
  %vm3707 = vcmp.eq.s32.totalorder %v3702, 2
  %v3708 = vxor.u32 %v3698, 2147483648
  %v3709 = vsel %vm3707, %v3708, %v3699
  %v3710 = vsel %vm3703, %v3706, %v3709
  %v3711 = vsel %vm3700, nan, %v3710
  %v3712 = vand.u32 2147483647, %v354
  %vm3713 = vcmp.le.f32.partialorder %v3712, 0.7853982
  %vm3714 = vcmp.lt.s32.totalorder %v354, 0
  %v3715 = vand.u32 %v354, 2139095040
  %v3716 = vshrl.u32 %v3715, 23
  %v3717 = vsub.s32 %v3716, 127
  %v3718 = vand.u32 2147483647, %v354
  %v3719 = vand.u32 %v3718, 8388607
  %v3720 = vor.u32 %v3719, 8388608
  %v3721 = vsub.s32 0, %v3720
  %v3722 = vadd.s32 %v3717, 1
  %vm3723 = vcmp.gt.s32.totalorder %v3722, 0
  %v3724 = vsel %vm3723, %v3722, 0
  %v3725 = vshrl.u32 %v3724, 5
  %v3726 = vand.u32 %v3724, 31
  %v3727 = vsub.s32 32, %v3726
  %v3728 = vshrl.u32 683565275, %v3727
  %v3729 = vshll.u32 683565275, %v3726
  %v3730 = vshrl.u32 2475754826, %v3727
  %v3731 = vor.u32 %v3729, %v3730
  %v3732 = vshll.u32 2475754826, %v3726
  %v3733 = vshrl.u32 2131351028, %v3727
  %v3734 = vor.u32 %v3732, %v3733
  %v3735 = vshll.u32 2131351028, %v3726
  %v3736 = vshrl.u32 2102212464, %v3727
  %v3737 = vor.u32 %v3735, %v3736
  %v3738 = vshll.u32 2102212464, %v3726
  %v3739 = vshrl.u32 920167782, %v3727
  %v3740 = vor.u32 %v3738, %v3739
  %v3741 = vshll.u32 920167782, %v3726
  %v3742 = vshrl.u32 1326507024, %v3727
  %v3743 = vor.u32 %v3741, %v3742
  %vm3744 = vcmp.lt.s32.totalorder %v3725, 1
  %vm3745 = vcmp.lt.s32.totalorder %v3725, 2
  %vm3746 = vcmp.lt.s32.totalorder %v3725, 3
  %vm3747 = vcmp.lt.s32.totalorder %v3725, 4
  %v3748 = vsel %vm3744, %v3728, %v3731
  %v3749 = vsel %vm3747, %v3737, 2102212464
  %v3750 = vsel %vm3746, %v3734, %v3749
  %v3751 = vsel %vm3745, %v3748, %v3750
  %v3752 = vsel %vm3744, %v3731, %v3734
  %v3753 = vsel %vm3747, %v3740, 920167782
  %v3754 = vsel %vm3746, %v3737, %v3753
  %v3755 = vsel %vm3745, %v3752, %v3754
  %v3756 = vsel %vm3744, %v3734, %v3737
  %v3757 = vsel %vm3747, %v3743, 1326507024
  %v3758 = vsel %vm3746, %v3740, %v3757
  %v3759 = vsel %vm3745, %v3756, %v3758
  %v3760 = vshll.u32 %v3720, 8
  %v3761 = vmul.u32.u64.compose %v3760, %v3759
  %v3762 = vextract.low.u32 %v3761
  %v3763 = vextract.high.u32 %v3761
  %v3764 = vmul.u32.u64.compose %v3760, %v3755
  %v3765 = vextract.low.u32 %v3764
  %v3766 = vextract.high.u32 %v3764
  %v3767 = vmul.u32 %v3760, %v3751
  %v3768 = vadd.s32 %v3763, %v3765
  %vm3769 = vc.u32 %v3763, %v3765
  %v3770 = vadd.s32 %v3766, 1
  %v3771 = vsel %vm3769, %v3770, %v3766
  %v3772 = vadd.s32 %v3767, %v3771
  %v3773 = vadd.s32 %v3772, 536870912
  %v3774 = vshrl.u32 %v3773, 30
  %v3775 = vshll.u32 %v3774, 30
  %v3776 = vsub.s32 %v3772, %v3775
  %vm3777 = vcmp.lt.s32.totalorder %v3776, 0
  %v3778 = vsub.s32 0, %v3776
  %v3779 = vsel %vm3777, %v3778, %v3776
  %v3780 = vclz %v3779
  %v3781 = vsub.s32 %v3780, 2
  %vm3782 = vcmp.gt.s32.totalorder 0, %v3781
  %v3783 = vsel %vm3782, 0, %v3781
  %v3784 = vsub.s32 32, %v3783
  %v3785 = vshll.u32 %v3776, %v3783
  %v3786 = vshrl.u32 %v3768, %v3784
  %v3787 = vor.u32 %v3785, %v3786
  %v3788 = vsub.s32 4294967266, %v3783
  %v3789 = vadd.s32 %v3788, 127
  %v3790 = vshll.u32 %v3789, 23
  %v3791 = vor.u32 4788187, %v3790
  %v3792 = vand.u32 2147483647, %v3791
  %v3794 = vcvt.s32.f32 %v3787
  %v3795 = vmul.f32 %v3794, %v3792
  %v3796 = vxor.u32 %v3795, 2147483648
  %v3797 = vsel %vm3714, %v3796, %v3795
  %v3798 = vsub.s32 4, %v3774
  %v3799 = vsel %vm3714, %v3798, %v3774
  %v3800 = vsel %vm3713, %v354, %v3797
  %v3801 = vsel %vm3713, 0, %v3799
  %v3802 = vcosq.f32.pop %v3800
  %v3803 = vsinq.f32.pop %v3800
  %vm3804 = vweird.f32 %v354
  %v3805 = vadd.s32 %v3801, 3
  %v3806 = vand.u32 %v3805, 3
  %vm3807 = vcmp.lt.s32.totalorder %v3806, 2
  %vm3808 = vcmp.eq.s32.totalorder %v3806, 0
  %v3809 = vxor.u32 %v3803, 2147483648
  %v3810 = vsel %vm3808, %v3802, %v3809
  %vm3811 = vcmp.eq.s32.totalorder %v3806, 2
  %v3812 = vxor.u32 %v3802, 2147483648
  %v3813 = vsel %vm3811, %v3812, %v3803
  %v3814 = vsel %vm3807, %v3810, %v3813
  %v3815 = vsel %vm3804, nan, %v3814
  %v3816 = vand.u32 2147483647, %v358
  %vm3817 = vcmp.le.f32.partialorder %v3816, 0.7853982
  %vm3818 = vcmp.lt.s32.totalorder %v358, 0
  %v3819 = vand.u32 %v358, 2139095040
  %v3820 = vshrl.u32 %v3819, 23
  %v3821 = vsub.s32 %v3820, 127
  %v3822 = vand.u32 2147483647, %v358
  %v3823 = vand.u32 %v3822, 8388607
  %v3824 = vor.u32 %v3823, 8388608
  %v3825 = vsub.s32 0, %v3824
  %v3826 = vadd.s32 %v3821, 1
  %vm3827 = vcmp.gt.s32.totalorder %v3826, 0
  %v3828 = vsel %vm3827, %v3826, 0
  %v3829 = vshrl.u32 %v3828, 5
  %v3830 = vand.u32 %v3828, 31
  %v3831 = vsub.s32 32, %v3830
  %v3832 = vshrl.u32 683565275, %v3831
  %v3833 = vshll.u32 683565275, %v3830
  %v3834 = vshrl.u32 2475754826, %v3831
  %v3835 = vor.u32 %v3833, %v3834
  %v3836 = vshll.u32 2475754826, %v3830
  %v3837 = vshrl.u32 2131351028, %v3831
  %v3838 = vor.u32 %v3836, %v3837
  %v3839 = vshll.u32 2131351028, %v3830
  %v3840 = vshrl.u32 2102212464, %v3831
  %v3841 = vor.u32 %v3839, %v3840
  %v3842 = vshll.u32 2102212464, %v3830
  %v3843 = vshrl.u32 920167782, %v3831
  %v3844 = vor.u32 %v3842, %v3843
  %v3845 = vshll.u32 920167782, %v3830
  %v3846 = vshrl.u32 1326507024, %v3831
  %v3847 = vor.u32 %v3845, %v3846
  %vm3848 = vcmp.lt.s32.totalorder %v3829, 1
  %vm3849 = vcmp.lt.s32.totalorder %v3829, 2
  %vm3850 = vcmp.lt.s32.totalorder %v3829, 3
  %vm3851 = vcmp.lt.s32.totalorder %v3829, 4
  %v3852 = vsel %vm3848, %v3832, %v3835
  %v3853 = vsel %vm3851, %v3841, 2102212464
  %v3854 = vsel %vm3850, %v3838, %v3853
  %v3855 = vsel %vm3849, %v3852, %v3854
  %v3856 = vsel %vm3848, %v3835, %v3838
  %v3857 = vsel %vm3851, %v3844, 920167782
  %v3858 = vsel %vm3850, %v3841, %v3857
  %v3859 = vsel %vm3849, %v3856, %v3858
  %v3860 = vsel %vm3848, %v3838, %v3841
  %v3861 = vsel %vm3851, %v3847, 1326507024
  %v3862 = vsel %vm3850, %v3844, %v3861
  %v3863 = vsel %vm3849, %v3860, %v3862
  %v3864 = vshll.u32 %v3824, 8
  %v3865 = vmul.u32.u64.compose %v3864, %v3863
  %v3866 = vextract.low.u32 %v3865
  %v3867 = vextract.high.u32 %v3865
  %v3868 = vmul.u32.u64.compose %v3864, %v3859
  %v3869 = vextract.low.u32 %v3868
  %v3870 = vextract.high.u32 %v3868
  %v3871 = vmul.u32 %v3864, %v3855
  %v3872 = vadd.s32 %v3867, %v3869
  %vm3873 = vc.u32 %v3867, %v3869
  %v3874 = vadd.s32 %v3870, 1
  %v3875 = vsel %vm3873, %v3874, %v3870
  %v3876 = vadd.s32 %v3871, %v3875
  %v3877 = vadd.s32 %v3876, 536870912
  %v3878 = vshrl.u32 %v3877, 30
  %v3879 = vshll.u32 %v3878, 30
  %v3880 = vsub.s32 %v3876, %v3879
  %vm3881 = vcmp.lt.s32.totalorder %v3880, 0
  %v3882 = vsub.s32 0, %v3880
  %v3883 = vsel %vm3881, %v3882, %v3880
  %v3884 = vclz %v3883
  %v3885 = vsub.s32 %v3884, 2
  %vm3886 = vcmp.gt.s32.totalorder 0, %v3885
  %v3887 = vsel %vm3886, 0, %v3885
  %v3888 = vsub.s32 32, %v3887
  %v3889 = vshll.u32 %v3880, %v3887
  %v3890 = vshrl.u32 %v3872, %v3888
  %v3891 = vor.u32 %v3889, %v3890
  %v3892 = vsub.s32 4294967266, %v3887
  %v3893 = vadd.s32 %v3892, 127
  %v3894 = vshll.u32 %v3893, 23
  %v3895 = vor.u32 4788187, %v3894
  %v3896 = vand.u32 2147483647, %v3895
  %v3898 = vcvt.s32.f32 %v3891
  %v3899 = vmul.f32 %v3898, %v3896
  %v3900 = vxor.u32 %v3899, 2147483648
  %v3901 = vsel %vm3818, %v3900, %v3899
  %v3902 = vsub.s32 4, %v3878
  %v3903 = vsel %vm3818, %v3902, %v3878
  %v3904 = vsel %vm3817, %v358, %v3901
  %v3905 = vsel %vm3817, 0, %v3903
  %v3906 = vcosq.f32.pop %v3904
  %v3907 = vsinq.f32.pop %v3904
  %vm3908 = vweird.f32 %v358
  %v3909 = vadd.s32 %v3905, 3
  %v3910 = vand.u32 %v3909, 3
  %vm3911 = vcmp.lt.s32.totalorder %v3910, 2
  %vm3912 = vcmp.eq.s32.totalorder %v3910, 0
  %v3913 = vxor.u32 %v3907, 2147483648
  %v3914 = vsel %vm3912, %v3906, %v3913
  %vm3915 = vcmp.eq.s32.totalorder %v3910, 2
  %v3916 = vxor.u32 %v3906, 2147483648
  %v3917 = vsel %vm3915, %v3916, %v3907
  %v3918 = vsel %vm3911, %v3914, %v3917
  %v3919 = vsel %vm3908, nan, %v3918
  %v3920 = vand.u32 2147483647, %v360
  %vm3921 = vcmp.le.f32.partialorder %v3920, 0.7853982
  %vm3922 = vcmp.lt.s32.totalorder %v360, 0
  %v3923 = vand.u32 %v360, 2139095040
  %v3924 = vshrl.u32 %v3923, 23
  %v3925 = vsub.s32 %v3924, 127
  %v3926 = vand.u32 2147483647, %v360
  %v3927 = vand.u32 %v3926, 8388607
  %v3928 = vor.u32 %v3927, 8388608
  %v3929 = vsub.s32 0, %v3928
  %v3930 = vadd.s32 %v3925, 1
  %vm3931 = vcmp.gt.s32.totalorder %v3930, 0
  %v3932 = vsel %vm3931, %v3930, 0
  %v3933 = vshrl.u32 %v3932, 5
  %v3934 = vand.u32 %v3932, 31
  %v3935 = vsub.s32 32, %v3934
  %v3936 = vshrl.u32 683565275, %v3935
  %v3937 = vshll.u32 683565275, %v3934
  %v3938 = vshrl.u32 2475754826, %v3935
  %v3939 = vor.u32 %v3937, %v3938
  %v3940 = vshll.u32 2475754826, %v3934
  %v3941 = vshrl.u32 2131351028, %v3935
  %v3942 = vor.u32 %v3940, %v3941
  %v3943 = vshll.u32 2131351028, %v3934
  %v3944 = vshrl.u32 2102212464, %v3935
  %v3945 = vor.u32 %v3943, %v3944
  %v3946 = vshll.u32 2102212464, %v3934
  %v3947 = vshrl.u32 920167782, %v3935
  %v3948 = vor.u32 %v3946, %v3947
  %v3949 = vshll.u32 920167782, %v3934
  %v3950 = vshrl.u32 1326507024, %v3935
  %v3951 = vor.u32 %v3949, %v3950
  %vm3952 = vcmp.lt.s32.totalorder %v3933, 1
  %vm3953 = vcmp.lt.s32.totalorder %v3933, 2
  %vm3954 = vcmp.lt.s32.totalorder %v3933, 3
  %vm3955 = vcmp.lt.s32.totalorder %v3933, 4
  %v3956 = vsel %vm3952, %v3936, %v3939
  %v3957 = vsel %vm3955, %v3945, 2102212464
  %v3958 = vsel %vm3954, %v3942, %v3957
  %v3959 = vsel %vm3953, %v3956, %v3958
  %v3960 = vsel %vm3952, %v3939, %v3942
  %v3961 = vsel %vm3955, %v3948, 920167782
  %v3962 = vsel %vm3954, %v3945, %v3961
  %v3963 = vsel %vm3953, %v3960, %v3962
  %v3964 = vsel %vm3952, %v3942, %v3945
  %v3965 = vsel %vm3955, %v3951, 1326507024
  %v3966 = vsel %vm3954, %v3948, %v3965
  %v3967 = vsel %vm3953, %v3964, %v3966
  %v3968 = vshll.u32 %v3928, 8
  %v3969 = vmul.u32.u64.compose %v3968, %v3967
  %v3970 = vextract.low.u32 %v3969
  %v3971 = vextract.high.u32 %v3969
  %v3972 = vmul.u32.u64.compose %v3968, %v3963
  %v3973 = vextract.low.u32 %v3972
  %v3974 = vextract.high.u32 %v3972
  %v3975 = vmul.u32 %v3968, %v3959
  %v3976 = vadd.s32 %v3971, %v3973
  %vm3977 = vc.u32 %v3971, %v3973
  %v3978 = vadd.s32 %v3974, 1
  %v3979 = vsel %vm3977, %v3978, %v3974
  %v3980 = vadd.s32 %v3975, %v3979
  %v3981 = vadd.s32 %v3980, 536870912
  %v3982 = vshrl.u32 %v3981, 30
  %v3983 = vshll.u32 %v3982, 30
  %v3984 = vsub.s32 %v3980, %v3983
  %vm3985 = vcmp.lt.s32.totalorder %v3984, 0
  %v3986 = vsub.s32 0, %v3984
  %v3987 = vsel %vm3985, %v3986, %v3984
  %v3988 = vclz %v3987
  %v3989 = vsub.s32 %v3988, 2
  %vm3990 = vcmp.gt.s32.totalorder 0, %v3989
  %v3991 = vsel %vm3990, 0, %v3989
  %v3992 = vsub.s32 32, %v3991
  %v3993 = vshll.u32 %v3984, %v3991
  %v3994 = vshrl.u32 %v3976, %v3992
  %v3995 = vor.u32 %v3993, %v3994
  %v3996 = vsub.s32 4294967266, %v3991
  %v3997 = vadd.s32 %v3996, 127
  %v3998 = vshll.u32 %v3997, 23
  %v3999 = vor.u32 4788187, %v3998
  %v4000 = vand.u32 2147483647, %v3999
  %v4002 = vcvt.s32.f32 %v3995
  %v4003 = vmul.f32 %v4002, %v4000
  %v4004 = vxor.u32 %v4003, 2147483648
  %v4005 = vsel %vm3922, %v4004, %v4003
  %v4006 = vsub.s32 4, %v3982
  %v4007 = vsel %vm3922, %v4006, %v3982
  %v4008 = vsel %vm3921, %v360, %v4005
  %v4009 = vsel %vm3921, 0, %v4007
  %v4010 = vcosq.f32.pop %v4008
  %v4011 = vsinq.f32.pop %v4008
  %vm4012 = vweird.f32 %v360
  %v4013 = vadd.s32 %v4009, 3
  %v4014 = vand.u32 %v4013, 3
  %vm4015 = vcmp.lt.s32.totalorder %v4014, 2
  %vm4016 = vcmp.eq.s32.totalorder %v4014, 0
  %v4017 = vxor.u32 %v4011, 2147483648
  %v4018 = vsel %vm4016, %v4010, %v4017
  %vm4019 = vcmp.eq.s32.totalorder %v4014, 2
  %v4020 = vxor.u32 %v4010, 2147483648
  %v4021 = vsel %vm4019, %v4020, %v4011
  %v4022 = vsel %vm4015, %v4018, %v4021
  %v4023 = vsel %vm4012, nan, %v4022
  %v4024 = vand.u32 2147483647, %v364
  %vm4025 = vcmp.le.f32.partialorder %v4024, 0.7853982
  %vm4026 = vcmp.lt.s32.totalorder %v364, 0
  %v4027 = vand.u32 %v364, 2139095040
  %v4028 = vshrl.u32 %v4027, 23
  %v4029 = vsub.s32 %v4028, 127
  %v4030 = vand.u32 2147483647, %v364
  %v4031 = vand.u32 %v4030, 8388607
  %v4032 = vor.u32 %v4031, 8388608
  %v4033 = vsub.s32 0, %v4032
  %v4034 = vadd.s32 %v4029, 1
  %vm4035 = vcmp.gt.s32.totalorder %v4034, 0
  %v4036 = vsel %vm4035, %v4034, 0
  %v4037 = vshrl.u32 %v4036, 5
  %v4038 = vand.u32 %v4036, 31
  %v4039 = vsub.s32 32, %v4038
  %v4040 = vshrl.u32 683565275, %v4039
  %v4041 = vshll.u32 683565275, %v4038
  %v4042 = vshrl.u32 2475754826, %v4039
  %v4043 = vor.u32 %v4041, %v4042
  %v4044 = vshll.u32 2475754826, %v4038
  %v4045 = vshrl.u32 2131351028, %v4039
  %v4046 = vor.u32 %v4044, %v4045
  %v4047 = vshll.u32 2131351028, %v4038
  %v4048 = vshrl.u32 2102212464, %v4039
  %v4049 = vor.u32 %v4047, %v4048
  %v4050 = vshll.u32 2102212464, %v4038
  %v4051 = vshrl.u32 920167782, %v4039
  %v4052 = vor.u32 %v4050, %v4051
  %v4053 = vshll.u32 920167782, %v4038
  %v4054 = vshrl.u32 1326507024, %v4039
  %v4055 = vor.u32 %v4053, %v4054
  %vm4056 = vcmp.lt.s32.totalorder %v4037, 1
  %vm4057 = vcmp.lt.s32.totalorder %v4037, 2
  %vm4058 = vcmp.lt.s32.totalorder %v4037, 3
  %vm4059 = vcmp.lt.s32.totalorder %v4037, 4
  %v4060 = vsel %vm4056, %v4040, %v4043
  %v4061 = vsel %vm4059, %v4049, 2102212464
  %v4062 = vsel %vm4058, %v4046, %v4061
  %v4063 = vsel %vm4057, %v4060, %v4062
  %v4064 = vsel %vm4056, %v4043, %v4046
  %v4065 = vsel %vm4059, %v4052, 920167782
  %v4066 = vsel %vm4058, %v4049, %v4065
  %v4067 = vsel %vm4057, %v4064, %v4066
  %v4068 = vsel %vm4056, %v4046, %v4049
  %v4069 = vsel %vm4059, %v4055, 1326507024
  %v4070 = vsel %vm4058, %v4052, %v4069
  %v4071 = vsel %vm4057, %v4068, %v4070
  %v4072 = vshll.u32 %v4032, 8
  %v4073 = vmul.u32.u64.compose %v4072, %v4071
  %v4074 = vextract.low.u32 %v4073
  %v4075 = vextract.high.u32 %v4073
  %v4076 = vmul.u32.u64.compose %v4072, %v4067
  %v4077 = vextract.low.u32 %v4076
  %v4078 = vextract.high.u32 %v4076
  %v4079 = vmul.u32 %v4072, %v4063
  %v4080 = vadd.s32 %v4075, %v4077
  %vm4081 = vc.u32 %v4075, %v4077
  %v4082 = vadd.s32 %v4078, 1
  %v4083 = vsel %vm4081, %v4082, %v4078
  %v4084 = vadd.s32 %v4079, %v4083
  %v4085 = vadd.s32 %v4084, 536870912
  %v4086 = vshrl.u32 %v4085, 30
  %v4087 = vshll.u32 %v4086, 30
  %v4088 = vsub.s32 %v4084, %v4087
  %vm4089 = vcmp.lt.s32.totalorder %v4088, 0
  %v4090 = vsub.s32 0, %v4088
  %v4091 = vsel %vm4089, %v4090, %v4088
  %v4092 = vclz %v4091
  %v4093 = vsub.s32 %v4092, 2
  %vm4094 = vcmp.gt.s32.totalorder 0, %v4093
  %v4095 = vsel %vm4094, 0, %v4093
  %v4096 = vsub.s32 32, %v4095
  %v4097 = vshll.u32 %v4088, %v4095
  %v4098 = vshrl.u32 %v4080, %v4096
  %v4099 = vor.u32 %v4097, %v4098
  %v4100 = vsub.s32 4294967266, %v4095
  %v4101 = vadd.s32 %v4100, 127
  %v4102 = vshll.u32 %v4101, 23
  %v4103 = vor.u32 4788187, %v4102
  %v4104 = vand.u32 2147483647, %v4103
  %v4106 = vcvt.s32.f32 %v4099
  %v4107 = vmul.f32 %v4106, %v4104
  %v4108 = vxor.u32 %v4107, 2147483648
  %v4109 = vsel %vm4026, %v4108, %v4107
  %v4110 = vsub.s32 4, %v4086
  %v4111 = vsel %vm4026, %v4110, %v4086
  %v4112 = vsel %vm4025, %v364, %v4109
  %v4113 = vsel %vm4025, 0, %v4111
  %v4114 = vcosq.f32.pop %v4112
  %v4115 = vsinq.f32.pop %v4112
  %vm4116 = vweird.f32 %v364
  %v4117 = vadd.s32 %v4113, 3
  %v4118 = vand.u32 %v4117, 3
  %vm4119 = vcmp.lt.s32.totalorder %v4118, 2
  %vm4120 = vcmp.eq.s32.totalorder %v4118, 0
  %v4121 = vxor.u32 %v4115, 2147483648
  %v4122 = vsel %vm4120, %v4114, %v4121
  %vm4123 = vcmp.eq.s32.totalorder %v4118, 2
  %v4124 = vxor.u32 %v4114, 2147483648
  %v4125 = vsel %vm4123, %v4124, %v4115
  %v4126 = vsel %vm4119, %v4122, %v4125
  %v4127 = vsel %vm4116, nan, %v4126
  %v4128 = vand.u32 2147483647, %v366
  %vm4129 = vcmp.le.f32.partialorder %v4128, 0.7853982
  %vm4130 = vcmp.lt.s32.totalorder %v366, 0
  %v4131 = vand.u32 %v366, 2139095040
  %v4132 = vshrl.u32 %v4131, 23
  %v4133 = vsub.s32 %v4132, 127
  %v4134 = vand.u32 2147483647, %v366
  %v4135 = vand.u32 %v4134, 8388607
  %v4136 = vor.u32 %v4135, 8388608
  %v4137 = vsub.s32 0, %v4136
  %v4138 = vadd.s32 %v4133, 1
  %vm4139 = vcmp.gt.s32.totalorder %v4138, 0
  %v4140 = vsel %vm4139, %v4138, 0
  %v4141 = vshrl.u32 %v4140, 5
  %v4142 = vand.u32 %v4140, 31
  %v4143 = vsub.s32 32, %v4142
  %v4144 = vshrl.u32 683565275, %v4143
  %v4145 = vshll.u32 683565275, %v4142
  %v4146 = vshrl.u32 2475754826, %v4143
  %v4147 = vor.u32 %v4145, %v4146
  %v4148 = vshll.u32 2475754826, %v4142
  %v4149 = vshrl.u32 2131351028, %v4143
  %v4150 = vor.u32 %v4148, %v4149
  %v4151 = vshll.u32 2131351028, %v4142
  %v4152 = vshrl.u32 2102212464, %v4143
  %v4153 = vor.u32 %v4151, %v4152
  %v4154 = vshll.u32 2102212464, %v4142
  %v4155 = vshrl.u32 920167782, %v4143
  %v4156 = vor.u32 %v4154, %v4155
  %v4157 = vshll.u32 920167782, %v4142
  %v4158 = vshrl.u32 1326507024, %v4143
  %v4159 = vor.u32 %v4157, %v4158
  %vm4160 = vcmp.lt.s32.totalorder %v4141, 1
  %vm4161 = vcmp.lt.s32.totalorder %v4141, 2
  %vm4162 = vcmp.lt.s32.totalorder %v4141, 3
  %vm4163 = vcmp.lt.s32.totalorder %v4141, 4
  %v4164 = vsel %vm4160, %v4144, %v4147
  %v4165 = vsel %vm4163, %v4153, 2102212464
  %v4166 = vsel %vm4162, %v4150, %v4165
  %v4167 = vsel %vm4161, %v4164, %v4166
  %v4168 = vsel %vm4160, %v4147, %v4150
  %v4169 = vsel %vm4163, %v4156, 920167782
  %v4170 = vsel %vm4162, %v4153, %v4169
  %v4171 = vsel %vm4161, %v4168, %v4170
  %v4172 = vsel %vm4160, %v4150, %v4153
  %v4173 = vsel %vm4163, %v4159, 1326507024
  %v4174 = vsel %vm4162, %v4156, %v4173
  %v4175 = vsel %vm4161, %v4172, %v4174
  %v4176 = vshll.u32 %v4136, 8
  %v4177 = vmul.u32.u64.compose %v4176, %v4175
  %v4178 = vextract.low.u32 %v4177
  %v4179 = vextract.high.u32 %v4177
  %v4180 = vmul.u32.u64.compose %v4176, %v4171
  %v4181 = vextract.low.u32 %v4180
  %v4182 = vextract.high.u32 %v4180
  %v4183 = vmul.u32 %v4176, %v4167
  %v4184 = vadd.s32 %v4179, %v4181
  %vm4185 = vc.u32 %v4179, %v4181
  %v4186 = vadd.s32 %v4182, 1
  %v4187 = vsel %vm4185, %v4186, %v4182
  %v4188 = vadd.s32 %v4183, %v4187
  %v4189 = vadd.s32 %v4188, 536870912
  %v4190 = vshrl.u32 %v4189, 30
  %v4191 = vshll.u32 %v4190, 30
  %v4192 = vsub.s32 %v4188, %v4191
  %vm4193 = vcmp.lt.s32.totalorder %v4192, 0
  %v4194 = vsub.s32 0, %v4192
  %v4195 = vsel %vm4193, %v4194, %v4192
  %v4196 = vclz %v4195
  %v4197 = vsub.s32 %v4196, 2
  %vm4198 = vcmp.gt.s32.totalorder 0, %v4197
  %v4199 = vsel %vm4198, 0, %v4197
  %v4200 = vsub.s32 32, %v4199
  %v4201 = vshll.u32 %v4192, %v4199
  %v4202 = vshrl.u32 %v4184, %v4200
  %v4203 = vor.u32 %v4201, %v4202
  %v4204 = vsub.s32 4294967266, %v4199
  %v4205 = vadd.s32 %v4204, 127
  %v4206 = vshll.u32 %v4205, 23
  %v4207 = vor.u32 4788187, %v4206
  %v4208 = vand.u32 2147483647, %v4207
  %v4210 = vcvt.s32.f32 %v4203
  %v4211 = vmul.f32 %v4210, %v4208
  %v4212 = vxor.u32 %v4211, 2147483648
  %v4213 = vsel %vm4130, %v4212, %v4211
  %v4214 = vsub.s32 4, %v4190
  %v4215 = vsel %vm4130, %v4214, %v4190
  %v4216 = vsel %vm4129, %v366, %v4213
  %v4217 = vsel %vm4129, 0, %v4215
  %v4218 = vcosq.f32.pop %v4216
  %v4219 = vsinq.f32.pop %v4216
  %vm4220 = vweird.f32 %v366
  %v4221 = vadd.s32 %v4217, 3
  %v4222 = vand.u32 %v4221, 3
  %vm4223 = vcmp.lt.s32.totalorder %v4222, 2
  %vm4224 = vcmp.eq.s32.totalorder %v4222, 0
  %v4225 = vxor.u32 %v4219, 2147483648
  %v4226 = vsel %vm4224, %v4218, %v4225
  %vm4227 = vcmp.eq.s32.totalorder %v4222, 2
  %v4228 = vxor.u32 %v4218, 2147483648
  %v4229 = vsel %vm4227, %v4228, %v4219
  %v4230 = vsel %vm4223, %v4226, %v4229
  %v4231 = vsel %vm4220, nan, %v4230
  %v4232 = vand.u32 2147483647, %v370
  %vm4233 = vcmp.le.f32.partialorder %v4232, 0.7853982
  %vm4234 = vcmp.lt.s32.totalorder %v370, 0
  %v4235 = vand.u32 %v370, 2139095040
  %v4236 = vshrl.u32 %v4235, 23
  %v4237 = vsub.s32 %v4236, 127
  %v4238 = vand.u32 2147483647, %v370
  %v4239 = vand.u32 %v4238, 8388607
  %v4240 = vor.u32 %v4239, 8388608
  %v4241 = vsub.s32 0, %v4240
  %v4242 = vadd.s32 %v4237, 1
  %vm4243 = vcmp.gt.s32.totalorder %v4242, 0
  %v4244 = vsel %vm4243, %v4242, 0
  %v4245 = vshrl.u32 %v4244, 5
  %v4246 = vand.u32 %v4244, 31
  %v4247 = vsub.s32 32, %v4246
  %v4248 = vshrl.u32 683565275, %v4247
  %v4249 = vshll.u32 683565275, %v4246
  %v4250 = vshrl.u32 2475754826, %v4247
  %v4251 = vor.u32 %v4249, %v4250
  %v4252 = vshll.u32 2475754826, %v4246
  %v4253 = vshrl.u32 2131351028, %v4247
  %v4254 = vor.u32 %v4252, %v4253
  %v4255 = vshll.u32 2131351028, %v4246
  %v4256 = vshrl.u32 2102212464, %v4247
  %v4257 = vor.u32 %v4255, %v4256
  %v4258 = vshll.u32 2102212464, %v4246
  %v4259 = vshrl.u32 920167782, %v4247
  %v4260 = vor.u32 %v4258, %v4259
  %v4261 = vshll.u32 920167782, %v4246
  %v4262 = vshrl.u32 1326507024, %v4247
  %v4263 = vor.u32 %v4261, %v4262
  %vm4264 = vcmp.lt.s32.totalorder %v4245, 1
  %vm4265 = vcmp.lt.s32.totalorder %v4245, 2
  %vm4266 = vcmp.lt.s32.totalorder %v4245, 3
  %vm4267 = vcmp.lt.s32.totalorder %v4245, 4
  %v4268 = vsel %vm4264, %v4248, %v4251
  %v4269 = vsel %vm4267, %v4257, 2102212464
  %v4270 = vsel %vm4266, %v4254, %v4269
  %v4271 = vsel %vm4265, %v4268, %v4270
  %v4272 = vsel %vm4264, %v4251, %v4254
  %v4273 = vsel %vm4267, %v4260, 920167782
  %v4274 = vsel %vm4266, %v4257, %v4273
  %v4275 = vsel %vm4265, %v4272, %v4274
  %v4276 = vsel %vm4264, %v4254, %v4257
  %v4277 = vsel %vm4267, %v4263, 1326507024
  %v4278 = vsel %vm4266, %v4260, %v4277
  %v4279 = vsel %vm4265, %v4276, %v4278
  %v4280 = vshll.u32 %v4240, 8
  %v4281 = vmul.u32.u64.compose %v4280, %v4279
  %v4282 = vextract.low.u32 %v4281
  %v4283 = vextract.high.u32 %v4281
  %v4284 = vmul.u32.u64.compose %v4280, %v4275
  %v4285 = vextract.low.u32 %v4284
  %v4286 = vextract.high.u32 %v4284
  %v4287 = vmul.u32 %v4280, %v4271
  %v4288 = vadd.s32 %v4283, %v4285
  %vm4289 = vc.u32 %v4283, %v4285
  %v4290 = vadd.s32 %v4286, 1
  %v4291 = vsel %vm4289, %v4290, %v4286
  %v4292 = vadd.s32 %v4287, %v4291
  %v4293 = vadd.s32 %v4292, 536870912
  %v4294 = vshrl.u32 %v4293, 30
  %v4295 = vshll.u32 %v4294, 30
  %v4296 = vsub.s32 %v4292, %v4295
  %vm4297 = vcmp.lt.s32.totalorder %v4296, 0
  %v4298 = vsub.s32 0, %v4296
  %v4299 = vsel %vm4297, %v4298, %v4296
  %v4300 = vclz %v4299
  %v4301 = vsub.s32 %v4300, 2
  %vm4302 = vcmp.gt.s32.totalorder 0, %v4301
  %v4303 = vsel %vm4302, 0, %v4301
  %v4304 = vsub.s32 32, %v4303
  %v4305 = vshll.u32 %v4296, %v4303
  %v4306 = vshrl.u32 %v4288, %v4304
  %v4307 = vor.u32 %v4305, %v4306
  %v4308 = vsub.s32 4294967266, %v4303
  %v4309 = vadd.s32 %v4308, 127
  %v4310 = vshll.u32 %v4309, 23
  %v4311 = vor.u32 4788187, %v4310
  %v4312 = vand.u32 2147483647, %v4311
  %v4314 = vcvt.s32.f32 %v4307
  %v4315 = vmul.f32 %v4314, %v4312
  %v4316 = vxor.u32 %v4315, 2147483648
  %v4317 = vsel %vm4234, %v4316, %v4315
  %v4318 = vsub.s32 4, %v4294
  %v4319 = vsel %vm4234, %v4318, %v4294
  %v4320 = vsel %vm4233, %v370, %v4317
  %v4321 = vsel %vm4233, 0, %v4319
  %v4322 = vcosq.f32.pop %v4320
  %v4323 = vsinq.f32.pop %v4320
  %vm4324 = vweird.f32 %v370
  %v4325 = vadd.s32 %v4321, 3
  %v4326 = vand.u32 %v4325, 3
  %vm4327 = vcmp.lt.s32.totalorder %v4326, 2
  %vm4328 = vcmp.eq.s32.totalorder %v4326, 0
  %v4329 = vxor.u32 %v4323, 2147483648
  %v4330 = vsel %vm4328, %v4322, %v4329
  %vm4331 = vcmp.eq.s32.totalorder %v4326, 2
  %v4332 = vxor.u32 %v4322, 2147483648
  %v4333 = vsel %vm4331, %v4332, %v4323
  %v4334 = vsel %vm4327, %v4330, %v4333
  %v4335 = vsel %vm4324, nan, %v4334
  %v4336 = vand.u32 2147483647, %v372
  %vm4337 = vcmp.le.f32.partialorder %v4336, 0.7853982
  %vm4338 = vcmp.lt.s32.totalorder %v372, 0
  %v4339 = vand.u32 %v372, 2139095040
  %v4340 = vshrl.u32 %v4339, 23
  %v4341 = vsub.s32 %v4340, 127
  %v4342 = vand.u32 2147483647, %v372
  %v4343 = vand.u32 %v4342, 8388607
  %v4344 = vor.u32 %v4343, 8388608
  %v4345 = vsub.s32 0, %v4344
  %v4346 = vadd.s32 %v4341, 1
  %vm4347 = vcmp.gt.s32.totalorder %v4346, 0
  %v4348 = vsel %vm4347, %v4346, 0
  %v4349 = vshrl.u32 %v4348, 5
  %v4350 = vand.u32 %v4348, 31
  %v4351 = vsub.s32 32, %v4350
  %v4352 = vshrl.u32 683565275, %v4351
  %v4353 = vshll.u32 683565275, %v4350
  %v4354 = vshrl.u32 2475754826, %v4351
  %v4355 = vor.u32 %v4353, %v4354
  %v4356 = vshll.u32 2475754826, %v4350
  %v4357 = vshrl.u32 2131351028, %v4351
  %v4358 = vor.u32 %v4356, %v4357
  %v4359 = vshll.u32 2131351028, %v4350
  %v4360 = vshrl.u32 2102212464, %v4351
  %v4361 = vor.u32 %v4359, %v4360
  %v4362 = vshll.u32 2102212464, %v4350
  %v4363 = vshrl.u32 920167782, %v4351
  %v4364 = vor.u32 %v4362, %v4363
  %v4365 = vshll.u32 920167782, %v4350
  %v4366 = vshrl.u32 1326507024, %v4351
  %v4367 = vor.u32 %v4365, %v4366
  %vm4368 = vcmp.lt.s32.totalorder %v4349, 1
  %vm4369 = vcmp.lt.s32.totalorder %v4349, 2
  %vm4370 = vcmp.lt.s32.totalorder %v4349, 3
  %vm4371 = vcmp.lt.s32.totalorder %v4349, 4
  %v4372 = vsel %vm4368, %v4352, %v4355
  %v4373 = vsel %vm4371, %v4361, 2102212464
  %v4374 = vsel %vm4370, %v4358, %v4373
  %v4375 = vsel %vm4369, %v4372, %v4374
  %v4376 = vsel %vm4368, %v4355, %v4358
  %v4377 = vsel %vm4371, %v4364, 920167782
  %v4378 = vsel %vm4370, %v4361, %v4377
  %v4379 = vsel %vm4369, %v4376, %v4378
  %v4380 = vsel %vm4368, %v4358, %v4361
  %v4381 = vsel %vm4371, %v4367, 1326507024
  %v4382 = vsel %vm4370, %v4364, %v4381
  %v4383 = vsel %vm4369, %v4380, %v4382
  %v4384 = vshll.u32 %v4344, 8
  %v4385 = vmul.u32.u64.compose %v4384, %v4383
  %v4386 = vextract.low.u32 %v4385
  %v4387 = vextract.high.u32 %v4385
  %v4388 = vmul.u32.u64.compose %v4384, %v4379
  %v4389 = vextract.low.u32 %v4388
  %v4390 = vextract.high.u32 %v4388
  %v4391 = vmul.u32 %v4384, %v4375
  %v4392 = vadd.s32 %v4387, %v4389
  %vm4393 = vc.u32 %v4387, %v4389
  %v4394 = vadd.s32 %v4390, 1
  %v4395 = vsel %vm4393, %v4394, %v4390
  %v4396 = vadd.s32 %v4391, %v4395
  %v4397 = vadd.s32 %v4396, 536870912
  %v4398 = vshrl.u32 %v4397, 30
  %v4399 = vshll.u32 %v4398, 30
  %v4400 = vsub.s32 %v4396, %v4399
  %vm4401 = vcmp.lt.s32.totalorder %v4400, 0
  %v4402 = vsub.s32 0, %v4400
  %v4403 = vsel %vm4401, %v4402, %v4400
  %v4404 = vclz %v4403
  %v4405 = vsub.s32 %v4404, 2
  %vm4406 = vcmp.gt.s32.totalorder 0, %v4405
  %v4407 = vsel %vm4406, 0, %v4405
  %v4408 = vsub.s32 32, %v4407
  %v4409 = vshll.u32 %v4400, %v4407
  %v4410 = vshrl.u32 %v4392, %v4408
  %v4411 = vor.u32 %v4409, %v4410
  %v4412 = vsub.s32 4294967266, %v4407
  %v4413 = vadd.s32 %v4412, 127
  %v4414 = vshll.u32 %v4413, 23
  %v4415 = vor.u32 4788187, %v4414
  %v4416 = vand.u32 2147483647, %v4415
  %v4418 = vcvt.s32.f32 %v4411
  %v4419 = vmul.f32 %v4418, %v4416
  %v4420 = vxor.u32 %v4419, 2147483648
  %v4421 = vsel %vm4338, %v4420, %v4419
  %v4422 = vsub.s32 4, %v4398
  %v4423 = vsel %vm4338, %v4422, %v4398
  %v4424 = vsel %vm4337, %v372, %v4421
  %v4425 = vsel %vm4337, 0, %v4423
  %v4426 = vcosq.f32.pop %v4424
  %v4427 = vsinq.f32.pop %v4424
  %vm4428 = vweird.f32 %v372
  %v4429 = vadd.s32 %v4425, 3
  %v4430 = vand.u32 %v4429, 3
  %vm4431 = vcmp.lt.s32.totalorder %v4430, 2
  %vm4432 = vcmp.eq.s32.totalorder %v4430, 0
  %v4433 = vxor.u32 %v4427, 2147483648
  %v4434 = vsel %vm4432, %v4426, %v4433
  %vm4435 = vcmp.eq.s32.totalorder %v4430, 2
  %v4436 = vxor.u32 %v4426, 2147483648
  %v4437 = vsel %vm4435, %v4436, %v4427
  %v4438 = vsel %vm4431, %v4434, %v4437
  %v4439 = vsel %vm4428, nan, %v4438
  %v4440 = vand.u32 2147483647, %v376
  %vm4441 = vcmp.le.f32.partialorder %v4440, 0.7853982
  %vm4442 = vcmp.lt.s32.totalorder %v376, 0
  %v4443 = vand.u32 %v376, 2139095040
  %v4444 = vshrl.u32 %v4443, 23
  %v4445 = vsub.s32 %v4444, 127
  %v4446 = vand.u32 2147483647, %v376
  %v4447 = vand.u32 %v4446, 8388607
  %v4448 = vor.u32 %v4447, 8388608
  %v4449 = vsub.s32 0, %v4448
  %v4450 = vadd.s32 %v4445, 1
  %vm4451 = vcmp.gt.s32.totalorder %v4450, 0
  %v4452 = vsel %vm4451, %v4450, 0
  %v4453 = vshrl.u32 %v4452, 5
  %v4454 = vand.u32 %v4452, 31
  %v4455 = vsub.s32 32, %v4454
  %v4456 = vshrl.u32 683565275, %v4455
  %v4457 = vshll.u32 683565275, %v4454
  %v4458 = vshrl.u32 2475754826, %v4455
  %v4459 = vor.u32 %v4457, %v4458
  %v4460 = vshll.u32 2475754826, %v4454
  %v4461 = vshrl.u32 2131351028, %v4455
  %v4462 = vor.u32 %v4460, %v4461
  %v4463 = vshll.u32 2131351028, %v4454
  %v4464 = vshrl.u32 2102212464, %v4455
  %v4465 = vor.u32 %v4463, %v4464
  %v4466 = vshll.u32 2102212464, %v4454
  %v4467 = vshrl.u32 920167782, %v4455
  %v4468 = vor.u32 %v4466, %v4467
  %v4469 = vshll.u32 920167782, %v4454
  %v4470 = vshrl.u32 1326507024, %v4455
  %v4471 = vor.u32 %v4469, %v4470
  %vm4472 = vcmp.lt.s32.totalorder %v4453, 1
  %vm4473 = vcmp.lt.s32.totalorder %v4453, 2
  %vm4474 = vcmp.lt.s32.totalorder %v4453, 3
  %vm4475 = vcmp.lt.s32.totalorder %v4453, 4
  %v4476 = vsel %vm4472, %v4456, %v4459
  %v4477 = vsel %vm4475, %v4465, 2102212464
  %v4478 = vsel %vm4474, %v4462, %v4477
  %v4479 = vsel %vm4473, %v4476, %v4478
  %v4480 = vsel %vm4472, %v4459, %v4462
  %v4481 = vsel %vm4475, %v4468, 920167782
  %v4482 = vsel %vm4474, %v4465, %v4481
  %v4483 = vsel %vm4473, %v4480, %v4482
  %v4484 = vsel %vm4472, %v4462, %v4465
  %v4485 = vsel %vm4475, %v4471, 1326507024
  %v4486 = vsel %vm4474, %v4468, %v4485
  %v4487 = vsel %vm4473, %v4484, %v4486
  %v4488 = vshll.u32 %v4448, 8
  %v4489 = vmul.u32.u64.compose %v4488, %v4487
  %v4490 = vextract.low.u32 %v4489
  %v4491 = vextract.high.u32 %v4489
  %v4492 = vmul.u32.u64.compose %v4488, %v4483
  %v4493 = vextract.low.u32 %v4492
  %v4494 = vextract.high.u32 %v4492
  %v4495 = vmul.u32 %v4488, %v4479
  %v4496 = vadd.s32 %v4491, %v4493
  %vm4497 = vc.u32 %v4491, %v4493
  %v4498 = vadd.s32 %v4494, 1
  %v4499 = vsel %vm4497, %v4498, %v4494
  %v4500 = vadd.s32 %v4495, %v4499
  %v4501 = vadd.s32 %v4500, 536870912
  %v4502 = vshrl.u32 %v4501, 30
  %v4503 = vshll.u32 %v4502, 30
  %v4504 = vsub.s32 %v4500, %v4503
  %vm4505 = vcmp.lt.s32.totalorder %v4504, 0
  %v4506 = vsub.s32 0, %v4504
  %v4507 = vsel %vm4505, %v4506, %v4504
  %v4508 = vclz %v4507
  %v4509 = vsub.s32 %v4508, 2
  %vm4510 = vcmp.gt.s32.totalorder 0, %v4509
  %v4511 = vsel %vm4510, 0, %v4509
  %v4512 = vsub.s32 32, %v4511
  %v4513 = vshll.u32 %v4504, %v4511
  %v4514 = vshrl.u32 %v4496, %v4512
  %v4515 = vor.u32 %v4513, %v4514
  %v4516 = vsub.s32 4294967266, %v4511
  %v4517 = vadd.s32 %v4516, 127
  %v4518 = vshll.u32 %v4517, 23
  %v4519 = vor.u32 4788187, %v4518
  %v4520 = vand.u32 2147483647, %v4519
  %v4522 = vcvt.s32.f32 %v4515
  %v4523 = vmul.f32 %v4522, %v4520
  %v4524 = vxor.u32 %v4523, 2147483648
  %v4525 = vsel %vm4442, %v4524, %v4523
  %v4526 = vsub.s32 4, %v4502
  %v4527 = vsel %vm4442, %v4526, %v4502
  %v4528 = vsel %vm4441, %v376, %v4525
  %v4529 = vsel %vm4441, 0, %v4527
  %v4530 = vcosq.f32.pop %v4528
  %v4531 = vsinq.f32.pop %v4528
  %vm4532 = vweird.f32 %v376
  %v4533 = vadd.s32 %v4529, 3
  %v4534 = vand.u32 %v4533, 3
  %vm4535 = vcmp.lt.s32.totalorder %v4534, 2
  %vm4536 = vcmp.eq.s32.totalorder %v4534, 0
  %v4537 = vxor.u32 %v4531, 2147483648
  %v4538 = vsel %vm4536, %v4530, %v4537
  %vm4539 = vcmp.eq.s32.totalorder %v4534, 2
  %v4540 = vxor.u32 %v4530, 2147483648
  %v4541 = vsel %vm4539, %v4540, %v4531
  %v4542 = vsel %vm4535, %v4538, %v4541
  %v4543 = vsel %vm4532, nan, %v4542
  %v4544 = vand.u32 2147483647, %v378
  %vm4545 = vcmp.le.f32.partialorder %v4544, 0.7853982
  %vm4546 = vcmp.lt.s32.totalorder %v378, 0
  %v4547 = vand.u32 %v378, 2139095040
  %v4548 = vshrl.u32 %v4547, 23
  %v4549 = vsub.s32 %v4548, 127
  %v4550 = vand.u32 2147483647, %v378
  %v4551 = vand.u32 %v4550, 8388607
  %v4552 = vor.u32 %v4551, 8388608
  %v4553 = vsub.s32 0, %v4552
  %v4554 = vadd.s32 %v4549, 1
  %vm4555 = vcmp.gt.s32.totalorder %v4554, 0
  %v4556 = vsel %vm4555, %v4554, 0
  %v4557 = vshrl.u32 %v4556, 5
  %v4558 = vand.u32 %v4556, 31
  %v4559 = vsub.s32 32, %v4558
  %v4560 = vshrl.u32 683565275, %v4559
  %v4561 = vshll.u32 683565275, %v4558
  %v4562 = vshrl.u32 2475754826, %v4559
  %v4563 = vor.u32 %v4561, %v4562
  %v4564 = vshll.u32 2475754826, %v4558
  %v4565 = vshrl.u32 2131351028, %v4559
  %v4566 = vor.u32 %v4564, %v4565
  %v4567 = vshll.u32 2131351028, %v4558
  %v4568 = vshrl.u32 2102212464, %v4559
  %v4569 = vor.u32 %v4567, %v4568
  %v4570 = vshll.u32 2102212464, %v4558
  %v4571 = vshrl.u32 920167782, %v4559
  %v4572 = vor.u32 %v4570, %v4571
  %v4573 = vshll.u32 920167782, %v4558
  %v4574 = vshrl.u32 1326507024, %v4559
  %v4575 = vor.u32 %v4573, %v4574
  %vm4576 = vcmp.lt.s32.totalorder %v4557, 1
  %vm4577 = vcmp.lt.s32.totalorder %v4557, 2
  %vm4578 = vcmp.lt.s32.totalorder %v4557, 3
  %vm4579 = vcmp.lt.s32.totalorder %v4557, 4
  %v4580 = vsel %vm4576, %v4560, %v4563
  %v4581 = vsel %vm4579, %v4569, 2102212464
  %v4582 = vsel %vm4578, %v4566, %v4581
  %v4583 = vsel %vm4577, %v4580, %v4582
  %v4584 = vsel %vm4576, %v4563, %v4566
  %v4585 = vsel %vm4579, %v4572, 920167782
  %v4586 = vsel %vm4578, %v4569, %v4585
  %v4587 = vsel %vm4577, %v4584, %v4586
  %v4588 = vsel %vm4576, %v4566, %v4569
  %v4589 = vsel %vm4579, %v4575, 1326507024
  %v4590 = vsel %vm4578, %v4572, %v4589
  %v4591 = vsel %vm4577, %v4588, %v4590
  %v4592 = vshll.u32 %v4552, 8
  %v4593 = vmul.u32.u64.compose %v4592, %v4591
  %v4594 = vextract.low.u32 %v4593
  %v4595 = vextract.high.u32 %v4593
  %v4596 = vmul.u32.u64.compose %v4592, %v4587
  %v4597 = vextract.low.u32 %v4596
  %v4598 = vextract.high.u32 %v4596
  %v4599 = vmul.u32 %v4592, %v4583
  %v4600 = vadd.s32 %v4595, %v4597
  %vm4601 = vc.u32 %v4595, %v4597
  %v4602 = vadd.s32 %v4598, 1
  %v4603 = vsel %vm4601, %v4602, %v4598
  %v4604 = vadd.s32 %v4599, %v4603
  %v4605 = vadd.s32 %v4604, 536870912
  %v4606 = vshrl.u32 %v4605, 30
  %v4607 = vshll.u32 %v4606, 30
  %v4608 = vsub.s32 %v4604, %v4607
  %vm4609 = vcmp.lt.s32.totalorder %v4608, 0
  %v4610 = vsub.s32 0, %v4608
  %v4611 = vsel %vm4609, %v4610, %v4608
  %v4612 = vclz %v4611
  %v4613 = vsub.s32 %v4612, 2
  %vm4614 = vcmp.gt.s32.totalorder 0, %v4613
  %v4615 = vsel %vm4614, 0, %v4613
  %v4616 = vsub.s32 32, %v4615
  %v4617 = vshll.u32 %v4608, %v4615
  %v4618 = vshrl.u32 %v4600, %v4616
  %v4619 = vor.u32 %v4617, %v4618
  %v4620 = vsub.s32 4294967266, %v4615
  %v4621 = vadd.s32 %v4620, 127
  %v4622 = vshll.u32 %v4621, 23
  %v4623 = vor.u32 4788187, %v4622
  %v4624 = vand.u32 2147483647, %v4623
  %v4626 = vcvt.s32.f32 %v4619
  %v4627 = vmul.f32 %v4626, %v4624
  %v4628 = vxor.u32 %v4627, 2147483648
  %v4629 = vsel %vm4546, %v4628, %v4627
  %v4630 = vsub.s32 4, %v4606
  %v4631 = vsel %vm4546, %v4630, %v4606
  %v4632 = vsel %vm4545, %v378, %v4629
  %v4633 = vsel %vm4545, 0, %v4631
  %v4634 = vcosq.f32.pop %v4632
  %v4635 = vsinq.f32.pop %v4632
  %vm4636 = vweird.f32 %v378
  %v4637 = vadd.s32 %v4633, 3
  %v4638 = vand.u32 %v4637, 3
  %vm4639 = vcmp.lt.s32.totalorder %v4638, 2
  %vm4640 = vcmp.eq.s32.totalorder %v4638, 0
  %v4641 = vxor.u32 %v4635, 2147483648
  %v4642 = vsel %vm4640, %v4634, %v4641
  %vm4643 = vcmp.eq.s32.totalorder %v4638, 2
  %v4644 = vxor.u32 %v4634, 2147483648
  %v4645 = vsel %vm4643, %v4644, %v4635
  %v4646 = vsel %vm4639, %v4642, %v4645
  %v4647 = vsel %vm4636, nan, %v4646
  %v4648 = vand.u32 2147483647, %v382
  %vm4649 = vcmp.le.f32.partialorder %v4648, 0.7853982
  %vm4650 = vcmp.lt.s32.totalorder %v382, 0
  %v4651 = vand.u32 %v382, 2139095040
  %v4652 = vshrl.u32 %v4651, 23
  %v4653 = vsub.s32 %v4652, 127
  %v4654 = vand.u32 2147483647, %v382
  %v4655 = vand.u32 %v4654, 8388607
  %v4656 = vor.u32 %v4655, 8388608
  %v4657 = vsub.s32 0, %v4656
  %v4658 = vadd.s32 %v4653, 1
  %vm4659 = vcmp.gt.s32.totalorder %v4658, 0
  %v4660 = vsel %vm4659, %v4658, 0
  %v4661 = vshrl.u32 %v4660, 5
  %v4662 = vand.u32 %v4660, 31
  %v4663 = vsub.s32 32, %v4662
  %v4664 = vshrl.u32 683565275, %v4663
  %v4665 = vshll.u32 683565275, %v4662
  %v4666 = vshrl.u32 2475754826, %v4663
  %v4667 = vor.u32 %v4665, %v4666
  %v4668 = vshll.u32 2475754826, %v4662
  %v4669 = vshrl.u32 2131351028, %v4663
  %v4670 = vor.u32 %v4668, %v4669
  %v4671 = vshll.u32 2131351028, %v4662
  %v4672 = vshrl.u32 2102212464, %v4663
  %v4673 = vor.u32 %v4671, %v4672
  %v4674 = vshll.u32 2102212464, %v4662
  %v4675 = vshrl.u32 920167782, %v4663
  %v4676 = vor.u32 %v4674, %v4675
  %v4677 = vshll.u32 920167782, %v4662
  %v4678 = vshrl.u32 1326507024, %v4663
  %v4679 = vor.u32 %v4677, %v4678
  %vm4680 = vcmp.lt.s32.totalorder %v4661, 1
  %vm4681 = vcmp.lt.s32.totalorder %v4661, 2
  %vm4682 = vcmp.lt.s32.totalorder %v4661, 3
  %vm4683 = vcmp.lt.s32.totalorder %v4661, 4
  %v4684 = vsel %vm4680, %v4664, %v4667
  %v4685 = vsel %vm4683, %v4673, 2102212464
  %v4686 = vsel %vm4682, %v4670, %v4685
  %v4687 = vsel %vm4681, %v4684, %v4686
  %v4688 = vsel %vm4680, %v4667, %v4670
  %v4689 = vsel %vm4683, %v4676, 920167782
  %v4690 = vsel %vm4682, %v4673, %v4689
  %v4691 = vsel %vm4681, %v4688, %v4690
  %v4692 = vsel %vm4680, %v4670, %v4673
  %v4693 = vsel %vm4683, %v4679, 1326507024
  %v4694 = vsel %vm4682, %v4676, %v4693
  %v4695 = vsel %vm4681, %v4692, %v4694
  %v4696 = vshll.u32 %v4656, 8
  %v4697 = vmul.u32.u64.compose %v4696, %v4695
  %v4698 = vextract.low.u32 %v4697
  %v4699 = vextract.high.u32 %v4697
  %v4700 = vmul.u32.u64.compose %v4696, %v4691
  %v4701 = vextract.low.u32 %v4700
  %v4702 = vextract.high.u32 %v4700
  %v4703 = vmul.u32 %v4696, %v4687
  %v4704 = vadd.s32 %v4699, %v4701
  %vm4705 = vc.u32 %v4699, %v4701
  %v4706 = vadd.s32 %v4702, 1
  %v4707 = vsel %vm4705, %v4706, %v4702
  %v4708 = vadd.s32 %v4703, %v4707
  %v4709 = vadd.s32 %v4708, 536870912
  %v4710 = vshrl.u32 %v4709, 30
  %v4711 = vshll.u32 %v4710, 30
  %v4712 = vsub.s32 %v4708, %v4711
  %vm4713 = vcmp.lt.s32.totalorder %v4712, 0
  %v4714 = vsub.s32 0, %v4712
  %v4715 = vsel %vm4713, %v4714, %v4712
  %v4716 = vclz %v4715
  %v4717 = vsub.s32 %v4716, 2
  %vm4718 = vcmp.gt.s32.totalorder 0, %v4717
  %v4719 = vsel %vm4718, 0, %v4717
  %v4720 = vsub.s32 32, %v4719
  %v4721 = vshll.u32 %v4712, %v4719
  %v4722 = vshrl.u32 %v4704, %v4720
  %v4723 = vor.u32 %v4721, %v4722
  %v4724 = vsub.s32 4294967266, %v4719
  %v4725 = vadd.s32 %v4724, 127
  %v4726 = vshll.u32 %v4725, 23
  %v4727 = vor.u32 4788187, %v4726
  %v4728 = vand.u32 2147483647, %v4727
  %v4730 = vcvt.s32.f32 %v4723
  %v4731 = vmul.f32 %v4730, %v4728
  %v4732 = vxor.u32 %v4731, 2147483648
  %v4733 = vsel %vm4650, %v4732, %v4731
  %v4734 = vsub.s32 4, %v4710
  %v4735 = vsel %vm4650, %v4734, %v4710
  %v4736 = vsel %vm4649, %v382, %v4733
  %v4737 = vsel %vm4649, 0, %v4735
  %v4738 = vcosq.f32.pop %v4736
  %v4739 = vsinq.f32.pop %v4736
  %vm4740 = vweird.f32 %v382
  %v4741 = vadd.s32 %v4737, 3
  %v4742 = vand.u32 %v4741, 3
  %vm4743 = vcmp.lt.s32.totalorder %v4742, 2
  %vm4744 = vcmp.eq.s32.totalorder %v4742, 0
  %v4745 = vxor.u32 %v4739, 2147483648
  %v4746 = vsel %vm4744, %v4738, %v4745
  %vm4747 = vcmp.eq.s32.totalorder %v4742, 2
  %v4748 = vxor.u32 %v4738, 2147483648
  %v4749 = vsel %vm4747, %v4748, %v4739
  %v4750 = vsel %vm4743, %v4746, %v4749
  %v4751 = vsel %vm4740, nan, %v4750
  %v4752 = vand.u32 2147483647, %v384
  %vm4753 = vcmp.le.f32.partialorder %v4752, 0.7853982
  %vm4754 = vcmp.lt.s32.totalorder %v384, 0
  %v4755 = vand.u32 %v384, 2139095040
  %v4756 = vshrl.u32 %v4755, 23
  %v4757 = vsub.s32 %v4756, 127
  %v4758 = vand.u32 2147483647, %v384
  %v4759 = vand.u32 %v4758, 8388607
  %v4760 = vor.u32 %v4759, 8388608
  %v4761 = vsub.s32 0, %v4760
  %v4762 = vadd.s32 %v4757, 1
  %vm4763 = vcmp.gt.s32.totalorder %v4762, 0
  %v4764 = vsel %vm4763, %v4762, 0
  %v4765 = vshrl.u32 %v4764, 5
  %v4766 = vand.u32 %v4764, 31
  %v4767 = vsub.s32 32, %v4766
  %v4768 = vshrl.u32 683565275, %v4767
  %v4769 = vshll.u32 683565275, %v4766
  %v4770 = vshrl.u32 2475754826, %v4767
  %v4771 = vor.u32 %v4769, %v4770
  %v4772 = vshll.u32 2475754826, %v4766
  %v4773 = vshrl.u32 2131351028, %v4767
  %v4774 = vor.u32 %v4772, %v4773
  %v4775 = vshll.u32 2131351028, %v4766
  %v4776 = vshrl.u32 2102212464, %v4767
  %v4777 = vor.u32 %v4775, %v4776
  %v4778 = vshll.u32 2102212464, %v4766
  %v4779 = vshrl.u32 920167782, %v4767
  %v4780 = vor.u32 %v4778, %v4779
  %v4781 = vshll.u32 920167782, %v4766
  %v4782 = vshrl.u32 1326507024, %v4767
  %v4783 = vor.u32 %v4781, %v4782
  %vm4784 = vcmp.lt.s32.totalorder %v4765, 1
  %vm4785 = vcmp.lt.s32.totalorder %v4765, 2
  %vm4786 = vcmp.lt.s32.totalorder %v4765, 3
  %vm4787 = vcmp.lt.s32.totalorder %v4765, 4
  %v4788 = vsel %vm4784, %v4768, %v4771
  %v4789 = vsel %vm4787, %v4777, 2102212464
  %v4790 = vsel %vm4786, %v4774, %v4789
  %v4791 = vsel %vm4785, %v4788, %v4790
  %v4792 = vsel %vm4784, %v4771, %v4774
  %v4793 = vsel %vm4787, %v4780, 920167782
  %v4794 = vsel %vm4786, %v4777, %v4793
  %v4795 = vsel %vm4785, %v4792, %v4794
  %v4796 = vsel %vm4784, %v4774, %v4777
  %v4797 = vsel %vm4787, %v4783, 1326507024
  %v4798 = vsel %vm4786, %v4780, %v4797
  %v4799 = vsel %vm4785, %v4796, %v4798
  %v4800 = vshll.u32 %v4760, 8
  %v4801 = vmul.u32.u64.compose %v4800, %v4799
  %v4802 = vextract.low.u32 %v4801
  %v4803 = vextract.high.u32 %v4801
  %v4804 = vmul.u32.u64.compose %v4800, %v4795
  %v4805 = vextract.low.u32 %v4804
  %v4806 = vextract.high.u32 %v4804
  %v4807 = vmul.u32 %v4800, %v4791
  %v4808 = vadd.s32 %v4803, %v4805
  %vm4809 = vc.u32 %v4803, %v4805
  %v4810 = vadd.s32 %v4806, 1
  %v4811 = vsel %vm4809, %v4810, %v4806
  %v4812 = vadd.s32 %v4807, %v4811
  %v4813 = vadd.s32 %v4812, 536870912
  %v4814 = vshrl.u32 %v4813, 30
  %v4815 = vshll.u32 %v4814, 30
  %v4816 = vsub.s32 %v4812, %v4815
  %vm4817 = vcmp.lt.s32.totalorder %v4816, 0
  %v4818 = vsub.s32 0, %v4816
  %v4819 = vsel %vm4817, %v4818, %v4816
  %v4820 = vclz %v4819
  %v4821 = vsub.s32 %v4820, 2
  %vm4822 = vcmp.gt.s32.totalorder 0, %v4821
  %v4823 = vsel %vm4822, 0, %v4821
  %v4824 = vsub.s32 32, %v4823
  %v4825 = vshll.u32 %v4816, %v4823
  %v4826 = vshrl.u32 %v4808, %v4824
  %v4827 = vor.u32 %v4825, %v4826
  %v4828 = vsub.s32 4294967266, %v4823
  %v4829 = vadd.s32 %v4828, 127
  %v4830 = vshll.u32 %v4829, 23
  %v4831 = vor.u32 4788187, %v4830
  %v4832 = vand.u32 2147483647, %v4831
  %v4834 = vcvt.s32.f32 %v4827
  %v4835 = vmul.f32 %v4834, %v4832
  %v4836 = vxor.u32 %v4835, 2147483648
  %v4837 = vsel %vm4754, %v4836, %v4835
  %v4838 = vsub.s32 4, %v4814
  %v4839 = vsel %vm4754, %v4838, %v4814
  %v4840 = vsel %vm4753, %v384, %v4837
  %v4841 = vsel %vm4753, 0, %v4839
  %v4842 = vcosq.f32.pop %v4840
  %v4843 = vsinq.f32.pop %v4840
  %vm4844 = vweird.f32 %v384
  %v4845 = vadd.s32 %v4841, 3
  %v4846 = vand.u32 %v4845, 3
  %vm4847 = vcmp.lt.s32.totalorder %v4846, 2
  %vm4848 = vcmp.eq.s32.totalorder %v4846, 0
  %v4849 = vxor.u32 %v4843, 2147483648
  %v4850 = vsel %vm4848, %v4842, %v4849
  %vm4851 = vcmp.eq.s32.totalorder %v4846, 2
  %v4852 = vxor.u32 %v4842, 2147483648
  %v4853 = vsel %vm4851, %v4852, %v4843
  %v4854 = vsel %vm4847, %v4850, %v4853
  %v4855 = vsel %vm4844, nan, %v4854
  %v4856 = vand.u32 2147483647, %v388
  %vm4857 = vcmp.le.f32.partialorder %v4856, 0.7853982
  %vm4858 = vcmp.lt.s32.totalorder %v388, 0
  %v4859 = vand.u32 %v388, 2139095040
  %v4860 = vshrl.u32 %v4859, 23
  %v4861 = vsub.s32 %v4860, 127
  %v4862 = vand.u32 2147483647, %v388
  %v4863 = vand.u32 %v4862, 8388607
  %v4864 = vor.u32 %v4863, 8388608
  %v4865 = vsub.s32 0, %v4864
  %v4866 = vadd.s32 %v4861, 1
  %vm4867 = vcmp.gt.s32.totalorder %v4866, 0
  %v4868 = vsel %vm4867, %v4866, 0
  %v4869 = vshrl.u32 %v4868, 5
  %v4870 = vand.u32 %v4868, 31
  %v4871 = vsub.s32 32, %v4870
  %v4872 = vshrl.u32 683565275, %v4871
  %v4873 = vshll.u32 683565275, %v4870
  %v4874 = vshrl.u32 2475754826, %v4871
  %v4875 = vor.u32 %v4873, %v4874
  %v4876 = vshll.u32 2475754826, %v4870
  %v4877 = vshrl.u32 2131351028, %v4871
  %v4878 = vor.u32 %v4876, %v4877
  %v4879 = vshll.u32 2131351028, %v4870
  %v4880 = vshrl.u32 2102212464, %v4871
  %v4881 = vor.u32 %v4879, %v4880
  %v4882 = vshll.u32 2102212464, %v4870
  %v4883 = vshrl.u32 920167782, %v4871
  %v4884 = vor.u32 %v4882, %v4883
  %v4885 = vshll.u32 920167782, %v4870
  %v4886 = vshrl.u32 1326507024, %v4871
  %v4887 = vor.u32 %v4885, %v4886
  %vm4888 = vcmp.lt.s32.totalorder %v4869, 1
  %vm4889 = vcmp.lt.s32.totalorder %v4869, 2
  %vm4890 = vcmp.lt.s32.totalorder %v4869, 3
  %vm4891 = vcmp.lt.s32.totalorder %v4869, 4
  %v4892 = vsel %vm4888, %v4872, %v4875
  %v4893 = vsel %vm4891, %v4881, 2102212464
  %v4894 = vsel %vm4890, %v4878, %v4893
  %v4895 = vsel %vm4889, %v4892, %v4894
  %v4896 = vsel %vm4888, %v4875, %v4878
  %v4897 = vsel %vm4891, %v4884, 920167782
  %v4898 = vsel %vm4890, %v4881, %v4897
  %v4899 = vsel %vm4889, %v4896, %v4898
  %v4900 = vsel %vm4888, %v4878, %v4881
  %v4901 = vsel %vm4891, %v4887, 1326507024
  %v4902 = vsel %vm4890, %v4884, %v4901
  %v4903 = vsel %vm4889, %v4900, %v4902
  %v4904 = vshll.u32 %v4864, 8
  %v4905 = vmul.u32.u64.compose %v4904, %v4903
  %v4906 = vextract.low.u32 %v4905
  %v4907 = vextract.high.u32 %v4905
  %v4908 = vmul.u32.u64.compose %v4904, %v4899
  %v4909 = vextract.low.u32 %v4908
  %v4910 = vextract.high.u32 %v4908
  %v4911 = vmul.u32 %v4904, %v4895
  %v4912 = vadd.s32 %v4907, %v4909
  %vm4913 = vc.u32 %v4907, %v4909
  %v4914 = vadd.s32 %v4910, 1
  %v4915 = vsel %vm4913, %v4914, %v4910
  %v4916 = vadd.s32 %v4911, %v4915
  %v4917 = vadd.s32 %v4916, 536870912
  %v4918 = vshrl.u32 %v4917, 30
  %v4919 = vshll.u32 %v4918, 30
  %v4920 = vsub.s32 %v4916, %v4919
  %vm4921 = vcmp.lt.s32.totalorder %v4920, 0
  %v4922 = vsub.s32 0, %v4920
  %v4923 = vsel %vm4921, %v4922, %v4920
  %v4924 = vclz %v4923
  %v4925 = vsub.s32 %v4924, 2
  %vm4926 = vcmp.gt.s32.totalorder 0, %v4925
  %v4927 = vsel %vm4926, 0, %v4925
  %v4928 = vsub.s32 32, %v4927
  %v4929 = vshll.u32 %v4920, %v4927
  %v4930 = vshrl.u32 %v4912, %v4928
  %v4931 = vor.u32 %v4929, %v4930
  %v4932 = vsub.s32 4294967266, %v4927
  %v4933 = vadd.s32 %v4932, 127
  %v4934 = vshll.u32 %v4933, 23
  %v4935 = vor.u32 4788187, %v4934
  %v4936 = vand.u32 2147483647, %v4935
  %v4938 = vcvt.s32.f32 %v4931
  %v4939 = vmul.f32 %v4938, %v4936
  %v4940 = vxor.u32 %v4939, 2147483648
  %v4941 = vsel %vm4858, %v4940, %v4939
  %v4942 = vsub.s32 4, %v4918
  %v4943 = vsel %vm4858, %v4942, %v4918
  %v4944 = vsel %vm4857, %v388, %v4941
  %v4945 = vsel %vm4857, 0, %v4943
  %v4946 = vcosq.f32.pop %v4944
  %v4947 = vsinq.f32.pop %v4944
  %vm4948 = vweird.f32 %v388
  %v4949 = vadd.s32 %v4945, 3
  %v4950 = vand.u32 %v4949, 3
  %vm4951 = vcmp.lt.s32.totalorder %v4950, 2
  %vm4952 = vcmp.eq.s32.totalorder %v4950, 0
  %v4953 = vxor.u32 %v4947, 2147483648
  %v4954 = vsel %vm4952, %v4946, %v4953
  %vm4955 = vcmp.eq.s32.totalorder %v4950, 2
  %v4956 = vxor.u32 %v4946, 2147483648
  %v4957 = vsel %vm4955, %v4956, %v4947
  %v4958 = vsel %vm4951, %v4954, %v4957
  %v4959 = vsel %vm4948, nan, %v4958
  %v4960 = vand.u32 2147483647, %v390
  %vm4961 = vcmp.le.f32.partialorder %v4960, 0.7853982
  %vm4962 = vcmp.lt.s32.totalorder %v390, 0
  %v4963 = vand.u32 %v390, 2139095040
  %v4964 = vshrl.u32 %v4963, 23
  %v4965 = vsub.s32 %v4964, 127
  %v4966 = vand.u32 2147483647, %v390
  %v4967 = vand.u32 %v4966, 8388607
  %v4968 = vor.u32 %v4967, 8388608
  %v4969 = vsub.s32 0, %v4968
  %v4970 = vadd.s32 %v4965, 1
  %vm4971 = vcmp.gt.s32.totalorder %v4970, 0
  %v4972 = vsel %vm4971, %v4970, 0
  %v4973 = vshrl.u32 %v4972, 5
  %v4974 = vand.u32 %v4972, 31
  %v4975 = vsub.s32 32, %v4974
  %v4976 = vshrl.u32 683565275, %v4975
  %v4977 = vshll.u32 683565275, %v4974
  %v4978 = vshrl.u32 2475754826, %v4975
  %v4979 = vor.u32 %v4977, %v4978
  %v4980 = vshll.u32 2475754826, %v4974
  %v4981 = vshrl.u32 2131351028, %v4975
  %v4982 = vor.u32 %v4980, %v4981
  %v4983 = vshll.u32 2131351028, %v4974
  %v4984 = vshrl.u32 2102212464, %v4975
  %v4985 = vor.u32 %v4983, %v4984
  %v4986 = vshll.u32 2102212464, %v4974
  %v4987 = vshrl.u32 920167782, %v4975
  %v4988 = vor.u32 %v4986, %v4987
  %v4989 = vshll.u32 920167782, %v4974
  %v4990 = vshrl.u32 1326507024, %v4975
  %v4991 = vor.u32 %v4989, %v4990
  %vm4992 = vcmp.lt.s32.totalorder %v4973, 1
  %vm4993 = vcmp.lt.s32.totalorder %v4973, 2
  %vm4994 = vcmp.lt.s32.totalorder %v4973, 3
  %vm4995 = vcmp.lt.s32.totalorder %v4973, 4
  %v4996 = vsel %vm4992, %v4976, %v4979
  %v4997 = vsel %vm4995, %v4985, 2102212464
  %v4998 = vsel %vm4994, %v4982, %v4997
  %v4999 = vsel %vm4993, %v4996, %v4998
  %v5000 = vsel %vm4992, %v4979, %v4982
  %v5001 = vsel %vm4995, %v4988, 920167782
  %v5002 = vsel %vm4994, %v4985, %v5001
  %v5003 = vsel %vm4993, %v5000, %v5002
  %v5004 = vsel %vm4992, %v4982, %v4985
  %v5005 = vsel %vm4995, %v4991, 1326507024
  %v5006 = vsel %vm4994, %v4988, %v5005
  %v5007 = vsel %vm4993, %v5004, %v5006
  %v5008 = vshll.u32 %v4968, 8
  %v5009 = vmul.u32.u64.compose %v5008, %v5007
  %v5010 = vextract.low.u32 %v5009
  %v5011 = vextract.high.u32 %v5009
  %v5012 = vmul.u32.u64.compose %v5008, %v5003
  %v5013 = vextract.low.u32 %v5012
  %v5014 = vextract.high.u32 %v5012
  %v5015 = vmul.u32 %v5008, %v4999
  %v5016 = vadd.s32 %v5011, %v5013
  %vm5017 = vc.u32 %v5011, %v5013
  %v5018 = vadd.s32 %v5014, 1
  %v5019 = vsel %vm5017, %v5018, %v5014
  %v5020 = vadd.s32 %v5015, %v5019
  %v5021 = vadd.s32 %v5020, 536870912
  %v5022 = vshrl.u32 %v5021, 30
  %v5023 = vshll.u32 %v5022, 30
  %v5024 = vsub.s32 %v5020, %v5023
  %vm5025 = vcmp.lt.s32.totalorder %v5024, 0
  %v5026 = vsub.s32 0, %v5024
  %v5027 = vsel %vm5025, %v5026, %v5024
  %v5028 = vclz %v5027
  %v5029 = vsub.s32 %v5028, 2
  %vm5030 = vcmp.gt.s32.totalorder 0, %v5029
  %v5031 = vsel %vm5030, 0, %v5029
  %v5032 = vsub.s32 32, %v5031
  %v5033 = vshll.u32 %v5024, %v5031
  %v5034 = vshrl.u32 %v5016, %v5032
  %v5035 = vor.u32 %v5033, %v5034
  %v5036 = vsub.s32 4294967266, %v5031
  %v5037 = vadd.s32 %v5036, 127
  %v5038 = vshll.u32 %v5037, 23
  %v5039 = vor.u32 4788187, %v5038
  %v5040 = vand.u32 2147483647, %v5039
  %v5042 = vcvt.s32.f32 %v5035
  %v5043 = vmul.f32 %v5042, %v5040
  %v5044 = vxor.u32 %v5043, 2147483648
  %v5045 = vsel %vm4962, %v5044, %v5043
  %v5046 = vsub.s32 4, %v5022
  %v5047 = vsel %vm4962, %v5046, %v5022
  %v5048 = vsel %vm4961, %v390, %v5045
  %v5049 = vsel %vm4961, 0, %v5047
  %v5050 = vcosq.f32.pop %v5048
  %v5051 = vsinq.f32.pop %v5048
  %vm5052 = vweird.f32 %v390
  %v5053 = vadd.s32 %v5049, 3
  %v5054 = vand.u32 %v5053, 3
  %vm5055 = vcmp.lt.s32.totalorder %v5054, 2
  %vm5056 = vcmp.eq.s32.totalorder %v5054, 0
  %v5057 = vxor.u32 %v5051, 2147483648
  %v5058 = vsel %vm5056, %v5050, %v5057
  %vm5059 = vcmp.eq.s32.totalorder %v5054, 2
  %v5060 = vxor.u32 %v5050, 2147483648
  %v5061 = vsel %vm5059, %v5060, %v5051
  %v5062 = vsel %vm5055, %v5058, %v5061
  %v5063 = vsel %vm5052, nan, %v5062
  %v5064 = vand.u32 2147483647, %v394
  %vm5065 = vcmp.le.f32.partialorder %v5064, 0.7853982
  %vm5066 = vcmp.lt.s32.totalorder %v394, 0
  %v5067 = vand.u32 %v394, 2139095040
  %v5068 = vshrl.u32 %v5067, 23
  %v5069 = vsub.s32 %v5068, 127
  %v5070 = vand.u32 2147483647, %v394
  %v5071 = vand.u32 %v5070, 8388607
  %v5072 = vor.u32 %v5071, 8388608
  %v5073 = vsub.s32 0, %v5072
  %v5074 = vadd.s32 %v5069, 1
  %vm5075 = vcmp.gt.s32.totalorder %v5074, 0
  %v5076 = vsel %vm5075, %v5074, 0
  %v5077 = vshrl.u32 %v5076, 5
  %v5078 = vand.u32 %v5076, 31
  %v5079 = vsub.s32 32, %v5078
  %v5080 = vshrl.u32 683565275, %v5079
  %v5081 = vshll.u32 683565275, %v5078
  %v5082 = vshrl.u32 2475754826, %v5079
  %v5083 = vor.u32 %v5081, %v5082
  %v5084 = vshll.u32 2475754826, %v5078
  %v5085 = vshrl.u32 2131351028, %v5079
  %v5086 = vor.u32 %v5084, %v5085
  %v5087 = vshll.u32 2131351028, %v5078
  %v5088 = vshrl.u32 2102212464, %v5079
  %v5089 = vor.u32 %v5087, %v5088
  %v5090 = vshll.u32 2102212464, %v5078
  %v5091 = vshrl.u32 920167782, %v5079
  %v5092 = vor.u32 %v5090, %v5091
  %v5093 = vshll.u32 920167782, %v5078
  %v5094 = vshrl.u32 1326507024, %v5079
  %v5095 = vor.u32 %v5093, %v5094
  %vm5096 = vcmp.lt.s32.totalorder %v5077, 1
  %vm5097 = vcmp.lt.s32.totalorder %v5077, 2
  %vm5098 = vcmp.lt.s32.totalorder %v5077, 3
  %vm5099 = vcmp.lt.s32.totalorder %v5077, 4
  %v5100 = vsel %vm5096, %v5080, %v5083
  %v5101 = vsel %vm5099, %v5089, 2102212464
  %v5102 = vsel %vm5098, %v5086, %v5101
  %v5103 = vsel %vm5097, %v5100, %v5102
  %v5104 = vsel %vm5096, %v5083, %v5086
  %v5105 = vsel %vm5099, %v5092, 920167782
  %v5106 = vsel %vm5098, %v5089, %v5105
  %v5107 = vsel %vm5097, %v5104, %v5106
  %v5108 = vsel %vm5096, %v5086, %v5089
  %v5109 = vsel %vm5099, %v5095, 1326507024
  %v5110 = vsel %vm5098, %v5092, %v5109
  %v5111 = vsel %vm5097, %v5108, %v5110
  %v5112 = vshll.u32 %v5072, 8
  %v5113 = vmul.u32.u64.compose %v5112, %v5111
  %v5114 = vextract.low.u32 %v5113
  %v5115 = vextract.high.u32 %v5113
  %v5116 = vmul.u32.u64.compose %v5112, %v5107
  %v5117 = vextract.low.u32 %v5116
  %v5118 = vextract.high.u32 %v5116
  %v5119 = vmul.u32 %v5112, %v5103
  %v5120 = vadd.s32 %v5115, %v5117
  %vm5121 = vc.u32 %v5115, %v5117
  %v5122 = vadd.s32 %v5118, 1
  %v5123 = vsel %vm5121, %v5122, %v5118
  %v5124 = vadd.s32 %v5119, %v5123
  %v5125 = vadd.s32 %v5124, 536870912
  %v5126 = vshrl.u32 %v5125, 30
  %v5127 = vshll.u32 %v5126, 30
  %v5128 = vsub.s32 %v5124, %v5127
  %vm5129 = vcmp.lt.s32.totalorder %v5128, 0
  %v5130 = vsub.s32 0, %v5128
  %v5131 = vsel %vm5129, %v5130, %v5128
  %v5132 = vclz %v5131
  %v5133 = vsub.s32 %v5132, 2
  %vm5134 = vcmp.gt.s32.totalorder 0, %v5133
  %v5135 = vsel %vm5134, 0, %v5133
  %v5136 = vsub.s32 32, %v5135
  %v5137 = vshll.u32 %v5128, %v5135
  %v5138 = vshrl.u32 %v5120, %v5136
  %v5139 = vor.u32 %v5137, %v5138
  %v5140 = vsub.s32 4294967266, %v5135
  %v5141 = vadd.s32 %v5140, 127
  %v5142 = vshll.u32 %v5141, 23
  %v5143 = vor.u32 4788187, %v5142
  %v5144 = vand.u32 2147483647, %v5143
  %v5146 = vcvt.s32.f32 %v5139
  %v5147 = vmul.f32 %v5146, %v5144
  %v5148 = vxor.u32 %v5147, 2147483648
  %v5149 = vsel %vm5066, %v5148, %v5147
  %v5150 = vsub.s32 4, %v5126
  %v5151 = vsel %vm5066, %v5150, %v5126
  %v5152 = vsel %vm5065, %v394, %v5149
  %v5153 = vsel %vm5065, 0, %v5151
  %v5154 = vcosq.f32.pop %v5152
  %v5155 = vsinq.f32.pop %v5152
  %vm5156 = vweird.f32 %v394
  %v5157 = vadd.s32 %v5153, 3
  %v5158 = vand.u32 %v5157, 3
  %vm5159 = vcmp.lt.s32.totalorder %v5158, 2
  %vm5160 = vcmp.eq.s32.totalorder %v5158, 0
  %v5161 = vxor.u32 %v5155, 2147483648
  %v5162 = vsel %vm5160, %v5154, %v5161
  %vm5163 = vcmp.eq.s32.totalorder %v5158, 2
  %v5164 = vxor.u32 %v5154, 2147483648
  %v5165 = vsel %vm5163, %v5164, %v5155
  %v5166 = vsel %vm5159, %v5162, %v5165
  %v5167 = vsel %vm5156, nan, %v5166
  %v5168 = vand.u32 2147483647, %v396
  %vm5169 = vcmp.le.f32.partialorder %v5168, 0.7853982
  %vm5170 = vcmp.lt.s32.totalorder %v396, 0
  %v5171 = vand.u32 %v396, 2139095040
  %v5172 = vshrl.u32 %v5171, 23
  %v5173 = vsub.s32 %v5172, 127
  %v5174 = vand.u32 2147483647, %v396
  %v5175 = vand.u32 %v5174, 8388607
  %v5176 = vor.u32 %v5175, 8388608
  %v5177 = vsub.s32 0, %v5176
  %v5178 = vadd.s32 %v5173, 1
  %vm5179 = vcmp.gt.s32.totalorder %v5178, 0
  %v5180 = vsel %vm5179, %v5178, 0
  %v5181 = vshrl.u32 %v5180, 5
  %v5182 = vand.u32 %v5180, 31
  %v5183 = vsub.s32 32, %v5182
  %v5184 = vshrl.u32 683565275, %v5183
  %v5185 = vshll.u32 683565275, %v5182
  %v5186 = vshrl.u32 2475754826, %v5183
  %v5187 = vor.u32 %v5185, %v5186
  %v5188 = vshll.u32 2475754826, %v5182
  %v5189 = vshrl.u32 2131351028, %v5183
  %v5190 = vor.u32 %v5188, %v5189
  %v5191 = vshll.u32 2131351028, %v5182
  %v5192 = vshrl.u32 2102212464, %v5183
  %v5193 = vor.u32 %v5191, %v5192
  %v5194 = vshll.u32 2102212464, %v5182
  %v5195 = vshrl.u32 920167782, %v5183
  %v5196 = vor.u32 %v5194, %v5195
  %v5197 = vshll.u32 920167782, %v5182
  %v5198 = vshrl.u32 1326507024, %v5183
  %v5199 = vor.u32 %v5197, %v5198
  %vm5200 = vcmp.lt.s32.totalorder %v5181, 1
  %vm5201 = vcmp.lt.s32.totalorder %v5181, 2
  %vm5202 = vcmp.lt.s32.totalorder %v5181, 3
  %vm5203 = vcmp.lt.s32.totalorder %v5181, 4
  %v5204 = vsel %vm5200, %v5184, %v5187
  %v5205 = vsel %vm5203, %v5193, 2102212464
  %v5206 = vsel %vm5202, %v5190, %v5205
  %v5207 = vsel %vm5201, %v5204, %v5206
  %v5208 = vsel %vm5200, %v5187, %v5190
  %v5209 = vsel %vm5203, %v5196, 920167782
  %v5210 = vsel %vm5202, %v5193, %v5209
  %v5211 = vsel %vm5201, %v5208, %v5210
  %v5212 = vsel %vm5200, %v5190, %v5193
  %v5213 = vsel %vm5203, %v5199, 1326507024
  %v5214 = vsel %vm5202, %v5196, %v5213
  %v5215 = vsel %vm5201, %v5212, %v5214
  %v5216 = vshll.u32 %v5176, 8
  %v5217 = vmul.u32.u64.compose %v5216, %v5215
  %v5218 = vextract.low.u32 %v5217
  %v5219 = vextract.high.u32 %v5217
  %v5220 = vmul.u32.u64.compose %v5216, %v5211
  %v5221 = vextract.low.u32 %v5220
  %v5222 = vextract.high.u32 %v5220
  %v5223 = vmul.u32 %v5216, %v5207
  %v5224 = vadd.s32 %v5219, %v5221
  %vm5225 = vc.u32 %v5219, %v5221
  %v5226 = vadd.s32 %v5222, 1
  %v5227 = vsel %vm5225, %v5226, %v5222
  %v5228 = vadd.s32 %v5223, %v5227
  %v5229 = vadd.s32 %v5228, 536870912
  %v5230 = vshrl.u32 %v5229, 30
  %v5231 = vshll.u32 %v5230, 30
  %v5232 = vsub.s32 %v5228, %v5231
  %vm5233 = vcmp.lt.s32.totalorder %v5232, 0
  %v5234 = vsub.s32 0, %v5232
  %v5235 = vsel %vm5233, %v5234, %v5232
  %v5236 = vclz %v5235
  %v5237 = vsub.s32 %v5236, 2
  %vm5238 = vcmp.gt.s32.totalorder 0, %v5237
  %v5239 = vsel %vm5238, 0, %v5237
  %v5240 = vsub.s32 32, %v5239
  %v5241 = vshll.u32 %v5232, %v5239
  %v5242 = vshrl.u32 %v5224, %v5240
  %v5243 = vor.u32 %v5241, %v5242
  %v5244 = vsub.s32 4294967266, %v5239
  %v5245 = vadd.s32 %v5244, 127
  %v5246 = vshll.u32 %v5245, 23
  %v5247 = vor.u32 4788187, %v5246
  %v5248 = vand.u32 2147483647, %v5247
  %v5250 = vcvt.s32.f32 %v5243
  %v5251 = vmul.f32 %v5250, %v5248
  %v5252 = vxor.u32 %v5251, 2147483648
  %v5253 = vsel %vm5170, %v5252, %v5251
  %v5254 = vsub.s32 4, %v5230
  %v5255 = vsel %vm5170, %v5254, %v5230
  %v5256 = vsel %vm5169, %v396, %v5253
  %v5257 = vsel %vm5169, 0, %v5255
  %v5258 = vcosq.f32.pop %v5256
  %v5259 = vsinq.f32.pop %v5256
  %vm5260 = vweird.f32 %v396
  %v5261 = vadd.s32 %v5257, 3
  %v5262 = vand.u32 %v5261, 3
  %vm5263 = vcmp.lt.s32.totalorder %v5262, 2
  %vm5264 = vcmp.eq.s32.totalorder %v5262, 0
  %v5265 = vxor.u32 %v5259, 2147483648
  %v5266 = vsel %vm5264, %v5258, %v5265
  %vm5267 = vcmp.eq.s32.totalorder %v5262, 2
  %v5268 = vxor.u32 %v5258, 2147483648
  %v5269 = vsel %vm5267, %v5268, %v5259
  %v5270 = vsel %vm5263, %v5266, %v5269
  %v5271 = vsel %vm5260, nan, %v5270
  %v5272 = vand.u32 2147483647, %v400
  %vm5273 = vcmp.le.f32.partialorder %v5272, 0.7853982
  %vm5274 = vcmp.lt.s32.totalorder %v400, 0
  %v5275 = vand.u32 %v400, 2139095040
  %v5276 = vshrl.u32 %v5275, 23
  %v5277 = vsub.s32 %v5276, 127
  %v5278 = vand.u32 2147483647, %v400
  %v5279 = vand.u32 %v5278, 8388607
  %v5280 = vor.u32 %v5279, 8388608
  %v5281 = vsub.s32 0, %v5280
  %v5282 = vadd.s32 %v5277, 1
  %vm5283 = vcmp.gt.s32.totalorder %v5282, 0
  %v5284 = vsel %vm5283, %v5282, 0
  %v5285 = vshrl.u32 %v5284, 5
  %v5286 = vand.u32 %v5284, 31
  %v5287 = vsub.s32 32, %v5286
  %v5288 = vshrl.u32 683565275, %v5287
  %v5289 = vshll.u32 683565275, %v5286
  %v5290 = vshrl.u32 2475754826, %v5287
  %v5291 = vor.u32 %v5289, %v5290
  %v5292 = vshll.u32 2475754826, %v5286
  %v5293 = vshrl.u32 2131351028, %v5287
  %v5294 = vor.u32 %v5292, %v5293
  %v5295 = vshll.u32 2131351028, %v5286
  %v5296 = vshrl.u32 2102212464, %v5287
  %v5297 = vor.u32 %v5295, %v5296
  %v5298 = vshll.u32 2102212464, %v5286
  %v5299 = vshrl.u32 920167782, %v5287
  %v5300 = vor.u32 %v5298, %v5299
  %v5301 = vshll.u32 920167782, %v5286
  %v5302 = vshrl.u32 1326507024, %v5287
  %v5303 = vor.u32 %v5301, %v5302
  %vm5304 = vcmp.lt.s32.totalorder %v5285, 1
  %vm5305 = vcmp.lt.s32.totalorder %v5285, 2
  %vm5306 = vcmp.lt.s32.totalorder %v5285, 3
  %vm5307 = vcmp.lt.s32.totalorder %v5285, 4
  %v5308 = vsel %vm5304, %v5288, %v5291
  %v5309 = vsel %vm5307, %v5297, 2102212464
  %v5310 = vsel %vm5306, %v5294, %v5309
  %v5311 = vsel %vm5305, %v5308, %v5310
  %v5312 = vsel %vm5304, %v5291, %v5294
  %v5313 = vsel %vm5307, %v5300, 920167782
  %v5314 = vsel %vm5306, %v5297, %v5313
  %v5315 = vsel %vm5305, %v5312, %v5314
  %v5316 = vsel %vm5304, %v5294, %v5297
  %v5317 = vsel %vm5307, %v5303, 1326507024
  %v5318 = vsel %vm5306, %v5300, %v5317
  %v5319 = vsel %vm5305, %v5316, %v5318
  %v5320 = vshll.u32 %v5280, 8
  %v5321 = vmul.u32.u64.compose %v5320, %v5319
  %v5322 = vextract.low.u32 %v5321
  %v5323 = vextract.high.u32 %v5321
  %v5324 = vmul.u32.u64.compose %v5320, %v5315
  %v5325 = vextract.low.u32 %v5324
  %v5326 = vextract.high.u32 %v5324
  %v5327 = vmul.u32 %v5320, %v5311
  %v5328 = vadd.s32 %v5323, %v5325
  %vm5329 = vc.u32 %v5323, %v5325
  %v5330 = vadd.s32 %v5326, 1
  %v5331 = vsel %vm5329, %v5330, %v5326
  %v5332 = vadd.s32 %v5327, %v5331
  %v5333 = vadd.s32 %v5332, 536870912
  %v5334 = vshrl.u32 %v5333, 30
  %v5335 = vshll.u32 %v5334, 30
  %v5336 = vsub.s32 %v5332, %v5335
  %vm5337 = vcmp.lt.s32.totalorder %v5336, 0
  %v5338 = vsub.s32 0, %v5336
  %v5339 = vsel %vm5337, %v5338, %v5336
  %v5340 = vclz %v5339
  %v5341 = vsub.s32 %v5340, 2
  %vm5342 = vcmp.gt.s32.totalorder 0, %v5341
  %v5343 = vsel %vm5342, 0, %v5341
  %v5344 = vsub.s32 32, %v5343
  %v5345 = vshll.u32 %v5336, %v5343
  %v5346 = vshrl.u32 %v5328, %v5344
  %v5347 = vor.u32 %v5345, %v5346
  %v5348 = vsub.s32 4294967266, %v5343
  %v5349 = vadd.s32 %v5348, 127
  %v5350 = vshll.u32 %v5349, 23
  %v5351 = vor.u32 4788187, %v5350
  %v5352 = vand.u32 2147483647, %v5351
  %v5354 = vcvt.s32.f32 %v5347
  %v5355 = vmul.f32 %v5354, %v5352
  %v5356 = vxor.u32 %v5355, 2147483648
  %v5357 = vsel %vm5274, %v5356, %v5355
  %v5358 = vsub.s32 4, %v5334
  %v5359 = vsel %vm5274, %v5358, %v5334
  %v5360 = vsel %vm5273, %v400, %v5357
  %v5361 = vsel %vm5273, 0, %v5359
  %v5362 = vcosq.f32.pop %v5360
  %v5363 = vsinq.f32.pop %v5360
  %vm5364 = vweird.f32 %v400
  %v5365 = vadd.s32 %v5361, 3
  %v5366 = vand.u32 %v5365, 3
  %vm5367 = vcmp.lt.s32.totalorder %v5366, 2
  %vm5368 = vcmp.eq.s32.totalorder %v5366, 0
  %v5369 = vxor.u32 %v5363, 2147483648
  %v5370 = vsel %vm5368, %v5362, %v5369
  %vm5371 = vcmp.eq.s32.totalorder %v5366, 2
  %v5372 = vxor.u32 %v5362, 2147483648
  %v5373 = vsel %vm5371, %v5372, %v5363
  %v5374 = vsel %vm5367, %v5370, %v5373
  %v5375 = vsel %vm5364, nan, %v5374
  %v5376 = vand.u32 2147483647, %v402
  %vm5377 = vcmp.le.f32.partialorder %v5376, 0.7853982
  %vm5378 = vcmp.lt.s32.totalorder %v402, 0
  %v5379 = vand.u32 %v402, 2139095040
  %v5380 = vshrl.u32 %v5379, 23
  %v5381 = vsub.s32 %v5380, 127
  %v5382 = vand.u32 2147483647, %v402
  %v5383 = vand.u32 %v5382, 8388607
  %v5384 = vor.u32 %v5383, 8388608
  %v5385 = vsub.s32 0, %v5384
  %v5386 = vadd.s32 %v5381, 1
  %vm5387 = vcmp.gt.s32.totalorder %v5386, 0
  %v5388 = vsel %vm5387, %v5386, 0
  %v5389 = vshrl.u32 %v5388, 5
  %v5390 = vand.u32 %v5388, 31
  %v5391 = vsub.s32 32, %v5390
  %v5392 = vshrl.u32 683565275, %v5391
  %v5393 = vshll.u32 683565275, %v5390
  %v5394 = vshrl.u32 2475754826, %v5391
  %v5395 = vor.u32 %v5393, %v5394
  %v5396 = vshll.u32 2475754826, %v5390
  %v5397 = vshrl.u32 2131351028, %v5391
  %v5398 = vor.u32 %v5396, %v5397
  %v5399 = vshll.u32 2131351028, %v5390
  %v5400 = vshrl.u32 2102212464, %v5391
  %v5401 = vor.u32 %v5399, %v5400
  %v5402 = vshll.u32 2102212464, %v5390
  %v5403 = vshrl.u32 920167782, %v5391
  %v5404 = vor.u32 %v5402, %v5403
  %v5405 = vshll.u32 920167782, %v5390
  %v5406 = vshrl.u32 1326507024, %v5391
  %v5407 = vor.u32 %v5405, %v5406
  %vm5408 = vcmp.lt.s32.totalorder %v5389, 1
  %vm5409 = vcmp.lt.s32.totalorder %v5389, 2
  %vm5410 = vcmp.lt.s32.totalorder %v5389, 3
  %vm5411 = vcmp.lt.s32.totalorder %v5389, 4
  %v5412 = vsel %vm5408, %v5392, %v5395
  %v5413 = vsel %vm5411, %v5401, 2102212464
  %v5414 = vsel %vm5410, %v5398, %v5413
  %v5415 = vsel %vm5409, %v5412, %v5414
  %v5416 = vsel %vm5408, %v5395, %v5398
  %v5417 = vsel %vm5411, %v5404, 920167782
  %v5418 = vsel %vm5410, %v5401, %v5417
  %v5419 = vsel %vm5409, %v5416, %v5418
  %v5420 = vsel %vm5408, %v5398, %v5401
  %v5421 = vsel %vm5411, %v5407, 1326507024
  %v5422 = vsel %vm5410, %v5404, %v5421
  %v5423 = vsel %vm5409, %v5420, %v5422
  %v5424 = vshll.u32 %v5384, 8
  %v5425 = vmul.u32.u64.compose %v5424, %v5423
  %v5426 = vextract.low.u32 %v5425
  %v5427 = vextract.high.u32 %v5425
  %v5428 = vmul.u32.u64.compose %v5424, %v5419
  %v5429 = vextract.low.u32 %v5428
  %v5430 = vextract.high.u32 %v5428
  %v5431 = vmul.u32 %v5424, %v5415
  %v5432 = vadd.s32 %v5427, %v5429
  %vm5433 = vc.u32 %v5427, %v5429
  %v5434 = vadd.s32 %v5430, 1
  %v5435 = vsel %vm5433, %v5434, %v5430
  %v5436 = vadd.s32 %v5431, %v5435
  %v5437 = vadd.s32 %v5436, 536870912
  %v5438 = vshrl.u32 %v5437, 30
  %v5439 = vshll.u32 %v5438, 30
  %v5440 = vsub.s32 %v5436, %v5439
  %vm5441 = vcmp.lt.s32.totalorder %v5440, 0
  %v5442 = vsub.s32 0, %v5440
  %v5443 = vsel %vm5441, %v5442, %v5440
  %v5444 = vclz %v5443
  %v5445 = vsub.s32 %v5444, 2
  %vm5446 = vcmp.gt.s32.totalorder 0, %v5445
  %v5447 = vsel %vm5446, 0, %v5445
  %v5448 = vsub.s32 32, %v5447
  %v5449 = vshll.u32 %v5440, %v5447
  %v5450 = vshrl.u32 %v5432, %v5448
  %v5451 = vor.u32 %v5449, %v5450
  %v5452 = vsub.s32 4294967266, %v5447
  %v5453 = vadd.s32 %v5452, 127
  %v5454 = vshll.u32 %v5453, 23
  %v5455 = vor.u32 4788187, %v5454
  %v5456 = vand.u32 2147483647, %v5455
  %v5458 = vcvt.s32.f32 %v5451
  %v5459 = vmul.f32 %v5458, %v5456
  %v5460 = vxor.u32 %v5459, 2147483648
  %v5461 = vsel %vm5378, %v5460, %v5459
  %v5462 = vsub.s32 4, %v5438
  %v5463 = vsel %vm5378, %v5462, %v5438
  %v5464 = vsel %vm5377, %v402, %v5461
  %v5465 = vsel %vm5377, 0, %v5463
  %v5466 = vcosq.f32.pop %v5464
  %v5467 = vsinq.f32.pop %v5464
  %vm5468 = vweird.f32 %v402
  %v5469 = vadd.s32 %v5465, 3
  %v5470 = vand.u32 %v5469, 3
  %vm5471 = vcmp.lt.s32.totalorder %v5470, 2
  %vm5472 = vcmp.eq.s32.totalorder %v5470, 0
  %v5473 = vxor.u32 %v5467, 2147483648
  %v5474 = vsel %vm5472, %v5466, %v5473
  %vm5475 = vcmp.eq.s32.totalorder %v5470, 2
  %v5476 = vxor.u32 %v5466, 2147483648
  %v5477 = vsel %vm5475, %v5476, %v5467
  %v5478 = vsel %vm5471, %v5474, %v5477
  %v5479 = vsel %vm5468, nan, %v5478
  %v5480 = vand.u32 2147483647, %v406
  %vm5481 = vcmp.le.f32.partialorder %v5480, 0.7853982
  %vm5482 = vcmp.lt.s32.totalorder %v406, 0
  %v5483 = vand.u32 %v406, 2139095040
  %v5484 = vshrl.u32 %v5483, 23
  %v5485 = vsub.s32 %v5484, 127
  %v5486 = vand.u32 2147483647, %v406
  %v5487 = vand.u32 %v5486, 8388607
  %v5488 = vor.u32 %v5487, 8388608
  %v5489 = vsub.s32 0, %v5488
  %v5490 = vadd.s32 %v5485, 1
  %vm5491 = vcmp.gt.s32.totalorder %v5490, 0
  %v5492 = vsel %vm5491, %v5490, 0
  %v5493 = vshrl.u32 %v5492, 5
  %v5494 = vand.u32 %v5492, 31
  %v5495 = vsub.s32 32, %v5494
  %v5496 = vshrl.u32 683565275, %v5495
  %v5497 = vshll.u32 683565275, %v5494
  %v5498 = vshrl.u32 2475754826, %v5495
  %v5499 = vor.u32 %v5497, %v5498
  %v5500 = vshll.u32 2475754826, %v5494
  %v5501 = vshrl.u32 2131351028, %v5495
  %v5502 = vor.u32 %v5500, %v5501
  %v5503 = vshll.u32 2131351028, %v5494
  %v5504 = vshrl.u32 2102212464, %v5495
  %v5505 = vor.u32 %v5503, %v5504
  %v5506 = vshll.u32 2102212464, %v5494
  %v5507 = vshrl.u32 920167782, %v5495
  %v5508 = vor.u32 %v5506, %v5507
  %v5509 = vshll.u32 920167782, %v5494
  %v5510 = vshrl.u32 1326507024, %v5495
  %v5511 = vor.u32 %v5509, %v5510
  %vm5512 = vcmp.lt.s32.totalorder %v5493, 1
  %vm5513 = vcmp.lt.s32.totalorder %v5493, 2
  %vm5514 = vcmp.lt.s32.totalorder %v5493, 3
  %vm5515 = vcmp.lt.s32.totalorder %v5493, 4
  %v5516 = vsel %vm5512, %v5496, %v5499
  %v5517 = vsel %vm5515, %v5505, 2102212464
  %v5518 = vsel %vm5514, %v5502, %v5517
  %v5519 = vsel %vm5513, %v5516, %v5518
  %v5520 = vsel %vm5512, %v5499, %v5502
  %v5521 = vsel %vm5515, %v5508, 920167782
  %v5522 = vsel %vm5514, %v5505, %v5521
  %v5523 = vsel %vm5513, %v5520, %v5522
  %v5524 = vsel %vm5512, %v5502, %v5505
  %v5525 = vsel %vm5515, %v5511, 1326507024
  %v5526 = vsel %vm5514, %v5508, %v5525
  %v5527 = vsel %vm5513, %v5524, %v5526
  %v5528 = vshll.u32 %v5488, 8
  %v5529 = vmul.u32.u64.compose %v5528, %v5527
  %v5530 = vextract.low.u32 %v5529
  %v5531 = vextract.high.u32 %v5529
  %v5532 = vmul.u32.u64.compose %v5528, %v5523
  %v5533 = vextract.low.u32 %v5532
  %v5534 = vextract.high.u32 %v5532
  %v5535 = vmul.u32 %v5528, %v5519
  %v5536 = vadd.s32 %v5531, %v5533
  %vm5537 = vc.u32 %v5531, %v5533
  %v5538 = vadd.s32 %v5534, 1
  %v5539 = vsel %vm5537, %v5538, %v5534
  %v5540 = vadd.s32 %v5535, %v5539
  %v5541 = vadd.s32 %v5540, 536870912
  %v5542 = vshrl.u32 %v5541, 30
  %v5543 = vshll.u32 %v5542, 30
  %v5544 = vsub.s32 %v5540, %v5543
  %vm5545 = vcmp.lt.s32.totalorder %v5544, 0
  %v5546 = vsub.s32 0, %v5544
  %v5547 = vsel %vm5545, %v5546, %v5544
  %v5548 = vclz %v5547
  %v5549 = vsub.s32 %v5548, 2
  %vm5550 = vcmp.gt.s32.totalorder 0, %v5549
  %v5551 = vsel %vm5550, 0, %v5549
  %v5552 = vsub.s32 32, %v5551
  %v5553 = vshll.u32 %v5544, %v5551
  %v5554 = vshrl.u32 %v5536, %v5552
  %v5555 = vor.u32 %v5553, %v5554
  %v5556 = vsub.s32 4294967266, %v5551
  %v5557 = vadd.s32 %v5556, 127
  %v5558 = vshll.u32 %v5557, 23
  %v5559 = vor.u32 4788187, %v5558
  %v5560 = vand.u32 2147483647, %v5559
  %v5562 = vcvt.s32.f32 %v5555
  %v5563 = vmul.f32 %v5562, %v5560
  %v5564 = vxor.u32 %v5563, 2147483648
  %v5565 = vsel %vm5482, %v5564, %v5563
  %v5566 = vsub.s32 4, %v5542
  %v5567 = vsel %vm5482, %v5566, %v5542
  %v5568 = vsel %vm5481, %v406, %v5565
  %v5569 = vsel %vm5481, 0, %v5567
  %v5570 = vcosq.f32.pop %v5568
  %v5571 = vsinq.f32.pop %v5568
  %vm5572 = vweird.f32 %v406
  %v5573 = vadd.s32 %v5569, 3
  %v5574 = vand.u32 %v5573, 3
  %vm5575 = vcmp.lt.s32.totalorder %v5574, 2
  %vm5576 = vcmp.eq.s32.totalorder %v5574, 0
  %v5577 = vxor.u32 %v5571, 2147483648
  %v5578 = vsel %vm5576, %v5570, %v5577
  %vm5579 = vcmp.eq.s32.totalorder %v5574, 2
  %v5580 = vxor.u32 %v5570, 2147483648
  %v5581 = vsel %vm5579, %v5580, %v5571
  %v5582 = vsel %vm5575, %v5578, %v5581
  %v5583 = vsel %vm5572, nan, %v5582
  %v5584 = vand.u32 2147483647, %v408
  %vm5585 = vcmp.le.f32.partialorder %v5584, 0.7853982
  %vm5586 = vcmp.lt.s32.totalorder %v408, 0
  %v5587 = vand.u32 %v408, 2139095040
  %v5588 = vshrl.u32 %v5587, 23
  %v5589 = vsub.s32 %v5588, 127
  %v5590 = vand.u32 2147483647, %v408
  %v5591 = vand.u32 %v5590, 8388607
  %v5592 = vor.u32 %v5591, 8388608
  %v5593 = vsub.s32 0, %v5592
  %v5594 = vadd.s32 %v5589, 1
  %vm5595 = vcmp.gt.s32.totalorder %v5594, 0
  %v5596 = vsel %vm5595, %v5594, 0
  %v5597 = vshrl.u32 %v5596, 5
  %v5598 = vand.u32 %v5596, 31
  %v5599 = vsub.s32 32, %v5598
  %v5600 = vshrl.u32 683565275, %v5599
  %v5601 = vshll.u32 683565275, %v5598
  %v5602 = vshrl.u32 2475754826, %v5599
  %v5603 = vor.u32 %v5601, %v5602
  %v5604 = vshll.u32 2475754826, %v5598
  %v5605 = vshrl.u32 2131351028, %v5599
  %v5606 = vor.u32 %v5604, %v5605
  %v5607 = vshll.u32 2131351028, %v5598
  %v5608 = vshrl.u32 2102212464, %v5599
  %v5609 = vor.u32 %v5607, %v5608
  %v5610 = vshll.u32 2102212464, %v5598
  %v5611 = vshrl.u32 920167782, %v5599
  %v5612 = vor.u32 %v5610, %v5611
  %v5613 = vshll.u32 920167782, %v5598
  %v5614 = vshrl.u32 1326507024, %v5599
  %v5615 = vor.u32 %v5613, %v5614
  %vm5616 = vcmp.lt.s32.totalorder %v5597, 1
  %vm5617 = vcmp.lt.s32.totalorder %v5597, 2
  %vm5618 = vcmp.lt.s32.totalorder %v5597, 3
  %vm5619 = vcmp.lt.s32.totalorder %v5597, 4
  %v5620 = vsel %vm5616, %v5600, %v5603
  %v5621 = vsel %vm5619, %v5609, 2102212464
  %v5622 = vsel %vm5618, %v5606, %v5621
  %v5623 = vsel %vm5617, %v5620, %v5622
  %v5624 = vsel %vm5616, %v5603, %v5606
  %v5625 = vsel %vm5619, %v5612, 920167782
  %v5626 = vsel %vm5618, %v5609, %v5625
  %v5627 = vsel %vm5617, %v5624, %v5626
  %v5628 = vsel %vm5616, %v5606, %v5609
  %v5629 = vsel %vm5619, %v5615, 1326507024
  %v5630 = vsel %vm5618, %v5612, %v5629
  %v5631 = vsel %vm5617, %v5628, %v5630
  %v5632 = vshll.u32 %v5592, 8
  %v5633 = vmul.u32.u64.compose %v5632, %v5631
  %v5634 = vextract.low.u32 %v5633
  %v5635 = vextract.high.u32 %v5633
  %v5636 = vmul.u32.u64.compose %v5632, %v5627
  %v5637 = vextract.low.u32 %v5636
  %v5638 = vextract.high.u32 %v5636
  %v5639 = vmul.u32 %v5632, %v5623
  %v5640 = vadd.s32 %v5635, %v5637
  %vm5641 = vc.u32 %v5635, %v5637
  %v5642 = vadd.s32 %v5638, 1
  %v5643 = vsel %vm5641, %v5642, %v5638
  %v5644 = vadd.s32 %v5639, %v5643
  %v5645 = vadd.s32 %v5644, 536870912
  %v5646 = vshrl.u32 %v5645, 30
  %v5647 = vshll.u32 %v5646, 30
  %v5648 = vsub.s32 %v5644, %v5647
  %vm5649 = vcmp.lt.s32.totalorder %v5648, 0
  %v5650 = vsub.s32 0, %v5648
  %v5651 = vsel %vm5649, %v5650, %v5648
  %v5652 = vclz %v5651
  %v5653 = vsub.s32 %v5652, 2
  %vm5654 = vcmp.gt.s32.totalorder 0, %v5653
  %v5655 = vsel %vm5654, 0, %v5653
  %v5656 = vsub.s32 32, %v5655
  %v5657 = vshll.u32 %v5648, %v5655
  %v5658 = vshrl.u32 %v5640, %v5656
  %v5659 = vor.u32 %v5657, %v5658
  %v5660 = vsub.s32 4294967266, %v5655
  %v5661 = vadd.s32 %v5660, 127
  %v5662 = vshll.u32 %v5661, 23
  %v5663 = vor.u32 4788187, %v5662
  %v5664 = vand.u32 2147483647, %v5663
  %v5666 = vcvt.s32.f32 %v5659
  %v5667 = vmul.f32 %v5666, %v5664
  %v5668 = vxor.u32 %v5667, 2147483648
  %v5669 = vsel %vm5586, %v5668, %v5667
  %v5670 = vsub.s32 4, %v5646
  %v5671 = vsel %vm5586, %v5670, %v5646
  %v5672 = vsel %vm5585, %v408, %v5669
  %v5673 = vsel %vm5585, 0, %v5671
  %v5674 = vcosq.f32.pop %v5672
  %v5675 = vsinq.f32.pop %v5672
  %vm5676 = vweird.f32 %v408
  %v5677 = vadd.s32 %v5673, 3
  %v5678 = vand.u32 %v5677, 3
  %vm5679 = vcmp.lt.s32.totalorder %v5678, 2
  %vm5680 = vcmp.eq.s32.totalorder %v5678, 0
  %v5681 = vxor.u32 %v5675, 2147483648
  %v5682 = vsel %vm5680, %v5674, %v5681
  %vm5683 = vcmp.eq.s32.totalorder %v5678, 2
  %v5684 = vxor.u32 %v5674, 2147483648
  %v5685 = vsel %vm5683, %v5684, %v5675
  %v5686 = vsel %vm5679, %v5682, %v5685
  %v5687 = vsel %vm5676, nan, %v5686
  %v5688 = vand.u32 2147483647, %v412
  %vm5689 = vcmp.le.f32.partialorder %v5688, 0.7853982
  %vm5690 = vcmp.lt.s32.totalorder %v412, 0
  %v5691 = vand.u32 %v412, 2139095040
  %v5692 = vshrl.u32 %v5691, 23
  %v5693 = vsub.s32 %v5692, 127
  %v5694 = vand.u32 2147483647, %v412
  %v5695 = vand.u32 %v5694, 8388607
  %v5696 = vor.u32 %v5695, 8388608
  %v5697 = vsub.s32 0, %v5696
  %v5698 = vadd.s32 %v5693, 1
  %vm5699 = vcmp.gt.s32.totalorder %v5698, 0
  %v5700 = vsel %vm5699, %v5698, 0
  %v5701 = vshrl.u32 %v5700, 5
  %v5702 = vand.u32 %v5700, 31
  %v5703 = vsub.s32 32, %v5702
  %v5704 = vshrl.u32 683565275, %v5703
  %v5705 = vshll.u32 683565275, %v5702
  %v5706 = vshrl.u32 2475754826, %v5703
  %v5707 = vor.u32 %v5705, %v5706
  %v5708 = vshll.u32 2475754826, %v5702
  %v5709 = vshrl.u32 2131351028, %v5703
  %v5710 = vor.u32 %v5708, %v5709
  %v5711 = vshll.u32 2131351028, %v5702
  %v5712 = vshrl.u32 2102212464, %v5703
  %v5713 = vor.u32 %v5711, %v5712
  %v5714 = vshll.u32 2102212464, %v5702
  %v5715 = vshrl.u32 920167782, %v5703
  %v5716 = vor.u32 %v5714, %v5715
  %v5717 = vshll.u32 920167782, %v5702
  %v5718 = vshrl.u32 1326507024, %v5703
  %v5719 = vor.u32 %v5717, %v5718
  %vm5720 = vcmp.lt.s32.totalorder %v5701, 1
  %vm5721 = vcmp.lt.s32.totalorder %v5701, 2
  %vm5722 = vcmp.lt.s32.totalorder %v5701, 3
  %vm5723 = vcmp.lt.s32.totalorder %v5701, 4
  %v5724 = vsel %vm5720, %v5704, %v5707
  %v5725 = vsel %vm5723, %v5713, 2102212464
  %v5726 = vsel %vm5722, %v5710, %v5725
  %v5727 = vsel %vm5721, %v5724, %v5726
  %v5728 = vsel %vm5720, %v5707, %v5710
  %v5729 = vsel %vm5723, %v5716, 920167782
  %v5730 = vsel %vm5722, %v5713, %v5729
  %v5731 = vsel %vm5721, %v5728, %v5730
  %v5732 = vsel %vm5720, %v5710, %v5713
  %v5733 = vsel %vm5723, %v5719, 1326507024
  %v5734 = vsel %vm5722, %v5716, %v5733
  %v5735 = vsel %vm5721, %v5732, %v5734
  %v5736 = vshll.u32 %v5696, 8
  %v5737 = vmul.u32.u64.compose %v5736, %v5735
  %v5738 = vextract.low.u32 %v5737
  %v5739 = vextract.high.u32 %v5737
  %v5740 = vmul.u32.u64.compose %v5736, %v5731
  %v5741 = vextract.low.u32 %v5740
  %v5742 = vextract.high.u32 %v5740
  %v5743 = vmul.u32 %v5736, %v5727
  %v5744 = vadd.s32 %v5739, %v5741
  %vm5745 = vc.u32 %v5739, %v5741
  %v5746 = vadd.s32 %v5742, 1
  %v5747 = vsel %vm5745, %v5746, %v5742
  %v5748 = vadd.s32 %v5743, %v5747
  %v5749 = vadd.s32 %v5748, 536870912
  %v5750 = vshrl.u32 %v5749, 30
  %v5751 = vshll.u32 %v5750, 30
  %v5752 = vsub.s32 %v5748, %v5751
  %vm5753 = vcmp.lt.s32.totalorder %v5752, 0
  %v5754 = vsub.s32 0, %v5752
  %v5755 = vsel %vm5753, %v5754, %v5752
  %v5756 = vclz %v5755
  %v5757 = vsub.s32 %v5756, 2
  %vm5758 = vcmp.gt.s32.totalorder 0, %v5757
  %v5759 = vsel %vm5758, 0, %v5757
  %v5760 = vsub.s32 32, %v5759
  %v5761 = vshll.u32 %v5752, %v5759
  %v5762 = vshrl.u32 %v5744, %v5760
  %v5763 = vor.u32 %v5761, %v5762
  %v5764 = vsub.s32 4294967266, %v5759
  %v5765 = vadd.s32 %v5764, 127
  %v5766 = vshll.u32 %v5765, 23
  %v5767 = vor.u32 4788187, %v5766
  %v5768 = vand.u32 2147483647, %v5767
  %v5770 = vcvt.s32.f32 %v5763
  %v5771 = vmul.f32 %v5770, %v5768
  %v5772 = vxor.u32 %v5771, 2147483648
  %v5773 = vsel %vm5690, %v5772, %v5771
  %v5774 = vsub.s32 4, %v5750
  %v5775 = vsel %vm5690, %v5774, %v5750
  %v5776 = vsel %vm5689, %v412, %v5773
  %v5777 = vsel %vm5689, 0, %v5775
  %v5778 = vcosq.f32.pop %v5776
  %v5779 = vsinq.f32.pop %v5776
  %vm5780 = vweird.f32 %v412
  %v5781 = vadd.s32 %v5777, 3
  %v5782 = vand.u32 %v5781, 3
  %vm5783 = vcmp.lt.s32.totalorder %v5782, 2
  %vm5784 = vcmp.eq.s32.totalorder %v5782, 0
  %v5785 = vxor.u32 %v5779, 2147483648
  %v5786 = vsel %vm5784, %v5778, %v5785
  %vm5787 = vcmp.eq.s32.totalorder %v5782, 2
  %v5788 = vxor.u32 %v5778, 2147483648
  %v5789 = vsel %vm5787, %v5788, %v5779
  %v5790 = vsel %vm5783, %v5786, %v5789
  %v5791 = vsel %vm5780, nan, %v5790
  %v5792 = vand.u32 2147483647, %v414
  %vm5793 = vcmp.le.f32.partialorder %v5792, 0.7853982
  %vm5794 = vcmp.lt.s32.totalorder %v414, 0
  %v5795 = vand.u32 %v414, 2139095040
  %v5796 = vshrl.u32 %v5795, 23
  %v5797 = vsub.s32 %v5796, 127
  %v5798 = vand.u32 2147483647, %v414
  %v5799 = vand.u32 %v5798, 8388607
  %v5800 = vor.u32 %v5799, 8388608
  %v5801 = vsub.s32 0, %v5800
  %v5802 = vadd.s32 %v5797, 1
  %vm5803 = vcmp.gt.s32.totalorder %v5802, 0
  %v5804 = vsel %vm5803, %v5802, 0
  %v5805 = vshrl.u32 %v5804, 5
  %v5806 = vand.u32 %v5804, 31
  %v5807 = vsub.s32 32, %v5806
  %v5808 = vshrl.u32 683565275, %v5807
  %v5809 = vshll.u32 683565275, %v5806
  %v5810 = vshrl.u32 2475754826, %v5807
  %v5811 = vor.u32 %v5809, %v5810
  %v5812 = vshll.u32 2475754826, %v5806
  %v5813 = vshrl.u32 2131351028, %v5807
  %v5814 = vor.u32 %v5812, %v5813
  %v5815 = vshll.u32 2131351028, %v5806
  %v5816 = vshrl.u32 2102212464, %v5807
  %v5817 = vor.u32 %v5815, %v5816
  %v5818 = vshll.u32 2102212464, %v5806
  %v5819 = vshrl.u32 920167782, %v5807
  %v5820 = vor.u32 %v5818, %v5819
  %v5821 = vshll.u32 920167782, %v5806
  %v5822 = vshrl.u32 1326507024, %v5807
  %v5823 = vor.u32 %v5821, %v5822
  %vm5824 = vcmp.lt.s32.totalorder %v5805, 1
  %vm5825 = vcmp.lt.s32.totalorder %v5805, 2
  %vm5826 = vcmp.lt.s32.totalorder %v5805, 3
  %vm5827 = vcmp.lt.s32.totalorder %v5805, 4
  %v5828 = vsel %vm5824, %v5808, %v5811
  %v5829 = vsel %vm5827, %v5817, 2102212464
  %v5830 = vsel %vm5826, %v5814, %v5829
  %v5831 = vsel %vm5825, %v5828, %v5830
  %v5832 = vsel %vm5824, %v5811, %v5814
  %v5833 = vsel %vm5827, %v5820, 920167782
  %v5834 = vsel %vm5826, %v5817, %v5833
  %v5835 = vsel %vm5825, %v5832, %v5834
  %v5836 = vsel %vm5824, %v5814, %v5817
  %v5837 = vsel %vm5827, %v5823, 1326507024
  %v5838 = vsel %vm5826, %v5820, %v5837
  %v5839 = vsel %vm5825, %v5836, %v5838
  %v5840 = vshll.u32 %v5800, 8
  %v5841 = vmul.u32.u64.compose %v5840, %v5839
  %v5842 = vextract.low.u32 %v5841
  %v5843 = vextract.high.u32 %v5841
  %v5844 = vmul.u32.u64.compose %v5840, %v5835
  %v5845 = vextract.low.u32 %v5844
  %v5846 = vextract.high.u32 %v5844
  %v5847 = vmul.u32 %v5840, %v5831
  %v5848 = vadd.s32 %v5843, %v5845
  %vm5849 = vc.u32 %v5843, %v5845
  %v5850 = vadd.s32 %v5846, 1
  %v5851 = vsel %vm5849, %v5850, %v5846
  %v5852 = vadd.s32 %v5847, %v5851
  %v5853 = vadd.s32 %v5852, 536870912
  %v5854 = vshrl.u32 %v5853, 30
  %v5855 = vshll.u32 %v5854, 30
  %v5856 = vsub.s32 %v5852, %v5855
  %vm5857 = vcmp.lt.s32.totalorder %v5856, 0
  %v5858 = vsub.s32 0, %v5856
  %v5859 = vsel %vm5857, %v5858, %v5856
  %v5860 = vclz %v5859
  %v5861 = vsub.s32 %v5860, 2
  %vm5862 = vcmp.gt.s32.totalorder 0, %v5861
  %v5863 = vsel %vm5862, 0, %v5861
  %v5864 = vsub.s32 32, %v5863
  %v5865 = vshll.u32 %v5856, %v5863
  %v5866 = vshrl.u32 %v5848, %v5864
  %v5867 = vor.u32 %v5865, %v5866
  %v5868 = vsub.s32 4294967266, %v5863
  %v5869 = vadd.s32 %v5868, 127
  %v5870 = vshll.u32 %v5869, 23
  %v5871 = vor.u32 4788187, %v5870
  %v5872 = vand.u32 2147483647, %v5871
  %v5874 = vcvt.s32.f32 %v5867
  %v5875 = vmul.f32 %v5874, %v5872
  %v5876 = vxor.u32 %v5875, 2147483648
  %v5877 = vsel %vm5794, %v5876, %v5875
  %v5878 = vsub.s32 4, %v5854
  %v5879 = vsel %vm5794, %v5878, %v5854
  %v5880 = vsel %vm5793, %v414, %v5877
  %v5881 = vsel %vm5793, 0, %v5879
  %v5882 = vcosq.f32.pop %v5880
  %v5883 = vsinq.f32.pop %v5880
  %vm5884 = vweird.f32 %v414
  %v5885 = vadd.s32 %v5881, 3
  %v5886 = vand.u32 %v5885, 3
  %vm5887 = vcmp.lt.s32.totalorder %v5886, 2
  %vm5888 = vcmp.eq.s32.totalorder %v5886, 0
  %v5889 = vxor.u32 %v5883, 2147483648
  %v5890 = vsel %vm5888, %v5882, %v5889
  %vm5891 = vcmp.eq.s32.totalorder %v5886, 2
  %v5892 = vxor.u32 %v5882, 2147483648
  %v5893 = vsel %vm5891, %v5892, %v5883
  %v5894 = vsel %vm5887, %v5890, %v5893
  %v5895 = vsel %vm5884, nan, %v5894
  %v5896 = vand.u32 2147483647, %v418
  %vm5897 = vcmp.le.f32.partialorder %v5896, 0.7853982
  %vm5898 = vcmp.lt.s32.totalorder %v418, 0
  %v5899 = vand.u32 %v418, 2139095040
  %v5900 = vshrl.u32 %v5899, 23
  %v5901 = vsub.s32 %v5900, 127
  %v5902 = vand.u32 2147483647, %v418
  %v5903 = vand.u32 %v5902, 8388607
  %v5904 = vor.u32 %v5903, 8388608
  %v5905 = vsub.s32 0, %v5904
  %v5906 = vadd.s32 %v5901, 1
  %vm5907 = vcmp.gt.s32.totalorder %v5906, 0
  %v5908 = vsel %vm5907, %v5906, 0
  %v5909 = vshrl.u32 %v5908, 5
  %v5910 = vand.u32 %v5908, 31
  %v5911 = vsub.s32 32, %v5910
  %v5912 = vshrl.u32 683565275, %v5911
  %v5913 = vshll.u32 683565275, %v5910
  %v5914 = vshrl.u32 2475754826, %v5911
  %v5915 = vor.u32 %v5913, %v5914
  %v5916 = vshll.u32 2475754826, %v5910
  %v5917 = vshrl.u32 2131351028, %v5911
  %v5918 = vor.u32 %v5916, %v5917
  %v5919 = vshll.u32 2131351028, %v5910
  %v5920 = vshrl.u32 2102212464, %v5911
  %v5921 = vor.u32 %v5919, %v5920
  %v5922 = vshll.u32 2102212464, %v5910
  %v5923 = vshrl.u32 920167782, %v5911
  %v5924 = vor.u32 %v5922, %v5923
  %v5925 = vshll.u32 920167782, %v5910
  %v5926 = vshrl.u32 1326507024, %v5911
  %v5927 = vor.u32 %v5925, %v5926
  %vm5928 = vcmp.lt.s32.totalorder %v5909, 1
  %vm5929 = vcmp.lt.s32.totalorder %v5909, 2
  %vm5930 = vcmp.lt.s32.totalorder %v5909, 3
  %vm5931 = vcmp.lt.s32.totalorder %v5909, 4
  %v5932 = vsel %vm5928, %v5912, %v5915
  %v5933 = vsel %vm5931, %v5921, 2102212464
  %v5934 = vsel %vm5930, %v5918, %v5933
  %v5935 = vsel %vm5929, %v5932, %v5934
  %v5936 = vsel %vm5928, %v5915, %v5918
  %v5937 = vsel %vm5931, %v5924, 920167782
  %v5938 = vsel %vm5930, %v5921, %v5937
  %v5939 = vsel %vm5929, %v5936, %v5938
  %v5940 = vsel %vm5928, %v5918, %v5921
  %v5941 = vsel %vm5931, %v5927, 1326507024
  %v5942 = vsel %vm5930, %v5924, %v5941
  %v5943 = vsel %vm5929, %v5940, %v5942
  %v5944 = vshll.u32 %v5904, 8
  %v5945 = vmul.u32.u64.compose %v5944, %v5943
  %v5946 = vextract.low.u32 %v5945
  %v5947 = vextract.high.u32 %v5945
  %v5948 = vmul.u32.u64.compose %v5944, %v5939
  %v5949 = vextract.low.u32 %v5948
  %v5950 = vextract.high.u32 %v5948
  %v5951 = vmul.u32 %v5944, %v5935
  %v5952 = vadd.s32 %v5947, %v5949
  %vm5953 = vc.u32 %v5947, %v5949
  %v5954 = vadd.s32 %v5950, 1
  %v5955 = vsel %vm5953, %v5954, %v5950
  %v5956 = vadd.s32 %v5951, %v5955
  %v5957 = vadd.s32 %v5956, 536870912
  %v5958 = vshrl.u32 %v5957, 30
  %v5959 = vshll.u32 %v5958, 30
  %v5960 = vsub.s32 %v5956, %v5959
  %vm5961 = vcmp.lt.s32.totalorder %v5960, 0
  %v5962 = vsub.s32 0, %v5960
  %v5963 = vsel %vm5961, %v5962, %v5960
  %v5964 = vclz %v5963
  %v5965 = vsub.s32 %v5964, 2
  %vm5966 = vcmp.gt.s32.totalorder 0, %v5965
  %v5967 = vsel %vm5966, 0, %v5965
  %v5968 = vsub.s32 32, %v5967
  %v5969 = vshll.u32 %v5960, %v5967
  %v5970 = vshrl.u32 %v5952, %v5968
  %v5971 = vor.u32 %v5969, %v5970
  %v5972 = vsub.s32 4294967266, %v5967
  %v5973 = vadd.s32 %v5972, 127
  %v5974 = vshll.u32 %v5973, 23
  %v5975 = vor.u32 4788187, %v5974
  %v5976 = vand.u32 2147483647, %v5975
  %v5978 = vcvt.s32.f32 %v5971
  %v5979 = vmul.f32 %v5978, %v5976
  %v5980 = vxor.u32 %v5979, 2147483648
  %v5981 = vsel %vm5898, %v5980, %v5979
  %v5982 = vsub.s32 4, %v5958
  %v5983 = vsel %vm5898, %v5982, %v5958
  %v5984 = vsel %vm5897, %v418, %v5981
  %v5985 = vsel %vm5897, 0, %v5983
  %v5986 = vcosq.f32.pop %v5984
  %v5987 = vsinq.f32.pop %v5984
  %vm5988 = vweird.f32 %v418
  %v5989 = vadd.s32 %v5985, 3
  %v5990 = vand.u32 %v5989, 3
  %vm5991 = vcmp.lt.s32.totalorder %v5990, 2
  %vm5992 = vcmp.eq.s32.totalorder %v5990, 0
  %v5993 = vxor.u32 %v5987, 2147483648
  %v5994 = vsel %vm5992, %v5986, %v5993
  %vm5995 = vcmp.eq.s32.totalorder %v5990, 2
  %v5996 = vxor.u32 %v5986, 2147483648
  %v5997 = vsel %vm5995, %v5996, %v5987
  %v5998 = vsel %vm5991, %v5994, %v5997
  %v5999 = vsel %vm5988, nan, %v5998
  %v6000 = vand.u32 2147483647, %v420
  %vm6001 = vcmp.le.f32.partialorder %v6000, 0.7853982
  %vm6002 = vcmp.lt.s32.totalorder %v420, 0
  %v6003 = vand.u32 %v420, 2139095040
  %v6004 = vshrl.u32 %v6003, 23
  %v6005 = vsub.s32 %v6004, 127
  %v6006 = vand.u32 2147483647, %v420
  %v6007 = vand.u32 %v6006, 8388607
  %v6008 = vor.u32 %v6007, 8388608
  %v6009 = vsub.s32 0, %v6008
  %v6010 = vadd.s32 %v6005, 1
  %vm6011 = vcmp.gt.s32.totalorder %v6010, 0
  %v6012 = vsel %vm6011, %v6010, 0
  %v6013 = vshrl.u32 %v6012, 5
  %v6014 = vand.u32 %v6012, 31
  %v6015 = vsub.s32 32, %v6014
  %v6016 = vshrl.u32 683565275, %v6015
  %v6017 = vshll.u32 683565275, %v6014
  %v6018 = vshrl.u32 2475754826, %v6015
  %v6019 = vor.u32 %v6017, %v6018
  %v6020 = vshll.u32 2475754826, %v6014
  %v6021 = vshrl.u32 2131351028, %v6015
  %v6022 = vor.u32 %v6020, %v6021
  %v6023 = vshll.u32 2131351028, %v6014
  %v6024 = vshrl.u32 2102212464, %v6015
  %v6025 = vor.u32 %v6023, %v6024
  %v6026 = vshll.u32 2102212464, %v6014
  %v6027 = vshrl.u32 920167782, %v6015
  %v6028 = vor.u32 %v6026, %v6027
  %v6029 = vshll.u32 920167782, %v6014
  %v6030 = vshrl.u32 1326507024, %v6015
  %v6031 = vor.u32 %v6029, %v6030
  %vm6032 = vcmp.lt.s32.totalorder %v6013, 1
  %vm6033 = vcmp.lt.s32.totalorder %v6013, 2
  %vm6034 = vcmp.lt.s32.totalorder %v6013, 3
  %vm6035 = vcmp.lt.s32.totalorder %v6013, 4
  %v6036 = vsel %vm6032, %v6016, %v6019
  %v6037 = vsel %vm6035, %v6025, 2102212464
  %v6038 = vsel %vm6034, %v6022, %v6037
  %v6039 = vsel %vm6033, %v6036, %v6038
  %v6040 = vsel %vm6032, %v6019, %v6022
  %v6041 = vsel %vm6035, %v6028, 920167782
  %v6042 = vsel %vm6034, %v6025, %v6041
  %v6043 = vsel %vm6033, %v6040, %v6042
  %v6044 = vsel %vm6032, %v6022, %v6025
  %v6045 = vsel %vm6035, %v6031, 1326507024
  %v6046 = vsel %vm6034, %v6028, %v6045
  %v6047 = vsel %vm6033, %v6044, %v6046
  %v6048 = vshll.u32 %v6008, 8
  %v6049 = vmul.u32.u64.compose %v6048, %v6047
  %v6050 = vextract.low.u32 %v6049
  %v6051 = vextract.high.u32 %v6049
  %v6052 = vmul.u32.u64.compose %v6048, %v6043
  %v6053 = vextract.low.u32 %v6052
  %v6054 = vextract.high.u32 %v6052
  %v6055 = vmul.u32 %v6048, %v6039
  %v6056 = vadd.s32 %v6051, %v6053
  %vm6057 = vc.u32 %v6051, %v6053
  %v6058 = vadd.s32 %v6054, 1
  %v6059 = vsel %vm6057, %v6058, %v6054
  %v6060 = vadd.s32 %v6055, %v6059
  %v6061 = vadd.s32 %v6060, 536870912
  %v6062 = vshrl.u32 %v6061, 30
  %v6063 = vshll.u32 %v6062, 30
  %v6064 = vsub.s32 %v6060, %v6063
  %vm6065 = vcmp.lt.s32.totalorder %v6064, 0
  %v6066 = vsub.s32 0, %v6064
  %v6067 = vsel %vm6065, %v6066, %v6064
  %v6068 = vclz %v6067
  %v6069 = vsub.s32 %v6068, 2
  %vm6070 = vcmp.gt.s32.totalorder 0, %v6069
  %v6071 = vsel %vm6070, 0, %v6069
  %v6072 = vsub.s32 32, %v6071
  %v6073 = vshll.u32 %v6064, %v6071
  %v6074 = vshrl.u32 %v6056, %v6072
  %v6075 = vor.u32 %v6073, %v6074
  %v6076 = vsub.s32 4294967266, %v6071
  %v6077 = vadd.s32 %v6076, 127
  %v6078 = vshll.u32 %v6077, 23
  %v6079 = vor.u32 4788187, %v6078
  %v6080 = vand.u32 2147483647, %v6079
  %v6082 = vcvt.s32.f32 %v6075
  %v6083 = vmul.f32 %v6082, %v6080
  %v6084 = vxor.u32 %v6083, 2147483648
  %v6085 = vsel %vm6002, %v6084, %v6083
  %v6086 = vsub.s32 4, %v6062
  %v6087 = vsel %vm6002, %v6086, %v6062
  %v6088 = vsel %vm6001, %v420, %v6085
  %v6089 = vsel %vm6001, 0, %v6087
  %v6090 = vcosq.f32.pop %v6088
  %v6091 = vsinq.f32.pop %v6088
  %vm6092 = vweird.f32 %v420
  %v6093 = vadd.s32 %v6089, 3
  %v6094 = vand.u32 %v6093, 3
  %vm6095 = vcmp.lt.s32.totalorder %v6094, 2
  %vm6096 = vcmp.eq.s32.totalorder %v6094, 0
  %v6097 = vxor.u32 %v6091, 2147483648
  %v6098 = vsel %vm6096, %v6090, %v6097
  %vm6099 = vcmp.eq.s32.totalorder %v6094, 2
  %v6100 = vxor.u32 %v6090, 2147483648
  %v6101 = vsel %vm6099, %v6100, %v6091
  %v6102 = vsel %vm6095, %v6098, %v6101
  %v6103 = vsel %vm6092, nan, %v6102
  %v6104 = vand.u32 2147483647, %v424
  %vm6105 = vcmp.le.f32.partialorder %v6104, 0.7853982
  %vm6106 = vcmp.lt.s32.totalorder %v424, 0
  %v6107 = vand.u32 %v424, 2139095040
  %v6108 = vshrl.u32 %v6107, 23
  %v6109 = vsub.s32 %v6108, 127
  %v6110 = vand.u32 2147483647, %v424
  %v6111 = vand.u32 %v6110, 8388607
  %v6112 = vor.u32 %v6111, 8388608
  %v6113 = vsub.s32 0, %v6112
  %v6114 = vadd.s32 %v6109, 1
  %vm6115 = vcmp.gt.s32.totalorder %v6114, 0
  %v6116 = vsel %vm6115, %v6114, 0
  %v6117 = vshrl.u32 %v6116, 5
  %v6118 = vand.u32 %v6116, 31
  %v6119 = vsub.s32 32, %v6118
  %v6120 = vshrl.u32 683565275, %v6119
  %v6121 = vshll.u32 683565275, %v6118
  %v6122 = vshrl.u32 2475754826, %v6119
  %v6123 = vor.u32 %v6121, %v6122
  %v6124 = vshll.u32 2475754826, %v6118
  %v6125 = vshrl.u32 2131351028, %v6119
  %v6126 = vor.u32 %v6124, %v6125
  %v6127 = vshll.u32 2131351028, %v6118
  %v6128 = vshrl.u32 2102212464, %v6119
  %v6129 = vor.u32 %v6127, %v6128
  %v6130 = vshll.u32 2102212464, %v6118
  %v6131 = vshrl.u32 920167782, %v6119
  %v6132 = vor.u32 %v6130, %v6131
  %v6133 = vshll.u32 920167782, %v6118
  %v6134 = vshrl.u32 1326507024, %v6119
  %v6135 = vor.u32 %v6133, %v6134
  %vm6136 = vcmp.lt.s32.totalorder %v6117, 1
  %vm6137 = vcmp.lt.s32.totalorder %v6117, 2
  %vm6138 = vcmp.lt.s32.totalorder %v6117, 3
  %vm6139 = vcmp.lt.s32.totalorder %v6117, 4
  %v6140 = vsel %vm6136, %v6120, %v6123
  %v6141 = vsel %vm6139, %v6129, 2102212464
  %v6142 = vsel %vm6138, %v6126, %v6141
  %v6143 = vsel %vm6137, %v6140, %v6142
  %v6144 = vsel %vm6136, %v6123, %v6126
  %v6145 = vsel %vm6139, %v6132, 920167782
  %v6146 = vsel %vm6138, %v6129, %v6145
  %v6147 = vsel %vm6137, %v6144, %v6146
  %v6148 = vsel %vm6136, %v6126, %v6129
  %v6149 = vsel %vm6139, %v6135, 1326507024
  %v6150 = vsel %vm6138, %v6132, %v6149
  %v6151 = vsel %vm6137, %v6148, %v6150
  %v6152 = vshll.u32 %v6112, 8
  %v6153 = vmul.u32.u64.compose %v6152, %v6151
  %v6154 = vextract.low.u32 %v6153
  %v6155 = vextract.high.u32 %v6153
  %v6156 = vmul.u32.u64.compose %v6152, %v6147
  %v6157 = vextract.low.u32 %v6156
  %v6158 = vextract.high.u32 %v6156
  %v6159 = vmul.u32 %v6152, %v6143
  %v6160 = vadd.s32 %v6155, %v6157
  %vm6161 = vc.u32 %v6155, %v6157
  %v6162 = vadd.s32 %v6158, 1
  %v6163 = vsel %vm6161, %v6162, %v6158
  %v6164 = vadd.s32 %v6159, %v6163
  %v6165 = vadd.s32 %v6164, 536870912
  %v6166 = vshrl.u32 %v6165, 30
  %v6167 = vshll.u32 %v6166, 30
  %v6168 = vsub.s32 %v6164, %v6167
  %vm6169 = vcmp.lt.s32.totalorder %v6168, 0
  %v6170 = vsub.s32 0, %v6168
  %v6171 = vsel %vm6169, %v6170, %v6168
  %v6172 = vclz %v6171
  %v6173 = vsub.s32 %v6172, 2
  %vm6174 = vcmp.gt.s32.totalorder 0, %v6173
  %v6175 = vsel %vm6174, 0, %v6173
  %v6176 = vsub.s32 32, %v6175
  %v6177 = vshll.u32 %v6168, %v6175
  %v6178 = vshrl.u32 %v6160, %v6176
  %v6179 = vor.u32 %v6177, %v6178
  %v6180 = vsub.s32 4294967266, %v6175
  %v6181 = vadd.s32 %v6180, 127
  %v6182 = vshll.u32 %v6181, 23
  %v6183 = vor.u32 4788187, %v6182
  %v6184 = vand.u32 2147483647, %v6183
  %v6186 = vcvt.s32.f32 %v6179
  %v6187 = vmul.f32 %v6186, %v6184
  %v6188 = vxor.u32 %v6187, 2147483648
  %v6189 = vsel %vm6106, %v6188, %v6187
  %v6190 = vsub.s32 4, %v6166
  %v6191 = vsel %vm6106, %v6190, %v6166
  %v6192 = vsel %vm6105, %v424, %v6189
  %v6193 = vsel %vm6105, 0, %v6191
  %v6194 = vcosq.f32.pop %v6192
  %v6195 = vsinq.f32.pop %v6192
  %vm6196 = vweird.f32 %v424
  %v6197 = vadd.s32 %v6193, 3
  %v6198 = vand.u32 %v6197, 3
  %vm6199 = vcmp.lt.s32.totalorder %v6198, 2
  %vm6200 = vcmp.eq.s32.totalorder %v6198, 0
  %v6201 = vxor.u32 %v6195, 2147483648
  %v6202 = vsel %vm6200, %v6194, %v6201
  %vm6203 = vcmp.eq.s32.totalorder %v6198, 2
  %v6204 = vxor.u32 %v6194, 2147483648
  %v6205 = vsel %vm6203, %v6204, %v6195
  %v6206 = vsel %vm6199, %v6202, %v6205
  %v6207 = vsel %vm6196, nan, %v6206
  %v6208 = vand.u32 2147483647, %v426
  %vm6209 = vcmp.le.f32.partialorder %v6208, 0.7853982
  %vm6210 = vcmp.lt.s32.totalorder %v426, 0
  %v6211 = vand.u32 %v426, 2139095040
  %v6212 = vshrl.u32 %v6211, 23
  %v6213 = vsub.s32 %v6212, 127
  %v6214 = vand.u32 2147483647, %v426
  %v6215 = vand.u32 %v6214, 8388607
  %v6216 = vor.u32 %v6215, 8388608
  %v6217 = vsub.s32 0, %v6216
  %v6218 = vadd.s32 %v6213, 1
  %vm6219 = vcmp.gt.s32.totalorder %v6218, 0
  %v6220 = vsel %vm6219, %v6218, 0
  %v6221 = vshrl.u32 %v6220, 5
  %v6222 = vand.u32 %v6220, 31
  %v6223 = vsub.s32 32, %v6222
  %v6224 = vshrl.u32 683565275, %v6223
  %v6225 = vshll.u32 683565275, %v6222
  %v6226 = vshrl.u32 2475754826, %v6223
  %v6227 = vor.u32 %v6225, %v6226
  %v6228 = vshll.u32 2475754826, %v6222
  %v6229 = vshrl.u32 2131351028, %v6223
  %v6230 = vor.u32 %v6228, %v6229
  %v6231 = vshll.u32 2131351028, %v6222
  %v6232 = vshrl.u32 2102212464, %v6223
  %v6233 = vor.u32 %v6231, %v6232
  %v6234 = vshll.u32 2102212464, %v6222
  %v6235 = vshrl.u32 920167782, %v6223
  %v6236 = vor.u32 %v6234, %v6235
  %v6237 = vshll.u32 920167782, %v6222
  %v6238 = vshrl.u32 1326507024, %v6223
  %v6239 = vor.u32 %v6237, %v6238
  %vm6240 = vcmp.lt.s32.totalorder %v6221, 1
  %vm6241 = vcmp.lt.s32.totalorder %v6221, 2
  %vm6242 = vcmp.lt.s32.totalorder %v6221, 3
  %vm6243 = vcmp.lt.s32.totalorder %v6221, 4
  %v6244 = vsel %vm6240, %v6224, %v6227
  %v6245 = vsel %vm6243, %v6233, 2102212464
  %v6246 = vsel %vm6242, %v6230, %v6245
  %v6247 = vsel %vm6241, %v6244, %v6246
  %v6248 = vsel %vm6240, %v6227, %v6230
  %v6249 = vsel %vm6243, %v6236, 920167782
  %v6250 = vsel %vm6242, %v6233, %v6249
  %v6251 = vsel %vm6241, %v6248, %v6250
  %v6252 = vsel %vm6240, %v6230, %v6233
  %v6253 = vsel %vm6243, %v6239, 1326507024
  %v6254 = vsel %vm6242, %v6236, %v6253
  %v6255 = vsel %vm6241, %v6252, %v6254
  %v6256 = vshll.u32 %v6216, 8
  %v6257 = vmul.u32.u64.compose %v6256, %v6255
  %v6258 = vextract.low.u32 %v6257
  %v6259 = vextract.high.u32 %v6257
  %v6260 = vmul.u32.u64.compose %v6256, %v6251
  %v6261 = vextract.low.u32 %v6260
  %v6262 = vextract.high.u32 %v6260
  %v6263 = vmul.u32 %v6256, %v6247
  %v6264 = vadd.s32 %v6259, %v6261
  %vm6265 = vc.u32 %v6259, %v6261
  %v6266 = vadd.s32 %v6262, 1
  %v6267 = vsel %vm6265, %v6266, %v6262
  %v6268 = vadd.s32 %v6263, %v6267
  %v6269 = vadd.s32 %v6268, 536870912
  %v6270 = vshrl.u32 %v6269, 30
  %v6271 = vshll.u32 %v6270, 30
  %v6272 = vsub.s32 %v6268, %v6271
  %vm6273 = vcmp.lt.s32.totalorder %v6272, 0
  %v6274 = vsub.s32 0, %v6272
  %v6275 = vsel %vm6273, %v6274, %v6272
  %v6276 = vclz %v6275
  %v6277 = vsub.s32 %v6276, 2
  %vm6278 = vcmp.gt.s32.totalorder 0, %v6277
  %v6279 = vsel %vm6278, 0, %v6277
  %v6280 = vsub.s32 32, %v6279
  %v6281 = vshll.u32 %v6272, %v6279
  %v6282 = vshrl.u32 %v6264, %v6280
  %v6283 = vor.u32 %v6281, %v6282
  %v6284 = vsub.s32 4294967266, %v6279
  %v6285 = vadd.s32 %v6284, 127
  %v6286 = vshll.u32 %v6285, 23
  %v6287 = vor.u32 4788187, %v6286
  %v6288 = vand.u32 2147483647, %v6287
  %v6290 = vcvt.s32.f32 %v6283
  %v6291 = vmul.f32 %v6290, %v6288
  %v6292 = vxor.u32 %v6291, 2147483648
  %v6293 = vsel %vm6210, %v6292, %v6291
  %v6294 = vsub.s32 4, %v6270
  %v6295 = vsel %vm6210, %v6294, %v6270
  %v6296 = vsel %vm6209, %v426, %v6293
  %v6297 = vsel %vm6209, 0, %v6295
  %v6298 = vcosq.f32.pop %v6296
  %v6299 = vsinq.f32.pop %v6296
  %vm6300 = vweird.f32 %v426
  %v6301 = vadd.s32 %v6297, 3
  %v6302 = vand.u32 %v6301, 3
  %vm6303 = vcmp.lt.s32.totalorder %v6302, 2
  %vm6304 = vcmp.eq.s32.totalorder %v6302, 0
  %v6305 = vxor.u32 %v6299, 2147483648
  %v6306 = vsel %vm6304, %v6298, %v6305
  %vm6307 = vcmp.eq.s32.totalorder %v6302, 2
  %v6308 = vxor.u32 %v6298, 2147483648
  %v6309 = vsel %vm6307, %v6308, %v6299
  %v6310 = vsel %vm6303, %v6306, %v6309
  %v6311 = vsel %vm6300, nan, %v6310
  %v6312 = vand.u32 2147483647, %v430
  %vm6313 = vcmp.le.f32.partialorder %v6312, 0.7853982
  %vm6314 = vcmp.lt.s32.totalorder %v430, 0
  %v6315 = vand.u32 %v430, 2139095040
  %v6316 = vshrl.u32 %v6315, 23
  %v6317 = vsub.s32 %v6316, 127
  %v6318 = vand.u32 2147483647, %v430
  %v6319 = vand.u32 %v6318, 8388607
  %v6320 = vor.u32 %v6319, 8388608
  %v6321 = vsub.s32 0, %v6320
  %v6322 = vadd.s32 %v6317, 1
  %vm6323 = vcmp.gt.s32.totalorder %v6322, 0
  %v6324 = vsel %vm6323, %v6322, 0
  %v6325 = vshrl.u32 %v6324, 5
  %v6326 = vand.u32 %v6324, 31
  %v6327 = vsub.s32 32, %v6326
  %v6328 = vshrl.u32 683565275, %v6327
  %v6329 = vshll.u32 683565275, %v6326
  %v6330 = vshrl.u32 2475754826, %v6327
  %v6331 = vor.u32 %v6329, %v6330
  %v6332 = vshll.u32 2475754826, %v6326
  %v6333 = vshrl.u32 2131351028, %v6327
  %v6334 = vor.u32 %v6332, %v6333
  %v6335 = vshll.u32 2131351028, %v6326
  %v6336 = vshrl.u32 2102212464, %v6327
  %v6337 = vor.u32 %v6335, %v6336
  %v6338 = vshll.u32 2102212464, %v6326
  %v6339 = vshrl.u32 920167782, %v6327
  %v6340 = vor.u32 %v6338, %v6339
  %v6341 = vshll.u32 920167782, %v6326
  %v6342 = vshrl.u32 1326507024, %v6327
  %v6343 = vor.u32 %v6341, %v6342
  %vm6344 = vcmp.lt.s32.totalorder %v6325, 1
  %vm6345 = vcmp.lt.s32.totalorder %v6325, 2
  %vm6346 = vcmp.lt.s32.totalorder %v6325, 3
  %vm6347 = vcmp.lt.s32.totalorder %v6325, 4
  %v6348 = vsel %vm6344, %v6328, %v6331
  %v6349 = vsel %vm6347, %v6337, 2102212464
  %v6350 = vsel %vm6346, %v6334, %v6349
  %v6351 = vsel %vm6345, %v6348, %v6350
  %v6352 = vsel %vm6344, %v6331, %v6334
  %v6353 = vsel %vm6347, %v6340, 920167782
  %v6354 = vsel %vm6346, %v6337, %v6353
  %v6355 = vsel %vm6345, %v6352, %v6354
  %v6356 = vsel %vm6344, %v6334, %v6337
  %v6357 = vsel %vm6347, %v6343, 1326507024
  %v6358 = vsel %vm6346, %v6340, %v6357
  %v6359 = vsel %vm6345, %v6356, %v6358
  %v6360 = vshll.u32 %v6320, 8
  %v6361 = vmul.u32.u64.compose %v6360, %v6359
  %v6362 = vextract.low.u32 %v6361
  %v6363 = vextract.high.u32 %v6361
  %v6364 = vmul.u32.u64.compose %v6360, %v6355
  %v6365 = vextract.low.u32 %v6364
  %v6366 = vextract.high.u32 %v6364
  %v6367 = vmul.u32 %v6360, %v6351
  %v6368 = vadd.s32 %v6363, %v6365
  %vm6369 = vc.u32 %v6363, %v6365
  %v6370 = vadd.s32 %v6366, 1
  %v6371 = vsel %vm6369, %v6370, %v6366
  %v6372 = vadd.s32 %v6367, %v6371
  %v6373 = vadd.s32 %v6372, 536870912
  %v6374 = vshrl.u32 %v6373, 30
  %v6375 = vshll.u32 %v6374, 30
  %v6376 = vsub.s32 %v6372, %v6375
  %vm6377 = vcmp.lt.s32.totalorder %v6376, 0
  %v6378 = vsub.s32 0, %v6376
  %v6379 = vsel %vm6377, %v6378, %v6376
  %v6380 = vclz %v6379
  %v6381 = vsub.s32 %v6380, 2
  %vm6382 = vcmp.gt.s32.totalorder 0, %v6381
  %v6383 = vsel %vm6382, 0, %v6381
  %v6384 = vsub.s32 32, %v6383
  %v6385 = vshll.u32 %v6376, %v6383
  %v6386 = vshrl.u32 %v6368, %v6384
  %v6387 = vor.u32 %v6385, %v6386
  %v6388 = vsub.s32 4294967266, %v6383
  %v6389 = vadd.s32 %v6388, 127
  %v6390 = vshll.u32 %v6389, 23
  %v6391 = vor.u32 4788187, %v6390
  %v6392 = vand.u32 2147483647, %v6391
  %v6394 = vcvt.s32.f32 %v6387
  %v6395 = vmul.f32 %v6394, %v6392
  %v6396 = vxor.u32 %v6395, 2147483648
  %v6397 = vsel %vm6314, %v6396, %v6395
  %v6398 = vsub.s32 4, %v6374
  %v6399 = vsel %vm6314, %v6398, %v6374
  %v6400 = vsel %vm6313, %v430, %v6397
  %v6401 = vsel %vm6313, 0, %v6399
  %v6402 = vcosq.f32.pop %v6400
  %v6403 = vsinq.f32.pop %v6400
  %vm6404 = vweird.f32 %v430
  %v6405 = vadd.s32 %v6401, 3
  %v6406 = vand.u32 %v6405, 3
  %vm6407 = vcmp.lt.s32.totalorder %v6406, 2
  %vm6408 = vcmp.eq.s32.totalorder %v6406, 0
  %v6409 = vxor.u32 %v6403, 2147483648
  %v6410 = vsel %vm6408, %v6402, %v6409
  %vm6411 = vcmp.eq.s32.totalorder %v6406, 2
  %v6412 = vxor.u32 %v6402, 2147483648
  %v6413 = vsel %vm6411, %v6412, %v6403
  %v6414 = vsel %vm6407, %v6410, %v6413
  %v6415 = vsel %vm6404, nan, %v6414
  %v6416 = vand.u32 2147483647, %v432
  %vm6417 = vcmp.le.f32.partialorder %v6416, 0.7853982
  %vm6418 = vcmp.lt.s32.totalorder %v432, 0
  %v6419 = vand.u32 %v432, 2139095040
  %v6420 = vshrl.u32 %v6419, 23
  %v6421 = vsub.s32 %v6420, 127
  %v6422 = vand.u32 2147483647, %v432
  %v6423 = vand.u32 %v6422, 8388607
  %v6424 = vor.u32 %v6423, 8388608
  %v6425 = vsub.s32 0, %v6424
  %v6426 = vadd.s32 %v6421, 1
  %vm6427 = vcmp.gt.s32.totalorder %v6426, 0
  %v6428 = vsel %vm6427, %v6426, 0
  %v6429 = vshrl.u32 %v6428, 5
  %v6430 = vand.u32 %v6428, 31
  %v6431 = vsub.s32 32, %v6430
  %v6432 = vshrl.u32 683565275, %v6431
  %v6433 = vshll.u32 683565275, %v6430
  %v6434 = vshrl.u32 2475754826, %v6431
  %v6435 = vor.u32 %v6433, %v6434
  %v6436 = vshll.u32 2475754826, %v6430
  %v6437 = vshrl.u32 2131351028, %v6431
  %v6438 = vor.u32 %v6436, %v6437
  %v6439 = vshll.u32 2131351028, %v6430
  %v6440 = vshrl.u32 2102212464, %v6431
  %v6441 = vor.u32 %v6439, %v6440
  %v6442 = vshll.u32 2102212464, %v6430
  %v6443 = vshrl.u32 920167782, %v6431
  %v6444 = vor.u32 %v6442, %v6443
  %v6445 = vshll.u32 920167782, %v6430
  %v6446 = vshrl.u32 1326507024, %v6431
  %v6447 = vor.u32 %v6445, %v6446
  %vm6448 = vcmp.lt.s32.totalorder %v6429, 1
  %vm6449 = vcmp.lt.s32.totalorder %v6429, 2
  %vm6450 = vcmp.lt.s32.totalorder %v6429, 3
  %vm6451 = vcmp.lt.s32.totalorder %v6429, 4
  %v6452 = vsel %vm6448, %v6432, %v6435
  %v6453 = vsel %vm6451, %v6441, 2102212464
  %v6454 = vsel %vm6450, %v6438, %v6453
  %v6455 = vsel %vm6449, %v6452, %v6454
  %v6456 = vsel %vm6448, %v6435, %v6438
  %v6457 = vsel %vm6451, %v6444, 920167782
  %v6458 = vsel %vm6450, %v6441, %v6457
  %v6459 = vsel %vm6449, %v6456, %v6458
  %v6460 = vsel %vm6448, %v6438, %v6441
  %v6461 = vsel %vm6451, %v6447, 1326507024
  %v6462 = vsel %vm6450, %v6444, %v6461
  %v6463 = vsel %vm6449, %v6460, %v6462
  %v6464 = vshll.u32 %v6424, 8
  %v6465 = vmul.u32.u64.compose %v6464, %v6463
  %v6466 = vextract.low.u32 %v6465
  %v6467 = vextract.high.u32 %v6465
  %v6468 = vmul.u32.u64.compose %v6464, %v6459
  %v6469 = vextract.low.u32 %v6468
  %v6470 = vextract.high.u32 %v6468
  %v6471 = vmul.u32 %v6464, %v6455
  %v6472 = vadd.s32 %v6467, %v6469
  %vm6473 = vc.u32 %v6467, %v6469
  %v6474 = vadd.s32 %v6470, 1
  %v6475 = vsel %vm6473, %v6474, %v6470
  %v6476 = vadd.s32 %v6471, %v6475
  %v6477 = vadd.s32 %v6476, 536870912
  %v6478 = vshrl.u32 %v6477, 30
  %v6479 = vshll.u32 %v6478, 30
  %v6480 = vsub.s32 %v6476, %v6479
  %vm6481 = vcmp.lt.s32.totalorder %v6480, 0
  %v6482 = vsub.s32 0, %v6480
  %v6483 = vsel %vm6481, %v6482, %v6480
  %v6484 = vclz %v6483
  %v6485 = vsub.s32 %v6484, 2
  %vm6486 = vcmp.gt.s32.totalorder 0, %v6485
  %v6487 = vsel %vm6486, 0, %v6485
  %v6488 = vsub.s32 32, %v6487
  %v6489 = vshll.u32 %v6480, %v6487
  %v6490 = vshrl.u32 %v6472, %v6488
  %v6491 = vor.u32 %v6489, %v6490
  %v6492 = vsub.s32 4294967266, %v6487
  %v6493 = vadd.s32 %v6492, 127
  %v6494 = vshll.u32 %v6493, 23
  %v6495 = vor.u32 4788187, %v6494
  %v6496 = vand.u32 2147483647, %v6495
  %v6498 = vcvt.s32.f32 %v6491
  %v6499 = vmul.f32 %v6498, %v6496
  %v6500 = vxor.u32 %v6499, 2147483648
  %v6501 = vsel %vm6418, %v6500, %v6499
  %v6502 = vsub.s32 4, %v6478
  %v6503 = vsel %vm6418, %v6502, %v6478
  %v6504 = vsel %vm6417, %v432, %v6501
  %v6505 = vsel %vm6417, 0, %v6503
  %v6506 = vcosq.f32.pop %v6504
  %v6507 = vsinq.f32.pop %v6504
  %vm6508 = vweird.f32 %v432
  %v6509 = vadd.s32 %v6505, 3
  %v6510 = vand.u32 %v6509, 3
  %vm6511 = vcmp.lt.s32.totalorder %v6510, 2
  %vm6512 = vcmp.eq.s32.totalorder %v6510, 0
  %v6513 = vxor.u32 %v6507, 2147483648
  %v6514 = vsel %vm6512, %v6506, %v6513
  %vm6515 = vcmp.eq.s32.totalorder %v6510, 2
  %v6516 = vxor.u32 %v6506, 2147483648
  %v6517 = vsel %vm6515, %v6516, %v6507
  %v6518 = vsel %vm6511, %v6514, %v6517
  %v6519 = vsel %vm6508, nan, %v6518
  %v6520 = vand.u32 2147483647, %v436
  %vm6521 = vcmp.le.f32.partialorder %v6520, 0.7853982
  %vm6522 = vcmp.lt.s32.totalorder %v436, 0
  %v6523 = vand.u32 %v436, 2139095040
  %v6524 = vshrl.u32 %v6523, 23
  %v6525 = vsub.s32 %v6524, 127
  %v6526 = vand.u32 2147483647, %v436
  %v6527 = vand.u32 %v6526, 8388607
  %v6528 = vor.u32 %v6527, 8388608
  %v6529 = vsub.s32 0, %v6528
  %v6530 = vadd.s32 %v6525, 1
  %vm6531 = vcmp.gt.s32.totalorder %v6530, 0
  %v6532 = vsel %vm6531, %v6530, 0
  %v6533 = vshrl.u32 %v6532, 5
  %v6534 = vand.u32 %v6532, 31
  %v6535 = vsub.s32 32, %v6534
  %v6536 = vshrl.u32 683565275, %v6535
  %v6537 = vshll.u32 683565275, %v6534
  %v6538 = vshrl.u32 2475754826, %v6535
  %v6539 = vor.u32 %v6537, %v6538
  %v6540 = vshll.u32 2475754826, %v6534
  %v6541 = vshrl.u32 2131351028, %v6535
  %v6542 = vor.u32 %v6540, %v6541
  %v6543 = vshll.u32 2131351028, %v6534
  %v6544 = vshrl.u32 2102212464, %v6535
  %v6545 = vor.u32 %v6543, %v6544
  %v6546 = vshll.u32 2102212464, %v6534
  %v6547 = vshrl.u32 920167782, %v6535
  %v6548 = vor.u32 %v6546, %v6547
  %v6549 = vshll.u32 920167782, %v6534
  %v6550 = vshrl.u32 1326507024, %v6535
  %v6551 = vor.u32 %v6549, %v6550
  %vm6552 = vcmp.lt.s32.totalorder %v6533, 1
  %vm6553 = vcmp.lt.s32.totalorder %v6533, 2
  %vm6554 = vcmp.lt.s32.totalorder %v6533, 3
  %vm6555 = vcmp.lt.s32.totalorder %v6533, 4
  %v6556 = vsel %vm6552, %v6536, %v6539
  %v6557 = vsel %vm6555, %v6545, 2102212464
  %v6558 = vsel %vm6554, %v6542, %v6557
  %v6559 = vsel %vm6553, %v6556, %v6558
  %v6560 = vsel %vm6552, %v6539, %v6542
  %v6561 = vsel %vm6555, %v6548, 920167782
  %v6562 = vsel %vm6554, %v6545, %v6561
  %v6563 = vsel %vm6553, %v6560, %v6562
  %v6564 = vsel %vm6552, %v6542, %v6545
  %v6565 = vsel %vm6555, %v6551, 1326507024
  %v6566 = vsel %vm6554, %v6548, %v6565
  %v6567 = vsel %vm6553, %v6564, %v6566
  %v6568 = vshll.u32 %v6528, 8
  %v6569 = vmul.u32.u64.compose %v6568, %v6567
  %v6570 = vextract.low.u32 %v6569
  %v6571 = vextract.high.u32 %v6569
  %v6572 = vmul.u32.u64.compose %v6568, %v6563
  %v6573 = vextract.low.u32 %v6572
  %v6574 = vextract.high.u32 %v6572
  %v6575 = vmul.u32 %v6568, %v6559
  %v6576 = vadd.s32 %v6571, %v6573
  %vm6577 = vc.u32 %v6571, %v6573
  %v6578 = vadd.s32 %v6574, 1
  %v6579 = vsel %vm6577, %v6578, %v6574
  %v6580 = vadd.s32 %v6575, %v6579
  %v6581 = vadd.s32 %v6580, 536870912
  %v6582 = vshrl.u32 %v6581, 30
  %v6583 = vshll.u32 %v6582, 30
  %v6584 = vsub.s32 %v6580, %v6583
  %vm6585 = vcmp.lt.s32.totalorder %v6584, 0
  %v6586 = vsub.s32 0, %v6584
  %v6587 = vsel %vm6585, %v6586, %v6584
  %v6588 = vclz %v6587
  %v6589 = vsub.s32 %v6588, 2
  %vm6590 = vcmp.gt.s32.totalorder 0, %v6589
  %v6591 = vsel %vm6590, 0, %v6589
  %v6592 = vsub.s32 32, %v6591
  %v6593 = vshll.u32 %v6584, %v6591
  %v6594 = vshrl.u32 %v6576, %v6592
  %v6595 = vor.u32 %v6593, %v6594
  %v6596 = vsub.s32 4294967266, %v6591
  %v6597 = vadd.s32 %v6596, 127
  %v6598 = vshll.u32 %v6597, 23
  %v6599 = vor.u32 4788187, %v6598
  %v6600 = vand.u32 2147483647, %v6599
  %v6602 = vcvt.s32.f32 %v6595
  %v6603 = vmul.f32 %v6602, %v6600
  %v6604 = vxor.u32 %v6603, 2147483648
  %v6605 = vsel %vm6522, %v6604, %v6603
  %v6606 = vsub.s32 4, %v6582
  %v6607 = vsel %vm6522, %v6606, %v6582
  %v6608 = vsel %vm6521, %v436, %v6605
  %v6609 = vsel %vm6521, 0, %v6607
  %v6610 = vcosq.f32.pop %v6608
  %v6611 = vsinq.f32.pop %v6608
  %vm6612 = vweird.f32 %v436
  %v6613 = vadd.s32 %v6609, 3
  %v6614 = vand.u32 %v6613, 3
  %vm6615 = vcmp.lt.s32.totalorder %v6614, 2
  %vm6616 = vcmp.eq.s32.totalorder %v6614, 0
  %v6617 = vxor.u32 %v6611, 2147483648
  %v6618 = vsel %vm6616, %v6610, %v6617
  %vm6619 = vcmp.eq.s32.totalorder %v6614, 2
  %v6620 = vxor.u32 %v6610, 2147483648
  %v6621 = vsel %vm6619, %v6620, %v6611
  %v6622 = vsel %vm6615, %v6618, %v6621
  %v6623 = vsel %vm6612, nan, %v6622
  %v6624 = vand.u32 2147483647, %v438
  %vm6625 = vcmp.le.f32.partialorder %v6624, 0.7853982
  %vm6626 = vcmp.lt.s32.totalorder %v438, 0
  %v6627 = vand.u32 %v438, 2139095040
  %v6628 = vshrl.u32 %v6627, 23
  %v6629 = vsub.s32 %v6628, 127
  %v6630 = vand.u32 2147483647, %v438
  %v6631 = vand.u32 %v6630, 8388607
  %v6632 = vor.u32 %v6631, 8388608
  %v6633 = vsub.s32 0, %v6632
  %v6634 = vadd.s32 %v6629, 1
  %vm6635 = vcmp.gt.s32.totalorder %v6634, 0
  %v6636 = vsel %vm6635, %v6634, 0
  %v6637 = vshrl.u32 %v6636, 5
  %v6638 = vand.u32 %v6636, 31
  %v6639 = vsub.s32 32, %v6638
  %v6640 = vshrl.u32 683565275, %v6639
  %v6641 = vshll.u32 683565275, %v6638
  %v6642 = vshrl.u32 2475754826, %v6639
  %v6643 = vor.u32 %v6641, %v6642
  %v6644 = vshll.u32 2475754826, %v6638
  %v6645 = vshrl.u32 2131351028, %v6639
  %v6646 = vor.u32 %v6644, %v6645
  %v6647 = vshll.u32 2131351028, %v6638
  %v6648 = vshrl.u32 2102212464, %v6639
  %v6649 = vor.u32 %v6647, %v6648
  %v6650 = vshll.u32 2102212464, %v6638
  %v6651 = vshrl.u32 920167782, %v6639
  %v6652 = vor.u32 %v6650, %v6651
  %v6653 = vshll.u32 920167782, %v6638
  %v6654 = vshrl.u32 1326507024, %v6639
  %v6655 = vor.u32 %v6653, %v6654
  %vm6656 = vcmp.lt.s32.totalorder %v6637, 1
  %vm6657 = vcmp.lt.s32.totalorder %v6637, 2
  %vm6658 = vcmp.lt.s32.totalorder %v6637, 3
  %vm6659 = vcmp.lt.s32.totalorder %v6637, 4
  %v6660 = vsel %vm6656, %v6640, %v6643
  %v6661 = vsel %vm6659, %v6649, 2102212464
  %v6662 = vsel %vm6658, %v6646, %v6661
  %v6663 = vsel %vm6657, %v6660, %v6662
  %v6664 = vsel %vm6656, %v6643, %v6646
  %v6665 = vsel %vm6659, %v6652, 920167782
  %v6666 = vsel %vm6658, %v6649, %v6665
  %v6667 = vsel %vm6657, %v6664, %v6666
  %v6668 = vsel %vm6656, %v6646, %v6649
  %v6669 = vsel %vm6659, %v6655, 1326507024
  %v6670 = vsel %vm6658, %v6652, %v6669
  %v6671 = vsel %vm6657, %v6668, %v6670
  %v6672 = vshll.u32 %v6632, 8
  %v6673 = vmul.u32.u64.compose %v6672, %v6671
  %v6674 = vextract.low.u32 %v6673
  %v6675 = vextract.high.u32 %v6673
  %v6676 = vmul.u32.u64.compose %v6672, %v6667
  %v6677 = vextract.low.u32 %v6676
  %v6678 = vextract.high.u32 %v6676
  %v6679 = vmul.u32 %v6672, %v6663
  %v6680 = vadd.s32 %v6675, %v6677
  %vm6681 = vc.u32 %v6675, %v6677
  %v6682 = vadd.s32 %v6678, 1
  %v6683 = vsel %vm6681, %v6682, %v6678
  %v6684 = vadd.s32 %v6679, %v6683
  %v6685 = vadd.s32 %v6684, 536870912
  %v6686 = vshrl.u32 %v6685, 30
  %v6687 = vshll.u32 %v6686, 30
  %v6688 = vsub.s32 %v6684, %v6687
  %vm6689 = vcmp.lt.s32.totalorder %v6688, 0
  %v6690 = vsub.s32 0, %v6688
  %v6691 = vsel %vm6689, %v6690, %v6688
  %v6692 = vclz %v6691
  %v6693 = vsub.s32 %v6692, 2
  %vm6694 = vcmp.gt.s32.totalorder 0, %v6693
  %v6695 = vsel %vm6694, 0, %v6693
  %v6696 = vsub.s32 32, %v6695
  %v6697 = vshll.u32 %v6688, %v6695
  %v6698 = vshrl.u32 %v6680, %v6696
  %v6699 = vor.u32 %v6697, %v6698
  %v6700 = vsub.s32 4294967266, %v6695
  %v6701 = vadd.s32 %v6700, 127
  %v6702 = vshll.u32 %v6701, 23
  %v6703 = vor.u32 4788187, %v6702
  %v6704 = vand.u32 2147483647, %v6703
  %v6706 = vcvt.s32.f32 %v6699
  %v6707 = vmul.f32 %v6706, %v6704
  %v6708 = vxor.u32 %v6707, 2147483648
  %v6709 = vsel %vm6626, %v6708, %v6707
  %v6710 = vsub.s32 4, %v6686
  %v6711 = vsel %vm6626, %v6710, %v6686
  %v6712 = vsel %vm6625, %v438, %v6709
  %v6713 = vsel %vm6625, 0, %v6711
  %v6714 = vcosq.f32.pop %v6712
  %v6715 = vsinq.f32.pop %v6712
  %vm6716 = vweird.f32 %v438
  %v6717 = vadd.s32 %v6713, 3
  %v6718 = vand.u32 %v6717, 3
  %vm6719 = vcmp.lt.s32.totalorder %v6718, 2
  %vm6720 = vcmp.eq.s32.totalorder %v6718, 0
  %v6721 = vxor.u32 %v6715, 2147483648
  %v6722 = vsel %vm6720, %v6714, %v6721
  %vm6723 = vcmp.eq.s32.totalorder %v6718, 2
  %v6724 = vxor.u32 %v6714, 2147483648
  %v6725 = vsel %vm6723, %v6724, %v6715
  %v6726 = vsel %vm6719, %v6722, %v6725
  %v6727 = vsel %vm6716, nan, %v6726
  %v6728 = vand.u32 2147483647, %v442
  %vm6729 = vcmp.le.f32.partialorder %v6728, 0.7853982
  %vm6730 = vcmp.lt.s32.totalorder %v442, 0
  %v6731 = vand.u32 %v442, 2139095040
  %v6732 = vshrl.u32 %v6731, 23
  %v6733 = vsub.s32 %v6732, 127
  %v6734 = vand.u32 2147483647, %v442
  %v6735 = vand.u32 %v6734, 8388607
  %v6736 = vor.u32 %v6735, 8388608
  %v6737 = vsub.s32 0, %v6736
  %v6738 = vadd.s32 %v6733, 1
  %vm6739 = vcmp.gt.s32.totalorder %v6738, 0
  %v6740 = vsel %vm6739, %v6738, 0
  %v6741 = vshrl.u32 %v6740, 5
  %v6742 = vand.u32 %v6740, 31
  %v6743 = vsub.s32 32, %v6742
  %v6744 = vshrl.u32 683565275, %v6743
  %v6745 = vshll.u32 683565275, %v6742
  %v6746 = vshrl.u32 2475754826, %v6743
  %v6747 = vor.u32 %v6745, %v6746
  %v6748 = vshll.u32 2475754826, %v6742
  %v6749 = vshrl.u32 2131351028, %v6743
  %v6750 = vor.u32 %v6748, %v6749
  %v6751 = vshll.u32 2131351028, %v6742
  %v6752 = vshrl.u32 2102212464, %v6743
  %v6753 = vor.u32 %v6751, %v6752
  %v6754 = vshll.u32 2102212464, %v6742
  %v6755 = vshrl.u32 920167782, %v6743
  %v6756 = vor.u32 %v6754, %v6755
  %v6757 = vshll.u32 920167782, %v6742
  %v6758 = vshrl.u32 1326507024, %v6743
  %v6759 = vor.u32 %v6757, %v6758
  %vm6760 = vcmp.lt.s32.totalorder %v6741, 1
  %vm6761 = vcmp.lt.s32.totalorder %v6741, 2
  %vm6762 = vcmp.lt.s32.totalorder %v6741, 3
  %vm6763 = vcmp.lt.s32.totalorder %v6741, 4
  %v6764 = vsel %vm6760, %v6744, %v6747
  %v6765 = vsel %vm6763, %v6753, 2102212464
  %v6766 = vsel %vm6762, %v6750, %v6765
  %v6767 = vsel %vm6761, %v6764, %v6766
  %v6768 = vsel %vm6760, %v6747, %v6750
  %v6769 = vsel %vm6763, %v6756, 920167782
  %v6770 = vsel %vm6762, %v6753, %v6769
  %v6771 = vsel %vm6761, %v6768, %v6770
  %v6772 = vsel %vm6760, %v6750, %v6753
  %v6773 = vsel %vm6763, %v6759, 1326507024
  %v6774 = vsel %vm6762, %v6756, %v6773
  %v6775 = vsel %vm6761, %v6772, %v6774
  %v6776 = vshll.u32 %v6736, 8
  %v6777 = vmul.u32.u64.compose %v6776, %v6775
  %v6778 = vextract.low.u32 %v6777
  %v6779 = vextract.high.u32 %v6777
  %v6780 = vmul.u32.u64.compose %v6776, %v6771
  %v6781 = vextract.low.u32 %v6780
  %v6782 = vextract.high.u32 %v6780
  %v6783 = vmul.u32 %v6776, %v6767
  %v6784 = vadd.s32 %v6779, %v6781
  %vm6785 = vc.u32 %v6779, %v6781
  %v6786 = vadd.s32 %v6782, 1
  %v6787 = vsel %vm6785, %v6786, %v6782
  %v6788 = vadd.s32 %v6783, %v6787
  %v6789 = vadd.s32 %v6788, 536870912
  %v6790 = vshrl.u32 %v6789, 30
  %v6791 = vshll.u32 %v6790, 30
  %v6792 = vsub.s32 %v6788, %v6791
  %vm6793 = vcmp.lt.s32.totalorder %v6792, 0
  %v6794 = vsub.s32 0, %v6792
  %v6795 = vsel %vm6793, %v6794, %v6792
  %v6796 = vclz %v6795
  %v6797 = vsub.s32 %v6796, 2
  %vm6798 = vcmp.gt.s32.totalorder 0, %v6797
  %v6799 = vsel %vm6798, 0, %v6797
  %v6800 = vsub.s32 32, %v6799
  %v6801 = vshll.u32 %v6792, %v6799
  %v6802 = vshrl.u32 %v6784, %v6800
  %v6803 = vor.u32 %v6801, %v6802
  %v6804 = vsub.s32 4294967266, %v6799
  %v6805 = vadd.s32 %v6804, 127
  %v6806 = vshll.u32 %v6805, 23
  %v6807 = vor.u32 4788187, %v6806
  %v6808 = vand.u32 2147483647, %v6807
  %v6810 = vcvt.s32.f32 %v6803
  %v6811 = vmul.f32 %v6810, %v6808
  %v6812 = vxor.u32 %v6811, 2147483648
  %v6813 = vsel %vm6730, %v6812, %v6811
  %v6814 = vsub.s32 4, %v6790
  %v6815 = vsel %vm6730, %v6814, %v6790
  %v6816 = vsel %vm6729, %v442, %v6813
  %v6817 = vsel %vm6729, 0, %v6815
  %v6818 = vcosq.f32.pop %v6816
  %v6819 = vsinq.f32.pop %v6816
  %vm6820 = vweird.f32 %v442
  %v6821 = vadd.s32 %v6817, 3
  %v6822 = vand.u32 %v6821, 3
  %vm6823 = vcmp.lt.s32.totalorder %v6822, 2
  %vm6824 = vcmp.eq.s32.totalorder %v6822, 0
  %v6825 = vxor.u32 %v6819, 2147483648
  %v6826 = vsel %vm6824, %v6818, %v6825
  %vm6827 = vcmp.eq.s32.totalorder %v6822, 2
  %v6828 = vxor.u32 %v6818, 2147483648
  %v6829 = vsel %vm6827, %v6828, %v6819
  %v6830 = vsel %vm6823, %v6826, %v6829
  %v6831 = vsel %vm6820, nan, %v6830
  %v6832 = vand.u32 2147483647, %v444
  %vm6833 = vcmp.le.f32.partialorder %v6832, 0.7853982
  %vm6834 = vcmp.lt.s32.totalorder %v444, 0
  %v6835 = vand.u32 %v444, 2139095040
  %v6836 = vshrl.u32 %v6835, 23
  %v6837 = vsub.s32 %v6836, 127
  %v6838 = vand.u32 2147483647, %v444
  %v6839 = vand.u32 %v6838, 8388607
  %v6840 = vor.u32 %v6839, 8388608
  %v6841 = vsub.s32 0, %v6840
  %v6842 = vadd.s32 %v6837, 1
  %vm6843 = vcmp.gt.s32.totalorder %v6842, 0
  %v6844 = vsel %vm6843, %v6842, 0
  %v6845 = vshrl.u32 %v6844, 5
  %v6846 = vand.u32 %v6844, 31
  %v6847 = vsub.s32 32, %v6846
  %v6848 = vshrl.u32 683565275, %v6847
  %v6849 = vshll.u32 683565275, %v6846
  %v6850 = vshrl.u32 2475754826, %v6847
  %v6851 = vor.u32 %v6849, %v6850
  %v6852 = vshll.u32 2475754826, %v6846
  %v6853 = vshrl.u32 2131351028, %v6847
  %v6854 = vor.u32 %v6852, %v6853
  %v6855 = vshll.u32 2131351028, %v6846
  %v6856 = vshrl.u32 2102212464, %v6847
  %v6857 = vor.u32 %v6855, %v6856
  %v6858 = vshll.u32 2102212464, %v6846
  %v6859 = vshrl.u32 920167782, %v6847
  %v6860 = vor.u32 %v6858, %v6859
  %v6861 = vshll.u32 920167782, %v6846
  %v6862 = vshrl.u32 1326507024, %v6847
  %v6863 = vor.u32 %v6861, %v6862
  %vm6864 = vcmp.lt.s32.totalorder %v6845, 1
  %vm6865 = vcmp.lt.s32.totalorder %v6845, 2
  %vm6866 = vcmp.lt.s32.totalorder %v6845, 3
  %vm6867 = vcmp.lt.s32.totalorder %v6845, 4
  %v6868 = vsel %vm6864, %v6848, %v6851
  %v6869 = vsel %vm6867, %v6857, 2102212464
  %v6870 = vsel %vm6866, %v6854, %v6869
  %v6871 = vsel %vm6865, %v6868, %v6870
  %v6872 = vsel %vm6864, %v6851, %v6854
  %v6873 = vsel %vm6867, %v6860, 920167782
  %v6874 = vsel %vm6866, %v6857, %v6873
  %v6875 = vsel %vm6865, %v6872, %v6874
  %v6876 = vsel %vm6864, %v6854, %v6857
  %v6877 = vsel %vm6867, %v6863, 1326507024
  %v6878 = vsel %vm6866, %v6860, %v6877
  %v6879 = vsel %vm6865, %v6876, %v6878
  %v6880 = vshll.u32 %v6840, 8
  %v6881 = vmul.u32.u64.compose %v6880, %v6879
  %v6882 = vextract.low.u32 %v6881
  %v6883 = vextract.high.u32 %v6881
  %v6884 = vmul.u32.u64.compose %v6880, %v6875
  %v6885 = vextract.low.u32 %v6884
  %v6886 = vextract.high.u32 %v6884
  %v6887 = vmul.u32 %v6880, %v6871
  %v6888 = vadd.s32 %v6883, %v6885
  %vm6889 = vc.u32 %v6883, %v6885
  %v6890 = vadd.s32 %v6886, 1
  %v6891 = vsel %vm6889, %v6890, %v6886
  %v6892 = vadd.s32 %v6887, %v6891
  %v6893 = vadd.s32 %v6892, 536870912
  %v6894 = vshrl.u32 %v6893, 30
  %v6895 = vshll.u32 %v6894, 30
  %v6896 = vsub.s32 %v6892, %v6895
  %vm6897 = vcmp.lt.s32.totalorder %v6896, 0
  %v6898 = vsub.s32 0, %v6896
  %v6899 = vsel %vm6897, %v6898, %v6896
  %v6900 = vclz %v6899
  %v6901 = vsub.s32 %v6900, 2
  %vm6902 = vcmp.gt.s32.totalorder 0, %v6901
  %v6903 = vsel %vm6902, 0, %v6901
  %v6904 = vsub.s32 32, %v6903
  %v6905 = vshll.u32 %v6896, %v6903
  %v6906 = vshrl.u32 %v6888, %v6904
  %v6907 = vor.u32 %v6905, %v6906
  %v6908 = vsub.s32 4294967266, %v6903
  %v6909 = vadd.s32 %v6908, 127
  %v6910 = vshll.u32 %v6909, 23
  %v6911 = vor.u32 4788187, %v6910
  %v6912 = vand.u32 2147483647, %v6911
  %v6914 = vcvt.s32.f32 %v6907
  %v6915 = vmul.f32 %v6914, %v6912
  %v6916 = vxor.u32 %v6915, 2147483648
  %v6917 = vsel %vm6834, %v6916, %v6915
  %v6918 = vsub.s32 4, %v6894
  %v6919 = vsel %vm6834, %v6918, %v6894
  %v6920 = vsel %vm6833, %v444, %v6917
  %v6921 = vsel %vm6833, 0, %v6919
  %v6922 = vcosq.f32.pop %v6920
  %v6923 = vsinq.f32.pop %v6920
  %vm6924 = vweird.f32 %v444
  %v6925 = vadd.s32 %v6921, 3
  %v6926 = vand.u32 %v6925, 3
  %vm6927 = vcmp.lt.s32.totalorder %v6926, 2
  %vm6928 = vcmp.eq.s32.totalorder %v6926, 0
  %v6929 = vxor.u32 %v6923, 2147483648
  %v6930 = vsel %vm6928, %v6922, %v6929
  %vm6931 = vcmp.eq.s32.totalorder %v6926, 2
  %v6932 = vxor.u32 %v6922, 2147483648
  %v6933 = vsel %vm6931, %v6932, %v6923
  %v6934 = vsel %vm6927, %v6930, %v6933
  %v6935 = vsel %vm6924, nan, %v6934
  %v6936 = vand.u32 2147483647, %v448
  %vm6937 = vcmp.le.f32.partialorder %v6936, 0.7853982
  %vm6938 = vcmp.lt.s32.totalorder %v448, 0
  %v6939 = vand.u32 %v448, 2139095040
  %v6940 = vshrl.u32 %v6939, 23
  %v6941 = vsub.s32 %v6940, 127
  %v6942 = vand.u32 2147483647, %v448
  %v6943 = vand.u32 %v6942, 8388607
  %v6944 = vor.u32 %v6943, 8388608
  %v6945 = vsub.s32 0, %v6944
  %v6946 = vadd.s32 %v6941, 1
  %vm6947 = vcmp.gt.s32.totalorder %v6946, 0
  %v6948 = vsel %vm6947, %v6946, 0
  %v6949 = vshrl.u32 %v6948, 5
  %v6950 = vand.u32 %v6948, 31
  %v6951 = vsub.s32 32, %v6950
  %v6952 = vshrl.u32 683565275, %v6951
  %v6953 = vshll.u32 683565275, %v6950
  %v6954 = vshrl.u32 2475754826, %v6951
  %v6955 = vor.u32 %v6953, %v6954
  %v6956 = vshll.u32 2475754826, %v6950
  %v6957 = vshrl.u32 2131351028, %v6951
  %v6958 = vor.u32 %v6956, %v6957
  %v6959 = vshll.u32 2131351028, %v6950
  %v6960 = vshrl.u32 2102212464, %v6951
  %v6961 = vor.u32 %v6959, %v6960
  %v6962 = vshll.u32 2102212464, %v6950
  %v6963 = vshrl.u32 920167782, %v6951
  %v6964 = vor.u32 %v6962, %v6963
  %v6965 = vshll.u32 920167782, %v6950
  %v6966 = vshrl.u32 1326507024, %v6951
  %v6967 = vor.u32 %v6965, %v6966
  %vm6968 = vcmp.lt.s32.totalorder %v6949, 1
  %vm6969 = vcmp.lt.s32.totalorder %v6949, 2
  %vm6970 = vcmp.lt.s32.totalorder %v6949, 3
  %vm6971 = vcmp.lt.s32.totalorder %v6949, 4
  %v6972 = vsel %vm6968, %v6952, %v6955
  %v6973 = vsel %vm6971, %v6961, 2102212464
  %v6974 = vsel %vm6970, %v6958, %v6973
  %v6975 = vsel %vm6969, %v6972, %v6974
  %v6976 = vsel %vm6968, %v6955, %v6958
  %v6977 = vsel %vm6971, %v6964, 920167782
  %v6978 = vsel %vm6970, %v6961, %v6977
  %v6979 = vsel %vm6969, %v6976, %v6978
  %v6980 = vsel %vm6968, %v6958, %v6961
  %v6981 = vsel %vm6971, %v6967, 1326507024
  %v6982 = vsel %vm6970, %v6964, %v6981
  %v6983 = vsel %vm6969, %v6980, %v6982
  %v6984 = vshll.u32 %v6944, 8
  %v6985 = vmul.u32.u64.compose %v6984, %v6983
  %v6986 = vextract.low.u32 %v6985
  %v6987 = vextract.high.u32 %v6985
  %v6988 = vmul.u32.u64.compose %v6984, %v6979
  %v6989 = vextract.low.u32 %v6988
  %v6990 = vextract.high.u32 %v6988
  %v6991 = vmul.u32 %v6984, %v6975
  %v6992 = vadd.s32 %v6987, %v6989
  %vm6993 = vc.u32 %v6987, %v6989
  %v6994 = vadd.s32 %v6990, 1
  %v6995 = vsel %vm6993, %v6994, %v6990
  %v6996 = vadd.s32 %v6991, %v6995
  %v6997 = vadd.s32 %v6996, 536870912
  %v6998 = vshrl.u32 %v6997, 30
  %v6999 = vshll.u32 %v6998, 30
  %v7000 = vsub.s32 %v6996, %v6999
  %vm7001 = vcmp.lt.s32.totalorder %v7000, 0
  %v7002 = vsub.s32 0, %v7000
  %v7003 = vsel %vm7001, %v7002, %v7000
  %v7004 = vclz %v7003
  %v7005 = vsub.s32 %v7004, 2
  %vm7006 = vcmp.gt.s32.totalorder 0, %v7005
  %v7007 = vsel %vm7006, 0, %v7005
  %v7008 = vsub.s32 32, %v7007
  %v7009 = vshll.u32 %v7000, %v7007
  %v7010 = vshrl.u32 %v6992, %v7008
  %v7011 = vor.u32 %v7009, %v7010
  %v7012 = vsub.s32 4294967266, %v7007
  %v7013 = vadd.s32 %v7012, 127
  %v7014 = vshll.u32 %v7013, 23
  %v7015 = vor.u32 4788187, %v7014
  %v7016 = vand.u32 2147483647, %v7015
  %v7018 = vcvt.s32.f32 %v7011
  %v7019 = vmul.f32 %v7018, %v7016
  %v7020 = vxor.u32 %v7019, 2147483648
  %v7021 = vsel %vm6938, %v7020, %v7019
  %v7022 = vsub.s32 4, %v6998
  %v7023 = vsel %vm6938, %v7022, %v6998
  %v7024 = vsel %vm6937, %v448, %v7021
  %v7025 = vsel %vm6937, 0, %v7023
  %v7026 = vcosq.f32.pop %v7024
  %v7027 = vsinq.f32.pop %v7024
  %vm7028 = vweird.f32 %v448
  %v7029 = vadd.s32 %v7025, 3
  %v7030 = vand.u32 %v7029, 3
  %vm7031 = vcmp.lt.s32.totalorder %v7030, 2
  %vm7032 = vcmp.eq.s32.totalorder %v7030, 0
  %v7033 = vxor.u32 %v7027, 2147483648
  %v7034 = vsel %vm7032, %v7026, %v7033
  %vm7035 = vcmp.eq.s32.totalorder %v7030, 2
  %v7036 = vxor.u32 %v7026, 2147483648
  %v7037 = vsel %vm7035, %v7036, %v7027
  %v7038 = vsel %vm7031, %v7034, %v7037
  %v7039 = vsel %vm7028, nan, %v7038
  %v7040 = vand.u32 2147483647, %v450
  %vm7041 = vcmp.le.f32.partialorder %v7040, 0.7853982
  %vm7042 = vcmp.lt.s32.totalorder %v450, 0
  %v7043 = vand.u32 %v450, 2139095040
  %v7044 = vshrl.u32 %v7043, 23
  %v7045 = vsub.s32 %v7044, 127
  %v7046 = vand.u32 2147483647, %v450
  %v7047 = vand.u32 %v7046, 8388607
  %v7048 = vor.u32 %v7047, 8388608
  %v7049 = vsub.s32 0, %v7048
  %v7050 = vadd.s32 %v7045, 1
  %vm7051 = vcmp.gt.s32.totalorder %v7050, 0
  %v7052 = vsel %vm7051, %v7050, 0
  %v7053 = vshrl.u32 %v7052, 5
  %v7054 = vand.u32 %v7052, 31
  %v7055 = vsub.s32 32, %v7054
  %v7056 = vshrl.u32 683565275, %v7055
  %v7057 = vshll.u32 683565275, %v7054
  %v7058 = vshrl.u32 2475754826, %v7055
  %v7059 = vor.u32 %v7057, %v7058
  %v7060 = vshll.u32 2475754826, %v7054
  %v7061 = vshrl.u32 2131351028, %v7055
  %v7062 = vor.u32 %v7060, %v7061
  %v7063 = vshll.u32 2131351028, %v7054
  %v7064 = vshrl.u32 2102212464, %v7055
  %v7065 = vor.u32 %v7063, %v7064
  %v7066 = vshll.u32 2102212464, %v7054
  %v7067 = vshrl.u32 920167782, %v7055
  %v7068 = vor.u32 %v7066, %v7067
  %v7069 = vshll.u32 920167782, %v7054
  %v7070 = vshrl.u32 1326507024, %v7055
  %v7071 = vor.u32 %v7069, %v7070
  %vm7072 = vcmp.lt.s32.totalorder %v7053, 1
  %vm7073 = vcmp.lt.s32.totalorder %v7053, 2
  %vm7074 = vcmp.lt.s32.totalorder %v7053, 3
  %vm7075 = vcmp.lt.s32.totalorder %v7053, 4
  %v7076 = vsel %vm7072, %v7056, %v7059
  %v7077 = vsel %vm7075, %v7065, 2102212464
  %v7078 = vsel %vm7074, %v7062, %v7077
  %v7079 = vsel %vm7073, %v7076, %v7078
  %v7080 = vsel %vm7072, %v7059, %v7062
  %v7081 = vsel %vm7075, %v7068, 920167782
  %v7082 = vsel %vm7074, %v7065, %v7081
  %v7083 = vsel %vm7073, %v7080, %v7082
  %v7084 = vsel %vm7072, %v7062, %v7065
  %v7085 = vsel %vm7075, %v7071, 1326507024
  %v7086 = vsel %vm7074, %v7068, %v7085
  %v7087 = vsel %vm7073, %v7084, %v7086
  %v7088 = vshll.u32 %v7048, 8
  %v7089 = vmul.u32.u64.compose %v7088, %v7087
  %v7090 = vextract.low.u32 %v7089
  %v7091 = vextract.high.u32 %v7089
  %v7092 = vmul.u32.u64.compose %v7088, %v7083
  %v7093 = vextract.low.u32 %v7092
  %v7094 = vextract.high.u32 %v7092
  %v7095 = vmul.u32 %v7088, %v7079
  %v7096 = vadd.s32 %v7091, %v7093
  %vm7097 = vc.u32 %v7091, %v7093
  %v7098 = vadd.s32 %v7094, 1
  %v7099 = vsel %vm7097, %v7098, %v7094
  %v7100 = vadd.s32 %v7095, %v7099
  %v7101 = vadd.s32 %v7100, 536870912
  %v7102 = vshrl.u32 %v7101, 30
  %v7103 = vshll.u32 %v7102, 30
  %v7104 = vsub.s32 %v7100, %v7103
  %vm7105 = vcmp.lt.s32.totalorder %v7104, 0
  %v7106 = vsub.s32 0, %v7104
  %v7107 = vsel %vm7105, %v7106, %v7104
  %v7108 = vclz %v7107
  %v7109 = vsub.s32 %v7108, 2
  %vm7110 = vcmp.gt.s32.totalorder 0, %v7109
  %v7111 = vsel %vm7110, 0, %v7109
  %v7112 = vsub.s32 32, %v7111
  %v7113 = vshll.u32 %v7104, %v7111
  %v7114 = vshrl.u32 %v7096, %v7112
  %v7115 = vor.u32 %v7113, %v7114
  %v7116 = vsub.s32 4294967266, %v7111
  %v7117 = vadd.s32 %v7116, 127
  %v7118 = vshll.u32 %v7117, 23
  %v7119 = vor.u32 4788187, %v7118
  %v7120 = vand.u32 2147483647, %v7119
  %v7122 = vcvt.s32.f32 %v7115
  %v7123 = vmul.f32 %v7122, %v7120
  %v7124 = vxor.u32 %v7123, 2147483648
  %v7125 = vsel %vm7042, %v7124, %v7123
  %v7126 = vsub.s32 4, %v7102
  %v7127 = vsel %vm7042, %v7126, %v7102
  %v7128 = vsel %vm7041, %v450, %v7125
  %v7129 = vsel %vm7041, 0, %v7127
  %v7130 = vcosq.f32.pop %v7128
  %v7131 = vsinq.f32.pop %v7128
  %vm7132 = vweird.f32 %v450
  %v7133 = vadd.s32 %v7129, 3
  %v7134 = vand.u32 %v7133, 3
  %vm7135 = vcmp.lt.s32.totalorder %v7134, 2
  %vm7136 = vcmp.eq.s32.totalorder %v7134, 0
  %v7137 = vxor.u32 %v7131, 2147483648
  %v7138 = vsel %vm7136, %v7130, %v7137
  %vm7139 = vcmp.eq.s32.totalorder %v7134, 2
  %v7140 = vxor.u32 %v7130, 2147483648
  %v7141 = vsel %vm7139, %v7140, %v7131
  %v7142 = vsel %vm7135, %v7138, %v7141
  %v7143 = vsel %vm7132, nan, %v7142
  %v7144 = vand.u32 2147483647, %v454
  %vm7145 = vcmp.le.f32.partialorder %v7144, 0.7853982
  %vm7146 = vcmp.lt.s32.totalorder %v454, 0
  %v7147 = vand.u32 %v454, 2139095040
  %v7148 = vshrl.u32 %v7147, 23
  %v7149 = vsub.s32 %v7148, 127
  %v7150 = vand.u32 2147483647, %v454
  %v7151 = vand.u32 %v7150, 8388607
  %v7152 = vor.u32 %v7151, 8388608
  %v7153 = vsub.s32 0, %v7152
  %v7154 = vadd.s32 %v7149, 1
  %vm7155 = vcmp.gt.s32.totalorder %v7154, 0
  %v7156 = vsel %vm7155, %v7154, 0
  %v7157 = vshrl.u32 %v7156, 5
  %v7158 = vand.u32 %v7156, 31
  %v7159 = vsub.s32 32, %v7158
  %v7160 = vshrl.u32 683565275, %v7159
  %v7161 = vshll.u32 683565275, %v7158
  %v7162 = vshrl.u32 2475754826, %v7159
  %v7163 = vor.u32 %v7161, %v7162
  %v7164 = vshll.u32 2475754826, %v7158
  %v7165 = vshrl.u32 2131351028, %v7159
  %v7166 = vor.u32 %v7164, %v7165
  %v7167 = vshll.u32 2131351028, %v7158
  %v7168 = vshrl.u32 2102212464, %v7159
  %v7169 = vor.u32 %v7167, %v7168
  %v7170 = vshll.u32 2102212464, %v7158
  %v7171 = vshrl.u32 920167782, %v7159
  %v7172 = vor.u32 %v7170, %v7171
  %v7173 = vshll.u32 920167782, %v7158
  %v7174 = vshrl.u32 1326507024, %v7159
  %v7175 = vor.u32 %v7173, %v7174
  %vm7176 = vcmp.lt.s32.totalorder %v7157, 1
  %vm7177 = vcmp.lt.s32.totalorder %v7157, 2
  %vm7178 = vcmp.lt.s32.totalorder %v7157, 3
  %vm7179 = vcmp.lt.s32.totalorder %v7157, 4
  %v7180 = vsel %vm7176, %v7160, %v7163
  %v7181 = vsel %vm7179, %v7169, 2102212464
  %v7182 = vsel %vm7178, %v7166, %v7181
  %v7183 = vsel %vm7177, %v7180, %v7182
  %v7184 = vsel %vm7176, %v7163, %v7166
  %v7185 = vsel %vm7179, %v7172, 920167782
  %v7186 = vsel %vm7178, %v7169, %v7185
  %v7187 = vsel %vm7177, %v7184, %v7186
  %v7188 = vsel %vm7176, %v7166, %v7169
  %v7189 = vsel %vm7179, %v7175, 1326507024
  %v7190 = vsel %vm7178, %v7172, %v7189
  %v7191 = vsel %vm7177, %v7188, %v7190
  %v7192 = vshll.u32 %v7152, 8
  %v7193 = vmul.u32.u64.compose %v7192, %v7191
  %v7194 = vextract.low.u32 %v7193
  %v7195 = vextract.high.u32 %v7193
  %v7196 = vmul.u32.u64.compose %v7192, %v7187
  %v7197 = vextract.low.u32 %v7196
  %v7198 = vextract.high.u32 %v7196
  %v7199 = vmul.u32 %v7192, %v7183
  %v7200 = vadd.s32 %v7195, %v7197
  %vm7201 = vc.u32 %v7195, %v7197
  %v7202 = vadd.s32 %v7198, 1
  %v7203 = vsel %vm7201, %v7202, %v7198
  %v7204 = vadd.s32 %v7199, %v7203
  %v7205 = vadd.s32 %v7204, 536870912
  %v7206 = vshrl.u32 %v7205, 30
  %v7207 = vshll.u32 %v7206, 30
  %v7208 = vsub.s32 %v7204, %v7207
  %vm7209 = vcmp.lt.s32.totalorder %v7208, 0
  %v7210 = vsub.s32 0, %v7208
  %v7211 = vsel %vm7209, %v7210, %v7208
  %v7212 = vclz %v7211
  %v7213 = vsub.s32 %v7212, 2
  %vm7214 = vcmp.gt.s32.totalorder 0, %v7213
  %v7215 = vsel %vm7214, 0, %v7213
  %v7216 = vsub.s32 32, %v7215
  %v7217 = vshll.u32 %v7208, %v7215
  %v7218 = vshrl.u32 %v7200, %v7216
  %v7219 = vor.u32 %v7217, %v7218
  %v7220 = vsub.s32 4294967266, %v7215
  %v7221 = vadd.s32 %v7220, 127
  %v7222 = vshll.u32 %v7221, 23
  %v7223 = vor.u32 4788187, %v7222
  %v7224 = vand.u32 2147483647, %v7223
  %v7226 = vcvt.s32.f32 %v7219
  %v7227 = vmul.f32 %v7226, %v7224
  %v7228 = vxor.u32 %v7227, 2147483648
  %v7229 = vsel %vm7146, %v7228, %v7227
  %v7230 = vsub.s32 4, %v7206
  %v7231 = vsel %vm7146, %v7230, %v7206
  %v7232 = vsel %vm7145, %v454, %v7229
  %v7233 = vsel %vm7145, 0, %v7231
  %v7234 = vcosq.f32.pop %v7232
  %v7235 = vsinq.f32.pop %v7232
  %vm7236 = vweird.f32 %v454
  %v7237 = vadd.s32 %v7233, 3
  %v7238 = vand.u32 %v7237, 3
  %vm7239 = vcmp.lt.s32.totalorder %v7238, 2
  %vm7240 = vcmp.eq.s32.totalorder %v7238, 0
  %v7241 = vxor.u32 %v7235, 2147483648
  %v7242 = vsel %vm7240, %v7234, %v7241
  %vm7243 = vcmp.eq.s32.totalorder %v7238, 2
  %v7244 = vxor.u32 %v7234, 2147483648
  %v7245 = vsel %vm7243, %v7244, %v7235
  %v7246 = vsel %vm7239, %v7242, %v7245
  %v7247 = vsel %vm7236, nan, %v7246
  %v7248 = vand.u32 2147483647, %v456
  %vm7249 = vcmp.le.f32.partialorder %v7248, 0.7853982
  %vm7250 = vcmp.lt.s32.totalorder %v456, 0
  %v7251 = vand.u32 %v456, 2139095040
  %v7252 = vshrl.u32 %v7251, 23
  %v7253 = vsub.s32 %v7252, 127
  %v7254 = vand.u32 2147483647, %v456
  %v7255 = vand.u32 %v7254, 8388607
  %v7256 = vor.u32 %v7255, 8388608
  %v7257 = vsub.s32 0, %v7256
  %v7258 = vadd.s32 %v7253, 1
  %vm7259 = vcmp.gt.s32.totalorder %v7258, 0
  %v7260 = vsel %vm7259, %v7258, 0
  %v7261 = vshrl.u32 %v7260, 5
  %v7262 = vand.u32 %v7260, 31
  %v7263 = vsub.s32 32, %v7262
  %v7264 = vshrl.u32 683565275, %v7263
  %v7265 = vshll.u32 683565275, %v7262
  %v7266 = vshrl.u32 2475754826, %v7263
  %v7267 = vor.u32 %v7265, %v7266
  %v7268 = vshll.u32 2475754826, %v7262
  %v7269 = vshrl.u32 2131351028, %v7263
  %v7270 = vor.u32 %v7268, %v7269
  %v7271 = vshll.u32 2131351028, %v7262
  %v7272 = vshrl.u32 2102212464, %v7263
  %v7273 = vor.u32 %v7271, %v7272
  %v7274 = vshll.u32 2102212464, %v7262
  %v7275 = vshrl.u32 920167782, %v7263
  %v7276 = vor.u32 %v7274, %v7275
  %v7277 = vshll.u32 920167782, %v7262
  %v7278 = vshrl.u32 1326507024, %v7263
  %v7279 = vor.u32 %v7277, %v7278
  %vm7280 = vcmp.lt.s32.totalorder %v7261, 1
  %vm7281 = vcmp.lt.s32.totalorder %v7261, 2
  %vm7282 = vcmp.lt.s32.totalorder %v7261, 3
  %vm7283 = vcmp.lt.s32.totalorder %v7261, 4
  %v7284 = vsel %vm7280, %v7264, %v7267
  %v7285 = vsel %vm7283, %v7273, 2102212464
  %v7286 = vsel %vm7282, %v7270, %v7285
  %v7287 = vsel %vm7281, %v7284, %v7286
  %v7288 = vsel %vm7280, %v7267, %v7270
  %v7289 = vsel %vm7283, %v7276, 920167782
  %v7290 = vsel %vm7282, %v7273, %v7289
  %v7291 = vsel %vm7281, %v7288, %v7290
  %v7292 = vsel %vm7280, %v7270, %v7273
  %v7293 = vsel %vm7283, %v7279, 1326507024
  %v7294 = vsel %vm7282, %v7276, %v7293
  %v7295 = vsel %vm7281, %v7292, %v7294
  %v7296 = vshll.u32 %v7256, 8
  %v7297 = vmul.u32.u64.compose %v7296, %v7295
  %v7298 = vextract.low.u32 %v7297
  %v7299 = vextract.high.u32 %v7297
  %v7300 = vmul.u32.u64.compose %v7296, %v7291
  %v7301 = vextract.low.u32 %v7300
  %v7302 = vextract.high.u32 %v7300
  %v7303 = vmul.u32 %v7296, %v7287
  %v7304 = vadd.s32 %v7299, %v7301
  %vm7305 = vc.u32 %v7299, %v7301
  %v7306 = vadd.s32 %v7302, 1
  %v7307 = vsel %vm7305, %v7306, %v7302
  %v7308 = vadd.s32 %v7303, %v7307
  %v7309 = vadd.s32 %v7308, 536870912
  %v7310 = vshrl.u32 %v7309, 30
  %v7311 = vshll.u32 %v7310, 30
  %v7312 = vsub.s32 %v7308, %v7311
  %vm7313 = vcmp.lt.s32.totalorder %v7312, 0
  %v7314 = vsub.s32 0, %v7312
  %v7315 = vsel %vm7313, %v7314, %v7312
  %v7316 = vclz %v7315
  %v7317 = vsub.s32 %v7316, 2
  %vm7318 = vcmp.gt.s32.totalorder 0, %v7317
  %v7319 = vsel %vm7318, 0, %v7317
  %v7320 = vsub.s32 32, %v7319
  %v7321 = vshll.u32 %v7312, %v7319
  %v7322 = vshrl.u32 %v7304, %v7320
  %v7323 = vor.u32 %v7321, %v7322
  %v7324 = vsub.s32 4294967266, %v7319
  %v7325 = vadd.s32 %v7324, 127
  %v7326 = vshll.u32 %v7325, 23
  %v7327 = vor.u32 4788187, %v7326
  %v7328 = vand.u32 2147483647, %v7327
  %v7330 = vcvt.s32.f32 %v7323
  %v7331 = vmul.f32 %v7330, %v7328
  %v7332 = vxor.u32 %v7331, 2147483648
  %v7333 = vsel %vm7250, %v7332, %v7331
  %v7334 = vsub.s32 4, %v7310
  %v7335 = vsel %vm7250, %v7334, %v7310
  %v7336 = vsel %vm7249, %v456, %v7333
  %v7337 = vsel %vm7249, 0, %v7335
  %v7338 = vcosq.f32.pop %v7336
  %v7339 = vsinq.f32.pop %v7336
  %vm7340 = vweird.f32 %v456
  %v7341 = vadd.s32 %v7337, 3
  %v7342 = vand.u32 %v7341, 3
  %vm7343 = vcmp.lt.s32.totalorder %v7342, 2
  %vm7344 = vcmp.eq.s32.totalorder %v7342, 0
  %v7345 = vxor.u32 %v7339, 2147483648
  %v7346 = vsel %vm7344, %v7338, %v7345
  %vm7347 = vcmp.eq.s32.totalorder %v7342, 2
  %v7348 = vxor.u32 %v7338, 2147483648
  %v7349 = vsel %vm7347, %v7348, %v7339
  %v7350 = vsel %vm7343, %v7346, %v7349
  %v7351 = vsel %vm7340, nan, %v7350
  %v7352 = vand.u32 2147483647, %v460
  %vm7353 = vcmp.le.f32.partialorder %v7352, 0.7853982
  %vm7354 = vcmp.lt.s32.totalorder %v460, 0
  %v7355 = vand.u32 %v460, 2139095040
  %v7356 = vshrl.u32 %v7355, 23
  %v7357 = vsub.s32 %v7356, 127
  %v7358 = vand.u32 2147483647, %v460
  %v7359 = vand.u32 %v7358, 8388607
  %v7360 = vor.u32 %v7359, 8388608
  %v7361 = vsub.s32 0, %v7360
  %v7362 = vadd.s32 %v7357, 1
  %vm7363 = vcmp.gt.s32.totalorder %v7362, 0
  %v7364 = vsel %vm7363, %v7362, 0
  %v7365 = vshrl.u32 %v7364, 5
  %v7366 = vand.u32 %v7364, 31
  %v7367 = vsub.s32 32, %v7366
  %v7368 = vshrl.u32 683565275, %v7367
  %v7369 = vshll.u32 683565275, %v7366
  %v7370 = vshrl.u32 2475754826, %v7367
  %v7371 = vor.u32 %v7369, %v7370
  %v7372 = vshll.u32 2475754826, %v7366
  %v7373 = vshrl.u32 2131351028, %v7367
  %v7374 = vor.u32 %v7372, %v7373
  %v7375 = vshll.u32 2131351028, %v7366
  %v7376 = vshrl.u32 2102212464, %v7367
  %v7377 = vor.u32 %v7375, %v7376
  %v7378 = vshll.u32 2102212464, %v7366
  %v7379 = vshrl.u32 920167782, %v7367
  %v7380 = vor.u32 %v7378, %v7379
  %v7381 = vshll.u32 920167782, %v7366
  %v7382 = vshrl.u32 1326507024, %v7367
  %v7383 = vor.u32 %v7381, %v7382
  %vm7384 = vcmp.lt.s32.totalorder %v7365, 1
  %vm7385 = vcmp.lt.s32.totalorder %v7365, 2
  %vm7386 = vcmp.lt.s32.totalorder %v7365, 3
  %vm7387 = vcmp.lt.s32.totalorder %v7365, 4
  %v7388 = vsel %vm7384, %v7368, %v7371
  %v7389 = vsel %vm7387, %v7377, 2102212464
  %v7390 = vsel %vm7386, %v7374, %v7389
  %v7391 = vsel %vm7385, %v7388, %v7390
  %v7392 = vsel %vm7384, %v7371, %v7374
  %v7393 = vsel %vm7387, %v7380, 920167782
  %v7394 = vsel %vm7386, %v7377, %v7393
  %v7395 = vsel %vm7385, %v7392, %v7394
  %v7396 = vsel %vm7384, %v7374, %v7377
  %v7397 = vsel %vm7387, %v7383, 1326507024
  %v7398 = vsel %vm7386, %v7380, %v7397
  %v7399 = vsel %vm7385, %v7396, %v7398
  %v7400 = vshll.u32 %v7360, 8
  %v7401 = vmul.u32.u64.compose %v7400, %v7399
  %v7402 = vextract.low.u32 %v7401
  %v7403 = vextract.high.u32 %v7401
  %v7404 = vmul.u32.u64.compose %v7400, %v7395
  %v7405 = vextract.low.u32 %v7404
  %v7406 = vextract.high.u32 %v7404
  %v7407 = vmul.u32 %v7400, %v7391
  %v7408 = vadd.s32 %v7403, %v7405
  %vm7409 = vc.u32 %v7403, %v7405
  %v7410 = vadd.s32 %v7406, 1
  %v7411 = vsel %vm7409, %v7410, %v7406
  %v7412 = vadd.s32 %v7407, %v7411
  %v7413 = vadd.s32 %v7412, 536870912
  %v7414 = vshrl.u32 %v7413, 30
  %v7415 = vshll.u32 %v7414, 30
  %v7416 = vsub.s32 %v7412, %v7415
  %vm7417 = vcmp.lt.s32.totalorder %v7416, 0
  %v7418 = vsub.s32 0, %v7416
  %v7419 = vsel %vm7417, %v7418, %v7416
  %v7420 = vclz %v7419
  %v7421 = vsub.s32 %v7420, 2
  %vm7422 = vcmp.gt.s32.totalorder 0, %v7421
  %v7423 = vsel %vm7422, 0, %v7421
  %v7424 = vsub.s32 32, %v7423
  %v7425 = vshll.u32 %v7416, %v7423
  %v7426 = vshrl.u32 %v7408, %v7424
  %v7427 = vor.u32 %v7425, %v7426
  %v7428 = vsub.s32 4294967266, %v7423
  %v7429 = vadd.s32 %v7428, 127
  %v7430 = vshll.u32 %v7429, 23
  %v7431 = vor.u32 4788187, %v7430
  %v7432 = vand.u32 2147483647, %v7431
  %v7434 = vcvt.s32.f32 %v7427
  %v7435 = vmul.f32 %v7434, %v7432
  %v7436 = vxor.u32 %v7435, 2147483648
  %v7437 = vsel %vm7354, %v7436, %v7435
  %v7438 = vsub.s32 4, %v7414
  %v7439 = vsel %vm7354, %v7438, %v7414
  %v7440 = vsel %vm7353, %v460, %v7437
  %v7441 = vsel %vm7353, 0, %v7439
  %v7442 = vcosq.f32.pop %v7440
  %v7443 = vsinq.f32.pop %v7440
  %vm7444 = vweird.f32 %v460
  %v7445 = vadd.s32 %v7441, 3
  %v7446 = vand.u32 %v7445, 3
  %vm7447 = vcmp.lt.s32.totalorder %v7446, 2
  %vm7448 = vcmp.eq.s32.totalorder %v7446, 0
  %v7449 = vxor.u32 %v7443, 2147483648
  %v7450 = vsel %vm7448, %v7442, %v7449
  %vm7451 = vcmp.eq.s32.totalorder %v7446, 2
  %v7452 = vxor.u32 %v7442, 2147483648
  %v7453 = vsel %vm7451, %v7452, %v7443
  %v7454 = vsel %vm7447, %v7450, %v7453
  %v7455 = vsel %vm7444, nan, %v7454
  %v7456 = vand.u32 2147483647, %v462
  %vm7457 = vcmp.le.f32.partialorder %v7456, 0.7853982
  %vm7458 = vcmp.lt.s32.totalorder %v462, 0
  %v7459 = vand.u32 %v462, 2139095040
  %v7460 = vshrl.u32 %v7459, 23
  %v7461 = vsub.s32 %v7460, 127
  %v7462 = vand.u32 2147483647, %v462
  %v7463 = vand.u32 %v7462, 8388607
  %v7464 = vor.u32 %v7463, 8388608
  %v7465 = vsub.s32 0, %v7464
  %v7466 = vadd.s32 %v7461, 1
  %vm7467 = vcmp.gt.s32.totalorder %v7466, 0
  %v7468 = vsel %vm7467, %v7466, 0
  %v7469 = vshrl.u32 %v7468, 5
  %v7470 = vand.u32 %v7468, 31
  %v7471 = vsub.s32 32, %v7470
  %v7472 = vshrl.u32 683565275, %v7471
  %v7473 = vshll.u32 683565275, %v7470
  %v7474 = vshrl.u32 2475754826, %v7471
  %v7475 = vor.u32 %v7473, %v7474
  %v7476 = vshll.u32 2475754826, %v7470
  %v7477 = vshrl.u32 2131351028, %v7471
  %v7478 = vor.u32 %v7476, %v7477
  %v7479 = vshll.u32 2131351028, %v7470
  %v7480 = vshrl.u32 2102212464, %v7471
  %v7481 = vor.u32 %v7479, %v7480
  %v7482 = vshll.u32 2102212464, %v7470
  %v7483 = vshrl.u32 920167782, %v7471
  %v7484 = vor.u32 %v7482, %v7483
  %v7485 = vshll.u32 920167782, %v7470
  %v7486 = vshrl.u32 1326507024, %v7471
  %v7487 = vor.u32 %v7485, %v7486
  %vm7488 = vcmp.lt.s32.totalorder %v7469, 1
  %vm7489 = vcmp.lt.s32.totalorder %v7469, 2
  %vm7490 = vcmp.lt.s32.totalorder %v7469, 3
  %vm7491 = vcmp.lt.s32.totalorder %v7469, 4
  %v7492 = vsel %vm7488, %v7472, %v7475
  %v7493 = vsel %vm7491, %v7481, 2102212464
  %v7494 = vsel %vm7490, %v7478, %v7493
  %v7495 = vsel %vm7489, %v7492, %v7494
  %v7496 = vsel %vm7488, %v7475, %v7478
  %v7497 = vsel %vm7491, %v7484, 920167782
  %v7498 = vsel %vm7490, %v7481, %v7497
  %v7499 = vsel %vm7489, %v7496, %v7498
  %v7500 = vsel %vm7488, %v7478, %v7481
  %v7501 = vsel %vm7491, %v7487, 1326507024
  %v7502 = vsel %vm7490, %v7484, %v7501
  %v7503 = vsel %vm7489, %v7500, %v7502
  %v7504 = vshll.u32 %v7464, 8
  %v7505 = vmul.u32.u64.compose %v7504, %v7503
  %v7506 = vextract.low.u32 %v7505
  %v7507 = vextract.high.u32 %v7505
  %v7508 = vmul.u32.u64.compose %v7504, %v7499
  %v7509 = vextract.low.u32 %v7508
  %v7510 = vextract.high.u32 %v7508
  %v7511 = vmul.u32 %v7504, %v7495
  %v7512 = vadd.s32 %v7507, %v7509
  %vm7513 = vc.u32 %v7507, %v7509
  %v7514 = vadd.s32 %v7510, 1
  %v7515 = vsel %vm7513, %v7514, %v7510
  %v7516 = vadd.s32 %v7511, %v7515
  %v7517 = vadd.s32 %v7516, 536870912
  %v7518 = vshrl.u32 %v7517, 30
  %v7519 = vshll.u32 %v7518, 30
  %v7520 = vsub.s32 %v7516, %v7519
  %vm7521 = vcmp.lt.s32.totalorder %v7520, 0
  %v7522 = vsub.s32 0, %v7520
  %v7523 = vsel %vm7521, %v7522, %v7520
  %v7524 = vclz %v7523
  %v7525 = vsub.s32 %v7524, 2
  %vm7526 = vcmp.gt.s32.totalorder 0, %v7525
  %v7527 = vsel %vm7526, 0, %v7525
  %v7528 = vsub.s32 32, %v7527
  %v7529 = vshll.u32 %v7520, %v7527
  %v7530 = vshrl.u32 %v7512, %v7528
  %v7531 = vor.u32 %v7529, %v7530
  %v7532 = vsub.s32 4294967266, %v7527
  %v7533 = vadd.s32 %v7532, 127
  %v7534 = vshll.u32 %v7533, 23
  %v7535 = vor.u32 4788187, %v7534
  %v7536 = vand.u32 2147483647, %v7535
  %v7538 = vcvt.s32.f32 %v7531
  %v7539 = vmul.f32 %v7538, %v7536
  %v7540 = vxor.u32 %v7539, 2147483648
  %v7541 = vsel %vm7458, %v7540, %v7539
  %v7542 = vsub.s32 4, %v7518
  %v7543 = vsel %vm7458, %v7542, %v7518
  %v7544 = vsel %vm7457, %v462, %v7541
  %v7545 = vsel %vm7457, 0, %v7543
  %v7546 = vcosq.f32.pop %v7544
  %v7547 = vsinq.f32.pop %v7544
  %vm7548 = vweird.f32 %v462
  %v7549 = vadd.s32 %v7545, 3
  %v7550 = vand.u32 %v7549, 3
  %vm7551 = vcmp.lt.s32.totalorder %v7550, 2
  %vm7552 = vcmp.eq.s32.totalorder %v7550, 0
  %v7553 = vxor.u32 %v7547, 2147483648
  %v7554 = vsel %vm7552, %v7546, %v7553
  %vm7555 = vcmp.eq.s32.totalorder %v7550, 2
  %v7556 = vxor.u32 %v7546, 2147483648
  %v7557 = vsel %vm7555, %v7556, %v7547
  %v7558 = vsel %vm7551, %v7554, %v7557
  %v7559 = vsel %vm7548, nan, %v7558
  %v7560 = vand.u32 2147483647, %v466
  %vm7561 = vcmp.le.f32.partialorder %v7560, 0.7853982
  %vm7562 = vcmp.lt.s32.totalorder %v466, 0
  %v7563 = vand.u32 %v466, 2139095040
  %v7564 = vshrl.u32 %v7563, 23
  %v7565 = vsub.s32 %v7564, 127
  %v7566 = vand.u32 2147483647, %v466
  %v7567 = vand.u32 %v7566, 8388607
  %v7568 = vor.u32 %v7567, 8388608
  %v7569 = vsub.s32 0, %v7568
  %v7570 = vadd.s32 %v7565, 1
  %vm7571 = vcmp.gt.s32.totalorder %v7570, 0
  %v7572 = vsel %vm7571, %v7570, 0
  %v7573 = vshrl.u32 %v7572, 5
  %v7574 = vand.u32 %v7572, 31
  %v7575 = vsub.s32 32, %v7574
  %v7576 = vshrl.u32 683565275, %v7575
  %v7577 = vshll.u32 683565275, %v7574
  %v7578 = vshrl.u32 2475754826, %v7575
  %v7579 = vor.u32 %v7577, %v7578
  %v7580 = vshll.u32 2475754826, %v7574
  %v7581 = vshrl.u32 2131351028, %v7575
  %v7582 = vor.u32 %v7580, %v7581
  %v7583 = vshll.u32 2131351028, %v7574
  %v7584 = vshrl.u32 2102212464, %v7575
  %v7585 = vor.u32 %v7583, %v7584
  %v7586 = vshll.u32 2102212464, %v7574
  %v7587 = vshrl.u32 920167782, %v7575
  %v7588 = vor.u32 %v7586, %v7587
  %v7589 = vshll.u32 920167782, %v7574
  %v7590 = vshrl.u32 1326507024, %v7575
  %v7591 = vor.u32 %v7589, %v7590
  %vm7592 = vcmp.lt.s32.totalorder %v7573, 1
  %vm7593 = vcmp.lt.s32.totalorder %v7573, 2
  %vm7594 = vcmp.lt.s32.totalorder %v7573, 3
  %vm7595 = vcmp.lt.s32.totalorder %v7573, 4
  %v7596 = vsel %vm7592, %v7576, %v7579
  %v7597 = vsel %vm7595, %v7585, 2102212464
  %v7598 = vsel %vm7594, %v7582, %v7597
  %v7599 = vsel %vm7593, %v7596, %v7598
  %v7600 = vsel %vm7592, %v7579, %v7582
  %v7601 = vsel %vm7595, %v7588, 920167782
  %v7602 = vsel %vm7594, %v7585, %v7601
  %v7603 = vsel %vm7593, %v7600, %v7602
  %v7604 = vsel %vm7592, %v7582, %v7585
  %v7605 = vsel %vm7595, %v7591, 1326507024
  %v7606 = vsel %vm7594, %v7588, %v7605
  %v7607 = vsel %vm7593, %v7604, %v7606
  %v7608 = vshll.u32 %v7568, 8
  %v7609 = vmul.u32.u64.compose %v7608, %v7607
  %v7610 = vextract.low.u32 %v7609
  %v7611 = vextract.high.u32 %v7609
  %v7612 = vmul.u32.u64.compose %v7608, %v7603
  %v7613 = vextract.low.u32 %v7612
  %v7614 = vextract.high.u32 %v7612
  %v7615 = vmul.u32 %v7608, %v7599
  %v7616 = vadd.s32 %v7611, %v7613
  %vm7617 = vc.u32 %v7611, %v7613
  %v7618 = vadd.s32 %v7614, 1
  %v7619 = vsel %vm7617, %v7618, %v7614
  %v7620 = vadd.s32 %v7615, %v7619
  %v7621 = vadd.s32 %v7620, 536870912
  %v7622 = vshrl.u32 %v7621, 30
  %v7623 = vshll.u32 %v7622, 30
  %v7624 = vsub.s32 %v7620, %v7623
  %vm7625 = vcmp.lt.s32.totalorder %v7624, 0
  %v7626 = vsub.s32 0, %v7624
  %v7627 = vsel %vm7625, %v7626, %v7624
  %v7628 = vclz %v7627
  %v7629 = vsub.s32 %v7628, 2
  %vm7630 = vcmp.gt.s32.totalorder 0, %v7629
  %v7631 = vsel %vm7630, 0, %v7629
  %v7632 = vsub.s32 32, %v7631
  %v7633 = vshll.u32 %v7624, %v7631
  %v7634 = vshrl.u32 %v7616, %v7632
  %v7635 = vor.u32 %v7633, %v7634
  %v7636 = vsub.s32 4294967266, %v7631
  %v7637 = vadd.s32 %v7636, 127
  %v7638 = vshll.u32 %v7637, 23
  %v7639 = vor.u32 4788187, %v7638
  %v7640 = vand.u32 2147483647, %v7639
  %v7642 = vcvt.s32.f32 %v7635
  %v7643 = vmul.f32 %v7642, %v7640
  %v7644 = vxor.u32 %v7643, 2147483648
  %v7645 = vsel %vm7562, %v7644, %v7643
  %v7646 = vsub.s32 4, %v7622
  %v7647 = vsel %vm7562, %v7646, %v7622
  %v7648 = vsel %vm7561, %v466, %v7645
  %v7649 = vsel %vm7561, 0, %v7647
  %v7650 = vcosq.f32.pop %v7648
  %v7651 = vsinq.f32.pop %v7648
  %vm7652 = vweird.f32 %v466
  %v7653 = vadd.s32 %v7649, 3
  %v7654 = vand.u32 %v7653, 3
  %vm7655 = vcmp.lt.s32.totalorder %v7654, 2
  %vm7656 = vcmp.eq.s32.totalorder %v7654, 0
  %v7657 = vxor.u32 %v7651, 2147483648
  %v7658 = vsel %vm7656, %v7650, %v7657
  %vm7659 = vcmp.eq.s32.totalorder %v7654, 2
  %v7660 = vxor.u32 %v7650, 2147483648
  %v7661 = vsel %vm7659, %v7660, %v7651
  %v7662 = vsel %vm7655, %v7658, %v7661
  %v7663 = vsel %vm7652, nan, %v7662
  %v7664 = vand.u32 2147483647, %v468
  %vm7665 = vcmp.le.f32.partialorder %v7664, 0.7853982
  %vm7666 = vcmp.lt.s32.totalorder %v468, 0
  %v7667 = vand.u32 %v468, 2139095040
  %v7668 = vshrl.u32 %v7667, 23
  %v7669 = vsub.s32 %v7668, 127
  %v7670 = vand.u32 2147483647, %v468
  %v7671 = vand.u32 %v7670, 8388607
  %v7672 = vor.u32 %v7671, 8388608
  %v7673 = vsub.s32 0, %v7672
  %v7674 = vadd.s32 %v7669, 1
  %vm7675 = vcmp.gt.s32.totalorder %v7674, 0
  %v7676 = vsel %vm7675, %v7674, 0
  %v7677 = vshrl.u32 %v7676, 5
  %v7678 = vand.u32 %v7676, 31
  %v7679 = vsub.s32 32, %v7678
  %v7680 = vshrl.u32 683565275, %v7679
  %v7681 = vshll.u32 683565275, %v7678
  %v7682 = vshrl.u32 2475754826, %v7679
  %v7683 = vor.u32 %v7681, %v7682
  %v7684 = vshll.u32 2475754826, %v7678
  %v7685 = vshrl.u32 2131351028, %v7679
  %v7686 = vor.u32 %v7684, %v7685
  %v7687 = vshll.u32 2131351028, %v7678
  %v7688 = vshrl.u32 2102212464, %v7679
  %v7689 = vor.u32 %v7687, %v7688
  %v7690 = vshll.u32 2102212464, %v7678
  %v7691 = vshrl.u32 920167782, %v7679
  %v7692 = vor.u32 %v7690, %v7691
  %v7693 = vshll.u32 920167782, %v7678
  %v7694 = vshrl.u32 1326507024, %v7679
  %v7695 = vor.u32 %v7693, %v7694
  %vm7696 = vcmp.lt.s32.totalorder %v7677, 1
  %vm7697 = vcmp.lt.s32.totalorder %v7677, 2
  %vm7698 = vcmp.lt.s32.totalorder %v7677, 3
  %vm7699 = vcmp.lt.s32.totalorder %v7677, 4
  %v7700 = vsel %vm7696, %v7680, %v7683
  %v7701 = vsel %vm7699, %v7689, 2102212464
  %v7702 = vsel %vm7698, %v7686, %v7701
  %v7703 = vsel %vm7697, %v7700, %v7702
  %v7704 = vsel %vm7696, %v7683, %v7686
  %v7705 = vsel %vm7699, %v7692, 920167782
  %v7706 = vsel %vm7698, %v7689, %v7705
  %v7707 = vsel %vm7697, %v7704, %v7706
  %v7708 = vsel %vm7696, %v7686, %v7689
  %v7709 = vsel %vm7699, %v7695, 1326507024
  %v7710 = vsel %vm7698, %v7692, %v7709
  %v7711 = vsel %vm7697, %v7708, %v7710
  %v7712 = vshll.u32 %v7672, 8
  %v7713 = vmul.u32.u64.compose %v7712, %v7711
  %v7714 = vextract.low.u32 %v7713
  %v7715 = vextract.high.u32 %v7713
  %v7716 = vmul.u32.u64.compose %v7712, %v7707
  %v7717 = vextract.low.u32 %v7716
  %v7718 = vextract.high.u32 %v7716
  %v7719 = vmul.u32 %v7712, %v7703
  %v7720 = vadd.s32 %v7715, %v7717
  %vm7721 = vc.u32 %v7715, %v7717
  %v7722 = vadd.s32 %v7718, 1
  %v7723 = vsel %vm7721, %v7722, %v7718
  %v7724 = vadd.s32 %v7719, %v7723
  %v7725 = vadd.s32 %v7724, 536870912
  %v7726 = vshrl.u32 %v7725, 30
  %v7727 = vshll.u32 %v7726, 30
  %v7728 = vsub.s32 %v7724, %v7727
  %vm7729 = vcmp.lt.s32.totalorder %v7728, 0
  %v7730 = vsub.s32 0, %v7728
  %v7731 = vsel %vm7729, %v7730, %v7728
  %v7732 = vclz %v7731
  %v7733 = vsub.s32 %v7732, 2
  %vm7734 = vcmp.gt.s32.totalorder 0, %v7733
  %v7735 = vsel %vm7734, 0, %v7733
  %v7736 = vsub.s32 32, %v7735
  %v7737 = vshll.u32 %v7728, %v7735
  %v7738 = vshrl.u32 %v7720, %v7736
  %v7739 = vor.u32 %v7737, %v7738
  %v7740 = vsub.s32 4294967266, %v7735
  %v7741 = vadd.s32 %v7740, 127
  %v7742 = vshll.u32 %v7741, 23
  %v7743 = vor.u32 4788187, %v7742
  %v7744 = vand.u32 2147483647, %v7743
  %v7746 = vcvt.s32.f32 %v7739
  %v7747 = vmul.f32 %v7746, %v7744
  %v7748 = vxor.u32 %v7747, 2147483648
  %v7749 = vsel %vm7666, %v7748, %v7747
  %v7750 = vsub.s32 4, %v7726
  %v7751 = vsel %vm7666, %v7750, %v7726
  %v7752 = vsel %vm7665, %v468, %v7749
  %v7753 = vsel %vm7665, 0, %v7751
  %v7754 = vcosq.f32.pop %v7752
  %v7755 = vsinq.f32.pop %v7752
  %vm7756 = vweird.f32 %v468
  %v7757 = vadd.s32 %v7753, 3
  %v7758 = vand.u32 %v7757, 3
  %vm7759 = vcmp.lt.s32.totalorder %v7758, 2
  %vm7760 = vcmp.eq.s32.totalorder %v7758, 0
  %v7761 = vxor.u32 %v7755, 2147483648
  %v7762 = vsel %vm7760, %v7754, %v7761
  %vm7763 = vcmp.eq.s32.totalorder %v7758, 2
  %v7764 = vxor.u32 %v7754, 2147483648
  %v7765 = vsel %vm7763, %v7764, %v7755
  %v7766 = vsel %vm7759, %v7762, %v7765
  %v7767 = vsel %vm7756, nan, %v7766
  %v7768 = vand.u32 2147483647, %v472
  %vm7769 = vcmp.le.f32.partialorder %v7768, 0.7853982
  %vm7770 = vcmp.lt.s32.totalorder %v472, 0
  %v7771 = vand.u32 %v472, 2139095040
  %v7772 = vshrl.u32 %v7771, 23
  %v7773 = vsub.s32 %v7772, 127
  %v7774 = vand.u32 2147483647, %v472
  %v7775 = vand.u32 %v7774, 8388607
  %v7776 = vor.u32 %v7775, 8388608
  %v7777 = vsub.s32 0, %v7776
  %v7778 = vadd.s32 %v7773, 1
  %vm7779 = vcmp.gt.s32.totalorder %v7778, 0
  %v7780 = vsel %vm7779, %v7778, 0
  %v7781 = vshrl.u32 %v7780, 5
  %v7782 = vand.u32 %v7780, 31
  %v7783 = vsub.s32 32, %v7782
  %v7784 = vshrl.u32 683565275, %v7783
  %v7785 = vshll.u32 683565275, %v7782
  %v7786 = vshrl.u32 2475754826, %v7783
  %v7787 = vor.u32 %v7785, %v7786
  %v7788 = vshll.u32 2475754826, %v7782
  %v7789 = vshrl.u32 2131351028, %v7783
  %v7790 = vor.u32 %v7788, %v7789
  %v7791 = vshll.u32 2131351028, %v7782
  %v7792 = vshrl.u32 2102212464, %v7783
  %v7793 = vor.u32 %v7791, %v7792
  %v7794 = vshll.u32 2102212464, %v7782
  %v7795 = vshrl.u32 920167782, %v7783
  %v7796 = vor.u32 %v7794, %v7795
  %v7797 = vshll.u32 920167782, %v7782
  %v7798 = vshrl.u32 1326507024, %v7783
  %v7799 = vor.u32 %v7797, %v7798
  %vm7800 = vcmp.lt.s32.totalorder %v7781, 1
  %vm7801 = vcmp.lt.s32.totalorder %v7781, 2
  %vm7802 = vcmp.lt.s32.totalorder %v7781, 3
  %vm7803 = vcmp.lt.s32.totalorder %v7781, 4
  %v7804 = vsel %vm7800, %v7784, %v7787
  %v7805 = vsel %vm7803, %v7793, 2102212464
  %v7806 = vsel %vm7802, %v7790, %v7805
  %v7807 = vsel %vm7801, %v7804, %v7806
  %v7808 = vsel %vm7800, %v7787, %v7790
  %v7809 = vsel %vm7803, %v7796, 920167782
  %v7810 = vsel %vm7802, %v7793, %v7809
  %v7811 = vsel %vm7801, %v7808, %v7810
  %v7812 = vsel %vm7800, %v7790, %v7793
  %v7813 = vsel %vm7803, %v7799, 1326507024
  %v7814 = vsel %vm7802, %v7796, %v7813
  %v7815 = vsel %vm7801, %v7812, %v7814
  %v7816 = vshll.u32 %v7776, 8
  %v7817 = vmul.u32.u64.compose %v7816, %v7815
  %v7818 = vextract.low.u32 %v7817
  %v7819 = vextract.high.u32 %v7817
  %v7820 = vmul.u32.u64.compose %v7816, %v7811
  %v7821 = vextract.low.u32 %v7820
  %v7822 = vextract.high.u32 %v7820
  %v7823 = vmul.u32 %v7816, %v7807
  %v7824 = vadd.s32 %v7819, %v7821
  %vm7825 = vc.u32 %v7819, %v7821
  %v7826 = vadd.s32 %v7822, 1
  %v7827 = vsel %vm7825, %v7826, %v7822
  %v7828 = vadd.s32 %v7823, %v7827
  %v7829 = vadd.s32 %v7828, 536870912
  %v7830 = vshrl.u32 %v7829, 30
  %v7831 = vshll.u32 %v7830, 30
  %v7832 = vsub.s32 %v7828, %v7831
  %vm7833 = vcmp.lt.s32.totalorder %v7832, 0
  %v7834 = vsub.s32 0, %v7832
  %v7835 = vsel %vm7833, %v7834, %v7832
  %v7836 = vclz %v7835
  %v7837 = vsub.s32 %v7836, 2
  %vm7838 = vcmp.gt.s32.totalorder 0, %v7837
  %v7839 = vsel %vm7838, 0, %v7837
  %v7840 = vsub.s32 32, %v7839
  %v7841 = vshll.u32 %v7832, %v7839
  %v7842 = vshrl.u32 %v7824, %v7840
  %v7843 = vor.u32 %v7841, %v7842
  %v7844 = vsub.s32 4294967266, %v7839
  %v7845 = vadd.s32 %v7844, 127
  %v7846 = vshll.u32 %v7845, 23
  %v7847 = vor.u32 4788187, %v7846
  %v7848 = vand.u32 2147483647, %v7847
  %v7850 = vcvt.s32.f32 %v7843
  %v7851 = vmul.f32 %v7850, %v7848
  %v7852 = vxor.u32 %v7851, 2147483648
  %v7853 = vsel %vm7770, %v7852, %v7851
  %v7854 = vsub.s32 4, %v7830
  %v7855 = vsel %vm7770, %v7854, %v7830
  %v7856 = vsel %vm7769, %v472, %v7853
  %v7857 = vsel %vm7769, 0, %v7855
  %v7858 = vcosq.f32.pop %v7856
  %v7859 = vsinq.f32.pop %v7856
  %vm7860 = vweird.f32 %v472
  %v7861 = vadd.s32 %v7857, 3
  %v7862 = vand.u32 %v7861, 3
  %vm7863 = vcmp.lt.s32.totalorder %v7862, 2
  %vm7864 = vcmp.eq.s32.totalorder %v7862, 0
  %v7865 = vxor.u32 %v7859, 2147483648
  %v7866 = vsel %vm7864, %v7858, %v7865
  %vm7867 = vcmp.eq.s32.totalorder %v7862, 2
  %v7868 = vxor.u32 %v7858, 2147483648
  %v7869 = vsel %vm7867, %v7868, %v7859
  %v7870 = vsel %vm7863, %v7866, %v7869
  %v7871 = vsel %vm7860, nan, %v7870
  %v7872 = vand.u32 2147483647, %v474
  %vm7873 = vcmp.le.f32.partialorder %v7872, 0.7853982
  %vm7874 = vcmp.lt.s32.totalorder %v474, 0
  %v7875 = vand.u32 %v474, 2139095040
  %v7876 = vshrl.u32 %v7875, 23
  %v7877 = vsub.s32 %v7876, 127
  %v7878 = vand.u32 2147483647, %v474
  %v7879 = vand.u32 %v7878, 8388607
  %v7880 = vor.u32 %v7879, 8388608
  %v7881 = vsub.s32 0, %v7880
  %v7882 = vadd.s32 %v7877, 1
  %vm7883 = vcmp.gt.s32.totalorder %v7882, 0
  %v7884 = vsel %vm7883, %v7882, 0
  %v7885 = vshrl.u32 %v7884, 5
  %v7886 = vand.u32 %v7884, 31
  %v7887 = vsub.s32 32, %v7886
  %v7888 = vshrl.u32 683565275, %v7887
  %v7889 = vshll.u32 683565275, %v7886
  %v7890 = vshrl.u32 2475754826, %v7887
  %v7891 = vor.u32 %v7889, %v7890
  %v7892 = vshll.u32 2475754826, %v7886
  %v7893 = vshrl.u32 2131351028, %v7887
  %v7894 = vor.u32 %v7892, %v7893
  %v7895 = vshll.u32 2131351028, %v7886
  %v7896 = vshrl.u32 2102212464, %v7887
  %v7897 = vor.u32 %v7895, %v7896
  %v7898 = vshll.u32 2102212464, %v7886
  %v7899 = vshrl.u32 920167782, %v7887
  %v7900 = vor.u32 %v7898, %v7899
  %v7901 = vshll.u32 920167782, %v7886
  %v7902 = vshrl.u32 1326507024, %v7887
  %v7903 = vor.u32 %v7901, %v7902
  %vm7904 = vcmp.lt.s32.totalorder %v7885, 1
  %vm7905 = vcmp.lt.s32.totalorder %v7885, 2
  %vm7906 = vcmp.lt.s32.totalorder %v7885, 3
  %vm7907 = vcmp.lt.s32.totalorder %v7885, 4
  %v7908 = vsel %vm7904, %v7888, %v7891
  %v7909 = vsel %vm7907, %v7897, 2102212464
  %v7910 = vsel %vm7906, %v7894, %v7909
  %v7911 = vsel %vm7905, %v7908, %v7910
  %v7912 = vsel %vm7904, %v7891, %v7894
  %v7913 = vsel %vm7907, %v7900, 920167782
  %v7914 = vsel %vm7906, %v7897, %v7913
  %v7915 = vsel %vm7905, %v7912, %v7914
  %v7916 = vsel %vm7904, %v7894, %v7897
  %v7917 = vsel %vm7907, %v7903, 1326507024
  %v7918 = vsel %vm7906, %v7900, %v7917
  %v7919 = vsel %vm7905, %v7916, %v7918
  %v7920 = vshll.u32 %v7880, 8
  %v7921 = vmul.u32.u64.compose %v7920, %v7919
  %v7922 = vextract.low.u32 %v7921
  %v7923 = vextract.high.u32 %v7921
  %v7924 = vmul.u32.u64.compose %v7920, %v7915
  %v7925 = vextract.low.u32 %v7924
  %v7926 = vextract.high.u32 %v7924
  %v7927 = vmul.u32 %v7920, %v7911
  %v7928 = vadd.s32 %v7923, %v7925
  %vm7929 = vc.u32 %v7923, %v7925
  %v7930 = vadd.s32 %v7926, 1
  %v7931 = vsel %vm7929, %v7930, %v7926
  %v7932 = vadd.s32 %v7927, %v7931
  %v7933 = vadd.s32 %v7932, 536870912
  %v7934 = vshrl.u32 %v7933, 30
  %v7935 = vshll.u32 %v7934, 30
  %v7936 = vsub.s32 %v7932, %v7935
  %vm7937 = vcmp.lt.s32.totalorder %v7936, 0
  %v7938 = vsub.s32 0, %v7936
  %v7939 = vsel %vm7937, %v7938, %v7936
  %v7940 = vclz %v7939
  %v7941 = vsub.s32 %v7940, 2
  %vm7942 = vcmp.gt.s32.totalorder 0, %v7941
  %v7943 = vsel %vm7942, 0, %v7941
  %v7944 = vsub.s32 32, %v7943
  %v7945 = vshll.u32 %v7936, %v7943
  %v7946 = vshrl.u32 %v7928, %v7944
  %v7947 = vor.u32 %v7945, %v7946
  %v7948 = vsub.s32 4294967266, %v7943
  %v7949 = vadd.s32 %v7948, 127
  %v7950 = vshll.u32 %v7949, 23
  %v7951 = vor.u32 4788187, %v7950
  %v7952 = vand.u32 2147483647, %v7951
  %v7954 = vcvt.s32.f32 %v7947
  %v7955 = vmul.f32 %v7954, %v7952
  %v7956 = vxor.u32 %v7955, 2147483648
  %v7957 = vsel %vm7874, %v7956, %v7955
  %v7958 = vsub.s32 4, %v7934
  %v7959 = vsel %vm7874, %v7958, %v7934
  %v7960 = vsel %vm7873, %v474, %v7957
  %v7961 = vsel %vm7873, 0, %v7959
  %v7962 = vcosq.f32.pop %v7960
  %v7963 = vsinq.f32.pop %v7960
  %vm7964 = vweird.f32 %v474
  %v7965 = vadd.s32 %v7961, 3
  %v7966 = vand.u32 %v7965, 3
  %vm7967 = vcmp.lt.s32.totalorder %v7966, 2
  %vm7968 = vcmp.eq.s32.totalorder %v7966, 0
  %v7969 = vxor.u32 %v7963, 2147483648
  %v7970 = vsel %vm7968, %v7962, %v7969
  %vm7971 = vcmp.eq.s32.totalorder %v7966, 2
  %v7972 = vxor.u32 %v7962, 2147483648
  %v7973 = vsel %vm7971, %v7972, %v7963
  %v7974 = vsel %vm7967, %v7970, %v7973
  %v7975 = vsel %vm7964, nan, %v7974
  %v7976 = vand.u32 2147483647, %v478
  %vm7977 = vcmp.le.f32.partialorder %v7976, 0.7853982
  %vm7978 = vcmp.lt.s32.totalorder %v478, 0
  %v7979 = vand.u32 %v478, 2139095040
  %v7980 = vshrl.u32 %v7979, 23
  %v7981 = vsub.s32 %v7980, 127
  %v7982 = vand.u32 2147483647, %v478
  %v7983 = vand.u32 %v7982, 8388607
  %v7984 = vor.u32 %v7983, 8388608
  %v7985 = vsub.s32 0, %v7984
  %v7986 = vadd.s32 %v7981, 1
  %vm7987 = vcmp.gt.s32.totalorder %v7986, 0
  %v7988 = vsel %vm7987, %v7986, 0
  %v7989 = vshrl.u32 %v7988, 5
  %v7990 = vand.u32 %v7988, 31
  %v7991 = vsub.s32 32, %v7990
  %v7992 = vshrl.u32 683565275, %v7991
  %v7993 = vshll.u32 683565275, %v7990
  %v7994 = vshrl.u32 2475754826, %v7991
  %v7995 = vor.u32 %v7993, %v7994
  %v7996 = vshll.u32 2475754826, %v7990
  %v7997 = vshrl.u32 2131351028, %v7991
  %v7998 = vor.u32 %v7996, %v7997
  %v7999 = vshll.u32 2131351028, %v7990
  %v8000 = vshrl.u32 2102212464, %v7991
  %v8001 = vor.u32 %v7999, %v8000
  %v8002 = vshll.u32 2102212464, %v7990
  %v8003 = vshrl.u32 920167782, %v7991
  %v8004 = vor.u32 %v8002, %v8003
  %v8005 = vshll.u32 920167782, %v7990
  %v8006 = vshrl.u32 1326507024, %v7991
  %v8007 = vor.u32 %v8005, %v8006
  %vm8008 = vcmp.lt.s32.totalorder %v7989, 1
  %vm8009 = vcmp.lt.s32.totalorder %v7989, 2
  %vm8010 = vcmp.lt.s32.totalorder %v7989, 3
  %vm8011 = vcmp.lt.s32.totalorder %v7989, 4
  %v8012 = vsel %vm8008, %v7992, %v7995
  %v8013 = vsel %vm8011, %v8001, 2102212464
  %v8014 = vsel %vm8010, %v7998, %v8013
  %v8015 = vsel %vm8009, %v8012, %v8014
  %v8016 = vsel %vm8008, %v7995, %v7998
  %v8017 = vsel %vm8011, %v8004, 920167782
  %v8018 = vsel %vm8010, %v8001, %v8017
  %v8019 = vsel %vm8009, %v8016, %v8018
  %v8020 = vsel %vm8008, %v7998, %v8001
  %v8021 = vsel %vm8011, %v8007, 1326507024
  %v8022 = vsel %vm8010, %v8004, %v8021
  %v8023 = vsel %vm8009, %v8020, %v8022
  %v8024 = vshll.u32 %v7984, 8
  %v8025 = vmul.u32.u64.compose %v8024, %v8023
  %v8026 = vextract.low.u32 %v8025
  %v8027 = vextract.high.u32 %v8025
  %v8028 = vmul.u32.u64.compose %v8024, %v8019
  %v8029 = vextract.low.u32 %v8028
  %v8030 = vextract.high.u32 %v8028
  %v8031 = vmul.u32 %v8024, %v8015
  %v8032 = vadd.s32 %v8027, %v8029
  %vm8033 = vc.u32 %v8027, %v8029
  %v8034 = vadd.s32 %v8030, 1
  %v8035 = vsel %vm8033, %v8034, %v8030
  %v8036 = vadd.s32 %v8031, %v8035
  %v8037 = vadd.s32 %v8036, 536870912
  %v8038 = vshrl.u32 %v8037, 30
  %v8039 = vshll.u32 %v8038, 30
  %v8040 = vsub.s32 %v8036, %v8039
  %vm8041 = vcmp.lt.s32.totalorder %v8040, 0
  %v8042 = vsub.s32 0, %v8040
  %v8043 = vsel %vm8041, %v8042, %v8040
  %v8044 = vclz %v8043
  %v8045 = vsub.s32 %v8044, 2
  %vm8046 = vcmp.gt.s32.totalorder 0, %v8045
  %v8047 = vsel %vm8046, 0, %v8045
  %v8048 = vsub.s32 32, %v8047
  %v8049 = vshll.u32 %v8040, %v8047
  %v8050 = vshrl.u32 %v8032, %v8048
  %v8051 = vor.u32 %v8049, %v8050
  %v8052 = vsub.s32 4294967266, %v8047
  %v8053 = vadd.s32 %v8052, 127
  %v8054 = vshll.u32 %v8053, 23
  %v8055 = vor.u32 4788187, %v8054
  %v8056 = vand.u32 2147483647, %v8055
  %v8058 = vcvt.s32.f32 %v8051
  %v8059 = vmul.f32 %v8058, %v8056
  %v8060 = vxor.u32 %v8059, 2147483648
  %v8061 = vsel %vm7978, %v8060, %v8059
  %v8062 = vsub.s32 4, %v8038
  %v8063 = vsel %vm7978, %v8062, %v8038
  %v8064 = vsel %vm7977, %v478, %v8061
  %v8065 = vsel %vm7977, 0, %v8063
  %v8066 = vcosq.f32.pop %v8064
  %v8067 = vsinq.f32.pop %v8064
  %vm8068 = vweird.f32 %v478
  %v8069 = vadd.s32 %v8065, 3
  %v8070 = vand.u32 %v8069, 3
  %vm8071 = vcmp.lt.s32.totalorder %v8070, 2
  %vm8072 = vcmp.eq.s32.totalorder %v8070, 0
  %v8073 = vxor.u32 %v8067, 2147483648
  %v8074 = vsel %vm8072, %v8066, %v8073
  %vm8075 = vcmp.eq.s32.totalorder %v8070, 2
  %v8076 = vxor.u32 %v8066, 2147483648
  %v8077 = vsel %vm8075, %v8076, %v8067
  %v8078 = vsel %vm8071, %v8074, %v8077
  %v8079 = vsel %vm8068, nan, %v8078
  %v8080 = vand.u32 2147483647, %v480
  %vm8081 = vcmp.le.f32.partialorder %v8080, 0.7853982
  %vm8082 = vcmp.lt.s32.totalorder %v480, 0
  %v8083 = vand.u32 %v480, 2139095040
  %v8084 = vshrl.u32 %v8083, 23
  %v8085 = vsub.s32 %v8084, 127
  %v8086 = vand.u32 2147483647, %v480
  %v8087 = vand.u32 %v8086, 8388607
  %v8088 = vor.u32 %v8087, 8388608
  %v8089 = vsub.s32 0, %v8088
  %v8090 = vadd.s32 %v8085, 1
  %vm8091 = vcmp.gt.s32.totalorder %v8090, 0
  %v8092 = vsel %vm8091, %v8090, 0
  %v8093 = vshrl.u32 %v8092, 5
  %v8094 = vand.u32 %v8092, 31
  %v8095 = vsub.s32 32, %v8094
  %v8096 = vshrl.u32 683565275, %v8095
  %v8097 = vshll.u32 683565275, %v8094
  %v8098 = vshrl.u32 2475754826, %v8095
  %v8099 = vor.u32 %v8097, %v8098
  %v8100 = vshll.u32 2475754826, %v8094
  %v8101 = vshrl.u32 2131351028, %v8095
  %v8102 = vor.u32 %v8100, %v8101
  %v8103 = vshll.u32 2131351028, %v8094
  %v8104 = vshrl.u32 2102212464, %v8095
  %v8105 = vor.u32 %v8103, %v8104
  %v8106 = vshll.u32 2102212464, %v8094
  %v8107 = vshrl.u32 920167782, %v8095
  %v8108 = vor.u32 %v8106, %v8107
  %v8109 = vshll.u32 920167782, %v8094
  %v8110 = vshrl.u32 1326507024, %v8095
  %v8111 = vor.u32 %v8109, %v8110
  %vm8112 = vcmp.lt.s32.totalorder %v8093, 1
  %vm8113 = vcmp.lt.s32.totalorder %v8093, 2
  %vm8114 = vcmp.lt.s32.totalorder %v8093, 3
  %vm8115 = vcmp.lt.s32.totalorder %v8093, 4
  %v8116 = vsel %vm8112, %v8096, %v8099
  %v8117 = vsel %vm8115, %v8105, 2102212464
  %v8118 = vsel %vm8114, %v8102, %v8117
  %v8119 = vsel %vm8113, %v8116, %v8118
  %v8120 = vsel %vm8112, %v8099, %v8102
  %v8121 = vsel %vm8115, %v8108, 920167782
  %v8122 = vsel %vm8114, %v8105, %v8121
  %v8123 = vsel %vm8113, %v8120, %v8122
  %v8124 = vsel %vm8112, %v8102, %v8105
  %v8125 = vsel %vm8115, %v8111, 1326507024
  %v8126 = vsel %vm8114, %v8108, %v8125
  %v8127 = vsel %vm8113, %v8124, %v8126
  %v8128 = vshll.u32 %v8088, 8
  %v8129 = vmul.u32.u64.compose %v8128, %v8127
  %v8130 = vextract.low.u32 %v8129
  %v8131 = vextract.high.u32 %v8129
  %v8132 = vmul.u32.u64.compose %v8128, %v8123
  %v8133 = vextract.low.u32 %v8132
  %v8134 = vextract.high.u32 %v8132
  %v8135 = vmul.u32 %v8128, %v8119
  %v8136 = vadd.s32 %v8131, %v8133
  %vm8137 = vc.u32 %v8131, %v8133
  %v8138 = vadd.s32 %v8134, 1
  %v8139 = vsel %vm8137, %v8138, %v8134
  %v8140 = vadd.s32 %v8135, %v8139
  %v8141 = vadd.s32 %v8140, 536870912
  %v8142 = vshrl.u32 %v8141, 30
  %v8143 = vshll.u32 %v8142, 30
  %v8144 = vsub.s32 %v8140, %v8143
  %vm8145 = vcmp.lt.s32.totalorder %v8144, 0
  %v8146 = vsub.s32 0, %v8144
  %v8147 = vsel %vm8145, %v8146, %v8144
  %v8148 = vclz %v8147
  %v8149 = vsub.s32 %v8148, 2
  %vm8150 = vcmp.gt.s32.totalorder 0, %v8149
  %v8151 = vsel %vm8150, 0, %v8149
  %v8152 = vsub.s32 32, %v8151
  %v8153 = vshll.u32 %v8144, %v8151
  %v8154 = vshrl.u32 %v8136, %v8152
  %v8155 = vor.u32 %v8153, %v8154
  %v8156 = vsub.s32 4294967266, %v8151
  %v8157 = vadd.s32 %v8156, 127
  %v8158 = vshll.u32 %v8157, 23
  %v8159 = vor.u32 4788187, %v8158
  %v8160 = vand.u32 2147483647, %v8159
  %v8162 = vcvt.s32.f32 %v8155
  %v8163 = vmul.f32 %v8162, %v8160
  %v8164 = vxor.u32 %v8163, 2147483648
  %v8165 = vsel %vm8082, %v8164, %v8163
  %v8166 = vsub.s32 4, %v8142
  %v8167 = vsel %vm8082, %v8166, %v8142
  %v8168 = vsel %vm8081, %v480, %v8165
  %v8169 = vsel %vm8081, 0, %v8167
  %v8170 = vcosq.f32.pop %v8168
  %v8171 = vsinq.f32.pop %v8168
  %vm8172 = vweird.f32 %v480
  %v8173 = vadd.s32 %v8169, 3
  %v8174 = vand.u32 %v8173, 3
  %vm8175 = vcmp.lt.s32.totalorder %v8174, 2
  %vm8176 = vcmp.eq.s32.totalorder %v8174, 0
  %v8177 = vxor.u32 %v8171, 2147483648
  %v8178 = vsel %vm8176, %v8170, %v8177
  %vm8179 = vcmp.eq.s32.totalorder %v8174, 2
  %v8180 = vxor.u32 %v8170, 2147483648
  %v8181 = vsel %vm8179, %v8180, %v8171
  %v8182 = vsel %vm8175, %v8178, %v8181
  %v8183 = vsel %vm8172, nan, %v8182
  %v8184 = vand.u32 2147483647, %v484
  %vm8185 = vcmp.le.f32.partialorder %v8184, 0.7853982
  %vm8186 = vcmp.lt.s32.totalorder %v484, 0
  %v8187 = vand.u32 %v484, 2139095040
  %v8188 = vshrl.u32 %v8187, 23
  %v8189 = vsub.s32 %v8188, 127
  %v8190 = vand.u32 2147483647, %v484
  %v8191 = vand.u32 %v8190, 8388607
  %v8192 = vor.u32 %v8191, 8388608
  %v8193 = vsub.s32 0, %v8192
  %v8194 = vadd.s32 %v8189, 1
  %vm8195 = vcmp.gt.s32.totalorder %v8194, 0
  %v8196 = vsel %vm8195, %v8194, 0
  %v8197 = vshrl.u32 %v8196, 5
  %v8198 = vand.u32 %v8196, 31
  %v8199 = vsub.s32 32, %v8198
  %v8200 = vshrl.u32 683565275, %v8199
  %v8201 = vshll.u32 683565275, %v8198
  %v8202 = vshrl.u32 2475754826, %v8199
  %v8203 = vor.u32 %v8201, %v8202
  %v8204 = vshll.u32 2475754826, %v8198
  %v8205 = vshrl.u32 2131351028, %v8199
  %v8206 = vor.u32 %v8204, %v8205
  %v8207 = vshll.u32 2131351028, %v8198
  %v8208 = vshrl.u32 2102212464, %v8199
  %v8209 = vor.u32 %v8207, %v8208
  %v8210 = vshll.u32 2102212464, %v8198
  %v8211 = vshrl.u32 920167782, %v8199
  %v8212 = vor.u32 %v8210, %v8211
  %v8213 = vshll.u32 920167782, %v8198
  %v8214 = vshrl.u32 1326507024, %v8199
  %v8215 = vor.u32 %v8213, %v8214
  %vm8216 = vcmp.lt.s32.totalorder %v8197, 1
  %vm8217 = vcmp.lt.s32.totalorder %v8197, 2
  %vm8218 = vcmp.lt.s32.totalorder %v8197, 3
  %vm8219 = vcmp.lt.s32.totalorder %v8197, 4
  %v8220 = vsel %vm8216, %v8200, %v8203
  %v8221 = vsel %vm8219, %v8209, 2102212464
  %v8222 = vsel %vm8218, %v8206, %v8221
  %v8223 = vsel %vm8217, %v8220, %v8222
  %v8224 = vsel %vm8216, %v8203, %v8206
  %v8225 = vsel %vm8219, %v8212, 920167782
  %v8226 = vsel %vm8218, %v8209, %v8225
  %v8227 = vsel %vm8217, %v8224, %v8226
  %v8228 = vsel %vm8216, %v8206, %v8209
  %v8229 = vsel %vm8219, %v8215, 1326507024
  %v8230 = vsel %vm8218, %v8212, %v8229
  %v8231 = vsel %vm8217, %v8228, %v8230
  %v8232 = vshll.u32 %v8192, 8
  %v8233 = vmul.u32.u64.compose %v8232, %v8231
  %v8234 = vextract.low.u32 %v8233
  %v8235 = vextract.high.u32 %v8233
  %v8236 = vmul.u32.u64.compose %v8232, %v8227
  %v8237 = vextract.low.u32 %v8236
  %v8238 = vextract.high.u32 %v8236
  %v8239 = vmul.u32 %v8232, %v8223
  %v8240 = vadd.s32 %v8235, %v8237
  %vm8241 = vc.u32 %v8235, %v8237
  %v8242 = vadd.s32 %v8238, 1
  %v8243 = vsel %vm8241, %v8242, %v8238
  %v8244 = vadd.s32 %v8239, %v8243
  %v8245 = vadd.s32 %v8244, 536870912
  %v8246 = vshrl.u32 %v8245, 30
  %v8247 = vshll.u32 %v8246, 30
  %v8248 = vsub.s32 %v8244, %v8247
  %vm8249 = vcmp.lt.s32.totalorder %v8248, 0
  %v8250 = vsub.s32 0, %v8248
  %v8251 = vsel %vm8249, %v8250, %v8248
  %v8252 = vclz %v8251
  %v8253 = vsub.s32 %v8252, 2
  %vm8254 = vcmp.gt.s32.totalorder 0, %v8253
  %v8255 = vsel %vm8254, 0, %v8253
  %v8256 = vsub.s32 32, %v8255
  %v8257 = vshll.u32 %v8248, %v8255
  %v8258 = vshrl.u32 %v8240, %v8256
  %v8259 = vor.u32 %v8257, %v8258
  %v8260 = vsub.s32 4294967266, %v8255
  %v8261 = vadd.s32 %v8260, 127
  %v8262 = vshll.u32 %v8261, 23
  %v8263 = vor.u32 4788187, %v8262
  %v8264 = vand.u32 2147483647, %v8263
  %v8266 = vcvt.s32.f32 %v8259
  %v8267 = vmul.f32 %v8266, %v8264
  %v8268 = vxor.u32 %v8267, 2147483648
  %v8269 = vsel %vm8186, %v8268, %v8267
  %v8270 = vsub.s32 4, %v8246
  %v8271 = vsel %vm8186, %v8270, %v8246
  %v8272 = vsel %vm8185, %v484, %v8269
  %v8273 = vsel %vm8185, 0, %v8271
  %v8274 = vcosq.f32.pop %v8272
  %v8275 = vsinq.f32.pop %v8272
  %vm8276 = vweird.f32 %v484
  %v8277 = vadd.s32 %v8273, 3
  %v8278 = vand.u32 %v8277, 3
  %vm8279 = vcmp.lt.s32.totalorder %v8278, 2
  %vm8280 = vcmp.eq.s32.totalorder %v8278, 0
  %v8281 = vxor.u32 %v8275, 2147483648
  %v8282 = vsel %vm8280, %v8274, %v8281
  %vm8283 = vcmp.eq.s32.totalorder %v8278, 2
  %v8284 = vxor.u32 %v8274, 2147483648
  %v8285 = vsel %vm8283, %v8284, %v8275
  %v8286 = vsel %vm8279, %v8282, %v8285
  %v8287 = vsel %vm8276, nan, %v8286
  %v8288 = vand.u32 2147483647, %v486
  %vm8289 = vcmp.le.f32.partialorder %v8288, 0.7853982
  %vm8290 = vcmp.lt.s32.totalorder %v486, 0
  %v8291 = vand.u32 %v486, 2139095040
  %v8292 = vshrl.u32 %v8291, 23
  %v8293 = vsub.s32 %v8292, 127
  %v8294 = vand.u32 2147483647, %v486
  %v8295 = vand.u32 %v8294, 8388607
  %v8296 = vor.u32 %v8295, 8388608
  %v8297 = vsub.s32 0, %v8296
  %v8298 = vadd.s32 %v8293, 1
  %vm8299 = vcmp.gt.s32.totalorder %v8298, 0
  %v8300 = vsel %vm8299, %v8298, 0
  %v8301 = vshrl.u32 %v8300, 5
  %v8302 = vand.u32 %v8300, 31
  %v8303 = vsub.s32 32, %v8302
  %v8304 = vshrl.u32 683565275, %v8303
  %v8305 = vshll.u32 683565275, %v8302
  %v8306 = vshrl.u32 2475754826, %v8303
  %v8307 = vor.u32 %v8305, %v8306
  %v8308 = vshll.u32 2475754826, %v8302
  %v8309 = vshrl.u32 2131351028, %v8303
  %v8310 = vor.u32 %v8308, %v8309
  %v8311 = vshll.u32 2131351028, %v8302
  %v8312 = vshrl.u32 2102212464, %v8303
  %v8313 = vor.u32 %v8311, %v8312
  %v8314 = vshll.u32 2102212464, %v8302
  %v8315 = vshrl.u32 920167782, %v8303
  %v8316 = vor.u32 %v8314, %v8315
  %v8317 = vshll.u32 920167782, %v8302
  %v8318 = vshrl.u32 1326507024, %v8303
  %v8319 = vor.u32 %v8317, %v8318
  %vm8320 = vcmp.lt.s32.totalorder %v8301, 1
  %vm8321 = vcmp.lt.s32.totalorder %v8301, 2
  %vm8322 = vcmp.lt.s32.totalorder %v8301, 3
  %vm8323 = vcmp.lt.s32.totalorder %v8301, 4
  %v8324 = vsel %vm8320, %v8304, %v8307
  %v8325 = vsel %vm8323, %v8313, 2102212464
  %v8326 = vsel %vm8322, %v8310, %v8325
  %v8327 = vsel %vm8321, %v8324, %v8326
  %v8328 = vsel %vm8320, %v8307, %v8310
  %v8329 = vsel %vm8323, %v8316, 920167782
  %v8330 = vsel %vm8322, %v8313, %v8329
  %v8331 = vsel %vm8321, %v8328, %v8330
  %v8332 = vsel %vm8320, %v8310, %v8313
  %v8333 = vsel %vm8323, %v8319, 1326507024
  %v8334 = vsel %vm8322, %v8316, %v8333
  %v8335 = vsel %vm8321, %v8332, %v8334
  %v8336 = vshll.u32 %v8296, 8
  %v8337 = vmul.u32.u64.compose %v8336, %v8335
  %v8338 = vextract.low.u32 %v8337
  %v8339 = vextract.high.u32 %v8337
  %v8340 = vmul.u32.u64.compose %v8336, %v8331
  %v8341 = vextract.low.u32 %v8340
  %v8342 = vextract.high.u32 %v8340
  %v8343 = vmul.u32 %v8336, %v8327
  %v8344 = vadd.s32 %v8339, %v8341
  %vm8345 = vc.u32 %v8339, %v8341
  %v8346 = vadd.s32 %v8342, 1
  %v8347 = vsel %vm8345, %v8346, %v8342
  %v8348 = vadd.s32 %v8343, %v8347
  %v8349 = vadd.s32 %v8348, 536870912
  %v8350 = vshrl.u32 %v8349, 30
  %v8351 = vshll.u32 %v8350, 30
  %v8352 = vsub.s32 %v8348, %v8351
  %vm8353 = vcmp.lt.s32.totalorder %v8352, 0
  %v8354 = vsub.s32 0, %v8352
  %v8355 = vsel %vm8353, %v8354, %v8352
  %v8356 = vclz %v8355
  %v8357 = vsub.s32 %v8356, 2
  %vm8358 = vcmp.gt.s32.totalorder 0, %v8357
  %v8359 = vsel %vm8358, 0, %v8357
  %v8360 = vsub.s32 32, %v8359
  %v8361 = vshll.u32 %v8352, %v8359
  %v8362 = vshrl.u32 %v8344, %v8360
  %v8363 = vor.u32 %v8361, %v8362
  %v8364 = vsub.s32 4294967266, %v8359
  %v8365 = vadd.s32 %v8364, 127
  %v8366 = vshll.u32 %v8365, 23
  %v8367 = vor.u32 4788187, %v8366
  %v8368 = vand.u32 2147483647, %v8367
  %v8370 = vcvt.s32.f32 %v8363
  %v8371 = vmul.f32 %v8370, %v8368
  %v8372 = vxor.u32 %v8371, 2147483648
  %v8373 = vsel %vm8290, %v8372, %v8371
  %v8374 = vsub.s32 4, %v8350
  %v8375 = vsel %vm8290, %v8374, %v8350
  %v8376 = vsel %vm8289, %v486, %v8373
  %v8377 = vsel %vm8289, 0, %v8375
  %v8378 = vcosq.f32.pop %v8376
  %v8379 = vsinq.f32.pop %v8376
  %vm8380 = vweird.f32 %v486
  %v8381 = vadd.s32 %v8377, 3
  %v8382 = vand.u32 %v8381, 3
  %vm8383 = vcmp.lt.s32.totalorder %v8382, 2
  %vm8384 = vcmp.eq.s32.totalorder %v8382, 0
  %v8385 = vxor.u32 %v8379, 2147483648
  %v8386 = vsel %vm8384, %v8378, %v8385
  %vm8387 = vcmp.eq.s32.totalorder %v8382, 2
  %v8388 = vxor.u32 %v8378, 2147483648
  %v8389 = vsel %vm8387, %v8388, %v8379
  %v8390 = vsel %vm8383, %v8386, %v8389
  %v8391 = vsel %vm8380, nan, %v8390
  %8392 = vst [vmem:[%s3] sm:$0xff] %v591
  %8393 = vst [vmem:[%s3 + $0x8] sm:$0xff] %v695
  %8394 = vst [vmem:[%s3 + $0x10] sm:$0xff] %v799
  %8395 = vst [vmem:[%s3 + $0x18] sm:$0xff] %v903
  %8396 = vst [vmem:[%s3 + $0x20] sm:$0xff] %v1007
  %8397 = vst [vmem:[%s3 + $0x28] sm:$0xff] %v1111
  %8398 = vst [vmem:[%s3 + $0x30] sm:$0xff] %v1215
  %8399 = vst [vmem:[%s3 + $0x38] sm:$0xff] %v1319
  %8400 = vst [vmem:[%s3 + $0x40] sm:$0xff] %v1423
  %8401 = vst [vmem:[%s3 + $0x48] sm:$0xff] %v1527
  %8402 = vst [vmem:[%s3 + $0x50] sm:$0xff] %v1631
  %8403 = vst [vmem:[%s3 + $0x58] sm:$0xff] %v1735
  %8404 = vst [vmem:[%s3 + $0x60] sm:$0xff] %v1839
  %8405 = vst [vmem:[%s3 + $0x68] sm:$0xff] %v1943
  %8406 = vst [vmem:[%s3 + $0x70] sm:$0xff] %v2047
  %8407 = vst [vmem:[%s3 + $0x78] sm:$0xff] %v2151
  %8408 = vst [vmem:[%s3 + $0x80] sm:$0xff] %v2255
  %8409 = vst [vmem:[%s3 + $0x88] sm:$0xff] %v2359
  %8410 = vst [vmem:[%s3 + $0x90] sm:$0xff] %v2463
  %8411 = vst [vmem:[%s3 + $0x98] sm:$0xff] %v2567
  %8412 = vst [vmem:[%s3 + $0xa0] sm:$0xff] %v2671
  %8413 = vst [vmem:[%s3 + $0xa8] sm:$0xff] %v2775
  %8414 = vst [vmem:[%s3 + $0xb0] sm:$0xff] %v2879
  %8415 = vst [vmem:[%s3 + $0xb8] sm:$0xff] %v2983
  %8416 = vst [vmem:[%s3 + $0xc0] sm:$0xff] %v3087
  %8417 = vst [vmem:[%s3 + $0xc8] sm:$0xff] %v3191
  %8418 = vst [vmem:[%s3 + $0xd0] sm:$0xff] %v3295
  %8419 = vst [vmem:[%s3 + $0xd8] sm:$0xff] %v3399
  %8420 = vst [vmem:[%s3 + $0xe0] sm:$0xff] %v3503
  %8421 = vst [vmem:[%s3 + $0xe8] sm:$0xff] %v3607
  %8422 = vst [vmem:[%s3 + $0xf0] sm:$0xff] %v3711
  %8423 = vst [vmem:[%s3 + $0xf8] sm:$0xff] %v3815
  %8424 = vst [vmem:[%s3 + $0x100] sm:$0xff] %v3919
  %8425 = vst [vmem:[%s3 + $0x108] sm:$0xff] %v4023
  %8426 = vst [vmem:[%s3 + $0x110] sm:$0xff] %v4127
  %8427 = vst [vmem:[%s3 + $0x118] sm:$0xff] %v4231
  %8428 = vst [vmem:[%s3 + $0x120] sm:$0xff] %v4335
  %8429 = vst [vmem:[%s3 + $0x128] sm:$0xff] %v4439
  %8430 = vst [vmem:[%s3 + $0x130] sm:$0xff] %v4543
  %8431 = vst [vmem:[%s3 + $0x138] sm:$0xff] %v4647
  %8432 = vst [vmem:[%s3 + $0x140] sm:$0xff] %v4751
  %8433 = vst [vmem:[%s3 + $0x148] sm:$0xff] %v4855
  %8434 = vst [vmem:[%s3 + $0x150] sm:$0xff] %v4959
  %8435 = vst [vmem:[%s3 + $0x158] sm:$0xff] %v5063
  %8436 = vst [vmem:[%s3 + $0x160] sm:$0xff] %v5167
  %8437 = vst [vmem:[%s3 + $0x168] sm:$0xff] %v5271
  %8438 = vst [vmem:[%s3 + $0x170] sm:$0xff] %v5375
  %8439 = vst [vmem:[%s3 + $0x178] sm:$0xff] %v5479
  %8440 = vst [vmem:[%s3 + $0x180] sm:$0xff] %v5583
  %8441 = vst [vmem:[%s3 + $0x188] sm:$0xff] %v5687
  %8442 = vst [vmem:[%s3 + $0x190] sm:$0xff] %v5791
  %8443 = vst [vmem:[%s3 + $0x198] sm:$0xff] %v5895
  %8444 = vst [vmem:[%s3 + $0x1a0] sm:$0xff] %v5999
  %8445 = vst [vmem:[%s3 + $0x1a8] sm:$0xff] %v6103
  %8446 = vst [vmem:[%s3 + $0x1b0] sm:$0xff] %v6207
  %8447 = vst [vmem:[%s3 + $0x1b8] sm:$0xff] %v6311
  %8448 = vst [vmem:[%s3 + $0x1c0] sm:$0xff] %v6415
  %8449 = vst [vmem:[%s3 + $0x1c8] sm:$0xff] %v6519
  %8450 = vst [vmem:[%s3 + $0x1d0] sm:$0xff] %v6623
  %8451 = vst [vmem:[%s3 + $0x1d8] sm:$0xff] %v6727
  %8452 = vst [vmem:[%s3 + $0x1e0] sm:$0xff] %v6831
  %8453 = vst [vmem:[%s3 + $0x1e8] sm:$0xff] %v6935
  %8454 = vst [vmem:[%s3 + $0x1f0] sm:$0xff] %v7039
  %8455 = vst [vmem:[%s3 + $0x1f8] sm:$0xff] %v7143
  %8456 = vst [vmem:[%s3 + $0x200] sm:$0xff] %v7247
  %8457 = vst [vmem:[%s3 + $0x208] sm:$0xff] %v7351
  %8458 = vst [vmem:[%s3 + $0x210] sm:$0xff] %v7455
  %8459 = vst [vmem:[%s3 + $0x218] sm:$0xff] %v7559
  %8460 = vst [vmem:[%s3 + $0x220] sm:$0xff] %v7663
  %8461 = vst [vmem:[%s3 + $0x228] sm:$0xff] %v7767
  %8462 = vst [vmem:[%s3 + $0x230] sm:$0xff] %v7871
  %8463 = vst [vmem:[%s3 + $0x238] sm:$0xff] %v7975
  %8464 = vst [vmem:[%s3 + $0x240] sm:$0xff] %v8079
  %8465 = vst [vmem:[%s3 + $0x248] sm:$0xff] %v8183
  %8466 = vst [vmem:[%s3 + $0x250] sm:$0xff] %v8287
  %8467 = vst [vmem:[%s3 + $0x258] sm:$0xff] %v8391
  // Predicated region
  $region14: #{tpu_custom_call.1} parent=0 // pred_check
    _
  $region15: #{tpu_custom_call.1} parent=0 // pred_check_branch
    %8469 = sbr.rel (0) target = $region17
  $region16: #{tpu_custom_call.1} parent=0 // pred_region
    _
  $region17: #{tpu_custom_call.1} parent=0 // pred_fallthru
    _
  // Predicated region
  $region18: #{tpu_custom_call.1} parent=0 // pred_check
    _
  $region19: #{tpu_custom_call.1} parent=0 // pred_check_branch
    %8471 = sbr.rel (0) target = $region21
  $region20: #{tpu_custom_call.1} parent=0 // pred_region
    _
  $region21: #{tpu_custom_call.1} parent=0 // pred_fallthru
    _

</llo_original>
